<compile_context>
chip_gen: v5e
topology: v5e:2x2
jax: 0.10.0
libtpu: 0.0.40
codegen_flags: <defaults>
</compile_context>

<pallas_src>
import functools
import math

import jax
import jax.numpy as jnp
from jax.experimental import pallas as pl
from jax.experimental.pallas import tpu as pltpu

LRELU_SLOPE = 0.1


def _round_up(x, m):
    return ((x + m - 1) // m) * m


def _cdiv(a, b):
    return -(-a // b)


# Per-layer static configuration of DiscriminatorR (mult=1):
#   (cin, cout, (KH, KW), stride_w, (ph, pw), apply_leaky_relu, fold_g)
def _conv_cfgs(mult=1):
    c = int(32 * mult)
    return [
        (1, c, (3, 9), 1, (1, 4), True, 4),    # conv1: Cin=1 -> fold 4 time taps into channels
        (c, c, (3, 9), 2, (1, 4), True, 8),    # conv2 (stride 2 folded away, K=1536, N=128)
        (c, c, (3, 9), 2, (1, 4), True, 8),    # conv3
        (c, c, (3, 9), 2, (1, 4), True, 8),    # conv4
        (c, c, (3, 3), 1, (1, 1), True, 4),    # conv5 (K=768, N=128)
        (c, 1, (3, 3), 1, (1, 1), False, 4),   # conv_post (no activation)
    ]


# ----------------------------- STFT magnitude kernel -----------------------------

def _stft_mag_kernel(basis_ref, frames_ref, o_ref):
    # basis_ref: (2, TF, n_fft)  rows = [cos ; sin] (window folded in, lane-padded freqs)
    # frames_ref: (n_fft, T)     time on the lane dim
    # o_ref:      (TF, T)        magnitude
    tf_ = basis_ref.shape[1]
    nfft = basis_ref.shape[2]
    bas = basis_ref[...].reshape(2 * tf_, nfft)
    res = jnp.dot(bas, frames_ref[...], preferred_element_type=jnp.float32)  # (2*TF, T)
    re = res[:tf_, :]
    im = res[tf_:, :]
    o_ref[...] = jnp.sqrt(re * re + im * im)


def stft_magnitude(x, n_fft, hop_length, win_length):
    """x: (B, 1, L) float32 -> (B, F, T) magnitude, F = n_fft//2 + 1.

    Matches torch: reflect-pad by (n_fft-hop)//2, torch.stft(window=None -> centered
    rectangular window of win_length, center=False, onesided=True), L2 over (re, im).
    """
    assert win_length <= n_fft
    B = x.shape[0]
    p = (n_fft - hop_length) // 2
    xp = jnp.pad(x, ((0, 0), (0, 0), (p, p)), mode="reflect")[:, 0, :]       # (B, Lp)
    Lp = xp.shape[-1]
    T = (Lp - n_fft) // hop_length + 1

    # Frame with time on the minor (lane) dim: frames[b, n, t] = xp[b, t*hop + n].
    idx = jnp.arange(n_fft)[:, None] + hop_length * jnp.arange(T)[None, :]   # (n_fft, T)
    frames = xp[:, idx].astype(jnp.float32)                                  # (B, n_fft, T)

    F = n_fft // 2 + 1
    Fp = _round_up(F, 128)                      # lane-pad the frequency axis (zero rows)

    # Rectangular window of width win_length, centered in n_fft, folded into the basis.
    win = jnp.zeros((n_fft,), jnp.float32)
    off = (n_fft - win_length) // 2
    win = win.at[off:off + win_length].set(1.0)

    n = jnp.arange(n_fft, dtype=jnp.float32)[None, :]
    f = jnp.arange(Fp, dtype=jnp.float32)[:, None]
    ang = -2.0 * jnp.pi * f * n / n_fft
    valid = f < F
    cos_b = jnp.where(valid, jnp.cos(ang), 0.0) * win[None, :]
    sin_b = jnp.where(valid, jnp.sin(ang), 0.0) * win[None, :]
    basis = jnp.stack([cos_b, sin_b], axis=0)                                # (2, Fp, n_fft)

    tile_f = 128
    nF = Fp // tile_f

    mag = pl.pallas_call(
        _stft_mag_kernel,
        out_shape=jax.ShapeDtypeStruct((B, Fp, T), jnp.float32),
        grid=(B, nF),
        in_specs=[
            pl.BlockSpec((2, tile_f, n_fft), lambda b, fi: (0, fi, 0)),
            pl.BlockSpec((None, n_fft, T), lambda b, fi: (b, 0, 0)),
        ],
        out_specs=pl.BlockSpec((None, tile_f, T), lambda b, fi: (b, fi, 0)),
        compiler_params=pltpu.CompilerParams(
            dimension_semantics=("parallel", "parallel"),
            vmem_limit_bytes=32 * 1024 * 1024,
        ),
    )(basis, frames)
    return mag[:, :F, :]                                                     # (B, F, T)


# ----------------------------- folded Conv2d (+bias +leaky_relu) kernel -----------------------------

def _make_conv_kernel(KH, KWf, tile_h, P_out, Cin_f, Cout_f, apply_lrelu):
    TH = tile_h * P_out

    def kernel(x_ref, w_ref, b_ref, o_ref, slab_ref):
        # x_ref:    (tile_h + KH - 1, P_out + KWf - 1, Cin_f)  folded, zero-padded input tile
        # w_ref:    (KH*KWf*Cin_f, Cout_f)                     folded weight in im2col order
        # b_ref:    (1, Cout_f)
        # o_ref:    (tile_h, P_out, Cout_f)
        # slab_ref: VMEM scratch (TH, KH*KWf*Cin_f)            im2col patch slab
        for kh in range(KH):
            for q in range(KWf):
                tap = kh * KWf + q
                patch = x_ref[kh:kh + tile_h, q:q + P_out, :]        # unit-stride slices
                slab_ref[:, tap * Cin_f:(tap + 1) * Cin_f] = patch.reshape(TH, Cin_f)
        acc = jnp.dot(slab_ref[...], w_ref[...], preferred_element_type=jnp.float32)
        acc = acc + b_ref[...]
        if apply_lrelu:
            acc = jnp.where(acc > 0, acc, LRELU_SLOPE * acc)
        o_ref[...] = acc.reshape(tile_h, P_out, Cout_f).astype(o_ref.dtype)

    return kernel


def conv2d_folded(x, w, b, *, stride_w, padding, fold_g, apply_lrelu,
                  compute_dtype=jnp.float32):
    """NHWC Conv2d with stride (1, stride_w), fused bias + leaky_relu.

    The time (W) axis is folded by `fold_g` into the channel dim before the kernel runs:
    (a) stride-2 becomes stride-1 with unit-stride in-kernel slices, (b) the matmul
    contraction deepens to K = KH*KWf*fold_g*Cin, (c) the output becomes lane-dense
    (Cout_f = fold_g/stride_w * Cout).  Exactly reproduces the un-folded conv.
    """
    B, H, W, Cin = x.shape
    KH, KW, _, Cout = w.shape
    ph, pw = padding
    sw = stride_w
    g = fold_g
    assert g % sw == 0
    g_out = g // sw

    H_out = H + 2 * ph - KH + 1                       # stride_h == 1 for all layers
    W_out = (W + 2 * pw - KW) // sw + 1
    KWf = (g - sw + KW - 1) // g + 1                  # folded kernel width
    Cin_f = g * Cin
    Cout_f = g_out * Cout
    K = KH * KWf * Cin_f

    P_out = _round_up(_cdiv(W_out, g_out), 8)         # folded (padded) output width
    P_in = P_out + KWf - 1

    # ---- fold the weight: wf[kh, q, r*Cin+ci, r_out*Cout+co] = w[kh, kw, ci, co]
    #      with kw = g*q + r - sw*r_out (zero where kw falls outside [0, KW)).
    wf = jnp.zeros((KH, KWf, g, Cin, g_out, Cout), jnp.float32)
    for r_out in range(g_out):
        for kw in range(KW):
            t = sw * r_out + kw
            q, r = t // g, t % g
            wf = wf.at[:, q, r, :, r_out, :].set(w[:, kw, :, :])
    wf = wf.reshape(K, Cout_f)
    bf = jnp.tile(b, (g_out,)).reshape(1, Cout_f).astype(jnp.float32)

    # ---- pick the frequency tile so the im2col slab stays ~<= 4 MiB of VMEM
    itemsize = jnp.dtype(compute_dtype).itemsize
    slab_budget = 4 * 1024 * 1024
    th_rows = max(8, min(2048, slab_budget // max(1, K * itemsize)))
    tile_h = max(8, min(64, (th_rows // max(P_out, 1)) // 8 * 8))
    tile_h = min(tile_h, _round_up(H_out, 8))
    nH = _cdiv(H_out, tile_h)
    th_in = tile_h + KH - 1

    # ---- zero pad + fold the input along time, pre-tile the freq axis with a halo
    Wp = g * P_in
    right = Wp - pw - W
    assert right >= pw, "internal: folded right padding too small"
    rows_needed = nH * tile_h + KH - 1
    bot = rows_needed - ph - H
    xp = jnp.pad(x, ((0, 0), (ph, bot), (pw, right), (0, 0)))
    xf = xp.reshape(B, rows_needed, P_in, Cin_f)                     # free fold
    row_idx = jnp.arange(nH)[:, None] * tile_h + jnp.arange(th_in)[None, :]
    xt = jnp.take(xf, row_idx, axis=1)                               # (B, nH, th_in, P_in, Cin_f)

    xt = xt.astype(compute_dtype)
    wf = wf.astype(compute_dtype)

    kernel = _make_conv_kernel(KH, KWf, tile_h, P_out, Cin_f, Cout_f, apply_lrelu)
    out_t = pl.pallas_call(
        kernel,
        out_shape=jax.ShapeDtypeStruct((B, nH, tile_h, P_out, Cout_f), jnp.float32),
        grid=(B, nH),
        in_specs=[
            pl.BlockSpec((None, None, th_in, P_in, Cin_f),
                         lambda bi, hi: (bi, hi, 0, 0, 0)),
            pl.BlockSpec((K, Cout_f), lambda bi, hi: (0, 0)),
            pl.BlockSpec((1, Cout_f), lambda bi, hi: (0, 0)),
        ],
        out_specs=pl.BlockSpec((None, None, tile_h, P_out, Cout_f),
                               lambda bi, hi: (bi, hi, 0, 0, 0)),
        scratch_shapes=[pltpu.VMEM((tile_h * P_out, K), compute_dtype)],
        compiler_params=pltpu.CompilerParams(
            dimension_semantics=("parallel", "parallel"),
            vmem_limit_bytes=32 * 1024 * 1024,
        ),
    )(xt, wf, bf)

    # un-tile rows and un-fold the time axis (both free reshapes), drop the padding.
    out = out_t.reshape(B, nH * tile_h, P_out * g_out, Cout)
    return out[:, :H_out, :W_out, :]


# ----------------------------- DiscriminatorR -----------------------------

def init_discriminator_r_params(key, mult=1):
    """Deterministic init; weight_norm at init == plain weight, so this matches the module."""
    params = []
    for (cin, cout, (kh, kw), _, _, _, _) in _conv_cfgs(mult):
        key, k1, k2 = jax.random.split(key, 3)
        scale = 1.0 / math.sqrt(cin * kh * kw)
        w = jax.random.uniform(k1, (kh, kw, cin, cout), jnp.float32, -scale, scale)
        b = jax.random.uniform(k2, (cout,), jnp.float32, -scale, scale)
        params.append((w, b))
    return params


def discriminator_r_forward(x, params, *, resolution, mult=1,
                            compute_dtype=jnp.float32, fmap_layout="NCHW"):
    """x: (B, 1, L) raw audio -> (flattened logits (B, F*T'), fmap list).

    compute_dtype=jnp.bfloat16 runs the conv matmuls in bf16 (f32 MXU accumulation) for
    ~2-3x MXU throughput on v6e/v7x; default stays f32 for bit-level parity.
    fmap_layout="NCHW" reproduces the PyTorch fmap layout; "NHWC" skips the per-layer
    transposes (pure bandwidth savings) when the downstream loss accepts NHWC.
    """
    n_fft, hop_length, win_length = resolution
    mag = stft_magnitude(x, n_fft, hop_length, win_length)          # (B, F, T)
    h = mag[..., None]                                              # NHWC, Cin=1

    fmap = []
    for (w, b), (_, _, _, sw, pad, act, g) in zip(params, _conv_cfgs(mult)):
        h = conv2d_folded(h, w, b, stride_w=sw, padding=pad, fold_g=g,
                          apply_lrelu=act, compute_dtype=compute_dtype)
        fmap.append(jnp.transpose(h, (0, 3, 1, 2)) if fmap_layout == "NCHW" else h)
    # flatten(x, 1, -1): NCHW (B, 1, F, T') -> (B, F*T'); NHWC (B, F, T', 1) has identical order.
    out = h.reshape(h.shape[0], -1)
    return out, fmap


if __name__ == "__main__":
    key = jax.random.PRNGKey(0)
    resolution = (32, 8, 32)          # (n_fft, hop_length, win_length) -- small synthetic config
    B, L = 2, 64                      # batch=2, audio length=64 samples
    kx, kp = jax.random.split(key)
    x = jax.random.normal(kx, (B, 1, L), dtype=jnp.float32)
    params = init_discriminator_r_params(kp, mult=1)

    fwd = jax.jit(functools.partial(discriminator_r_forward, resolution=resolution, mult=1))
    out, fmap = fwd(x, params)
    jax.block_until_ready((out, fmap))
    print("KERNEL_OK")
</pallas_src>

<mosaic_0001>
module attributes {stable_mosaic.version = 11 : i64} {
  func.func @_stft_mag_kernel(%arg0: i32, %arg1: i32, %arg2: memref<2x128x32xf32, #tpu.memory_space<vmem>>, %arg3: memref<1x32x8xf32, #tpu.memory_space<vmem>>, %arg4: memref<1x128x8xf32, #tpu.memory_space<vmem>>) attributes {dimension_semantics = [#tpu.dimension_semantics<parallel>, #tpu.dimension_semantics<parallel>], iteration_bounds = array<i64: 2, 1>, scalar_prefetch = 0 : i64, scratch_operands = 0 : i64, tpu.core_type = #tpu.core_type<tc>, window_params = [{transform_indices = @transform_0, window_bounds = array<i64: 2, 128, 32>}, {transform_indices = @transform_1, window_bounds = array<i64: 1, 32, 8>}, {transform_indices = @transform_2, window_bounds = array<i64: 1, 128, 8>}]} {
    %c0 = arith.constant 0 : index
    %c0_0 = arith.constant 0 : index
    %c0_1 = arith.constant 0 : index
    %0 = vector.load %arg2[%c0, %c0_0, %c0_1] : memref<2x128x32xf32, #tpu.memory_space<vmem>>, vector<2x128x32xf32>
    %1 = vector.shape_cast %0 : vector<2x128x32xf32> to vector<256x32xf32>
    %c0_2 = arith.constant 0 : index
    %c0_3 = arith.constant 0 : index
    %c0_4 = arith.constant 0 : index
    %2 = vector.load %arg3[%c0_2, %c0_3, %c0_4] : memref<1x32x8xf32, #tpu.memory_space<vmem>>, vector<1x32x8xf32>
    %3 = vector.shape_cast %2 : vector<1x32x8xf32> to vector<32x8xf32>
    %cst = arith.constant dense<0.000000e+00> : vector<256x8xf32>
    %4 = tpu.matmul %1, %3, %cst {dimension_numbers = #tpu.dot_dimension_numbers<[1], [0], [0], [1], [0, 0, 1, 1], [], []>} : vector<256x32xf32>, vector<32x8xf32>, vector<256x8xf32> -> vector<256x8xf32>
    %5 = vector.extract_strided_slice %4 {offsets = [0, 0], sizes = [128, 8], strides = [1, 1]} : vector<256x8xf32> to vector<128x8xf32>
    %6 = vector.extract_strided_slice %4 {offsets = [128, 0], sizes = [128, 8], strides = [1, 1]} : vector<256x8xf32> to vector<128x8xf32>
    %7 = arith.mulf %5, %5 : vector<128x8xf32>
    %8 = arith.mulf %6, %6 : vector<128x8xf32>
    %9 = arith.addf %7, %8 : vector<128x8xf32>
    %10 = math.sqrt %9 : vector<128x8xf32>
    %c0_5 = arith.constant 0 : index
    %c0_6 = arith.constant 0 : index
    %c0_7 = arith.constant 0 : index
    %11 = vector.load %arg4[%c0_5, %c0_6, %c0_7] : memref<1x128x8xf32, #tpu.memory_space<vmem>>, vector<1x128x8xf32>
    %12 = vector.shape_cast %11 : vector<1x128x8xf32> to vector<128x8xf32>
    %13 = vector.shape_cast %10 : vector<128x8xf32> to vector<1x128x8xf32>
    tpu.vector_store %arg4[%c0_5, %c0_6, %c0_7], %13 {strides = array<i32>} : memref<1x128x8xf32, #tpu.memory_space<vmem>>, vector<1x128x8xf32>,
    return
  }
  func.func @transform_0(%arg0: i32, %arg1: i32) -> (i32, i32, i32) {
    %c0_i32 = arith.constant 0 : i32
    %c0_i32_0 = arith.constant 0 : i32
    %c0_i32_1 = arith.constant 0 : i32
    return %c0_i32, %arg1, %c0_i32_0 : i32, i32, i32
  }
  func.func @transform_1(%arg0: i32, %arg1: i32) -> (i32, i32, i32) {
    %c0_i32 = arith.constant 0 : i32
    %c0_i32_0 = arith.constant 0 : i32
    %c0_i32_1 = arith.constant 0 : i32
    return %arg0, %c0_i32, %c0_i32_0 : i32, i32, i32
  }
  func.func @transform_2(%arg0: i32, %arg1: i32) -> (i32, i32, i32) {
    %c0_i32 = arith.constant 0 : i32
    %c0_i32_0 = arith.constant 0 : i32
    return %arg0, %arg1, %c0_i32 : i32, i32, i32
  }
}

module attributes {stable_mosaic.version = 11 : i64} {
  func.func @kernel(%arg0: i32, %arg1: i32, %arg2: memref<1x1x26x10x4xf32, #tpu.memory_space<vmem>>, %arg3: memref<36x128xf32, #tpu.memory_space<vmem>>, %arg4: memref<1x128xf32, #tpu.memory_space<vmem>>, %arg5: memref<1x1x24x8x128xf32, #tpu.memory_space<vmem>>, %arg6: memref<192x36xf32, #tpu.memory_space<vmem>>) attributes {dimension_semantics = [#tpu.dimension_semantics<parallel>, #tpu.dimension_semantics<parallel>], iteration_bounds = array<i64: 2, 1>, scalar_prefetch = 0 : i64, scratch_operands = 1 : i64, tpu.core_type = #tpu.core_type<tc>, window_params = [{transform_indices = @transform_0, window_bounds = array<i64: 1, 1, 26, 10, 4>}, {pipeline_mode = #tpu.pipeline_mode<synchronous>, transform_indices = @transform_1, window_bounds = array<i64: 36, 128>}, {pipeline_mode = #tpu.pipeline_mode<synchronous>, transform_indices = @transform_2, window_bounds = array<i64: 1, 128>}, {transform_indices = @transform_3, window_bounds = array<i64: 1, 1, 24, 8, 128>}]} {
    %c0 = arith.constant 0 : index
    %c0_0 = arith.constant 0 : index
    %c0_1 = arith.constant 0 : index
    %c0_2 = arith.constant 0 : index
    %c0_3 = arith.constant 0 : index
    %0 = vector.load %arg2[%c0, %c0_0, %c0_1, %c0_2, %c0_3] : memref<1x1x26x10x4xf32, #tpu.memory_space<vmem>>, vector<1x1x24x8x4xf32>
    %1 = vector.shape_cast %0 : vector<1x1x24x8x4xf32> to vector<24x8x4xf32>
    %2 = vector.shape_cast %1 : vector<24x8x4xf32> to vector<192x4xf32>
    %c0_4 = arith.constant 0 : index
    %c0_5 = arith.constant 0 : index
    %3 = vector.load %arg6[%c0_4, %c0_5] : memref<192x36xf32, #tpu.memory_space<vmem>>, vector<192x4xf32>
    tpu.vector_store %arg6[%c0_4, %c0_5], %2 {strides = array<i32>} : memref<192x36xf32, #tpu.memory_space<vmem>>, vector<192x4xf32>,
    %c0_6 = arith.constant 0 : index
    %c0_7 = arith.constant 0 : index
    %c0_8 = arith.constant 0 : index
    %c1 = arith.constant 1 : index
    %c0_9 = arith.constant 0 : index
    %4 = vector.load %arg2[%c0_6, %c0_7, %c0_8, %c1, %c0_9] : memref<1x1x26x10x4xf32, #tpu.memory_space<vmem>>, vector<1x1x24x8x4xf32>
    %5 = vector.shape_cast %4 : vector<1x1x24x8x4xf32> to vector<24x8x4xf32>
    %6 = vector.shape_cast %5 : vector<24x8x4xf32> to vector<192x4xf32>
    %c0_10 = arith.constant 0 : index
    %c4 = arith.constant 4 : index
    %7 = vector.load %arg6[%c0_10, %c4] : memref<192x36xf32, #tpu.memory_space<vmem>>, vector<192x4xf32>
    tpu.vector_store %arg6[%c0_10, %c4], %6 {strides = array<i32>} : memref<192x36xf32, #tpu.memory_space<vmem>>, vector<192x4xf32>,
    %c0_11 = arith.constant 0 : index
    %c0_12 = arith.constant 0 : index
    %c0_13 = arith.constant 0 : index
    %c2 = arith.constant 2 : index
    %c0_14 = arith.constant 0 : index
    %8 = vector.load %arg2[%c0_11, %c0_12, %c0_13, %c2, %c0_14] : memref<1x1x26x10x4xf32, #tpu.memory_space<vmem>>, vector<1x1x24x8x4xf32>
    %9 = vector.shape_cast %8 : vector<1x1x24x8x4xf32> to vector<24x8x4xf32>
    %10 = vector.shape_cast %9 : vector<24x8x4xf32> to vector<192x4xf32>
    %c0_15 = arith.constant 0 : index
    %c8 = arith.constant 8 : index
    %11 = vector.load %arg6[%c0_15, %c8] : memref<192x36xf32, #tpu.memory_space<vmem>>, vector<192x4xf32>
    tpu.vector_store %arg6[%c0_15, %c8], %10 {strides = array<i32>} : memref<192x36xf32, #tpu.memory_space<vmem>>, vector<192x4xf32>,
    %c0_16 = arith.constant 0 : index
    %c0_17 = arith.constant 0 : index
    %c1_18 = arith.constant 1 : index
    %c0_19 = arith.constant 0 : index
    %c0_20 = arith.constant 0 : index
    %12 = vector.load %arg2[%c0_16, %c0_17, %c1_18, %c0_19, %c0_20] : memref<1x1x26x10x4xf32, #tpu.memory_space<vmem>>, vector<1x1x24x8x4xf32>
    %13 = vector.shape_cast %12 : vector<1x1x24x8x4xf32> to vector<24x8x4xf32>
    %14 = vector.shape_cast %13 : vector<24x8x4xf32> to vector<192x4xf32>
    %c0_21 = arith.constant 0 : index
    %c12 = arith.constant 12 : index
    %15 = vector.load %arg6[%c0_21, %c12] : memref<192x36xf32, #tpu.memory_space<vmem>>, vector<192x4xf32>
    tpu.vector_store %arg6[%c0_21, %c12], %14 {strides = array<i32>} : memref<192x36xf32, #tpu.memory_space<vmem>>, vector<192x4xf32>,
    %c0_22 = arith.constant 0 : index
    %c0_23 = arith.constant 0 : index
    %c1_24 = arith.constant 1 : index
    %c1_25 = arith.constant 1 : index
    %c0_26 = arith.constant 0 : index
    %16 = vector.load %arg2[%c0_22, %c0_23, %c1_24, %c1_25, %c0_26] : memref<1x1x26x10x4xf32, #tpu.memory_space<vmem>>, vector<1x1x24x8x4xf32>
    %17 = vector.shape_cast %16 : vector<1x1x24x8x4xf32> to vector<24x8x4xf32>
    %18 = vector.shape_cast %17 : vector<24x8x4xf32> to vector<192x4xf32>
    %c0_27 = arith.constant 0 : index
    %c16 = arith.constant 16 : index
    %19 = vector.load %arg6[%c0_27, %c16] : memref<192x36xf32, #tpu.memory_space<vmem>>, vector<192x4xf32>
    tpu.vector_store %arg6[%c0_27, %c16], %18 {strides = array<i32>} : memref<192x36xf32, #tpu.memory_space<vmem>>, vector<192x4xf32>,
    %c0_28 = arith.constant 0 : index
    %c0_29 = arith.constant 0 : index
    %c1_30 = arith.constant 1 : index
    %c2_31 = arith.constant 2 : index
    %c0_32 = arith.constant 0 : index
    %20 = vector.load %arg2[%c0_28, %c0_29, %c1_30, %c2_31, %c0_32] : memref<1x1x26x10x4xf32, #tpu.memory_space<vmem>>, vector<1x1x24x8x4xf32>
    %21 = vector.shape_cast %20 : vector<1x1x24x8x4xf32> to vector<24x8x4xf32>
    %22 = vector.shape_cast %21 : vector<24x8x4xf32> to vector<192x4xf32>
    %c0_33 = arith.constant 0 : index
    %c20 = arith.constant 20 : index
    %23 = vector.load %arg6[%c0_33, %c20] : memref<192x36xf32, #tpu.memory_space<vmem>>, vector<192x4xf32>
    tpu.vector_store %arg6[%c0_33, %c20], %22 {strides = array<i32>} : memref<192x36xf32, #tpu.memory_space<vmem>>, vector<192x4xf32>,
    %c0_34 = arith.constant 0 : index
    %c0_35 = arith.constant 0 : index
    %c2_36 = arith.constant 2 : index
    %c0_37 = arith.constant 0 : index
    %c0_38 = arith.constant 0 : index
    %24 = vector.load %arg2[%c0_34, %c0_35, %c2_36, %c0_37, %c0_38] : memref<1x1x26x10x4xf32, #tpu.memory_space<vmem>>, vector<1x1x24x8x4xf32>
    %25 = vector.shape_cast %24 : vector<1x1x24x8x4xf32> to vector<24x8x4xf32>
    %26 = vector.shape_cast %25 : vector<24x8x4xf32> to vector<192x4xf32>
    %c0_39 = arith.constant 0 : index
    %c24 = arith.constant 24 : index
    %27 = vector.load %arg6[%c0_39, %c24] : memref<192x36xf32, #tpu.memory_space<vmem>>, vector<192x4xf32>
    tpu.vector_store %arg6[%c0_39, %c24], %26 {strides = array<i32>} : memref<192x36xf32, #tpu.memory_space<vmem>>, vector<192x4xf32>,
    %c0_40 = arith.constant 0 : index
    %c0_41 = arith.constant 0 : index
    %c2_42 = arith.constant 2 : index
    %c1_43 = arith.constant 1 : index
    %c0_44 = arith.constant 0 : index
    %28 = vector.load %arg2[%c0_40, %c0_41, %c2_42, %c1_43, %c0_44] : memref<1x1x26x10x4xf32, #tpu.memory_space<vmem>>, vector<1x1x24x8x4xf32>
    %29 = vector.shape_cast %28 : vector<1x1x24x8x4xf32> to vector<24x8x4xf32>
    %30 = vector.shape_cast %29 : vector<24x8x4xf32> to vector<192x4xf32>
    %c0_45 = arith.constant 0 : index
    %c28 = arith.constant 28 : index
    %31 = vector.load %arg6[%c0_45, %c28] : memref<192x36xf32, #tpu.memory_space<vmem>>, vector<192x4xf32>
    tpu.vector_store %arg6[%c0_45, %c28], %30 {strides = array<i32>} : memref<192x36xf32, #tpu.memory_space<vmem>>, vector<192x4xf32>,
    %c0_46 = arith.constant 0 : index
    %c0_47 = arith.constant 0 : index
    %c2_48 = arith.constant 2 : index
    %c2_49 = arith.constant 2 : index
    %c0_50 = arith.constant 0 : index
    %32 = vector.load %arg2[%c0_46, %c0_47, %c2_48, %c2_49, %c0_50] : memref<1x1x26x10x4xf32, #tpu.memory_space<vmem>>, vector<1x1x24x8x4xf32>
    %33 = vector.shape_cast %32 : vector<1x1x24x8x4xf32> to vector<24x8x4xf32>
    %34 = vector.shape_cast %33 : vector<24x8x4xf32> to vector<192x4xf32>
    %c0_51 = arith.constant 0 : index
    %c32 = arith.constant 32 : index
    %35 = vector.load %arg6[%c0_51, %c32] : memref<192x36xf32, #tpu.memory_space<vmem>>, vector<192x4xf32>
    tpu.vector_store %arg6[%c0_51, %c32], %34 {strides = array<i32>} : memref<192x36xf32, #tpu.memory_space<vmem>>, vector<192x4xf32>,
    %c0_52 = arith.constant 0 : index
    %c0_53 = arith.constant 0 : index
    %36 = vector.load %arg6[%c0_52, %c0_53] : memref<192x36xf32, #tpu.memory_space<vmem>>, vector<192x36xf32>
    %c0_54 = arith.constant 0 : index
    %c0_55 = arith.constant 0 : index
    %37 = vector.load %arg3[%c0_54, %c0_55] : memref<36x128xf32, #tpu.memory_space<vmem>>, vector<36x128xf32>
    %cst = arith.constant dense<0.000000e+00> : vector<192x128xf32>
    %38 = tpu.matmul %36, %37, %cst {dimension_numbers = #tpu.dot_dimension_numbers<[1], [0], [0], [1], [0, 0, 1, 1], [], []>} : vector<192x36xf32>, vector<36x128xf32>, vector<192x128xf32> -> vector<192x128xf32>
    %c0_56 = arith.constant 0 : index
    %c0_57 = arith.constant 0 : index
    %39 = vector.load %arg4[%c0_56, %c0_57] : memref<1x128xf32, #tpu.memory_space<vmem>>, vector<1x128xf32>
    %40 = vector.broadcast %39 : vector<1x128xf32> to vector<192x128xf32>
    %41 = arith.addf %38, %40 : vector<192x128xf32>
    %cst_58 = arith.constant 0.000000e+00 : f32
    %42 = vector.broadcast %cst_58 : f32 to vector<192x128xf32>
    %43 = arith.cmpf ogt, %41, %42 : vector<192x128xf32>
    %cst_59 = arith.constant 1.000000e-01 : f32
    %44 = vector.broadcast %cst_59 : f32 to vector<192x128xf32>
    %45 = arith.mulf %44, %41 : vector<192x128xf32>
    %46 = arith.select %43, %41, %45 : vector<192x128xi1>, vector<192x128xf32>
    %47 = vector.shape_cast %46 : vector<192x128xf32> to vector<24x8x128xf32>
    %c0_60 = arith.constant 0 : index
    %c0_61 = arith.constant 0 : index
    %c0_62 = arith.constant 0 : index
    %c0_63 = arith.constant 0 : index
    %c0_64 = arith.constant 0 : index
    %48 = vector.load %arg5[%c0_60, %c0_61, %c0_62, %c0_63, %c0_64] : memref<1x1x24x8x128xf32, #tpu.memory_space<vmem>>, vector<1x1x24x8x128xf32>
    %49 = vector.shape_cast %48 : vector<1x1x24x8x128xf32> to vector<24x8x128xf32>
    %50 = vector.shape_cast %47 : vector<24x8x128xf32> to vector<1x1x24x8x128xf32>
    tpu.vector_store %arg5[%c0_60, %c0_61, %c0_62, %c0_63, %c0_64], %50 {strides = array<i32>} : memref<1x1x24x8x128xf32, #tpu.memory_space<vmem>>, vector<1x1x24x8x128xf32>,
    return
  }
  func.func @transform_0(%arg0: i32, %arg1: i32) -> (i32, i32, i32, i32, i32) {
    %c0_i32 = arith.constant 0 : i32
    %c0_i32_0 = arith.constant 0 : i32
    %c0_i32_1 = arith.constant 0 : i32
    %c0_i32_2 = arith.constant 0 : i32
    return %arg0, %arg1, %c0_i32, %c0_i32_0, %c0_i32_1 : i32, i32, i32, i32, i32
  }
  func.func @transform_1(%arg0: i32, %arg1: i32) -> (i32, i32) {
    %c0_i32 = arith.constant 0 : i32
    %c0_i32_0 = arith.constant 0 : i32
    %c0_i32_1 = arith.constant 0 : i32
    return %c0_i32, %c0_i32_0 : i32, i32
  }
  func.func @transform_2(%arg0: i32, %arg1: i32) -> (i32, i32) {
    %c0_i32 = arith.constant 0 : i32
    %c0_i32_0 = arith.constant 0 : i32
    %c0_i32_1 = arith.constant 0 : i32
    return %c0_i32, %c0_i32_0 : i32, i32
  }
  func.func @transform_3(%arg0: i32, %arg1: i32) -> (i32, i32, i32, i32, i32) {
    %c0_i32 = arith.constant 0 : i32
    %c0_i32_0 = arith.constant 0 : i32
    %c0_i32_1 = arith.constant 0 : i32
    %c0_i32_2 = arith.constant 0 : i32
    return %arg0, %arg1, %c0_i32, %c0_i32_0, %c0_i32_1 : i32, i32, i32, i32, i32
  }
}

module attributes {stable_mosaic.version = 11 : i64} {
  func.func @kernel(%arg0: i32, %arg1: i32, %arg2: memref<1x1x26x9x256xf32, #tpu.memory_space<vmem>>, %arg3: memref<1536x128xf32, #tpu.memory_space<vmem>>, %arg4: memref<1x128xf32, #tpu.memory_space<vmem>>, %arg5: memref<1x1x24x8x128xf32, #tpu.memory_space<vmem>>, %arg6: memref<192x1536xf32, #tpu.memory_space<vmem>>) attributes {dimension_semantics = [#tpu.dimension_semantics<parallel>, #tpu.dimension_semantics<parallel>], iteration_bounds = array<i64: 2, 1>, scalar_prefetch = 0 : i64, scratch_operands = 1 : i64, tpu.core_type = #tpu.core_type<tc>, window_params = [{transform_indices = @transform_0, window_bounds = array<i64: 1, 1, 26, 9, 256>}, {pipeline_mode = #tpu.pipeline_mode<synchronous>, transform_indices = @transform_1, window_bounds = array<i64: 1536, 128>}, {pipeline_mode = #tpu.pipeline_mode<synchronous>, transform_indices = @transform_2, window_bounds = array<i64: 1, 128>}, {transform_indices = @transform_3, window_bounds = array<i64: 1, 1, 24, 8, 128>}]} {
    %c0 = arith.constant 0 : index
    %c0_0 = arith.constant 0 : index
    %c0_1 = arith.constant 0 : index
    %c0_2 = arith.constant 0 : index
    %c0_3 = arith.constant 0 : index
    %0 = vector.load %arg2[%c0, %c0_0, %c0_1, %c0_2, %c0_3] : memref<1x1x26x9x256xf32, #tpu.memory_space<vmem>>, vector<1x1x24x8x256xf32>
    %1 = vector.shape_cast %0 : vector<1x1x24x8x256xf32> to vector<24x8x256xf32>
    %2 = vector.shape_cast %1 : vector<24x8x256xf32> to vector<192x256xf32>
    %c0_4 = arith.constant 0 : index
    %c0_5 = arith.constant 0 : index
    %3 = vector.load %arg6[%c0_4, %c0_5] : memref<192x1536xf32, #tpu.memory_space<vmem>>, vector<192x256xf32>
    tpu.vector_store %arg6[%c0_4, %c0_5], %2 {strides = array<i32>} : memref<192x1536xf32, #tpu.memory_space<vmem>>, vector<192x256xf32>,
    %c0_6 = arith.constant 0 : index
    %c0_7 = arith.constant 0 : index
    %c0_8 = arith.constant 0 : index
    %c1 = arith.constant 1 : index
    %c0_9 = arith.constant 0 : index
    %4 = vector.load %arg2[%c0_6, %c0_7, %c0_8, %c1, %c0_9] : memref<1x1x26x9x256xf32, #tpu.memory_space<vmem>>, vector<1x1x24x8x256xf32>
    %5 = vector.shape_cast %4 : vector<1x1x24x8x256xf32> to vector<24x8x256xf32>
    %6 = vector.shape_cast %5 : vector<24x8x256xf32> to vector<192x256xf32>
    %c0_10 = arith.constant 0 : index
    %c256 = arith.constant 256 : index
    %7 = vector.load %arg6[%c0_10, %c256] : memref<192x1536xf32, #tpu.memory_space<vmem>>, vector<192x256xf32>
    tpu.vector_store %arg6[%c0_10, %c256], %6 {strides = array<i32>} : memref<192x1536xf32, #tpu.memory_space<vmem>>, vector<192x256xf32>,
    %c0_11 = arith.constant 0 : index
    %c0_12 = arith.constant 0 : index
    %c1_13 = arith.constant 1 : index
    %c0_14 = arith.constant 0 : index
    %c0_15 = arith.constant 0 : index
    %8 = vector.load %arg2[%c0_11, %c0_12, %c1_13, %c0_14, %c0_15] : memref<1x1x26x9x256xf32, #tpu.memory_space<vmem>>, vector<1x1x24x8x256xf32>
    %9 = vector.shape_cast %8 : vector<1x1x24x8x256xf32> to vector<24x8x256xf32>
    %10 = vector.shape_cast %9 : vector<24x8x256xf32> to vector<192x256xf32>
    %c0_16 = arith.constant 0 : index
    %c512 = arith.constant 512 : index
    %11 = vector.load %arg6[%c0_16, %c512] : memref<192x1536xf32, #tpu.memory_space<vmem>>, vector<192x256xf32>
    tpu.vector_store %arg6[%c0_16, %c512], %10 {strides = array<i32>} : memref<192x1536xf32, #tpu.memory_space<vmem>>, vector<192x256xf32>,
    %c0_17 = arith.constant 0 : index
    %c0_18 = arith.constant 0 : index
    %c1_19 = arith.constant 1 : index
    %c1_20 = arith.constant 1 : index
    %c0_21 = arith.constant 0 : index
    %12 = vector.load %arg2[%c0_17, %c0_18, %c1_19, %c1_20, %c0_21] : memref<1x1x26x9x256xf32, #tpu.memory_space<vmem>>, vector<1x1x24x8x256xf32>
    %13 = vector.shape_cast %12 : vector<1x1x24x8x256xf32> to vector<24x8x256xf32>
    %14 = vector.shape_cast %13 : vector<24x8x256xf32> to vector<192x256xf32>
    %c0_22 = arith.constant 0 : index
    %c768 = arith.constant 768 : index
    %15 = vector.load %arg6[%c0_22, %c768] : memref<192x1536xf32, #tpu.memory_space<vmem>>, vector<192x256xf32>
    tpu.vector_store %arg6[%c0_22, %c768], %14 {strides = array<i32>} : memref<192x1536xf32, #tpu.memory_space<vmem>>, vector<192x256xf32>,
    %c0_23 = arith.constant 0 : index
    %c0_24 = arith.constant 0 : index
    %c2 = arith.constant 2 : index
    %c0_25 = arith.constant 0 : index
    %c0_26 = arith.constant 0 : index
    %16 = vector.load %arg2[%c0_23, %c0_24, %c2, %c0_25, %c0_26] : memref<1x1x26x9x256xf32, #tpu.memory_space<vmem>>, vector<1x1x24x8x256xf32>
    %17 = vector.shape_cast %16 : vector<1x1x24x8x256xf32> to vector<24x8x256xf32>
    %18 = vector.shape_cast %17 : vector<24x8x256xf32> to vector<192x256xf32>
    %c0_27 = arith.constant 0 : index
    %c1024 = arith.constant 1024 : index
    %19 = vector.load %arg6[%c0_27, %c1024] : memref<192x1536xf32, #tpu.memory_space<vmem>>, vector<192x256xf32>
    tpu.vector_store %arg6[%c0_27, %c1024], %18 {strides = array<i32>} : memref<192x1536xf32, #tpu.memory_space<vmem>>, vector<192x256xf32>,
    %c0_28 = arith.constant 0 : index
    %c0_29 = arith.constant 0 : index
    %c2_30 = arith.constant 2 : index
    %c1_31 = arith.constant 1 : index
    %c0_32 = arith.constant 0 : index
    %20 = vector.load %arg2[%c0_28, %c0_29, %c2_30, %c1_31, %c0_32] : memref<1x1x26x9x256xf32, #tpu.memory_space<vmem>>, vector<1x1x24x8x256xf32>
    %21 = vector.shape_cast %20 : vector<1x1x24x8x256xf32> to vector<24x8x256xf32>
    %22 = vector.shape_cast %21 : vector<24x8x256xf32> to vector<192x256xf32>
    %c0_33 = arith.constant 0 : index
    %c1280 = arith.constant 1280 : index
    %23 = vector.load %arg6[%c0_33, %c1280] : memref<192x1536xf32, #tpu.memory_space<vmem>>, vector<192x256xf32>
    tpu.vector_store %arg6[%c0_33, %c1280], %22 {strides = array<i32>} : memref<192x1536xf32, #tpu.memory_space<vmem>>, vector<192x256xf32>,
    %c0_34 = arith.constant 0 : index
    %c0_35 = arith.constant 0 : index
    %24 = vector.load %arg6[%c0_34, %c0_35] : memref<192x1536xf32, #tpu.memory_space<vmem>>, vector<192x1536xf32>
    %c0_36 = arith.constant 0 : index
    %c0_37 = arith.constant 0 : index
    %25 = vector.load %arg3[%c0_36, %c0_37] : memref<1536x128xf32, #tpu.memory_space<vmem>>, vector<1536x128xf32>
    %cst = arith.constant dense<0.000000e+00> : vector<192x128xf32>
    %26 = tpu.matmul %24, %25, %cst {dimension_numbers = #tpu.dot_dimension_numbers<[1], [0], [0], [1], [0, 0, 1, 1], [], []>} : vector<192x1536xf32>, vector<1536x128xf32>, vector<192x128xf32> -> vector<192x128xf32>
    %c0_38 = arith.constant 0 : index
    %c0_39 = arith.constant 0 : index
    %27 = vector.load %arg4[%c0_38, %c0_39] : memref<1x128xf32, #tpu.memory_space<vmem>>, vector<1x128xf32>
    %28 = vector.broadcast %27 : vector<1x128xf32> to vector<192x128xf32>
    %29 = arith.addf %26, %28 : vector<192x128xf32>
    %cst_40 = arith.constant 0.000000e+00 : f32
    %30 = vector.broadcast %cst_40 : f32 to vector<192x128xf32>
    %31 = arith.cmpf ogt, %29, %30 : vector<192x128xf32>
    %cst_41 = arith.constant 1.000000e-01 : f32
    %32 = vector.broadcast %cst_41 : f32 to vector<192x128xf32>
    %33 = arith.mulf %32, %29 : vector<192x128xf32>
    %34 = arith.select %31, %29, %33 : vector<192x128xi1>, vector<192x128xf32>
    %35 = vector.shape_cast %34 : vector<192x128xf32> to vector<24x8x128xf32>
    %c0_42 = arith.constant 0 : index
    %c0_43 = arith.constant 0 : index
    %c0_44 = arith.constant 0 : index
    %c0_45 = arith.constant 0 : index
    %c0_46 = arith.constant 0 : index
    %36 = vector.load %arg5[%c0_42, %c0_43, %c0_44, %c0_45, %c0_46] : memref<1x1x24x8x128xf32, #tpu.memory_space<vmem>>, vector<1x1x24x8x128xf32>
    %37 = vector.shape_cast %36 : vector<1x1x24x8x128xf32> to vector<24x8x128xf32>
    %38 = vector.shape_cast %35 : vector<24x8x128xf32> to vector<1x1x24x8x128xf32>
    tpu.vector_store %arg5[%c0_42, %c0_43, %c0_44, %c0_45, %c0_46], %38 {strides = array<i32>} : memref<1x1x24x8x128xf32, #tpu.memory_space<vmem>>, vector<1x1x24x8x128xf32>,
    return
  }
  func.func @transform_0(%arg0: i32, %arg1: i32) -> (i32, i32, i32, i32, i32) {
    %c0_i32 = arith.constant 0 : i32
    %c0_i32_0 = arith.constant 0 : i32
    %c0_i32_1 = arith.constant 0 : i32
    %c0_i32_2 = arith.constant 0 : i32
    return %arg0, %arg1, %c0_i32, %c0_i32_0, %c0_i32_1 : i32, i32, i32, i32, i32
  }
  func.func @transform_1(%arg0: i32, %arg1: i32) -> (i32, i32) {
    %c0_i32 = arith.constant 0 : i32
    %c0_i32_0 = arith.constant 0 : i32
    %c0_i32_1 = arith.constant 0 : i32
    return %c0_i32, %c0_i32_0 : i32, i32
  }
  func.func @transform_2(%arg0: i32, %arg1: i32) -> (i32, i32) {
    %c0_i32 = arith.constant 0 : i32
    %c0_i32_0 = arith.constant 0 : i32
    %c0_i32_1 = arith.constant 0 : i32
    return %c0_i32, %c0_i32_0 : i32, i32
  }
  func.func @transform_3(%arg0: i32, %arg1: i32) -> (i32, i32, i32, i32, i32) {
    %c0_i32 = arith.constant 0 : i32
    %c0_i32_0 = arith.constant 0 : i32
    %c0_i32_1 = arith.constant 0 : i32
    %c0_i32_2 = arith.constant 0 : i32
    return %arg0, %arg1, %c0_i32, %c0_i32_0, %c0_i32_1 : i32, i32, i32, i32, i32
  }
}

module attributes {stable_mosaic.version = 11 : i64} {
  func.func @kernel(%arg0: i32, %arg1: i32, %arg2: memref<1x1x26x9x128xf32, #tpu.memory_space<vmem>>, %arg3: memref<768x128xf32, #tpu.memory_space<vmem>>, %arg4: memref<1x128xf32, #tpu.memory_space<vmem>>, %arg5: memref<1x1x24x8x128xf32, #tpu.memory_space<vmem>>, %arg6: memref<192x768xf32, #tpu.memory_space<vmem>>) attributes {dimension_semantics = [#tpu.dimension_semantics<parallel>, #tpu.dimension_semantics<parallel>], iteration_bounds = array<i64: 2, 1>, scalar_prefetch = 0 : i64, scratch_operands = 1 : i64, tpu.core_type = #tpu.core_type<tc>, window_params = [{transform_indices = @transform_0, window_bounds = array<i64: 1, 1, 26, 9, 128>}, {pipeline_mode = #tpu.pipeline_mode<synchronous>, transform_indices = @transform_1, window_bounds = array<i64: 768, 128>}, {pipeline_mode = #tpu.pipeline_mode<synchronous>, transform_indices = @transform_2, window_bounds = array<i64: 1, 128>}, {transform_indices = @transform_3, window_bounds = array<i64: 1, 1, 24, 8, 128>}]} {
    %c0 = arith.constant 0 : index
    %c0_0 = arith.constant 0 : index
    %c0_1 = arith.constant 0 : index
    %c0_2 = arith.constant 0 : index
    %c0_3 = arith.constant 0 : index
    %0 = vector.load %arg2[%c0, %c0_0, %c0_1, %c0_2, %c0_3] : memref<1x1x26x9x128xf32, #tpu.memory_space<vmem>>, vector<1x1x24x8x128xf32>
    %1 = vector.shape_cast %0 : vector<1x1x24x8x128xf32> to vector<24x8x128xf32>
    %2 = vector.shape_cast %1 : vector<24x8x128xf32> to vector<192x128xf32>
    %c0_4 = arith.constant 0 : index
    %c0_5 = arith.constant 0 : index
    %3 = vector.load %arg6[%c0_4, %c0_5] : memref<192x768xf32, #tpu.memory_space<vmem>>, vector<192x128xf32>
    tpu.vector_store %arg6[%c0_4, %c0_5], %2 {strides = array<i32>} : memref<192x768xf32, #tpu.memory_space<vmem>>, vector<192x128xf32>,
    %c0_6 = arith.constant 0 : index
    %c0_7 = arith.constant 0 : index
    %c0_8 = arith.constant 0 : index
    %c1 = arith.constant 1 : index
    %c0_9 = arith.constant 0 : index
    %4 = vector.load %arg2[%c0_6, %c0_7, %c0_8, %c1, %c0_9] : memref<1x1x26x9x128xf32, #tpu.memory_space<vmem>>, vector<1x1x24x8x128xf32>
    %5 = vector.shape_cast %4 : vector<1x1x24x8x128xf32> to vector<24x8x128xf32>
    %6 = vector.shape_cast %5 : vector<24x8x128xf32> to vector<192x128xf32>
    %c0_10 = arith.constant 0 : index
    %c128 = arith.constant 128 : index
    %7 = vector.load %arg6[%c0_10, %c128] : memref<192x768xf32, #tpu.memory_space<vmem>>, vector<192x128xf32>
    tpu.vector_store %arg6[%c0_10, %c128], %6 {strides = array<i32>} : memref<192x768xf32, #tpu.memory_space<vmem>>, vector<192x128xf32>,
    %c0_11 = arith.constant 0 : index
    %c0_12 = arith.constant 0 : index
    %c1_13 = arith.constant 1 : index
    %c0_14 = arith.constant 0 : index
    %c0_15 = arith.constant 0 : index
    %8 = vector.load %arg2[%c0_11, %c0_12, %c1_13, %c0_14, %c0_15] : memref<1x1x26x9x128xf32, #tpu.memory_space<vmem>>, vector<1x1x24x8x128xf32>
    %9 = vector.shape_cast %8 : vector<1x1x24x8x128xf32> to vector<24x8x128xf32>
    %10 = vector.shape_cast %9 : vector<24x8x128xf32> to vector<192x128xf32>
    %c0_16 = arith.constant 0 : index
    %c256 = arith.constant 256 : index
    %11 = vector.load %arg6[%c0_16, %c256] : memref<192x768xf32, #tpu.memory_space<vmem>>, vector<192x128xf32>
    tpu.vector_store %arg6[%c0_16, %c256], %10 {strides = array<i32>} : memref<192x768xf32, #tpu.memory_space<vmem>>, vector<192x128xf32>,
    %c0_17 = arith.constant 0 : index
    %c0_18 = arith.constant 0 : index
    %c1_19 = arith.constant 1 : index
    %c1_20 = arith.constant 1 : index
    %c0_21 = arith.constant 0 : index
    %12 = vector.load %arg2[%c0_17, %c0_18, %c1_19, %c1_20, %c0_21] : memref<1x1x26x9x128xf32, #tpu.memory_space<vmem>>, vector<1x1x24x8x128xf32>
    %13 = vector.shape_cast %12 : vector<1x1x24x8x128xf32> to vector<24x8x128xf32>
    %14 = vector.shape_cast %13 : vector<24x8x128xf32> to vector<192x128xf32>
    %c0_22 = arith.constant 0 : index
    %c384 = arith.constant 384 : index
    %15 = vector.load %arg6[%c0_22, %c384] : memref<192x768xf32, #tpu.memory_space<vmem>>, vector<192x128xf32>
    tpu.vector_store %arg6[%c0_22, %c384], %14 {strides = array<i32>} : memref<192x768xf32, #tpu.memory_space<vmem>>, vector<192x128xf32>,
    %c0_23 = arith.constant 0 : index
    %c0_24 = arith.constant 0 : index
    %c2 = arith.constant 2 : index
    %c0_25 = arith.constant 0 : index
    %c0_26 = arith.constant 0 : index
    %16 = vector.load %arg2[%c0_23, %c0_24, %c2, %c0_25, %c0_26] : memref<1x1x26x9x128xf32, #tpu.memory_space<vmem>>, vector<1x1x24x8x128xf32>
    %17 = vector.shape_cast %16 : vector<1x1x24x8x128xf32> to vector<24x8x128xf32>
    %18 = vector.shape_cast %17 : vector<24x8x128xf32> to vector<192x128xf32>
    %c0_27 = arith.constant 0 : index
    %c512 = arith.constant 512 : index
    %19 = vector.load %arg6[%c0_27, %c512] : memref<192x768xf32, #tpu.memory_space<vmem>>, vector<192x128xf32>
    tpu.vector_store %arg6[%c0_27, %c512], %18 {strides = array<i32>} : memref<192x768xf32, #tpu.memory_space<vmem>>, vector<192x128xf32>,
    %c0_28 = arith.constant 0 : index
    %c0_29 = arith.constant 0 : index
    %c2_30 = arith.constant 2 : index
    %c1_31 = arith.constant 1 : index
    %c0_32 = arith.constant 0 : index
    %20 = vector.load %arg2[%c0_28, %c0_29, %c2_30, %c1_31, %c0_32] : memref<1x1x26x9x128xf32, #tpu.memory_space<vmem>>, vector<1x1x24x8x128xf32>
    %21 = vector.shape_cast %20 : vector<1x1x24x8x128xf32> to vector<24x8x128xf32>
    %22 = vector.shape_cast %21 : vector<24x8x128xf32> to vector<192x128xf32>
    %c0_33 = arith.constant 0 : index
    %c640 = arith.constant 640 : index
    %23 = vector.load %arg6[%c0_33, %c640] : memref<192x768xf32, #tpu.memory_space<vmem>>, vector<192x128xf32>
    tpu.vector_store %arg6[%c0_33, %c640], %22 {strides = array<i32>} : memref<192x768xf32, #tpu.memory_space<vmem>>, vector<192x128xf32>,
    %c0_34 = arith.constant 0 : index
    %c0_35 = arith.constant 0 : index
    %24 = vector.load %arg6[%c0_34, %c0_35] : memref<192x768xf32, #tpu.memory_space<vmem>>, vector<192x768xf32>
    %c0_36 = arith.constant 0 : index
    %c0_37 = arith.constant 0 : index
    %25 = vector.load %arg3[%c0_36, %c0_37] : memref<768x128xf32, #tpu.memory_space<vmem>>, vector<768x128xf32>
    %cst = arith.constant dense<0.000000e+00> : vector<192x128xf32>
    %26 = tpu.matmul %24, %25, %cst {dimension_numbers = #tpu.dot_dimension_numbers<[1], [0], [0], [1], [0, 0, 1, 1], [], []>} : vector<192x768xf32>, vector<768x128xf32>, vector<192x128xf32> -> vector<192x128xf32>
    %c0_38 = arith.constant 0 : index
    %c0_39 = arith.constant 0 : index
    %27 = vector.load %arg4[%c0_38, %c0_39] : memref<1x128xf32, #tpu.memory_space<vmem>>, vector<1x128xf32>
    %28 = vector.broadcast %27 : vector<1x128xf32> to vector<192x128xf32>
    %29 = arith.addf %26, %28 : vector<192x128xf32>
    %cst_40 = arith.constant 0.000000e+00 : f32
    %30 = vector.broadcast %cst_40 : f32 to vector<192x128xf32>
    %31 = arith.cmpf ogt, %29, %30 : vector<192x128xf32>
    %cst_41 = arith.constant 1.000000e-01 : f32
    %32 = vector.broadcast %cst_41 : f32 to vector<192x128xf32>
    %33 = arith.mulf %32, %29 : vector<192x128xf32>
    %34 = arith.select %31, %29, %33 : vector<192x128xi1>, vector<192x128xf32>
    %35 = vector.shape_cast %34 : vector<192x128xf32> to vector<24x8x128xf32>
    %c0_42 = arith.constant 0 : index
    %c0_43 = arith.constant 0 : index
    %c0_44 = arith.constant 0 : index
    %c0_45 = arith.constant 0 : index
    %c0_46 = arith.constant 0 : index
    %36 = vector.load %arg5[%c0_42, %c0_43, %c0_44, %c0_45, %c0_46] : memref<1x1x24x8x128xf32, #tpu.memory_space<vmem>>, vector<1x1x24x8x128xf32>
    %37 = vector.shape_cast %36 : vector<1x1x24x8x128xf32> to vector<24x8x128xf32>
    %38 = vector.shape_cast %35 : vector<24x8x128xf32> to vector<1x1x24x8x128xf32>
    tpu.vector_store %arg5[%c0_42, %c0_43, %c0_44, %c0_45, %c0_46], %38 {strides = array<i32>} : memref<1x1x24x8x128xf32, #tpu.memory_space<vmem>>, vector<1x1x24x8x128xf32>,
    return
  }
  func.func @transform_0(%arg0: i32, %arg1: i32) -> (i32, i32, i32, i32, i32) {
    %c0_i32 = arith.constant 0 : i32
    %c0_i32_0 = arith.constant 0 : i32
    %c0_i32_1 = arith.constant 0 : i32
    %c0_i32_2 = arith.constant 0 : i32
    return %arg0, %arg1, %c0_i32, %c0_i32_0, %c0_i32_1 : i32, i32, i32, i32, i32
  }
  func.func @transform_1(%arg0: i32, %arg1: i32) -> (i32, i32) {
    %c0_i32 = arith.constant 0 : i32
    %c0_i32_0 = arith.constant 0 : i32
    %c0_i32_1 = arith.constant 0 : i32
    return %c0_i32, %c0_i32_0 : i32, i32
  }
  func.func @transform_2(%arg0: i32, %arg1: i32) -> (i32, i32) {
    %c0_i32 = arith.constant 0 : i32
    %c0_i32_0 = arith.constant 0 : i32
    %c0_i32_1 = arith.constant 0 : i32
    return %c0_i32, %c0_i32_0 : i32, i32
  }
  func.func @transform_3(%arg0: i32, %arg1: i32) -> (i32, i32, i32, i32, i32) {
    %c0_i32 = arith.constant 0 : i32
    %c0_i32_0 = arith.constant 0 : i32
    %c0_i32_1 = arith.constant 0 : i32
    %c0_i32_2 = arith.constant 0 : i32
    return %arg0, %arg1, %c0_i32, %c0_i32_0, %c0_i32_1 : i32, i32, i32, i32, i32
  }
}

module attributes {stable_mosaic.version = 11 : i64} {
  func.func @kernel(%arg0: i32, %arg1: i32, %arg2: memref<1x1x26x9x128xf32, #tpu.memory_space<vmem>>, %arg3: memref<768x4xf32, #tpu.memory_space<vmem>>, %arg4: memref<1x4xf32, #tpu.memory_space<vmem>>, %arg5: memref<1x1x24x8x4xf32, #tpu.memory_space<vmem>>, %arg6: memref<192x768xf32, #tpu.memory_space<vmem>>) attributes {dimension_semantics = [#tpu.dimension_semantics<parallel>, #tpu.dimension_semantics<parallel>], iteration_bounds = array<i64: 2, 1>, scalar_prefetch = 0 : i64, scratch_operands = 1 : i64, tpu.core_type = #tpu.core_type<tc>, window_params = [{transform_indices = @transform_0, window_bounds = array<i64: 1, 1, 26, 9, 128>}, {pipeline_mode = #tpu.pipeline_mode<synchronous>, transform_indices = @transform_1, window_bounds = array<i64: 768, 4>}, {pipeline_mode = #tpu.pipeline_mode<synchronous>, transform_indices = @transform_2, window_bounds = array<i64: 1, 4>}, {transform_indices = @transform_3, window_bounds = array<i64: 1, 1, 24, 8, 4>}]} {
    %c0 = arith.constant 0 : index
    %c0_0 = arith.constant 0 : index
    %c0_1 = arith.constant 0 : index
    %c0_2 = arith.constant 0 : index
    %c0_3 = arith.constant 0 : index
    %0 = vector.load %arg2[%c0, %c0_0, %c0_1, %c0_2, %c0_3] : memref<1x1x26x9x128xf32, #tpu.memory_space<vmem>>, vector<1x1x24x8x128xf32>
    %1 = vector.shape_cast %0 : vector<1x1x24x8x128xf32> to vector<24x8x128xf32>
    %2 = vector.shape_cast %1 : vector<24x8x128xf32> to vector<192x128xf32>
    %c0_4 = arith.constant 0 : index
    %c0_5 = arith.constant 0 : index
    %3 = vector.load %arg6[%c0_4, %c0_5] : memref<192x768xf32, #tpu.memory_space<vmem>>, vector<192x128xf32>
    tpu.vector_store %arg6[%c0_4, %c0_5], %2 {strides = array<i32>} : memref<192x768xf32, #tpu.memory_space<vmem>>, vector<192x128xf32>,
    %c0_6 = arith.constant 0 : index
    %c0_7 = arith.constant 0 : index
    %c0_8 = arith.constant 0 : index
    %c1 = arith.constant 1 : index
    %c0_9 = arith.constant 0 : index
    %4 = vector.load %arg2[%c0_6, %c0_7, %c0_8, %c1, %c0_9] : memref<1x1x26x9x128xf32, #tpu.memory_space<vmem>>, vector<1x1x24x8x128xf32>
    %5 = vector.shape_cast %4 : vector<1x1x24x8x128xf32> to vector<24x8x128xf32>
    %6 = vector.shape_cast %5 : vector<24x8x128xf32> to vector<192x128xf32>
    %c0_10 = arith.constant 0 : index
    %c128 = arith.constant 128 : index
    %7 = vector.load %arg6[%c0_10, %c128] : memref<192x768xf32, #tpu.memory_space<vmem>>, vector<192x128xf32>
    tpu.vector_store %arg6[%c0_10, %c128], %6 {strides = array<i32>} : memref<192x768xf32, #tpu.memory_space<vmem>>, vector<192x128xf32>,
    %c0_11 = arith.constant 0 : index
    %c0_12 = arith.constant 0 : index
    %c1_13 = arith.constant 1 : index
    %c0_14 = arith.constant 0 : index
    %c0_15 = arith.constant 0 : index
    %8 = vector.load %arg2[%c0_11, %c0_12, %c1_13, %c0_14, %c0_15] : memref<1x1x26x9x128xf32, #tpu.memory_space<vmem>>, vector<1x1x24x8x128xf32>
    %9 = vector.shape_cast %8 : vector<1x1x24x8x128xf32> to vector<24x8x128xf32>
    %10 = vector.shape_cast %9 : vector<24x8x128xf32> to vector<192x128xf32>
    %c0_16 = arith.constant 0 : index
    %c256 = arith.constant 256 : index
    %11 = vector.load %arg6[%c0_16, %c256] : memref<192x768xf32, #tpu.memory_space<vmem>>, vector<192x128xf32>
    tpu.vector_store %arg6[%c0_16, %c256], %10 {strides = array<i32>} : memref<192x768xf32, #tpu.memory_space<vmem>>, vector<192x128xf32>,
    %c0_17 = arith.constant 0 : index
    %c0_18 = arith.constant 0 : index
    %c1_19 = arith.constant 1 : index
    %c1_20 = arith.constant 1 : index
    %c0_21 = arith.constant 0 : index
    %12 = vector.load %arg2[%c0_17, %c0_18, %c1_19, %c1_20, %c0_21] : memref<1x1x26x9x128xf32, #tpu.memory_space<vmem>>, vector<1x1x24x8x128xf32>
    %13 = vector.shape_cast %12 : vector<1x1x24x8x128xf32> to vector<24x8x128xf32>
    %14 = vector.shape_cast %13 : vector<24x8x128xf32> to vector<192x128xf32>
    %c0_22 = arith.constant 0 : index
    %c384 = arith.constant 384 : index
    %15 = vector.load %arg6[%c0_22, %c384] : memref<192x768xf32, #tpu.memory_space<vmem>>, vector<192x128xf32>
    tpu.vector_store %arg6[%c0_22, %c384], %14 {strides = array<i32>} : memref<192x768xf32, #tpu.memory_space<vmem>>, vector<192x128xf32>,
    %c0_23 = arith.constant 0 : index
    %c0_24 = arith.constant 0 : index
    %c2 = arith.constant 2 : index
    %c0_25 = arith.constant 0 : index
    %c0_26 = arith.constant 0 : index
    %16 = vector.load %arg2[%c0_23, %c0_24, %c2, %c0_25, %c0_26] : memref<1x1x26x9x128xf32, #tpu.memory_space<vmem>>, vector<1x1x24x8x128xf32>
    %17 = vector.shape_cast %16 : vector<1x1x24x8x128xf32> to vector<24x8x128xf32>
    %18 = vector.shape_cast %17 : vector<24x8x128xf32> to vector<192x128xf32>
    %c0_27 = arith.constant 0 : index
    %c512 = arith.constant 512 : index
    %19 = vector.load %arg6[%c0_27, %c512] : memref<192x768xf32, #tpu.memory_space<vmem>>, vector<192x128xf32>
    tpu.vector_store %arg6[%c0_27, %c512], %18 {strides = array<i32>} : memref<192x768xf32, #tpu.memory_space<vmem>>, vector<192x128xf32>,
    %c0_28 = arith.constant 0 : index
    %c0_29 = arith.constant 0 : index
    %c2_30 = arith.constant 2 : index
    %c1_31 = arith.constant 1 : index
    %c0_32 = arith.constant 0 : index
    %20 = vector.load %arg2[%c0_28, %c0_29, %c2_30, %c1_31, %c0_32] : memref<1x1x26x9x128xf32, #tpu.memory_space<vmem>>, vector<1x1x24x8x128xf32>
    %21 = vector.shape_cast %20 : vector<1x1x24x8x128xf32> to vector<24x8x128xf32>
    %22 = vector.shape_cast %21 : vector<24x8x128xf32> to vector<192x128xf32>
    %c0_33 = arith.constant 0 : index
    %c640 = arith.constant 640 : index
    %23 = vector.load %arg6[%c0_33, %c640] : memref<192x768xf32, #tpu.memory_space<vmem>>, vector<192x128xf32>
    tpu.vector_store %arg6[%c0_33, %c640], %22 {strides = array<i32>} : memref<192x768xf32, #tpu.memory_space<vmem>>, vector<192x128xf32>,
    %c0_34 = arith.constant 0 : index
    %c0_35 = arith.constant 0 : index
    %24 = vector.load %arg6[%c0_34, %c0_35] : memref<192x768xf32, #tpu.memory_space<vmem>>, vector<192x768xf32>
    %c0_36 = arith.constant 0 : index
    %c0_37 = arith.constant 0 : index
    %25 = vector.load %arg3[%c0_36, %c0_37] : memref<768x4xf32, #tpu.memory_space<vmem>>, vector<768x4xf32>
    %cst = arith.constant dense<0.000000e+00> : vector<192x4xf32>
    %26 = tpu.matmul %24, %25, %cst {dimension_numbers = #tpu.dot_dimension_numbers<[1], [0], [0], [1], [0, 0, 1, 1], [], []>} : vector<192x768xf32>, vector<768x4xf32>, vector<192x4xf32> -> vector<192x4xf32>
    %c0_38 = arith.constant 0 : index
    %c0_39 = arith.constant 0 : index
    %27 = vector.load %arg4[%c0_38, %c0_39] : memref<1x4xf32, #tpu.memory_space<vmem>>, vector<1x4xf32>
    %28 = vector.broadcast %27 : vector<1x4xf32> to vector<192x4xf32>
    %29 = arith.addf %26, %28 : vector<192x4xf32>
    %30 = vector.shape_cast %29 : vector<192x4xf32> to vector<24x8x4xf32>
    %c0_40 = arith.constant 0 : index
    %c0_41 = arith.constant 0 : index
    %c0_42 = arith.constant 0 : index
    %c0_43 = arith.constant 0 : index
    %c0_44 = arith.constant 0 : index
    %31 = vector.load %arg5[%c0_40, %c0_41, %c0_42, %c0_43, %c0_44] : memref<1x1x24x8x4xf32, #tpu.memory_space<vmem>>, vector<1x1x24x8x4xf32>
    %32 = vector.shape_cast %31 : vector<1x1x24x8x4xf32> to vector<24x8x4xf32>
    %33 = vector.shape_cast %30 : vector<24x8x4xf32> to vector<1x1x24x8x4xf32>
    tpu.vector_store %arg5[%c0_40, %c0_41, %c0_42, %c0_43, %c0_44], %33 {strides = array<i32>} : memref<1x1x24x8x4xf32, #tpu.memory_space<vmem>>, vector<1x1x24x8x4xf32>,
    return
  }
  func.func @transform_0(%arg0: i32, %arg1: i32) -> (i32, i32, i32, i32, i32) {
    %c0_i32 = arith.constant 0 : i32
    %c0_i32_0 = arith.constant 0 : i32
    %c0_i32_1 = arith.constant 0 : i32
    %c0_i32_2 = arith.constant 0 : i32
    return %arg0, %arg1, %c0_i32, %c0_i32_0, %c0_i32_1 : i32, i32, i32, i32, i32
  }
  func.func @transform_1(%arg0: i32, %arg1: i32) -> (i32, i32) {
    %c0_i32 = arith.constant 0 : i32
    %c0_i32_0 = arith.constant 0 : i32
    %c0_i32_1 = arith.constant 0 : i32
    return %c0_i32, %c0_i32_0 : i32, i32
  }
  func.func @transform_2(%arg0: i32, %arg1: i32) -> (i32, i32) {
    %c0_i32 = arith.constant 0 : i32
    %c0_i32_0 = arith.constant 0 : i32
    %c0_i32_1 = arith.constant 0 : i32
    return %c0_i32, %c0_i32_0 : i32, i32
  }
  func.func @transform_3(%arg0: i32, %arg1: i32) -> (i32, i32, i32, i32, i32) {
    %c0_i32 = arith.constant 0 : i32
    %c0_i32_0 = arith.constant 0 : i32
    %c0_i32_1 = arith.constant 0 : i32
    %c0_i32_2 = arith.constant 0 : i32
    return %arg0, %arg1, %c0_i32, %c0_i32_0, %c0_i32_1 : i32, i32, i32, i32, i32
  }
}

</mosaic_0001>

<llo_original>
// kernel: tile.33
$region0: #{tile.33}
  #allocation0 [shape = 's32[1]{0}', space=sflag, size = 0x4, scoped, tag = 'scoped memory for tile.33']
  %s0 = inlined_call_operand.vmem [shape: f32[32], index: 0, kind: input, shape index: {}]
  %s1 = inlined_call_operand.vmem [shape: f32[4,32], index: 1, kind: output, shape index: {}]
  // Predicated region
  $region2: #{tile.33} parent=0 // pred_check
    _
  $region3: #{tile.33} parent=0 // pred_check_branch
    %3 = sbr.rel (0) target = $region5
  $region4: #{tile.33} parent=0 // pred_region
    _
  $region5: #{tile.33} parent=0 // pred_fallthru
    _
  %v4 = vld [vmem:[%s0] ss:$0 sm:$0xff]
  %5 = vst [vmem:[%s1] sm:$0xf] %v4

// kernel: discriminator_r_forward.7
$region0: #{discriminator_r_forward.7}
  #allocation0 [shape = 'u32[]', space=smem, size = 0x4, offset = 0x4, fixed_abs, tag = 'smem constant byte address 0x4 - core index']
  #allocation1 [shape = 'u32[72,128]{1,0:T(1,128)}', space=vmem, size = 0x9000, scoped, tag = 'internal scratch']
  %s0 = inlined_call_operand.vmem [shape: f32[2,128,32], index: 0, kind: input, shape index: {}]
  %s1 = inlined_call_operand.vmem [shape: f32[2,32,8], index: 1, kind: input, shape index: {}]
  %s2 = inlined_call_operand.vmem [shape: f32[2,128,8], index: 2, kind: output, shape index: {}]
  %s3 = sld [smem:[#allocation0]]
  $region41: #{discriminator_r_forward.7} parent=0
    _
  %s5 = ssub.s32 1, %s3
  %s6 = scalar_select 0, %s5, %s3
  loop: start=0, step=1, limit=4
  $region2: #{discriminator_r_forward.7} parent=0 // loop_pre_header
    _
  $region3: #{discriminator_r_forward.7} parent=0 // loop_header
    %s8 = sphi 0, %s12
    %p9 = scmp.ge.s32.totalorder %s8, 4
    %s15 = sphi 0, %s27
    %s16 = sphi 0, %s23
    %s17 = sphi 0, %s15
    %s18 = sphi 0, %s16
    %s19 = sphi 0, %s17
    %s20 = sphi 0, %s18
    %s30 = sphi 0, %s32
    %s33 = sphi 0, %s30
    %s34 = sphi 0, %s33
    %s50 = sphi 0, %s34
    %s56 = sphi 0, %s58
    %s59 = sphi 0, %s56
    %s60 = sphi 0, %s59
    %s76 = sphi 0, %s60
    %s84 = sphi 0, %s86
    %s87 = sphi 0, %s84
    %s88 = sphi 0, %s87
    %s104 = sphi 0, %s88
  $region4: #{discriminator_r_forward.7} parent=0 // loop_header_branch
    %11 = sbr.rel (%p9) target = $region8
  $region5: #{discriminator_r_forward.7} parent=0 // loop_body
    %s13 = ssub.s32 %s8, 1
    %s14 = ssub.s32 %s8, 2
    %s21 = sadd.s32 1, %s16
    %p22 = scmp.ge.s32.totalorder %s21, 1
    %s23 = scalar_select %p22, 0, %s21
    %s24 = sadd.s32 1, %s15
    %s25 = scalar_select %p22, %s24, %s15
    %p26 = scmp.ge.s32.totalorder %s25, 2
    %s27 = scalar_select %p26, 0, %s25
    %s28 = ssub.s32 %s16, %s23
    %p29 = scmp.eq.s32.totalorder %s28, 0
    %s31 = sadd.s32 %s30, 1
    %s32 = scalar_select %p29, %s30, %s31
    %p35 = pneg %p29
    %p36 = scmp.eq.s32.totalorder %s8, 1
    %p37 = por %p35, %p36
    %p38 = scmp.ne.s32.totalorder %s30, %s33
    %p39 = scmp.eq.s32.totalorder %s8, 0
    %p40 = por %p38, %p39
    %p41 = scmp.ne.s32.totalorder %s30, %s33
    %p42 = scmp.eq.s32.totalorder %s13, 1
    %p43 = por %p41, %p42
    %p44 = scmp.ne.s32.totalorder %s33, %s34
    %p45 = scmp.eq.s32.totalorder %s13, 0
    %p46 = por %p44, %p45
    %p47 = scmp.ne.s32.totalorder %s33, %s34
    %p48 = scmp.eq.s32.totalorder %s14, 1
    %p49 = por %p47, %p48
    %p51 = scmp.ne.s32.totalorder %s34, %s50
    %p52 = scmp.eq.s32.totalorder %s14, 0
    %p53 = por %p51, %p52
    %s54 = ssub.s32 %s15, %s27
    %p55 = scmp.eq.s32.totalorder %s54, 0
    %s57 = sadd.s32 %s56, 1
    %s58 = scalar_select %p55, %s56, %s57
    %p61 = pneg %p55
    %p62 = scmp.eq.s32.totalorder %s8, 1
    %p63 = por %p61, %p62
    %p64 = scmp.ne.s32.totalorder %s56, %s59
    %p65 = scmp.eq.s32.totalorder %s8, 0
    %p66 = por %p64, %p65
    %p67 = scmp.ne.s32.totalorder %s56, %s59
    %p68 = scmp.eq.s32.totalorder %s13, 1
    %p69 = por %p67, %p68
    %p70 = scmp.ne.s32.totalorder %s59, %s60
    %p71 = scmp.eq.s32.totalorder %s13, 0
    %p72 = por %p70, %p71
    %p73 = scmp.ne.s32.totalorder %s59, %s60
    %p74 = scmp.eq.s32.totalorder %s14, 1
    %p75 = por %p73, %p74
    %p77 = scmp.ne.s32.totalorder %s60, %s76
    %p78 = scmp.eq.s32.totalorder %s14, 0
    %p79 = por %p77, %p78
    %s80 = ssub.s32 %s15, %s27
    %s81 = ssub.s32 %s16, %s23
    %s82 = sor.u32 %s80, %s81
    %p83 = scmp.eq.s32.totalorder %s82, 0
    %s85 = sadd.s32 %s84, 1
    %s86 = scalar_select %p83, %s84, %s85
    %p89 = pneg %p83
    %p90 = scmp.eq.s32.totalorder %s8, 1
    %p91 = por %p89, %p90
    %p92 = scmp.ne.s32.totalorder %s84, %s87
    %p93 = scmp.eq.s32.totalorder %s8, 0
    %p94 = por %p92, %p93
    %p95 = scmp.ne.s32.totalorder %s84, %s87
    %p96 = scmp.eq.s32.totalorder %s13, 1
    %p97 = por %p95, %p96
    %p98 = scmp.ne.s32.totalorder %s87, %s88
    %p99 = scmp.eq.s32.totalorder %s13, 0
    %p100 = por %p98, %p99
    %p101 = scmp.ne.s32.totalorder %s87, %s88
    %p102 = scmp.eq.s32.totalorder %s14, 1
    %p103 = por %p101, %p102
    %p105 = scmp.ne.s32.totalorder %s88, %s104
    %p106 = scmp.eq.s32.totalorder %s14, 0
    %p107 = por %p105, %p106
    %p108 = scmp.le.s32.totalorder 1, %s8
    %p109 = scmp.lt.s32.totalorder %s8, 3
    %p110 = pnand %p108, %p109
    %p111 = pneg %p110
    // Predicated region
    $region9: #{discriminator_r_forward.7} parent=5 // pred_check
      _
    $region10: #{discriminator_r_forward.7} parent=5 // pred_check_branch
      %113 = sbr.rel (%p110) target = $region12
    $region11: #{discriminator_r_forward.7} parent=5 // pred_region
      %s114 = ssub.s32 %s8, 1
      // Predicated region
      $region13: #{discriminator_r_forward.7} parent=11 // pred_check
        %p115 = pneg %p46
      $region14: #{discriminator_r_forward.7} parent=11 // pred_check_branch
        %117 = sbr.rel (%p115) target = $region16
      $region15: #{discriminator_r_forward.7} parent=11 // pred_region
        %s118 = smul.u32 16, %s18
        %p119 = scmp.lt.s32.totalorder %s118, 15
        %s120 = scalar_select %p119, %s118, 15
        %s121 = smul.addr %s120, 8
        %s122 = scalar_lea.vmem %s0, %s121
        %s123 = smul.u32 16, %s18
      $region16: #{discriminator_r_forward.7} parent=11 // pred_fallthru
        _
    $region12: #{discriminator_r_forward.7} parent=5 // pred_fallthru
      _
    %p124 = scmp.lt.s32.totalorder %s8, 2
    // Predicated region
    $region17: #{discriminator_r_forward.7} parent=5 // pred_check
      %p125 = pneg %p124
    $region18: #{discriminator_r_forward.7} parent=5 // pred_check_branch
      %127 = sbr.rel (%p125) target = $region20
    $region19: #{discriminator_r_forward.7} parent=5 // pred_region
      // Predicated region
      $region21: #{discriminator_r_forward.7} parent=19 // pred_check
        %p128 = pneg %p66
      $region22: #{discriminator_r_forward.7} parent=19 // pred_check_branch
        %130 = sbr.rel (%p128) target = $region24
      $region23: #{discriminator_r_forward.7} parent=19 // pred_region
        %p131 = scmp.lt.s32.totalorder %s15, 1
        %s132 = scalar_select %p131, %s15, 1
        %s133 = smul.addr %s132, 4
        %s134 = smul.addr %s133, 8
        %s135 = scalar_lea.vmem %s1, %s134
      $region24: #{discriminator_r_forward.7} parent=19 // pred_fallthru
        _
    $region20: #{discriminator_r_forward.7} parent=5 // pred_fallthru
      _
    %p136 = scmp.le.s32.totalorder 1, %s8
    %p137 = scmp.lt.s32.totalorder %s8, 3
    %p138 = pnand %p136, %p137
    %p139 = pneg %p138
    // Predicated region
    $region25: #{discriminator_r_forward.7} parent=5 // pred_check
      _
    $region26: #{discriminator_r_forward.7} parent=5 // pred_check_branch
      %141 = sbr.rel (%p138) target = $region28
    $region27: #{discriminator_r_forward.7} parent=5 // pred_region
      %s142 = ssub.s32 %s8, 1
      %s143 = smul.u32 16, %s18
      %p144 = scmp.lt.s32.totalorder %s143, 15
      %s145 = scalar_select %p144, %s143, 15
      %s146 = smul.addr %s145, 8
      %s147 = scalar_lea.vmem %s0, %s146
      %p148 = pneg %p46
      %p149 = pneg %p43
      %p150 = scmp.lt.s32.totalorder %s17, 1
      %s151 = scalar_select %p150, %s17, 1
      %s152 = smul.addr %s151, 4
      %s153 = smul.addr %s152, 8
      %s154 = scalar_lea.vmem %s1, %s153
      %p155 = pneg %p72
      %p156 = pneg %p69
      %p157 = pneg %p100
      %p158 = pneg %p97
      %s159 = smul.u32 16, %s18
      %p160 = scmp.lt.s32.totalorder %s17, 1
      %s161 = scalar_select %p160, %s17, 1
      %p162 = scmp.lt.s32.totalorder %s159, 15
      %s163 = scalar_select %p162, %s159, 15
      %s164 = smul.addr %s161, 16
      %s165 = sadd.s32 %s163, %s164
      %s166 = smul.addr %s165, 8
      %s167 = scalar_lea.vmem %s2, %s166
      %s168 = smul.u32 16, %s18
      %p169 = scmp.lt.s32.totalorder %s168, 15
      %s170 = scalar_select %p169, %s168, 15
      %s171 = smul.addr %s170, 8
      %s172 = scalar_lea.vmem %s0, %s171
      %s173 = smul.u32 16, %s18
      %p174 = scmp.lt.s32.totalorder %s17, 1
      %s175 = scalar_select %p174, %s17, 1
      %s176 = smul.addr %s175, 4
      %s177 = smul.addr %s176, 8
      %s178 = scalar_lea.vmem %s1, %s177
      %s179 = smul.u32 16, %s18
      %p180 = scmp.lt.s32.totalorder %s17, 1
      %s181 = scalar_select %p180, %s17, 1
      %p182 = scmp.lt.s32.totalorder %s179, 15
      %s183 = scalar_select %p182, %s179, 15
      %s184 = smul.addr %s181, 16
      %s185 = sadd.s32 %s183, %s184
      %s186 = smul.addr %s185, 8
      %s187 = scalar_lea.vmem %s2, %s186
      %s188 = smul.u32 16, %s18
      %v189 = vld [vmem:[%s172] sm:$0xff]
      %v190 = vld [vmem:[%s172 + $0x8] sm:$0xff]
      %v191 = vld [vmem:[%s172 + $0x10] sm:$0xff]
      %v192 = vld [vmem:[%s172 + $0x18] sm:$0xff]
      %v193 = vld [vmem:[%s172 + $0x20] sm:$0xff]
      %v194 = vld [vmem:[%s172 + $0x28] sm:$0xff]
      %v195 = vld [vmem:[%s172 + $0x30] sm:$0xff]
      %v196 = vld [vmem:[%s172 + $0x38] sm:$0xff]
      %v197 = vld [vmem:[%s172 + $0x40] sm:$0xff]
      %v198 = vld [vmem:[%s172 + $0x48] sm:$0xff]
      %v199 = vld [vmem:[%s172 + $0x50] sm:$0xff]
      %v200 = vld [vmem:[%s172 + $0x58] sm:$0xff]
      %v201 = vld [vmem:[%s172 + $0x60] sm:$0xff]
      %v202 = vld [vmem:[%s172 + $0x68] sm:$0xff]
      %v203 = vld [vmem:[%s172 + $0x70] sm:$0xff]
      %v204 = vld [vmem:[%s172 + $0x78] sm:$0xff]
      %v205 = vld [vmem:[%s172 + $0x80] sm:$0xff]
      %v206 = vld [vmem:[%s172 + $0x88] sm:$0xff]
      %v207 = vld [vmem:[%s172 + $0x90] sm:$0xff]
      %v208 = vld [vmem:[%s172 + $0x98] sm:$0xff]
      %v209 = vld [vmem:[%s172 + $0xa0] sm:$0xff]
      %v210 = vld [vmem:[%s172 + $0xa8] sm:$0xff]
      %v211 = vld [vmem:[%s172 + $0xb0] sm:$0xff]
      %v212 = vld [vmem:[%s172 + $0xb8] sm:$0xff]
      %v213 = vld [vmem:[%s172 + $0xc0] sm:$0xff]
      %v214 = vld [vmem:[%s172 + $0xc8] sm:$0xff]
      %v215 = vld [vmem:[%s172 + $0xd0] sm:$0xff]
      %v216 = vld [vmem:[%s172 + $0xd8] sm:$0xff]
      %v217 = vld [vmem:[%s172 + $0xe0] sm:$0xff]
      %v218 = vld [vmem:[%s172 + $0xe8] sm:$0xff]
      %v219 = vld [vmem:[%s172 + $0xf0] sm:$0xff]
      %v220 = vld [vmem:[%s172 + $0xf8] sm:$0xff]
      %v221 = vld [vmem:[%s178] sm:$0xff]
      %v222 = vld [vmem:[%s178 + $0x8] sm:$0xff]
      %v223 = vld [vmem:[%s178 + $0x10] sm:$0xff]
      %v224 = vld [vmem:[%s178 + $0x18] sm:$0xff]
      %vm225 = vcmask 261120
      %v227 = vsel %vm225, %v189, 0
      %v230 = vsel %vm225, %v190, 0
      %v233 = vsel %vm225, %v191, 0
      %v236 = vsel %vm225, %v192, 0
      %v239 = vsel %vm225, %v193, 0
      %v242 = vsel %vm225, %v194, 0
      %v245 = vsel %vm225, %v195, 0
      %v248 = vsel %vm225, %v196, 0
      %v251 = vsel %vm225, %v197, 0
      %v254 = vsel %vm225, %v198, 0
      %v257 = vsel %vm225, %v199, 0
      %v260 = vsel %vm225, %v200, 0
      %v263 = vsel %vm225, %v201, 0
      %v266 = vsel %vm225, %v202, 0
      %v269 = vsel %vm225, %v203, 0
      %v272 = vsel %vm225, %v204, 0
      %v275 = vsel %vm225, %v205, 0
      %v278 = vsel %vm225, %v206, 0
      %v281 = vsel %vm225, %v207, 0
      %v284 = vsel %vm225, %v208, 0
      %v287 = vsel %vm225, %v209, 0
      %v290 = vsel %vm225, %v210, 0
      %v293 = vsel %vm225, %v211, 0
      %v296 = vsel %vm225, %v212, 0
      %v299 = vsel %vm225, %v213, 0
      %v302 = vsel %vm225, %v214, 0
      %v305 = vsel %vm225, %v215, 0
      %v308 = vsel %vm225, %v216, 0
      %v311 = vsel %vm225, %v217, 0
      %v314 = vsel %vm225, %v218, 0
      %v317 = vsel %vm225, %v219, 0
      %v320 = vsel %vm225, %v220, 0
      %322 = vmatpush.msra.mxu0 0.0
      %323 = vmatpush.msra.mxu0 0.0
      %324 = vmatpush.msra.mxu0 0.0
      %325 = vmatpush.msra.mxu0 0.0
      %326 = vmatpush.msra.mxu0 0.0
      %327 = vmatpush.msra.mxu0 0.0
      %328 = vmatpush.msra.mxu0 0.0
      %329 = vmatpush.msra.mxu0 0.0
      %330 = vmatpush.msra.mxu0 0.0
      %331 = vmatpush.msra.mxu0 0.0
      %332 = vmatpush.msra.mxu0 0.0
      %333 = vmatpush.msra.mxu0 0.0
      %334 = vmatpush.msra.mxu0 %v224
      %335 = vmatpush.msra.mxu0 %v223
      %336 = vmatpush.msra.mxu0 %v222
      %337 = vmatpush.msra.mxu0 %v221
      %338 = vmatmul.f32.gmra.mxu0 %v227
      %v339 = vpop.f32.mrf.mxu0
      %v340 = vadd.f32 0.0, %v339
      %341 = vmatmul.f32.gmra.mxu0 %v230
      %v342 = vpop.f32.mrf.mxu0
      %v343 = vadd.f32 0.0, %v342
      %344 = vmatmul.f32.gmra.mxu0 %v233
      %v345 = vpop.f32.mrf.mxu0
      %v346 = vadd.f32 0.0, %v345
      %347 = vmatmul.f32.gmra.mxu0 %v236
      %v348 = vpop.f32.mrf.mxu0
      %v349 = vadd.f32 0.0, %v348
      %350 = vmatmul.f32.gmra.mxu0 %v239
      %v351 = vpop.f32.mrf.mxu0
      %v352 = vadd.f32 0.0, %v351
      %353 = vmatmul.f32.gmra.mxu0 %v242
      %v354 = vpop.f32.mrf.mxu0
      %v355 = vadd.f32 0.0, %v354
      %356 = vmatmul.f32.gmra.mxu0 %v245
      %v357 = vpop.f32.mrf.mxu0
      %v358 = vadd.f32 0.0, %v357
      %359 = vmatmul.f32.gmra.mxu0 %v248
      %v360 = vpop.f32.mrf.mxu0
      %v361 = vadd.f32 0.0, %v360
      %362 = vmatmul.f32.gmra.mxu0 %v251
      %v363 = vpop.f32.mrf.mxu0
      %v364 = vadd.f32 0.0, %v363
      %365 = vmatmul.f32.gmra.mxu0 %v254
      %v366 = vpop.f32.mrf.mxu0
      %v367 = vadd.f32 0.0, %v366
      %368 = vmatmul.f32.gmra.mxu0 %v257
      %v369 = vpop.f32.mrf.mxu0
      %v370 = vadd.f32 0.0, %v369
      %371 = vmatmul.f32.gmra.mxu0 %v260
      %v372 = vpop.f32.mrf.mxu0
      %v373 = vadd.f32 0.0, %v372
      %374 = vmatmul.f32.gmra.mxu0 %v263
      %v375 = vpop.f32.mrf.mxu0
      %v376 = vadd.f32 0.0, %v375
      %377 = vmatmul.f32.gmra.mxu0 %v266
      %v378 = vpop.f32.mrf.mxu0
      %v379 = vadd.f32 0.0, %v378
      %380 = vmatmul.f32.gmra.mxu0 %v269
      %v381 = vpop.f32.mrf.mxu0
      %v382 = vadd.f32 0.0, %v381
      %383 = vmatmul.f32.gmra.mxu0 %v272
      %v384 = vpop.f32.mrf.mxu0
      %v385 = vadd.f32 0.0, %v384
      %386 = vmatmul.f32.gmra.mxu0 %v275
      %v387 = vpop.f32.mrf.mxu0
      %v388 = vadd.f32 0.0, %v387
      %389 = vmatmul.f32.gmra.mxu0 %v278
      %v390 = vpop.f32.mrf.mxu0
      %v391 = vadd.f32 0.0, %v390
      %392 = vmatmul.f32.gmra.mxu0 %v281
      %v393 = vpop.f32.mrf.mxu0
      %v394 = vadd.f32 0.0, %v393
      %395 = vmatmul.f32.gmra.mxu0 %v284
      %v396 = vpop.f32.mrf.mxu0
      %v397 = vadd.f32 0.0, %v396
      %398 = vmatmul.f32.gmra.mxu0 %v287
      %v399 = vpop.f32.mrf.mxu0
      %v400 = vadd.f32 0.0, %v399
      %401 = vmatmul.f32.gmra.mxu0 %v290
      %v402 = vpop.f32.mrf.mxu0
      %v403 = vadd.f32 0.0, %v402
      %404 = vmatmul.f32.gmra.mxu0 %v293
      %v405 = vpop.f32.mrf.mxu0
      %v406 = vadd.f32 0.0, %v405
      %407 = vmatmul.f32.gmra.mxu0 %v296
      %v408 = vpop.f32.mrf.mxu0
      %v409 = vadd.f32 0.0, %v408
      %410 = vmatmul.f32.gmra.mxu0 %v299
      %v411 = vpop.f32.mrf.mxu0
      %v412 = vadd.f32 0.0, %v411
      %413 = vmatmul.f32.gmra.mxu0 %v302
      %v414 = vpop.f32.mrf.mxu0
      %v415 = vadd.f32 0.0, %v414
      %416 = vmatmul.f32.gmra.mxu0 %v305
      %v417 = vpop.f32.mrf.mxu0
      %v418 = vadd.f32 0.0, %v417
      %419 = vmatmul.f32.gmra.mxu0 %v308
      %v420 = vpop.f32.mrf.mxu0
      %v421 = vadd.f32 0.0, %v420
      %422 = vmatmul.f32.gmra.mxu0 %v311
      %v423 = vpop.f32.mrf.mxu0
      %v424 = vadd.f32 0.0, %v423
      %425 = vmatmul.f32.gmra.mxu0 %v314
      %v426 = vpop.f32.mrf.mxu0
      %v427 = vadd.f32 0.0, %v426
      %428 = vmatmul.f32.gmra.mxu0 %v317
      %v429 = vpop.f32.mrf.mxu0
      %v430 = vadd.f32 0.0, %v429
      %431 = vmatmul.f32.gmra.mxu0 %v320
      %v432 = vpop.f32.mrf.mxu0
      %v433 = vadd.f32 0.0, %v432
      %434 = vdwg.mxu0
      %v435 = vmul.f32 %v340, %v340
      %v436 = vmul.f32 %v343, %v343
      %v437 = vmul.f32 %v346, %v346
      %v438 = vmul.f32 %v349, %v349
      %v439 = vmul.f32 %v352, %v352
      %v440 = vmul.f32 %v355, %v355
      %v441 = vmul.f32 %v358, %v358
      %v442 = vmul.f32 %v361, %v361
      %v443 = vmul.f32 %v364, %v364
      %v444 = vmul.f32 %v367, %v367
      %v445 = vmul.f32 %v370, %v370
      %v446 = vmul.f32 %v373, %v373
      %v447 = vmul.f32 %v376, %v376
      %v448 = vmul.f32 %v379, %v379
      %v449 = vmul.f32 %v382, %v382
      %v450 = vmul.f32 %v385, %v385
      %v451 = vmul.f32 %v388, %v388
      %v452 = vmul.f32 %v391, %v391
      %v453 = vmul.f32 %v394, %v394
      %v454 = vmul.f32 %v397, %v397
      %v455 = vmul.f32 %v400, %v400
      %v456 = vmul.f32 %v403, %v403
      %v457 = vmul.f32 %v406, %v406
      %v458 = vmul.f32 %v409, %v409
      %v459 = vmul.f32 %v412, %v412
      %v460 = vmul.f32 %v415, %v415
      %v461 = vmul.f32 %v418, %v418
      %v462 = vmul.f32 %v421, %v421
      %v463 = vmul.f32 %v424, %v424
      %v464 = vmul.f32 %v427, %v427
      %v465 = vmul.f32 %v430, %v430
      %v466 = vmul.f32 %v433, %v433
      %v467 = vadd.f32 %v435, %v451
      %v468 = vadd.f32 %v436, %v452
      %v469 = vadd.f32 %v437, %v453
      %v470 = vadd.f32 %v438, %v454
      %v471 = vadd.f32 %v439, %v455
      %v472 = vadd.f32 %v440, %v456
      %v473 = vadd.f32 %v441, %v457
      %v474 = vadd.f32 %v442, %v458
      %v475 = vadd.f32 %v443, %v459
      %v476 = vadd.f32 %v444, %v460
      %v477 = vadd.f32 %v445, %v461
      %v478 = vadd.f32 %v446, %v462
      %v479 = vadd.f32 %v447, %v463
      %v480 = vadd.f32 %v448, %v464
      %v481 = vadd.f32 %v449, %v465
      %v482 = vadd.f32 %v450, %v466
      %v483 = vrsqrt.pop %v467
      %v484 = vmul.f32 %v483, %v467
      %v485 = vmul.f32 %v484, %v483
      %v486 = vmul.f32 0.5, %v485
      %v487 = vsub.f32 1.5, %v486
      %v488 = vmul.f32 %v483, %v487
      %v489 = vmul.f32 %v467, %v488
      %vm490 = vcmp.eq.f32.partialorder %v467, inf
      %v491 = vsel %vm490, %v467, %v489
      %vm492 = vcmp.eq.f32.partialorder %v467, 0.0
      %v493 = vand.u32 %v467, 2147483648
      %v494 = vsel %vm492, %v493, %v491
      %v495 = vrsqrt.pop %v468
      %v496 = vmul.f32 %v495, %v468
      %v497 = vmul.f32 %v496, %v495
      %v498 = vmul.f32 0.5, %v497
      %v499 = vsub.f32 1.5, %v498
      %v500 = vmul.f32 %v495, %v499
      %v501 = vmul.f32 %v468, %v500
      %vm502 = vcmp.eq.f32.partialorder %v468, inf
      %v503 = vsel %vm502, %v468, %v501
      %vm504 = vcmp.eq.f32.partialorder %v468, 0.0
      %v505 = vand.u32 %v468, 2147483648
      %v506 = vsel %vm504, %v505, %v503
      %v507 = vrsqrt.pop %v469
      %v508 = vmul.f32 %v507, %v469
      %v509 = vmul.f32 %v508, %v507
      %v510 = vmul.f32 0.5, %v509
      %v511 = vsub.f32 1.5, %v510
      %v512 = vmul.f32 %v507, %v511
      %v513 = vmul.f32 %v469, %v512
      %vm514 = vcmp.eq.f32.partialorder %v469, inf
      %v515 = vsel %vm514, %v469, %v513
      %vm516 = vcmp.eq.f32.partialorder %v469, 0.0
      %v517 = vand.u32 %v469, 2147483648
      %v518 = vsel %vm516, %v517, %v515
      %v519 = vrsqrt.pop %v470
      %v520 = vmul.f32 %v519, %v470
      %v521 = vmul.f32 %v520, %v519
      %v522 = vmul.f32 0.5, %v521
      %v523 = vsub.f32 1.5, %v522
      %v524 = vmul.f32 %v519, %v523
      %v525 = vmul.f32 %v470, %v524
      %vm526 = vcmp.eq.f32.partialorder %v470, inf
      %v527 = vsel %vm526, %v470, %v525
      %vm528 = vcmp.eq.f32.partialorder %v470, 0.0
      %v529 = vand.u32 %v470, 2147483648
      %v530 = vsel %vm528, %v529, %v527
      %v531 = vrsqrt.pop %v471
      %v532 = vmul.f32 %v531, %v471
      %v533 = vmul.f32 %v532, %v531
      %v534 = vmul.f32 0.5, %v533
      %v535 = vsub.f32 1.5, %v534
      %v536 = vmul.f32 %v531, %v535
      %v537 = vmul.f32 %v471, %v536
      %vm538 = vcmp.eq.f32.partialorder %v471, inf
      %v539 = vsel %vm538, %v471, %v537
      %vm540 = vcmp.eq.f32.partialorder %v471, 0.0
      %v541 = vand.u32 %v471, 2147483648
      %v542 = vsel %vm540, %v541, %v539
      %v543 = vrsqrt.pop %v472
      %v544 = vmul.f32 %v543, %v472
      %v545 = vmul.f32 %v544, %v543
      %v546 = vmul.f32 0.5, %v545
      %v547 = vsub.f32 1.5, %v546
      %v548 = vmul.f32 %v543, %v547
      %v549 = vmul.f32 %v472, %v548
      %vm550 = vcmp.eq.f32.partialorder %v472, inf
      %v551 = vsel %vm550, %v472, %v549
      %vm552 = vcmp.eq.f32.partialorder %v472, 0.0
      %v553 = vand.u32 %v472, 2147483648
      %v554 = vsel %vm552, %v553, %v551
      %v555 = vrsqrt.pop %v473
      %v556 = vmul.f32 %v555, %v473
      %v557 = vmul.f32 %v556, %v555
      %v558 = vmul.f32 0.5, %v557
      %v559 = vsub.f32 1.5, %v558
      %v560 = vmul.f32 %v555, %v559
      %v561 = vmul.f32 %v473, %v560
      %vm562 = vcmp.eq.f32.partialorder %v473, inf
      %v563 = vsel %vm562, %v473, %v561
      %vm564 = vcmp.eq.f32.partialorder %v473, 0.0
      %v565 = vand.u32 %v473, 2147483648
      %v566 = vsel %vm564, %v565, %v563
      %v567 = vrsqrt.pop %v474
      %v568 = vmul.f32 %v567, %v474
      %v569 = vmul.f32 %v568, %v567
      %v570 = vmul.f32 0.5, %v569
      %v571 = vsub.f32 1.5, %v570
      %v572 = vmul.f32 %v567, %v571
      %v573 = vmul.f32 %v474, %v572
      %vm574 = vcmp.eq.f32.partialorder %v474, inf
      %v575 = vsel %vm574, %v474, %v573
      %vm576 = vcmp.eq.f32.partialorder %v474, 0.0
      %v577 = vand.u32 %v474, 2147483648
      %v578 = vsel %vm576, %v577, %v575
      %v579 = vrsqrt.pop %v475
      %v580 = vmul.f32 %v579, %v475
      %v581 = vmul.f32 %v580, %v579
      %v582 = vmul.f32 0.5, %v581
      %v583 = vsub.f32 1.5, %v582
      %v584 = vmul.f32 %v579, %v583
      %v585 = vmul.f32 %v475, %v584
      %vm586 = vcmp.eq.f32.partialorder %v475, inf
      %v587 = vsel %vm586, %v475, %v585
      %vm588 = vcmp.eq.f32.partialorder %v475, 0.0
      %v589 = vand.u32 %v475, 2147483648
      %v590 = vsel %vm588, %v589, %v587
      %v591 = vrsqrt.pop %v476
      %v592 = vmul.f32 %v591, %v476
      %v593 = vmul.f32 %v592, %v591
      %v594 = vmul.f32 0.5, %v593
      %v595 = vsub.f32 1.5, %v594
      %v596 = vmul.f32 %v591, %v595
      %v597 = vmul.f32 %v476, %v596
      %vm598 = vcmp.eq.f32.partialorder %v476, inf
      %v599 = vsel %vm598, %v476, %v597
      %vm600 = vcmp.eq.f32.partialorder %v476, 0.0
      %v601 = vand.u32 %v476, 2147483648
      %v602 = vsel %vm600, %v601, %v599
      %v603 = vrsqrt.pop %v477
      %v604 = vmul.f32 %v603, %v477
      %v605 = vmul.f32 %v604, %v603
      %v606 = vmul.f32 0.5, %v605
      %v607 = vsub.f32 1.5, %v606
      %v608 = vmul.f32 %v603, %v607
      %v609 = vmul.f32 %v477, %v608
      %vm610 = vcmp.eq.f32.partialorder %v477, inf
      %v611 = vsel %vm610, %v477, %v609
      %vm612 = vcmp.eq.f32.partialorder %v477, 0.0
      %v613 = vand.u32 %v477, 2147483648
      %v614 = vsel %vm612, %v613, %v611
      %v615 = vrsqrt.pop %v478
      %v616 = vmul.f32 %v615, %v478
      %v617 = vmul.f32 %v616, %v615
      %v618 = vmul.f32 0.5, %v617
      %v619 = vsub.f32 1.5, %v618
      %v620 = vmul.f32 %v615, %v619
      %v621 = vmul.f32 %v478, %v620
      %vm622 = vcmp.eq.f32.partialorder %v478, inf
      %v623 = vsel %vm622, %v478, %v621
      %vm624 = vcmp.eq.f32.partialorder %v478, 0.0
      %v625 = vand.u32 %v478, 2147483648
      %v626 = vsel %vm624, %v625, %v623
      %v627 = vrsqrt.pop %v479
      %v628 = vmul.f32 %v627, %v479
      %v629 = vmul.f32 %v628, %v627
      %v630 = vmul.f32 0.5, %v629
      %v631 = vsub.f32 1.5, %v630
      %v632 = vmul.f32 %v627, %v631
      %v633 = vmul.f32 %v479, %v632
      %vm634 = vcmp.eq.f32.partialorder %v479, inf
      %v635 = vsel %vm634, %v479, %v633
      %vm636 = vcmp.eq.f32.partialorder %v479, 0.0
      %v637 = vand.u32 %v479, 2147483648
      %v638 = vsel %vm636, %v637, %v635
      %v639 = vrsqrt.pop %v480
      %v640 = vmul.f32 %v639, %v480
      %v641 = vmul.f32 %v640, %v639
      %v642 = vmul.f32 0.5, %v641
      %v643 = vsub.f32 1.5, %v642
      %v644 = vmul.f32 %v639, %v643
      %v645 = vmul.f32 %v480, %v644
      %vm646 = vcmp.eq.f32.partialorder %v480, inf
      %v647 = vsel %vm646, %v480, %v645
      %vm648 = vcmp.eq.f32.partialorder %v480, 0.0
      %v649 = vand.u32 %v480, 2147483648
      %v650 = vsel %vm648, %v649, %v647
      %v651 = vrsqrt.pop %v481
      %v652 = vmul.f32 %v651, %v481
      %v653 = vmul.f32 %v652, %v651
      %v654 = vmul.f32 0.5, %v653
      %v655 = vsub.f32 1.5, %v654
      %v656 = vmul.f32 %v651, %v655
      %v657 = vmul.f32 %v481, %v656
      %vm658 = vcmp.eq.f32.partialorder %v481, inf
      %v659 = vsel %vm658, %v481, %v657
      %vm660 = vcmp.eq.f32.partialorder %v481, 0.0
      %v661 = vand.u32 %v481, 2147483648
      %v662 = vsel %vm660, %v661, %v659
      %v663 = vrsqrt.pop %v482
      %v664 = vmul.f32 %v663, %v482
      %v665 = vmul.f32 %v664, %v663
      %v666 = vmul.f32 0.5, %v665
      %v667 = vsub.f32 1.5, %v666
      %v668 = vmul.f32 %v663, %v667
      %v669 = vmul.f32 %v482, %v668
      %vm670 = vcmp.eq.f32.partialorder %v482, inf
      %v671 = vsel %vm670, %v482, %v669
      %vm672 = vcmp.eq.f32.partialorder %v482, 0.0
      %v673 = vand.u32 %v482, 2147483648
      %v674 = vsel %vm672, %v673, %v671
      %vm675 = vcmask 64512
      %676 = vst.msk [vmem:[%s187] sm:$0xff] %vm675, %v494
      %677 = vst.msk [vmem:[%s187 + $0x8] sm:$0xff] %vm675, %v506
      %678 = vst.msk [vmem:[%s187 + $0x10] sm:$0xff] %vm675, %v518
      %679 = vst.msk [vmem:[%s187 + $0x18] sm:$0xff] %vm675, %v530
      %680 = vst.msk [vmem:[%s187 + $0x20] sm:$0xff] %vm675, %v542
      %681 = vst.msk [vmem:[%s187 + $0x28] sm:$0xff] %vm675, %v554
      %682 = vst.msk [vmem:[%s187 + $0x30] sm:$0xff] %vm675, %v566
      %683 = vst.msk [vmem:[%s187 + $0x38] sm:$0xff] %vm675, %v578
      %684 = vst.msk [vmem:[%s187 + $0x40] sm:$0xff] %vm675, %v590
      %685 = vst.msk [vmem:[%s187 + $0x48] sm:$0xff] %vm675, %v602
      %686 = vst.msk [vmem:[%s187 + $0x50] sm:$0xff] %vm675, %v614
      %687 = vst.msk [vmem:[%s187 + $0x58] sm:$0xff] %vm675, %v626
      %688 = vst.msk [vmem:[%s187 + $0x60] sm:$0xff] %vm675, %v638
      %689 = vst.msk [vmem:[%s187 + $0x68] sm:$0xff] %vm675, %v650
      %690 = vst.msk [vmem:[%s187 + $0x70] sm:$0xff] %vm675, %v662
      %691 = vst.msk [vmem:[%s187 + $0x78] sm:$0xff] %vm675, %v674
      %s692 = smul.u32 16, %s18
      %p693 = scmp.lt.s32.totalorder %s17, 1
      %s694 = scalar_select %p693, %s17, 1
      %p695 = scmp.lt.s32.totalorder %s692, 15
      %s696 = scalar_select %p695, %s692, 15
      %s697 = smul.addr %s694, 16
      %s698 = sadd.s32 %s696, %s697
      %s699 = smul.addr %s698, 8
      %s700 = scalar_lea.vmem %s2, %s699
      // Predicated region
      $region29: #{discriminator_r_forward.7} parent=27 // pred_check
        %p701 = pneg %p97
      $region30: #{discriminator_r_forward.7} parent=27 // pred_check_branch
        %703 = sbr.rel (%p701) target = $region32
      $region31: #{discriminator_r_forward.7} parent=27 // pred_region
        %s704 = smul.u32 16, %s18
      $region32: #{discriminator_r_forward.7} parent=27 // pred_fallthru
        _
    $region28: #{discriminator_r_forward.7} parent=5 // pred_fallthru
      _
    %p705 = scmp.le.s32.totalorder 2, %s8
    // Predicated region
    $region33: #{discriminator_r_forward.7} parent=5 // pred_check
      %p706 = pneg %p705
    $region34: #{discriminator_r_forward.7} parent=5 // pred_check_branch
      %708 = sbr.rel (%p706) target = $region36
    $region35: #{discriminator_r_forward.7} parent=5 // pred_region
      %s709 = ssub.s32 %s8, 2
      // Predicated region
      $region37: #{discriminator_r_forward.7} parent=35 // pred_check
        %p710 = pneg %p103
      $region38: #{discriminator_r_forward.7} parent=35 // pred_check_branch
        %712 = sbr.rel (%p710) target = $region40
      $region39: #{discriminator_r_forward.7} parent=35 // pred_region
        %s713 = smul.u32 16, %s20
        %p714 = scmp.lt.s32.totalorder %s19, 1
        %s715 = scalar_select %p714, %s19, 1
        %p716 = scmp.lt.s32.totalorder %s713, 15
        %s717 = scalar_select %p716, %s713, 15
        %s718 = smul.addr %s715, 16
        %s719 = sadd.s32 %s717, %s718
        %s720 = smul.addr %s719, 8
        %s721 = scalar_lea.vmem %s2, %s720
      $region40: #{discriminator_r_forward.7} parent=35 // pred_fallthru
        _
    $region36: #{discriminator_r_forward.7} parent=5 // pred_fallthru
      _
  $region6: #{discriminator_r_forward.7} parent=0 // loop_footer
    %s12 = sadd.s32 1, %s8
  $region7: #{discriminator_r_forward.7} parent=0 // loop_footer_branch
    %7 = sbr.rel target = $region3
  $region8: #{discriminator_r_forward.7} parent=0 // loop_exit
    _

// kernel: tile.34
$region0: #{tile.34}
  %s0 = inlined_call_operand.vmem [shape: f32[4,32], index: 0, kind: input, shape index: {}]
  %s1 = inlined_call_operand.vmem [shape: f32[1,128], index: 1, kind: output, shape index: {}]
  $region1: #{tile.34} parent=0
    #allocation0 [shape = 'u8[4096]{0}', space=vmem, size = 0x1000, scoped, tag = 'scoped mem for output reshape']
    #allocation1 [shape = 'u8[4096]{0}', space=vmem, size = 0x1000, scoped, tag = 'scoped mem for input reshape']
    %s3 = ssub.s32 16, 1
    %v4 = vld [vmem:[%s0] sm:%s3]
    %5 = vst [vmem:[#allocation1] sm:%s3] %v4
    %v6 = vld [vmem:[#allocation1] sm:$0x1]
    %vm7 = vcmask 261120
    %8 = vst.msk [vmem:[#allocation0] sm:$0x1] %vm7, %v6
    %s9 = scalar_lea.vmem [#allocation1], 3
    %v10 = vld [vmem:[%s9] sm:$0x1]
    %11 = vrot.lane.b32.xlu0 %v10, 96
    %v12 = vpop.permute.xlu0 %11
    %vm13 = vcmask 1048320
    %14 = vst.msk [vmem:[#allocation0] sm:$0x1] %vm13, %v12
    %s15 = scalar_lea.vmem [#allocation1], 2
    %v16 = vld [vmem:[%s15] sm:$0x1]
    %17 = vrot.lane.b32.xlu0 %v16, 64
    %v18 = vpop.permute.xlu0 %17
    %vm19 = vcmask 785920
    %20 = vst.msk [vmem:[#allocation0] sm:$0x1] %vm19, %v18
    %s21 = scalar_lea.vmem [#allocation1], 1
    %v22 = vld [vmem:[%s21] sm:$0x1]
    %23 = vrot.lane.b32.xlu0 %v22, 32
    %v24 = vpop.permute.xlu0 %23
    %vm25 = vcmask 523520
    %26 = vst.msk [vmem:[#allocation0] sm:$0x1] %vm25, %v24
    %s28 = ssub.s32 2, 1
    %v29 = vld [vmem:[#allocation0] sm:%s28]
    %s31 = ssub.s32 2, 1
    %32 = vst [vmem:[%s1] sm:%s31] %v29

// kernel: discriminator_r_forward.8
$region0: #{discriminator_r_forward.8}
  #allocation0 [shape = 'u32[]', space=smem, size = 0x4, offset = 0x4, fixed_abs, tag = 'smem constant byte address 0x4 - core index']
  #allocation1 [shape = 'u32[72,128]{1,0:T(1,128)}', space=vmem, size = 0x9000, scoped, tag = 'internal scratch']
  #allocation2 [shape = 'f32[192,36]{1,0:T(8,128)}', space=vmem, size = 0x18000, scoped, tag = 'scratch operand']
  %s0 = inlined_call_operand.vmem [shape: f32[2,1,26,10,4], index: 0, kind: input, shape index: {}]
  %s1 = inlined_call_operand.vmem [shape: f32[36,128], index: 1, kind: input, shape index: {}]
  %s2 = inlined_call_operand.vmem [shape: f32[1,128], index: 2, kind: input, shape index: {}]
  %s3 = inlined_call_operand.vmem [shape: f32[2,1,24,8,128], index: 3, kind: output, shape index: {}]
  %s4 = sld [smem:[#allocation0]]
  $region45: #{discriminator_r_forward.8} parent=0
    _
  %s6 = ssub.s32 1, %s4
  %s7 = scalar_select 0, %s6, %s4
  loop: start=0, step=1, limit=4
  $region2: #{discriminator_r_forward.8} parent=0 // loop_pre_header
    _
  $region3: #{discriminator_r_forward.8} parent=0 // loop_header
    %s9 = sphi 0, %s13
    %p10 = scmp.ge.s32.totalorder %s9, 4
    %s16 = sphi 0, %s28
    %s17 = sphi 0, %s24
    %s18 = sphi 0, %s16
    %s19 = sphi 0, %s17
    %s20 = sphi 0, %s18
    %s21 = sphi 0, %s19
    %s33 = sphi 0, %s35
    %s36 = sphi 0, %s33
    %s37 = sphi 0, %s36
    %s53 = sphi 0, %s37
    %s57 = sphi 0, %s57
    %s59 = sphi 0, %s57
    %s60 = sphi 0, %s59
    %s74 = sphi 0, %s60
    %s78 = sphi 0, %s78
    %s80 = sphi 0, %s78
    %s81 = sphi 0, %s80
    %s95 = sphi 0, %s81
    %s103 = sphi 0, %s105
    %s106 = sphi 0, %s103
    %s107 = sphi 0, %s106
    %s123 = sphi 0, %s107
  $region4: #{discriminator_r_forward.8} parent=0 // loop_header_branch
    %12 = sbr.rel (%p10) target = $region8
  $region5: #{discriminator_r_forward.8} parent=0 // loop_body
    %s14 = ssub.s32 %s9, 1
    %s15 = ssub.s32 %s9, 2
    %s22 = sadd.s32 1, %s17
    %p23 = scmp.ge.s32.totalorder %s22, 1
    %s24 = scalar_select %p23, 0, %s22
    %s25 = sadd.s32 1, %s16
    %s26 = scalar_select %p23, %s25, %s16
    %p27 = scmp.ge.s32.totalorder %s26, 2
    %s28 = scalar_select %p27, 0, %s26
    %s29 = ssub.s32 %s16, %s28
    %s30 = ssub.s32 %s17, %s24
    %s31 = sor.u32 %s29, %s30
    %p32 = scmp.eq.s32.totalorder %s31, 0
    %s34 = sadd.s32 %s33, 1
    %s35 = scalar_select %p32, %s33, %s34
    %p38 = pneg %p32
    %p39 = scmp.eq.s32.totalorder %s9, 1
    %p40 = por %p38, %p39
    %p41 = scmp.ne.s32.totalorder %s33, %s36
    %p42 = scmp.eq.s32.totalorder %s9, 0
    %p43 = por %p41, %p42
    %p44 = scmp.ne.s32.totalorder %s33, %s36
    %p45 = scmp.eq.s32.totalorder %s14, 1
    %p46 = por %p44, %p45
    %p47 = scmp.ne.s32.totalorder %s36, %s37
    %p48 = scmp.eq.s32.totalorder %s14, 0
    %p49 = por %p47, %p48
    %p50 = scmp.ne.s32.totalorder %s36, %s37
    %p51 = scmp.eq.s32.totalorder %s15, 1
    %p52 = por %p50, %p51
    %p54 = scmp.ne.s32.totalorder %s37, %s53
    %p55 = scmp.eq.s32.totalorder %s15, 0
    %p56 = por %p54, %p55
    %s58 = sadd.s32 %s57, 1
    %p61 = scmp.eq.s32.totalorder %s9, 1
    %p62 = scmp.ne.s32.totalorder %s57, %s59
    %p63 = scmp.eq.s32.totalorder %s9, 0
    %p64 = por %p62, %p63
    %p65 = scmp.ne.s32.totalorder %s57, %s59
    %p66 = scmp.eq.s32.totalorder %s14, 1
    %p67 = por %p65, %p66
    %p68 = scmp.ne.s32.totalorder %s59, %s60
    %p69 = scmp.eq.s32.totalorder %s14, 0
    %p70 = por %p68, %p69
    %p71 = scmp.ne.s32.totalorder %s59, %s60
    %p72 = scmp.eq.s32.totalorder %s15, 1
    %p73 = por %p71, %p72
    %p75 = scmp.ne.s32.totalorder %s60, %s74
    %p76 = scmp.eq.s32.totalorder %s15, 0
    %p77 = por %p75, %p76
    %s79 = sadd.s32 %s78, 1
    %p82 = scmp.eq.s32.totalorder %s9, 1
    %p83 = scmp.ne.s32.totalorder %s78, %s80
    %p84 = scmp.eq.s32.totalorder %s9, 0
    %p85 = por %p83, %p84
    %p86 = scmp.ne.s32.totalorder %s78, %s80
    %p87 = scmp.eq.s32.totalorder %s14, 1
    %p88 = por %p86, %p87
    %p89 = scmp.ne.s32.totalorder %s80, %s81
    %p90 = scmp.eq.s32.totalorder %s14, 0
    %p91 = por %p89, %p90
    %p92 = scmp.ne.s32.totalorder %s80, %s81
    %p93 = scmp.eq.s32.totalorder %s15, 1
    %p94 = por %p92, %p93
    %p96 = scmp.ne.s32.totalorder %s81, %s95
    %p97 = scmp.eq.s32.totalorder %s15, 0
    %p98 = por %p96, %p97
    %s99 = ssub.s32 %s16, %s28
    %s100 = ssub.s32 %s17, %s24
    %s101 = sor.u32 %s99, %s100
    %p102 = scmp.eq.s32.totalorder %s101, 0
    %s104 = sadd.s32 %s103, 1
    %s105 = scalar_select %p102, %s103, %s104
    %p108 = pneg %p102
    %p109 = scmp.eq.s32.totalorder %s9, 1
    %p110 = por %p108, %p109
    %p111 = scmp.ne.s32.totalorder %s103, %s106
    %p112 = scmp.eq.s32.totalorder %s9, 0
    %p113 = por %p111, %p112
    %p114 = scmp.ne.s32.totalorder %s103, %s106
    %p115 = scmp.eq.s32.totalorder %s14, 1
    %p116 = por %p114, %p115
    %p117 = scmp.ne.s32.totalorder %s106, %s107
    %p118 = scmp.eq.s32.totalorder %s14, 0
    %p119 = por %p117, %p118
    %p120 = scmp.ne.s32.totalorder %s106, %s107
    %p121 = scmp.eq.s32.totalorder %s15, 1
    %p122 = por %p120, %p121
    %p124 = scmp.ne.s32.totalorder %s107, %s123
    %p125 = scmp.eq.s32.totalorder %s15, 0
    %p126 = por %p124, %p125
    %p127 = scmp.le.s32.totalorder 1, %s9
    %p128 = scmp.lt.s32.totalorder %s9, 3
    %p129 = pnand %p127, %p128
    %p130 = pneg %p129
    // Predicated region
    $region9: #{discriminator_r_forward.8} parent=5 // pred_check
      _
    $region10: #{discriminator_r_forward.8} parent=5 // pred_check_branch
      %132 = sbr.rel (%p129) target = $region12
    $region11: #{discriminator_r_forward.8} parent=5 // pred_region
      %s133 = ssub.s32 %s9, 1
      // Predicated region
      $region13: #{discriminator_r_forward.8} parent=11 // pred_check
        %p134 = pneg %p70
      $region14: #{discriminator_r_forward.8} parent=11 // pred_check_branch
        %136 = sbr.rel (%p134) target = $region16
      $region15: #{discriminator_r_forward.8} parent=11 // pred_region
        _
      $region16: #{discriminator_r_forward.8} parent=11 // pred_fallthru
        _
      // Predicated region
      $region17: #{discriminator_r_forward.8} parent=11 // pred_check
        %p137 = pneg %p91
      $region18: #{discriminator_r_forward.8} parent=11 // pred_check_branch
        %139 = sbr.rel (%p137) target = $region20
      $region19: #{discriminator_r_forward.8} parent=11 // pred_region
        _
      $region20: #{discriminator_r_forward.8} parent=11 // pred_fallthru
        _
    $region12: #{discriminator_r_forward.8} parent=5 // pred_fallthru
      _
    %p140 = scmp.lt.s32.totalorder %s9, 2
    // Predicated region
    $region21: #{discriminator_r_forward.8} parent=5 // pred_check
      %p141 = pneg %p140
    $region22: #{discriminator_r_forward.8} parent=5 // pred_check_branch
      %143 = sbr.rel (%p141) target = $region24
    $region23: #{discriminator_r_forward.8} parent=5 // pred_region
      // Predicated region
      $region25: #{discriminator_r_forward.8} parent=23 // pred_check
        %p144 = pneg %p43
      $region26: #{discriminator_r_forward.8} parent=23 // pred_check_branch
        %146 = sbr.rel (%p144) target = $region28
      $region27: #{discriminator_r_forward.8} parent=23 // pred_region
        %p147 = scmp.lt.s32.totalorder %s16, 1
        %s148 = scalar_select %p147, %s16, 1
        %p149 = scmp.lt.s32.totalorder %s17, 0
        %s150 = scalar_select %p149, %s17, 0
        %s151 = smul.addr %s150, 52
        %s152 = smul.addr %s148, 52
        %s153 = sadd.s32 %s151, %s152
        %s154 = smul.addr %s153, 8
        %s155 = scalar_lea.vmem %s0, %s154
      $region28: #{discriminator_r_forward.8} parent=23 // pred_fallthru
        _
    $region24: #{discriminator_r_forward.8} parent=5 // pred_fallthru
      _
    %p156 = scmp.le.s32.totalorder 1, %s9
    %p157 = scmp.lt.s32.totalorder %s9, 3
    %p158 = pnand %p156, %p157
    %p159 = pneg %p158
    // Predicated region
    $region29: #{discriminator_r_forward.8} parent=5 // pred_check
      _
    $region30: #{discriminator_r_forward.8} parent=5 // pred_check_branch
      %161 = sbr.rel (%p158) target = $region32
    $region31: #{discriminator_r_forward.8} parent=5 // pred_region
      %s162 = ssub.s32 %s9, 1
      %p163 = scmp.lt.s32.totalorder %s18, 1
      %s164 = scalar_select %p163, %s18, 1
      %p165 = scmp.lt.s32.totalorder %s19, 0
      %s166 = scalar_select %p165, %s19, 0
      %s167 = smul.addr %s166, 52
      %s168 = smul.addr %s164, 52
      %s169 = sadd.s32 %s167, %s168
      %s170 = smul.addr %s169, 8
      %s171 = scalar_lea.vmem %s0, %s170
      %p172 = pneg %p49
      %p173 = pneg %p46
      %p174 = pneg %p70
      %p175 = pneg %p67
      %p176 = pneg %p91
      %p177 = pneg %p88
      %p178 = pneg %p119
      %p179 = pneg %p116
      %p180 = scmp.lt.s32.totalorder %s18, 1
      %s181 = scalar_select %p180, %s18, 1
      %p182 = scmp.lt.s32.totalorder %s19, 0
      %s183 = scalar_select %p182, %s19, 0
      %s184 = smul.addr %s183, 24
      %s185 = smul.addr %s181, 24
      %s186 = sadd.s32 %s184, %s185
      %s187 = smul.addr %s186, 8
      %s188 = scalar_lea.vmem %s3, %s187
      %p189 = scmp.lt.s32.totalorder %s18, 1
      %s190 = scalar_select %p189, %s18, 1
      %p191 = scmp.lt.s32.totalorder %s19, 0
      %s192 = scalar_select %p191, %s19, 0
      %s193 = smul.addr %s192, 52
      %s194 = smul.addr %s190, 52
      %s195 = sadd.s32 %s193, %s194
      %s196 = smul.addr %s195, 8
      %s197 = scalar_lea.vmem %s0, %s196
      %p198 = scmp.lt.s32.totalorder %s18, 1
      %s199 = scalar_select %p198, %s18, 1
      %p200 = scmp.lt.s32.totalorder %s19, 0
      %s201 = scalar_select %p200, %s19, 0
      %s202 = smul.addr %s201, 24
      %s203 = smul.addr %s199, 24
      %s204 = sadd.s32 %s202, %s203
      %s205 = smul.addr %s204, 8
      %s206 = scalar_lea.vmem %s3, %s205
      %v207 = vld [vmem:[%s197] sm:$0xff]
      %v208 = vld [vmem:[%s197 + $0x10] sm:$0xff]
      %v209 = vld [vmem:[%s197 + $0x20] sm:$0xff]
      %v210 = vld [vmem:[%s197 + $0x30] sm:$0xff]
      %v211 = vld [vmem:[%s197 + $0x40] sm:$0xff]
      %v212 = vld [vmem:[%s197 + $0x50] sm:$0xff]
      %v213 = vld [vmem:[%s197 + $0x60] sm:$0xff]
      %v214 = vld [vmem:[%s197 + $0x70] sm:$0xff]
      %v215 = vld [vmem:[%s197 + $0x80] sm:$0xff]
      %v216 = vld [vmem:[%s197 + $0x90] sm:$0xff]
      %v217 = vld [vmem:[%s197 + $0xa0] sm:$0xff]
      %v218 = vld [vmem:[%s197 + $0xb0] sm:$0xff]
      %v219 = vld [vmem:[%s197 + $0xc0] sm:$0xff]
      %v220 = vld [vmem:[%s197 + $0xd0] sm:$0xff]
      %v221 = vld [vmem:[%s197 + $0xe0] sm:$0xff]
      %v222 = vld [vmem:[%s197 + $0xf0] sm:$0xff]
      %v223 = vld [vmem:[%s197 + $0x100] sm:$0xff]
      %v224 = vld [vmem:[%s197 + $0x110] sm:$0xff]
      %v225 = vld [vmem:[%s197 + $0x120] sm:$0xff]
      %v226 = vld [vmem:[%s197 + $0x130] sm:$0xff]
      %v227 = vld [vmem:[%s197 + $0x140] sm:$0xff]
      %v228 = vld [vmem:[%s197 + $0x150] sm:$0xff]
      %v229 = vld [vmem:[%s197 + $0x160] sm:$0xff]
      %v230 = vld [vmem:[%s197 + $0x170] sm:$0xff]
      %vm231 = vcmask 31744
      %232 = vst.msk [vmem:[#allocation2] sm:$0xff] %vm231, %v207
      %233 = vst.msk [vmem:[#allocation2 + $0x8] sm:$0xff] %vm231, %v208
      %234 = vst.msk [vmem:[#allocation2 + $0x10] sm:$0xff] %vm231, %v209
      %235 = vst.msk [vmem:[#allocation2 + $0x18] sm:$0xff] %vm231, %v210
      %236 = vst.msk [vmem:[#allocation2 + $0x20] sm:$0xff] %vm231, %v211
      %237 = vst.msk [vmem:[#allocation2 + $0x28] sm:$0xff] %vm231, %v212
      %238 = vst.msk [vmem:[#allocation2 + $0x30] sm:$0xff] %vm231, %v213
      %239 = vst.msk [vmem:[#allocation2 + $0x38] sm:$0xff] %vm231, %v214
      %240 = vst.msk [vmem:[#allocation2 + $0x40] sm:$0xff] %vm231, %v215
      %241 = vst.msk [vmem:[#allocation2 + $0x48] sm:$0xff] %vm231, %v216
      %242 = vst.msk [vmem:[#allocation2 + $0x50] sm:$0xff] %vm231, %v217
      %243 = vst.msk [vmem:[#allocation2 + $0x58] sm:$0xff] %vm231, %v218
      %244 = vst.msk [vmem:[#allocation2 + $0x60] sm:$0xff] %vm231, %v219
      %245 = vst.msk [vmem:[#allocation2 + $0x68] sm:$0xff] %vm231, %v220
      %246 = vst.msk [vmem:[#allocation2 + $0x70] sm:$0xff] %vm231, %v221
      %247 = vst.msk [vmem:[#allocation2 + $0x78] sm:$0xff] %vm231, %v222
      %248 = vst.msk [vmem:[#allocation2 + $0x80] sm:$0xff] %vm231, %v223
      %249 = vst.msk [vmem:[#allocation2 + $0x88] sm:$0xff] %vm231, %v224
      %250 = vst.msk [vmem:[#allocation2 + $0x90] sm:$0xff] %vm231, %v225
      %251 = vst.msk [vmem:[#allocation2 + $0x98] sm:$0xff] %vm231, %v226
      %252 = vst.msk [vmem:[#allocation2 + $0xa0] sm:$0xff] %vm231, %v227
      %253 = vst.msk [vmem:[#allocation2 + $0xa8] sm:$0xff] %vm231, %v228
      %254 = vst.msk [vmem:[#allocation2 + $0xb0] sm:$0xff] %vm231, %v229
      %255 = vst.msk [vmem:[#allocation2 + $0xb8] sm:$0xff] %vm231, %v230
      %v256 = vld [vmem:[%s197 + $0x1] sm:$0xff]
      %v257 = vld [vmem:[%s197 + $0x11] sm:$0xff]
      %v258 = vld [vmem:[%s197 + $0x21] sm:$0xff]
      %v259 = vld [vmem:[%s197 + $0x31] sm:$0xff]
      %v260 = vld [vmem:[%s197 + $0x41] sm:$0xff]
      %v261 = vld [vmem:[%s197 + $0x51] sm:$0xff]
      %v262 = vld [vmem:[%s197 + $0x61] sm:$0xff]
      %v263 = vld [vmem:[%s197 + $0x71] sm:$0xff]
      %v264 = vld [vmem:[%s197 + $0x81] sm:$0xff]
      %v265 = vld [vmem:[%s197 + $0x91] sm:$0xff]
      %v266 = vld [vmem:[%s197 + $0xa1] sm:$0xff]
      %v267 = vld [vmem:[%s197 + $0xb1] sm:$0xff]
      %v268 = vld [vmem:[%s197 + $0xc1] sm:$0xff]
      %v269 = vld [vmem:[%s197 + $0xd1] sm:$0xff]
      %v270 = vld [vmem:[%s197 + $0xe1] sm:$0xff]
      %v271 = vld [vmem:[%s197 + $0xf1] sm:$0xff]
      %v272 = vld [vmem:[%s197 + $0x101] sm:$0xff]
      %v273 = vld [vmem:[%s197 + $0x111] sm:$0xff]
      %v274 = vld [vmem:[%s197 + $0x121] sm:$0xff]
      %v275 = vld [vmem:[%s197 + $0x131] sm:$0xff]
      %v276 = vld [vmem:[%s197 + $0x141] sm:$0xff]
      %v277 = vld [vmem:[%s197 + $0x151] sm:$0xff]
      %v278 = vld [vmem:[%s197 + $0x161] sm:$0xff]
      %v279 = vld [vmem:[%s197 + $0x171] sm:$0xff]
      %304 = vrot.lane.b32.xlu0 %v256, 4
      %v305 = vpop.permute.xlu0 %304
      %306 = vrot.lane.b32.xlu0 %v257, 4
      %v307 = vpop.permute.xlu0 %306
      %308 = vrot.lane.b32.xlu0 %v258, 4
      %v309 = vpop.permute.xlu0 %308
      %310 = vrot.lane.b32.xlu0 %v259, 4
      %v311 = vpop.permute.xlu0 %310
      %312 = vrot.lane.b32.xlu0 %v260, 4
      %v313 = vpop.permute.xlu0 %312
      %314 = vrot.lane.b32.xlu0 %v261, 4
      %v315 = vpop.permute.xlu0 %314
      %316 = vrot.lane.b32.xlu0 %v262, 4
      %v317 = vpop.permute.xlu0 %316
      %318 = vrot.lane.b32.xlu0 %v263, 4
      %v319 = vpop.permute.xlu0 %318
      %320 = vrot.lane.b32.xlu0 %v264, 4
      %v321 = vpop.permute.xlu0 %320
      %322 = vrot.lane.b32.xlu0 %v265, 4
      %v323 = vpop.permute.xlu0 %322
      %324 = vrot.lane.b32.xlu0 %v266, 4
      %v325 = vpop.permute.xlu0 %324
      %326 = vrot.lane.b32.xlu0 %v267, 4
      %v327 = vpop.permute.xlu0 %326
      %328 = vrot.lane.b32.xlu0 %v268, 4
      %v329 = vpop.permute.xlu0 %328
      %330 = vrot.lane.b32.xlu0 %v269, 4
      %v331 = vpop.permute.xlu0 %330
      %332 = vrot.lane.b32.xlu0 %v270, 4
      %v333 = vpop.permute.xlu0 %332
      %334 = vrot.lane.b32.xlu0 %v271, 4
      %v335 = vpop.permute.xlu0 %334
      %336 = vrot.lane.b32.xlu0 %v272, 4
      %v337 = vpop.permute.xlu0 %336
      %338 = vrot.lane.b32.xlu0 %v273, 4
      %v339 = vpop.permute.xlu0 %338
      %340 = vrot.lane.b32.xlu0 %v274, 4
      %v341 = vpop.permute.xlu0 %340
      %342 = vrot.lane.b32.xlu0 %v275, 4
      %v343 = vpop.permute.xlu0 %342
      %344 = vrot.lane.b32.xlu0 %v276, 4
      %v345 = vpop.permute.xlu0 %344
      %346 = vrot.lane.b32.xlu0 %v277, 4
      %v347 = vpop.permute.xlu0 %346
      %348 = vrot.lane.b32.xlu0 %v278, 4
      %v349 = vpop.permute.xlu0 %348
      %350 = vrot.lane.b32.xlu0 %v279, 4
      %v351 = vpop.permute.xlu0 %350
      %vm376 = vcmask 64544
      %377 = vst.msk [vmem:[#allocation2] sm:$0xff] %vm376, %v305
      %378 = vst.msk [vmem:[#allocation2 + $0x8] sm:$0xff] %vm376, %v307
      %379 = vst.msk [vmem:[#allocation2 + $0x10] sm:$0xff] %vm376, %v309
      %380 = vst.msk [vmem:[#allocation2 + $0x18] sm:$0xff] %vm376, %v311
      %381 = vst.msk [vmem:[#allocation2 + $0x20] sm:$0xff] %vm376, %v313
      %382 = vst.msk [vmem:[#allocation2 + $0x28] sm:$0xff] %vm376, %v315
      %383 = vst.msk [vmem:[#allocation2 + $0x30] sm:$0xff] %vm376, %v317
      %384 = vst.msk [vmem:[#allocation2 + $0x38] sm:$0xff] %vm376, %v319
      %385 = vst.msk [vmem:[#allocation2 + $0x40] sm:$0xff] %vm376, %v321
      %386 = vst.msk [vmem:[#allocation2 + $0x48] sm:$0xff] %vm376, %v323
      %387 = vst.msk [vmem:[#allocation2 + $0x50] sm:$0xff] %vm376, %v325
      %388 = vst.msk [vmem:[#allocation2 + $0x58] sm:$0xff] %vm376, %v327
      %389 = vst.msk [vmem:[#allocation2 + $0x60] sm:$0xff] %vm376, %v329
      %390 = vst.msk [vmem:[#allocation2 + $0x68] sm:$0xff] %vm376, %v331
      %391 = vst.msk [vmem:[#allocation2 + $0x70] sm:$0xff] %vm376, %v333
      %392 = vst.msk [vmem:[#allocation2 + $0x78] sm:$0xff] %vm376, %v335
      %393 = vst.msk [vmem:[#allocation2 + $0x80] sm:$0xff] %vm376, %v337
      %394 = vst.msk [vmem:[#allocation2 + $0x88] sm:$0xff] %vm376, %v339
      %395 = vst.msk [vmem:[#allocation2 + $0x90] sm:$0xff] %vm376, %v341
      %396 = vst.msk [vmem:[#allocation2 + $0x98] sm:$0xff] %vm376, %v343
      %397 = vst.msk [vmem:[#allocation2 + $0xa0] sm:$0xff] %vm376, %v345
      %398 = vst.msk [vmem:[#allocation2 + $0xa8] sm:$0xff] %vm376, %v347
      %399 = vst.msk [vmem:[#allocation2 + $0xb0] sm:$0xff] %vm376, %v349
      %400 = vst.msk [vmem:[#allocation2 + $0xb8] sm:$0xff] %vm376, %v351
      %v401 = vld [vmem:[%s197 + $0x2] sm:$0xff]
      %v402 = vld [vmem:[%s197 + $0x12] sm:$0xff]
      %v403 = vld [vmem:[%s197 + $0x22] sm:$0xff]
      %v404 = vld [vmem:[%s197 + $0x32] sm:$0xff]
      %v405 = vld [vmem:[%s197 + $0x42] sm:$0xff]
      %v406 = vld [vmem:[%s197 + $0x52] sm:$0xff]
      %v407 = vld [vmem:[%s197 + $0x62] sm:$0xff]
      %v408 = vld [vmem:[%s197 + $0x72] sm:$0xff]
      %v409 = vld [vmem:[%s197 + $0x82] sm:$0xff]
      %v410 = vld [vmem:[%s197 + $0x92] sm:$0xff]
      %v411 = vld [vmem:[%s197 + $0xa2] sm:$0xff]
      %v412 = vld [vmem:[%s197 + $0xb2] sm:$0xff]
      %v413 = vld [vmem:[%s197 + $0xc2] sm:$0xff]
      %v414 = vld [vmem:[%s197 + $0xd2] sm:$0xff]
      %v415 = vld [vmem:[%s197 + $0xe2] sm:$0xff]
      %v416 = vld [vmem:[%s197 + $0xf2] sm:$0xff]
      %v417 = vld [vmem:[%s197 + $0x102] sm:$0xff]
      %v418 = vld [vmem:[%s197 + $0x112] sm:$0xff]
      %v419 = vld [vmem:[%s197 + $0x122] sm:$0xff]
      %v420 = vld [vmem:[%s197 + $0x132] sm:$0xff]
      %v421 = vld [vmem:[%s197 + $0x142] sm:$0xff]
      %v422 = vld [vmem:[%s197 + $0x152] sm:$0xff]
      %v423 = vld [vmem:[%s197 + $0x162] sm:$0xff]
      %v424 = vld [vmem:[%s197 + $0x172] sm:$0xff]
      %449 = vrot.lane.b32.xlu0 %v401, 8
      %v450 = vpop.permute.xlu0 %449
      %451 = vrot.lane.b32.xlu0 %v402, 8
      %v452 = vpop.permute.xlu0 %451
      %453 = vrot.lane.b32.xlu0 %v403, 8
      %v454 = vpop.permute.xlu0 %453
      %455 = vrot.lane.b32.xlu0 %v404, 8
      %v456 = vpop.permute.xlu0 %455
      %457 = vrot.lane.b32.xlu0 %v405, 8
      %v458 = vpop.permute.xlu0 %457
      %459 = vrot.lane.b32.xlu0 %v406, 8
      %v460 = vpop.permute.xlu0 %459
      %461 = vrot.lane.b32.xlu0 %v407, 8
      %v462 = vpop.permute.xlu0 %461
      %463 = vrot.lane.b32.xlu0 %v408, 8
      %v464 = vpop.permute.xlu0 %463
      %465 = vrot.lane.b32.xlu0 %v409, 8
      %v466 = vpop.permute.xlu0 %465
      %467 = vrot.lane.b32.xlu0 %v410, 8
      %v468 = vpop.permute.xlu0 %467
      %469 = vrot.lane.b32.xlu0 %v411, 8
      %v470 = vpop.permute.xlu0 %469
      %471 = vrot.lane.b32.xlu0 %v412, 8
      %v472 = vpop.permute.xlu0 %471
      %473 = vrot.lane.b32.xlu0 %v413, 8
      %v474 = vpop.permute.xlu0 %473
      %475 = vrot.lane.b32.xlu0 %v414, 8
      %v476 = vpop.permute.xlu0 %475
      %477 = vrot.lane.b32.xlu0 %v415, 8
      %v478 = vpop.permute.xlu0 %477
      %479 = vrot.lane.b32.xlu0 %v416, 8
      %v480 = vpop.permute.xlu0 %479
      %481 = vrot.lane.b32.xlu0 %v417, 8
      %v482 = vpop.permute.xlu0 %481
      %483 = vrot.lane.b32.xlu0 %v418, 8
      %v484 = vpop.permute.xlu0 %483
      %485 = vrot.lane.b32.xlu0 %v419, 8
      %v486 = vpop.permute.xlu0 %485
      %487 = vrot.lane.b32.xlu0 %v420, 8
      %v488 = vpop.permute.xlu0 %487
      %489 = vrot.lane.b32.xlu0 %v421, 8
      %v490 = vpop.permute.xlu0 %489
      %491 = vrot.lane.b32.xlu0 %v422, 8
      %v492 = vpop.permute.xlu0 %491
      %493 = vrot.lane.b32.xlu0 %v423, 8
      %v494 = vpop.permute.xlu0 %493
      %495 = vrot.lane.b32.xlu0 %v424, 8
      %v496 = vpop.permute.xlu0 %495
      %vm521 = vcmask 97344
      %522 = vst.msk [vmem:[#allocation2] sm:$0xff] %vm521, %v450
      %523 = vst.msk [vmem:[#allocation2 + $0x8] sm:$0xff] %vm521, %v452
      %524 = vst.msk [vmem:[#allocation2 + $0x10] sm:$0xff] %vm521, %v454
      %525 = vst.msk [vmem:[#allocation2 + $0x18] sm:$0xff] %vm521, %v456
      %526 = vst.msk [vmem:[#allocation2 + $0x20] sm:$0xff] %vm521, %v458
      %527 = vst.msk [vmem:[#allocation2 + $0x28] sm:$0xff] %vm521, %v460
      %528 = vst.msk [vmem:[#allocation2 + $0x30] sm:$0xff] %vm521, %v462
      %529 = vst.msk [vmem:[#allocation2 + $0x38] sm:$0xff] %vm521, %v464
      %530 = vst.msk [vmem:[#allocation2 + $0x40] sm:$0xff] %vm521, %v466
      %531 = vst.msk [vmem:[#allocation2 + $0x48] sm:$0xff] %vm521, %v468
      %532 = vst.msk [vmem:[#allocation2 + $0x50] sm:$0xff] %vm521, %v470
      %533 = vst.msk [vmem:[#allocation2 + $0x58] sm:$0xff] %vm521, %v472
      %534 = vst.msk [vmem:[#allocation2 + $0x60] sm:$0xff] %vm521, %v474
      %535 = vst.msk [vmem:[#allocation2 + $0x68] sm:$0xff] %vm521, %v476
      %536 = vst.msk [vmem:[#allocation2 + $0x70] sm:$0xff] %vm521, %v478
      %537 = vst.msk [vmem:[#allocation2 + $0x78] sm:$0xff] %vm521, %v480
      %538 = vst.msk [vmem:[#allocation2 + $0x80] sm:$0xff] %vm521, %v482
      %539 = vst.msk [vmem:[#allocation2 + $0x88] sm:$0xff] %vm521, %v484
      %540 = vst.msk [vmem:[#allocation2 + $0x90] sm:$0xff] %vm521, %v486
      %541 = vst.msk [vmem:[#allocation2 + $0x98] sm:$0xff] %vm521, %v488
      %542 = vst.msk [vmem:[#allocation2 + $0xa0] sm:$0xff] %vm521, %v490
      %543 = vst.msk [vmem:[#allocation2 + $0xa8] sm:$0xff] %vm521, %v492
      %544 = vst.msk [vmem:[#allocation2 + $0xb0] sm:$0xff] %vm521, %v494
      %545 = vst.msk [vmem:[#allocation2 + $0xb8] sm:$0xff] %vm521, %v496
      %s546 = scalar_lea.vmem %s197, 16
      %v547 = vld [vmem:[%s546] sm:$0xff]
      %v548 = vld [vmem:[%s546 + $0x10] sm:$0xff]
      %v549 = vld [vmem:[%s546 + $0x20] sm:$0xff]
      %v550 = vld [vmem:[%s546 + $0x30] sm:$0xff]
      %v551 = vld [vmem:[%s546 + $0x40] sm:$0xff]
      %v552 = vld [vmem:[%s546 + $0x50] sm:$0xff]
      %v553 = vld [vmem:[%s546 + $0x60] sm:$0xff]
      %v554 = vld [vmem:[%s546 + $0x70] sm:$0xff]
      %v555 = vld [vmem:[%s546 + $0x80] sm:$0xff]
      %v556 = vld [vmem:[%s546 + $0x90] sm:$0xff]
      %v557 = vld [vmem:[%s546 + $0xa0] sm:$0xff]
      %v558 = vld [vmem:[%s546 + $0xb0] sm:$0xff]
      %v559 = vld [vmem:[%s546 + $0xc0] sm:$0xff]
      %v560 = vld [vmem:[%s546 + $0xd0] sm:$0xff]
      %v561 = vld [vmem:[%s546 + $0xe0] sm:$0xff]
      %v562 = vld [vmem:[%s546 + $0xf0] sm:$0xff]
      %v563 = vld [vmem:[%s546 + $0x100] sm:$0xff]
      %v564 = vld [vmem:[%s546 + $0x110] sm:$0xff]
      %v565 = vld [vmem:[%s546 + $0x120] sm:$0xff]
      %v566 = vld [vmem:[%s546 + $0x130] sm:$0xff]
      %v567 = vld [vmem:[%s546 + $0x140] sm:$0xff]
      %v568 = vld [vmem:[%s546 + $0x150] sm:$0xff]
      %v569 = vld [vmem:[%s546 + $0x160] sm:$0xff]
      %v570 = vld [vmem:[%s546 + $0x170] sm:$0xff]
      %595 = vrot.lane.b32.xlu0 %v547, 12
      %v596 = vpop.permute.xlu0 %595
      %597 = vrot.lane.b32.xlu0 %v548, 12
      %v598 = vpop.permute.xlu0 %597
      %599 = vrot.lane.b32.xlu0 %v549, 12
      %v600 = vpop.permute.xlu0 %599
      %601 = vrot.lane.b32.xlu0 %v550, 12
      %v602 = vpop.permute.xlu0 %601
      %603 = vrot.lane.b32.xlu0 %v551, 12
      %v604 = vpop.permute.xlu0 %603
      %605 = vrot.lane.b32.xlu0 %v552, 12
      %v606 = vpop.permute.xlu0 %605
      %607 = vrot.lane.b32.xlu0 %v553, 12
      %v608 = vpop.permute.xlu0 %607
      %609 = vrot.lane.b32.xlu0 %v554, 12
      %v610 = vpop.permute.xlu0 %609
      %611 = vrot.lane.b32.xlu0 %v555, 12
      %v612 = vpop.permute.xlu0 %611
      %613 = vrot.lane.b32.xlu0 %v556, 12
      %v614 = vpop.permute.xlu0 %613
      %615 = vrot.lane.b32.xlu0 %v557, 12
      %v616 = vpop.permute.xlu0 %615
      %617 = vrot.lane.b32.xlu0 %v558, 12
      %v618 = vpop.permute.xlu0 %617
      %619 = vrot.lane.b32.xlu0 %v559, 12
      %v620 = vpop.permute.xlu0 %619
      %621 = vrot.lane.b32.xlu0 %v560, 12
      %v622 = vpop.permute.xlu0 %621
      %623 = vrot.lane.b32.xlu0 %v561, 12
      %v624 = vpop.permute.xlu0 %623
      %625 = vrot.lane.b32.xlu0 %v562, 12
      %v626 = vpop.permute.xlu0 %625
      %627 = vrot.lane.b32.xlu0 %v563, 12
      %v628 = vpop.permute.xlu0 %627
      %629 = vrot.lane.b32.xlu0 %v564, 12
      %v630 = vpop.permute.xlu0 %629
      %631 = vrot.lane.b32.xlu0 %v565, 12
      %v632 = vpop.permute.xlu0 %631
      %633 = vrot.lane.b32.xlu0 %v566, 12
      %v634 = vpop.permute.xlu0 %633
      %635 = vrot.lane.b32.xlu0 %v567, 12
      %v636 = vpop.permute.xlu0 %635
      %637 = vrot.lane.b32.xlu0 %v568, 12
      %v638 = vpop.permute.xlu0 %637
      %639 = vrot.lane.b32.xlu0 %v569, 12
      %v640 = vpop.permute.xlu0 %639
      %641 = vrot.lane.b32.xlu0 %v570, 12
      %v642 = vpop.permute.xlu0 %641
      %vm667 = vcmask 130144
      %668 = vst.msk [vmem:[#allocation2] sm:$0xff] %vm667, %v596
      %669 = vst.msk [vmem:[#allocation2 + $0x8] sm:$0xff] %vm667, %v598
      %670 = vst.msk [vmem:[#allocation2 + $0x10] sm:$0xff] %vm667, %v600
      %671 = vst.msk [vmem:[#allocation2 + $0x18] sm:$0xff] %vm667, %v602
      %672 = vst.msk [vmem:[#allocation2 + $0x20] sm:$0xff] %vm667, %v604
      %673 = vst.msk [vmem:[#allocation2 + $0x28] sm:$0xff] %vm667, %v606
      %674 = vst.msk [vmem:[#allocation2 + $0x30] sm:$0xff] %vm667, %v608
      %675 = vst.msk [vmem:[#allocation2 + $0x38] sm:$0xff] %vm667, %v610
      %676 = vst.msk [vmem:[#allocation2 + $0x40] sm:$0xff] %vm667, %v612
      %677 = vst.msk [vmem:[#allocation2 + $0x48] sm:$0xff] %vm667, %v614
      %678 = vst.msk [vmem:[#allocation2 + $0x50] sm:$0xff] %vm667, %v616
      %679 = vst.msk [vmem:[#allocation2 + $0x58] sm:$0xff] %vm667, %v618
      %680 = vst.msk [vmem:[#allocation2 + $0x60] sm:$0xff] %vm667, %v620
      %681 = vst.msk [vmem:[#allocation2 + $0x68] sm:$0xff] %vm667, %v622
      %682 = vst.msk [vmem:[#allocation2 + $0x70] sm:$0xff] %vm667, %v624
      %683 = vst.msk [vmem:[#allocation2 + $0x78] sm:$0xff] %vm667, %v626
      %684 = vst.msk [vmem:[#allocation2 + $0x80] sm:$0xff] %vm667, %v628
      %685 = vst.msk [vmem:[#allocation2 + $0x88] sm:$0xff] %vm667, %v630
      %686 = vst.msk [vmem:[#allocation2 + $0x90] sm:$0xff] %vm667, %v632
      %687 = vst.msk [vmem:[#allocation2 + $0x98] sm:$0xff] %vm667, %v634
      %688 = vst.msk [vmem:[#allocation2 + $0xa0] sm:$0xff] %vm667, %v636
      %689 = vst.msk [vmem:[#allocation2 + $0xa8] sm:$0xff] %vm667, %v638
      %690 = vst.msk [vmem:[#allocation2 + $0xb0] sm:$0xff] %vm667, %v640
      %691 = vst.msk [vmem:[#allocation2 + $0xb8] sm:$0xff] %vm667, %v642
      %v692 = vld [vmem:[%s546 + $0x1] sm:$0xff]
      %v693 = vld [vmem:[%s546 + $0x11] sm:$0xff]
      %v694 = vld [vmem:[%s546 + $0x21] sm:$0xff]
      %v695 = vld [vmem:[%s546 + $0x31] sm:$0xff]
      %v696 = vld [vmem:[%s546 + $0x41] sm:$0xff]
      %v697 = vld [vmem:[%s546 + $0x51] sm:$0xff]
      %v698 = vld [vmem:[%s546 + $0x61] sm:$0xff]
      %v699 = vld [vmem:[%s546 + $0x71] sm:$0xff]
      %v700 = vld [vmem:[%s546 + $0x81] sm:$0xff]
      %v701 = vld [vmem:[%s546 + $0x91] sm:$0xff]
      %v702 = vld [vmem:[%s546 + $0xa1] sm:$0xff]
      %v703 = vld [vmem:[%s546 + $0xb1] sm:$0xff]
      %v704 = vld [vmem:[%s546 + $0xc1] sm:$0xff]
      %v705 = vld [vmem:[%s546 + $0xd1] sm:$0xff]
      %v706 = vld [vmem:[%s546 + $0xe1] sm:$0xff]
      %v707 = vld [vmem:[%s546 + $0xf1] sm:$0xff]
      %v708 = vld [vmem:[%s546 + $0x101] sm:$0xff]
      %v709 = vld [vmem:[%s546 + $0x111] sm:$0xff]
      %v710 = vld [vmem:[%s546 + $0x121] sm:$0xff]
      %v711 = vld [vmem:[%s546 + $0x131] sm:$0xff]
      %v712 = vld [vmem:[%s546 + $0x141] sm:$0xff]
      %v713 = vld [vmem:[%s546 + $0x151] sm:$0xff]
      %v714 = vld [vmem:[%s546 + $0x161] sm:$0xff]
      %v715 = vld [vmem:[%s546 + $0x171] sm:$0xff]
      %740 = vrot.lane.b32.xlu0 %v692, 16
      %v741 = vpop.permute.xlu0 %740
      %742 = vrot.lane.b32.xlu0 %v693, 16
      %v743 = vpop.permute.xlu0 %742
      %744 = vrot.lane.b32.xlu0 %v694, 16
      %v745 = vpop.permute.xlu0 %744
      %746 = vrot.lane.b32.xlu0 %v695, 16
      %v747 = vpop.permute.xlu0 %746
      %748 = vrot.lane.b32.xlu0 %v696, 16
      %v749 = vpop.permute.xlu0 %748
      %750 = vrot.lane.b32.xlu0 %v697, 16
      %v751 = vpop.permute.xlu0 %750
      %752 = vrot.lane.b32.xlu0 %v698, 16
      %v753 = vpop.permute.xlu0 %752
      %754 = vrot.lane.b32.xlu0 %v699, 16
      %v755 = vpop.permute.xlu0 %754
      %756 = vrot.lane.b32.xlu0 %v700, 16
      %v757 = vpop.permute.xlu0 %756
      %758 = vrot.lane.b32.xlu0 %v701, 16
      %v759 = vpop.permute.xlu0 %758
      %760 = vrot.lane.b32.xlu0 %v702, 16
      %v761 = vpop.permute.xlu0 %760
      %762 = vrot.lane.b32.xlu0 %v703, 16
      %v763 = vpop.permute.xlu0 %762
      %764 = vrot.lane.b32.xlu0 %v704, 16
      %v765 = vpop.permute.xlu0 %764
      %766 = vrot.lane.b32.xlu0 %v705, 16
      %v767 = vpop.permute.xlu0 %766
      %768 = vrot.lane.b32.xlu0 %v706, 16
      %v769 = vpop.permute.xlu0 %768
      %770 = vrot.lane.b32.xlu0 %v707, 16
      %v771 = vpop.permute.xlu0 %770
      %772 = vrot.lane.b32.xlu0 %v708, 16
      %v773 = vpop.permute.xlu0 %772
      %774 = vrot.lane.b32.xlu0 %v709, 16
      %v775 = vpop.permute.xlu0 %774
      %776 = vrot.lane.b32.xlu0 %v710, 16
      %v777 = vpop.permute.xlu0 %776
      %778 = vrot.lane.b32.xlu0 %v711, 16
      %v779 = vpop.permute.xlu0 %778
      %780 = vrot.lane.b32.xlu0 %v712, 16
      %v781 = vpop.permute.xlu0 %780
      %782 = vrot.lane.b32.xlu0 %v713, 16
      %v783 = vpop.permute.xlu0 %782
      %784 = vrot.lane.b32.xlu0 %v714, 16
      %v785 = vpop.permute.xlu0 %784
      %786 = vrot.lane.b32.xlu0 %v715, 16
      %v787 = vpop.permute.xlu0 %786
      %vm812 = vcmask 162944
      %813 = vst.msk [vmem:[#allocation2] sm:$0xff] %vm812, %v741
      %814 = vst.msk [vmem:[#allocation2 + $0x8] sm:$0xff] %vm812, %v743
      %815 = vst.msk [vmem:[#allocation2 + $0x10] sm:$0xff] %vm812, %v745
      %816 = vst.msk [vmem:[#allocation2 + $0x18] sm:$0xff] %vm812, %v747
      %817 = vst.msk [vmem:[#allocation2 + $0x20] sm:$0xff] %vm812, %v749
      %818 = vst.msk [vmem:[#allocation2 + $0x28] sm:$0xff] %vm812, %v751
      %819 = vst.msk [vmem:[#allocation2 + $0x30] sm:$0xff] %vm812, %v753
      %820 = vst.msk [vmem:[#allocation2 + $0x38] sm:$0xff] %vm812, %v755
      %821 = vst.msk [vmem:[#allocation2 + $0x40] sm:$0xff] %vm812, %v757
      %822 = vst.msk [vmem:[#allocation2 + $0x48] sm:$0xff] %vm812, %v759
      %823 = vst.msk [vmem:[#allocation2 + $0x50] sm:$0xff] %vm812, %v761
      %824 = vst.msk [vmem:[#allocation2 + $0x58] sm:$0xff] %vm812, %v763
      %825 = vst.msk [vmem:[#allocation2 + $0x60] sm:$0xff] %vm812, %v765
      %826 = vst.msk [vmem:[#allocation2 + $0x68] sm:$0xff] %vm812, %v767
      %827 = vst.msk [vmem:[#allocation2 + $0x70] sm:$0xff] %vm812, %v769
      %828 = vst.msk [vmem:[#allocation2 + $0x78] sm:$0xff] %vm812, %v771
      %829 = vst.msk [vmem:[#allocation2 + $0x80] sm:$0xff] %vm812, %v773
      %830 = vst.msk [vmem:[#allocation2 + $0x88] sm:$0xff] %vm812, %v775
      %831 = vst.msk [vmem:[#allocation2 + $0x90] sm:$0xff] %vm812, %v777
      %832 = vst.msk [vmem:[#allocation2 + $0x98] sm:$0xff] %vm812, %v779
      %833 = vst.msk [vmem:[#allocation2 + $0xa0] sm:$0xff] %vm812, %v781
      %834 = vst.msk [vmem:[#allocation2 + $0xa8] sm:$0xff] %vm812, %v783
      %835 = vst.msk [vmem:[#allocation2 + $0xb0] sm:$0xff] %vm812, %v785
      %836 = vst.msk [vmem:[#allocation2 + $0xb8] sm:$0xff] %vm812, %v787
      %v837 = vld [vmem:[%s546 + $0x2] sm:$0xff]
      %v838 = vld [vmem:[%s546 + $0x12] sm:$0xff]
      %v839 = vld [vmem:[%s546 + $0x22] sm:$0xff]
      %v840 = vld [vmem:[%s546 + $0x32] sm:$0xff]
      %v841 = vld [vmem:[%s546 + $0x42] sm:$0xff]
      %v842 = vld [vmem:[%s546 + $0x52] sm:$0xff]
      %v843 = vld [vmem:[%s546 + $0x62] sm:$0xff]
      %v844 = vld [vmem:[%s546 + $0x72] sm:$0xff]
      %v845 = vld [vmem:[%s546 + $0x82] sm:$0xff]
      %v846 = vld [vmem:[%s546 + $0x92] sm:$0xff]
      %v847 = vld [vmem:[%s546 + $0xa2] sm:$0xff]
      %v848 = vld [vmem:[%s546 + $0xb2] sm:$0xff]
      %v849 = vld [vmem:[%s546 + $0xc2] sm:$0xff]
      %v850 = vld [vmem:[%s546 + $0xd2] sm:$0xff]
      %v851 = vld [vmem:[%s546 + $0xe2] sm:$0xff]
      %v852 = vld [vmem:[%s546 + $0xf2] sm:$0xff]
      %v853 = vld [vmem:[%s546 + $0x102] sm:$0xff]
      %v854 = vld [vmem:[%s546 + $0x112] sm:$0xff]
      %v855 = vld [vmem:[%s546 + $0x122] sm:$0xff]
      %v856 = vld [vmem:[%s546 + $0x132] sm:$0xff]
      %v857 = vld [vmem:[%s546 + $0x142] sm:$0xff]
      %v858 = vld [vmem:[%s546 + $0x152] sm:$0xff]
      %v859 = vld [vmem:[%s546 + $0x162] sm:$0xff]
      %v860 = vld [vmem:[%s546 + $0x172] sm:$0xff]
      %885 = vrot.lane.b32.xlu0 %v837, 20
      %v886 = vpop.permute.xlu0 %885
      %887 = vrot.lane.b32.xlu0 %v838, 20
      %v888 = vpop.permute.xlu0 %887
      %889 = vrot.lane.b32.xlu0 %v839, 20
      %v890 = vpop.permute.xlu0 %889
      %891 = vrot.lane.b32.xlu0 %v840, 20
      %v892 = vpop.permute.xlu0 %891
      %893 = vrot.lane.b32.xlu0 %v841, 20
      %v894 = vpop.permute.xlu0 %893
      %895 = vrot.lane.b32.xlu0 %v842, 20
      %v896 = vpop.permute.xlu0 %895
      %897 = vrot.lane.b32.xlu0 %v843, 20
      %v898 = vpop.permute.xlu0 %897
      %899 = vrot.lane.b32.xlu0 %v844, 20
      %v900 = vpop.permute.xlu0 %899
      %901 = vrot.lane.b32.xlu0 %v845, 20
      %v902 = vpop.permute.xlu0 %901
      %903 = vrot.lane.b32.xlu0 %v846, 20
      %v904 = vpop.permute.xlu0 %903
      %905 = vrot.lane.b32.xlu0 %v847, 20
      %v906 = vpop.permute.xlu0 %905
      %907 = vrot.lane.b32.xlu0 %v848, 20
      %v908 = vpop.permute.xlu0 %907
      %909 = vrot.lane.b32.xlu0 %v849, 20
      %v910 = vpop.permute.xlu0 %909
      %911 = vrot.lane.b32.xlu0 %v850, 20
      %v912 = vpop.permute.xlu0 %911
      %913 = vrot.lane.b32.xlu0 %v851, 20
      %v914 = vpop.permute.xlu0 %913
      %915 = vrot.lane.b32.xlu0 %v852, 20
      %v916 = vpop.permute.xlu0 %915
      %917 = vrot.lane.b32.xlu0 %v853, 20
      %v918 = vpop.permute.xlu0 %917
      %919 = vrot.lane.b32.xlu0 %v854, 20
      %v920 = vpop.permute.xlu0 %919
      %921 = vrot.lane.b32.xlu0 %v855, 20
      %v922 = vpop.permute.xlu0 %921
      %923 = vrot.lane.b32.xlu0 %v856, 20
      %v924 = vpop.permute.xlu0 %923
      %925 = vrot.lane.b32.xlu0 %v857, 20
      %v926 = vpop.permute.xlu0 %925
      %927 = vrot.lane.b32.xlu0 %v858, 20
      %v928 = vpop.permute.xlu0 %927
      %929 = vrot.lane.b32.xlu0 %v859, 20
      %v930 = vpop.permute.xlu0 %929
      %931 = vrot.lane.b32.xlu0 %v860, 20
      %v932 = vpop.permute.xlu0 %931
      %vm957 = vcmask 195744
      %958 = vst.msk [vmem:[#allocation2] sm:$0xff] %vm957, %v886
      %959 = vst.msk [vmem:[#allocation2 + $0x8] sm:$0xff] %vm957, %v888
      %960 = vst.msk [vmem:[#allocation2 + $0x10] sm:$0xff] %vm957, %v890
      %961 = vst.msk [vmem:[#allocation2 + $0x18] sm:$0xff] %vm957, %v892
      %962 = vst.msk [vmem:[#allocation2 + $0x20] sm:$0xff] %vm957, %v894
      %963 = vst.msk [vmem:[#allocation2 + $0x28] sm:$0xff] %vm957, %v896
      %964 = vst.msk [vmem:[#allocation2 + $0x30] sm:$0xff] %vm957, %v898
      %965 = vst.msk [vmem:[#allocation2 + $0x38] sm:$0xff] %vm957, %v900
      %966 = vst.msk [vmem:[#allocation2 + $0x40] sm:$0xff] %vm957, %v902
      %967 = vst.msk [vmem:[#allocation2 + $0x48] sm:$0xff] %vm957, %v904
      %968 = vst.msk [vmem:[#allocation2 + $0x50] sm:$0xff] %vm957, %v906
      %969 = vst.msk [vmem:[#allocation2 + $0x58] sm:$0xff] %vm957, %v908
      %970 = vst.msk [vmem:[#allocation2 + $0x60] sm:$0xff] %vm957, %v910
      %971 = vst.msk [vmem:[#allocation2 + $0x68] sm:$0xff] %vm957, %v912
      %972 = vst.msk [vmem:[#allocation2 + $0x70] sm:$0xff] %vm957, %v914
      %973 = vst.msk [vmem:[#allocation2 + $0x78] sm:$0xff] %vm957, %v916
      %974 = vst.msk [vmem:[#allocation2 + $0x80] sm:$0xff] %vm957, %v918
      %975 = vst.msk [vmem:[#allocation2 + $0x88] sm:$0xff] %vm957, %v920
      %976 = vst.msk [vmem:[#allocation2 + $0x90] sm:$0xff] %vm957, %v922
      %977 = vst.msk [vmem:[#allocation2 + $0x98] sm:$0xff] %vm957, %v924
      %978 = vst.msk [vmem:[#allocation2 + $0xa0] sm:$0xff] %vm957, %v926
      %979 = vst.msk [vmem:[#allocation2 + $0xa8] sm:$0xff] %vm957, %v928
      %980 = vst.msk [vmem:[#allocation2 + $0xb0] sm:$0xff] %vm957, %v930
      %981 = vst.msk [vmem:[#allocation2 + $0xb8] sm:$0xff] %vm957, %v932
      %s982 = scalar_lea.vmem %s197, 32
      %v983 = vld [vmem:[%s982] sm:$0xff]
      %v984 = vld [vmem:[%s982 + $0x10] sm:$0xff]
      %v985 = vld [vmem:[%s982 + $0x20] sm:$0xff]
      %v986 = vld [vmem:[%s982 + $0x30] sm:$0xff]
      %v987 = vld [vmem:[%s982 + $0x40] sm:$0xff]
      %v988 = vld [vmem:[%s982 + $0x50] sm:$0xff]
      %v989 = vld [vmem:[%s982 + $0x60] sm:$0xff]
      %v990 = vld [vmem:[%s982 + $0x70] sm:$0xff]
      %v991 = vld [vmem:[%s982 + $0x80] sm:$0xff]
      %v992 = vld [vmem:[%s982 + $0x90] sm:$0xff]
      %v993 = vld [vmem:[%s982 + $0xa0] sm:$0xff]
      %v994 = vld [vmem:[%s982 + $0xb0] sm:$0xff]
      %v995 = vld [vmem:[%s982 + $0xc0] sm:$0xff]
      %v996 = vld [vmem:[%s982 + $0xd0] sm:$0xff]
      %v997 = vld [vmem:[%s982 + $0xe0] sm:$0xff]
      %v998 = vld [vmem:[%s982 + $0xf0] sm:$0xff]
      %v999 = vld [vmem:[%s982 + $0x100] sm:$0xff]
      %v1000 = vld [vmem:[%s982 + $0x110] sm:$0xff]
      %v1001 = vld [vmem:[%s982 + $0x120] sm:$0xff]
      %v1002 = vld [vmem:[%s982 + $0x130] sm:$0xff]
      %v1003 = vld [vmem:[%s982 + $0x140] sm:$0xff]
      %v1004 = vld [vmem:[%s982 + $0x150] sm:$0xff]
      %v1005 = vld [vmem:[%s982 + $0x160] sm:$0xff]
      %v1006 = vld [vmem:[%s982 + $0x170] sm:$0xff]
      %1031 = vrot.lane.b32.xlu0 %v983, 24
      %v1032 = vpop.permute.xlu0 %1031
      %1033 = vrot.lane.b32.xlu0 %v984, 24
      %v1034 = vpop.permute.xlu0 %1033
      %1035 = vrot.lane.b32.xlu0 %v985, 24
      %v1036 = vpop.permute.xlu0 %1035
      %1037 = vrot.lane.b32.xlu0 %v986, 24
      %v1038 = vpop.permute.xlu0 %1037
      %1039 = vrot.lane.b32.xlu0 %v987, 24
      %v1040 = vpop.permute.xlu0 %1039
      %1041 = vrot.lane.b32.xlu0 %v988, 24
      %v1042 = vpop.permute.xlu0 %1041
      %1043 = vrot.lane.b32.xlu0 %v989, 24
      %v1044 = vpop.permute.xlu0 %1043
      %1045 = vrot.lane.b32.xlu0 %v990, 24
      %v1046 = vpop.permute.xlu0 %1045
      %1047 = vrot.lane.b32.xlu0 %v991, 24
      %v1048 = vpop.permute.xlu0 %1047
      %1049 = vrot.lane.b32.xlu0 %v992, 24
      %v1050 = vpop.permute.xlu0 %1049
      %1051 = vrot.lane.b32.xlu0 %v993, 24
      %v1052 = vpop.permute.xlu0 %1051
      %1053 = vrot.lane.b32.xlu0 %v994, 24
      %v1054 = vpop.permute.xlu0 %1053
      %1055 = vrot.lane.b32.xlu0 %v995, 24
      %v1056 = vpop.permute.xlu0 %1055
      %1057 = vrot.lane.b32.xlu0 %v996, 24
      %v1058 = vpop.permute.xlu0 %1057
      %1059 = vrot.lane.b32.xlu0 %v997, 24
      %v1060 = vpop.permute.xlu0 %1059
      %1061 = vrot.lane.b32.xlu0 %v998, 24
      %v1062 = vpop.permute.xlu0 %1061
      %1063 = vrot.lane.b32.xlu0 %v999, 24
      %v1064 = vpop.permute.xlu0 %1063
      %1065 = vrot.lane.b32.xlu0 %v1000, 24
      %v1066 = vpop.permute.xlu0 %1065
      %1067 = vrot.lane.b32.xlu0 %v1001, 24
      %v1068 = vpop.permute.xlu0 %1067
      %1069 = vrot.lane.b32.xlu0 %v1002, 24
      %v1070 = vpop.permute.xlu0 %1069
      %1071 = vrot.lane.b32.xlu0 %v1003, 24
      %v1072 = vpop.permute.xlu0 %1071
      %1073 = vrot.lane.b32.xlu0 %v1004, 24
      %v1074 = vpop.permute.xlu0 %1073
      %1075 = vrot.lane.b32.xlu0 %v1005, 24
      %v1076 = vpop.permute.xlu0 %1075
      %1077 = vrot.lane.b32.xlu0 %v1006, 24
      %v1078 = vpop.permute.xlu0 %1077
      %vm1103 = vcmask 228544
      %1104 = vst.msk [vmem:[#allocation2] sm:$0xff] %vm1103, %v1032
      %1105 = vst.msk [vmem:[#allocation2 + $0x8] sm:$0xff] %vm1103, %v1034
      %1106 = vst.msk [vmem:[#allocation2 + $0x10] sm:$0xff] %vm1103, %v1036
      %1107 = vst.msk [vmem:[#allocation2 + $0x18] sm:$0xff] %vm1103, %v1038
      %1108 = vst.msk [vmem:[#allocation2 + $0x20] sm:$0xff] %vm1103, %v1040
      %1109 = vst.msk [vmem:[#allocation2 + $0x28] sm:$0xff] %vm1103, %v1042
      %1110 = vst.msk [vmem:[#allocation2 + $0x30] sm:$0xff] %vm1103, %v1044
      %1111 = vst.msk [vmem:[#allocation2 + $0x38] sm:$0xff] %vm1103, %v1046
      %1112 = vst.msk [vmem:[#allocation2 + $0x40] sm:$0xff] %vm1103, %v1048
      %1113 = vst.msk [vmem:[#allocation2 + $0x48] sm:$0xff] %vm1103, %v1050
      %1114 = vst.msk [vmem:[#allocation2 + $0x50] sm:$0xff] %vm1103, %v1052
      %1115 = vst.msk [vmem:[#allocation2 + $0x58] sm:$0xff] %vm1103, %v1054
      %1116 = vst.msk [vmem:[#allocation2 + $0x60] sm:$0xff] %vm1103, %v1056
      %1117 = vst.msk [vmem:[#allocation2 + $0x68] sm:$0xff] %vm1103, %v1058
      %1118 = vst.msk [vmem:[#allocation2 + $0x70] sm:$0xff] %vm1103, %v1060
      %1119 = vst.msk [vmem:[#allocation2 + $0x78] sm:$0xff] %vm1103, %v1062
      %1120 = vst.msk [vmem:[#allocation2 + $0x80] sm:$0xff] %vm1103, %v1064
      %1121 = vst.msk [vmem:[#allocation2 + $0x88] sm:$0xff] %vm1103, %v1066
      %1122 = vst.msk [vmem:[#allocation2 + $0x90] sm:$0xff] %vm1103, %v1068
      %1123 = vst.msk [vmem:[#allocation2 + $0x98] sm:$0xff] %vm1103, %v1070
      %1124 = vst.msk [vmem:[#allocation2 + $0xa0] sm:$0xff] %vm1103, %v1072
      %1125 = vst.msk [vmem:[#allocation2 + $0xa8] sm:$0xff] %vm1103, %v1074
      %1126 = vst.msk [vmem:[#allocation2 + $0xb0] sm:$0xff] %vm1103, %v1076
      %1127 = vst.msk [vmem:[#allocation2 + $0xb8] sm:$0xff] %vm1103, %v1078
      %v1128 = vld [vmem:[%s982 + $0x1] sm:$0xff]
      %v1129 = vld [vmem:[%s982 + $0x11] sm:$0xff]
      %v1130 = vld [vmem:[%s982 + $0x21] sm:$0xff]
      %v1131 = vld [vmem:[%s982 + $0x31] sm:$0xff]
      %v1132 = vld [vmem:[%s982 + $0x41] sm:$0xff]
      %v1133 = vld [vmem:[%s982 + $0x51] sm:$0xff]
      %v1134 = vld [vmem:[%s982 + $0x61] sm:$0xff]
      %v1135 = vld [vmem:[%s982 + $0x71] sm:$0xff]
      %v1136 = vld [vmem:[%s982 + $0x81] sm:$0xff]
      %v1137 = vld [vmem:[%s982 + $0x91] sm:$0xff]
      %v1138 = vld [vmem:[%s982 + $0xa1] sm:$0xff]
      %v1139 = vld [vmem:[%s982 + $0xb1] sm:$0xff]
      %v1140 = vld [vmem:[%s982 + $0xc1] sm:$0xff]
      %v1141 = vld [vmem:[%s982 + $0xd1] sm:$0xff]
      %v1142 = vld [vmem:[%s982 + $0xe1] sm:$0xff]
      %v1143 = vld [vmem:[%s982 + $0xf1] sm:$0xff]
      %v1144 = vld [vmem:[%s982 + $0x101] sm:$0xff]
      %v1145 = vld [vmem:[%s982 + $0x111] sm:$0xff]
      %v1146 = vld [vmem:[%s982 + $0x121] sm:$0xff]
      %v1147 = vld [vmem:[%s982 + $0x131] sm:$0xff]
      %v1148 = vld [vmem:[%s982 + $0x141] sm:$0xff]
      %v1149 = vld [vmem:[%s982 + $0x151] sm:$0xff]
      %v1150 = vld [vmem:[%s982 + $0x161] sm:$0xff]
      %v1151 = vld [vmem:[%s982 + $0x171] sm:$0xff]
      %1176 = vrot.lane.b32.xlu0 %v1128, 28
      %v1177 = vpop.permute.xlu0 %1176
      %1178 = vrot.lane.b32.xlu0 %v1129, 28
      %v1179 = vpop.permute.xlu0 %1178
      %1180 = vrot.lane.b32.xlu0 %v1130, 28
      %v1181 = vpop.permute.xlu0 %1180
      %1182 = vrot.lane.b32.xlu0 %v1131, 28
      %v1183 = vpop.permute.xlu0 %1182
      %1184 = vrot.lane.b32.xlu0 %v1132, 28
      %v1185 = vpop.permute.xlu0 %1184
      %1186 = vrot.lane.b32.xlu0 %v1133, 28
      %v1187 = vpop.permute.xlu0 %1186
      %1188 = vrot.lane.b32.xlu0 %v1134, 28
      %v1189 = vpop.permute.xlu0 %1188
      %1190 = vrot.lane.b32.xlu0 %v1135, 28
      %v1191 = vpop.permute.xlu0 %1190
      %1192 = vrot.lane.b32.xlu0 %v1136, 28
      %v1193 = vpop.permute.xlu0 %1192
      %1194 = vrot.lane.b32.xlu0 %v1137, 28
      %v1195 = vpop.permute.xlu0 %1194
      %1196 = vrot.lane.b32.xlu0 %v1138, 28
      %v1197 = vpop.permute.xlu0 %1196
      %1198 = vrot.lane.b32.xlu0 %v1139, 28
      %v1199 = vpop.permute.xlu0 %1198
      %1200 = vrot.lane.b32.xlu0 %v1140, 28
      %v1201 = vpop.permute.xlu0 %1200
      %1202 = vrot.lane.b32.xlu0 %v1141, 28
      %v1203 = vpop.permute.xlu0 %1202
      %1204 = vrot.lane.b32.xlu0 %v1142, 28
      %v1205 = vpop.permute.xlu0 %1204
      %1206 = vrot.lane.b32.xlu0 %v1143, 28
      %v1207 = vpop.permute.xlu0 %1206
      %1208 = vrot.lane.b32.xlu0 %v1144, 28
      %v1209 = vpop.permute.xlu0 %1208
      %1210 = vrot.lane.b32.xlu0 %v1145, 28
      %v1211 = vpop.permute.xlu0 %1210
      %1212 = vrot.lane.b32.xlu0 %v1146, 28
      %v1213 = vpop.permute.xlu0 %1212
      %1214 = vrot.lane.b32.xlu0 %v1147, 28
      %v1215 = vpop.permute.xlu0 %1214
      %1216 = vrot.lane.b32.xlu0 %v1148, 28
      %v1217 = vpop.permute.xlu0 %1216
      %1218 = vrot.lane.b32.xlu0 %v1149, 28
      %v1219 = vpop.permute.xlu0 %1218
      %1220 = vrot.lane.b32.xlu0 %v1150, 28
      %v1221 = vpop.permute.xlu0 %1220
      %1222 = vrot.lane.b32.xlu0 %v1151, 28
      %v1223 = vpop.permute.xlu0 %1222
      %vm1248 = vcmask 261344
      %1249 = vst.msk [vmem:[#allocation2] sm:$0xff] %vm1248, %v1177
      %1250 = vst.msk [vmem:[#allocation2 + $0x8] sm:$0xff] %vm1248, %v1179
      %1251 = vst.msk [vmem:[#allocation2 + $0x10] sm:$0xff] %vm1248, %v1181
      %1252 = vst.msk [vmem:[#allocation2 + $0x18] sm:$0xff] %vm1248, %v1183
      %1253 = vst.msk [vmem:[#allocation2 + $0x20] sm:$0xff] %vm1248, %v1185
      %1254 = vst.msk [vmem:[#allocation2 + $0x28] sm:$0xff] %vm1248, %v1187
      %1255 = vst.msk [vmem:[#allocation2 + $0x30] sm:$0xff] %vm1248, %v1189
      %1256 = vst.msk [vmem:[#allocation2 + $0x38] sm:$0xff] %vm1248, %v1191
      %1257 = vst.msk [vmem:[#allocation2 + $0x40] sm:$0xff] %vm1248, %v1193
      %1258 = vst.msk [vmem:[#allocation2 + $0x48] sm:$0xff] %vm1248, %v1195
      %1259 = vst.msk [vmem:[#allocation2 + $0x50] sm:$0xff] %vm1248, %v1197
      %1260 = vst.msk [vmem:[#allocation2 + $0x58] sm:$0xff] %vm1248, %v1199
      %1261 = vst.msk [vmem:[#allocation2 + $0x60] sm:$0xff] %vm1248, %v1201
      %1262 = vst.msk [vmem:[#allocation2 + $0x68] sm:$0xff] %vm1248, %v1203
      %1263 = vst.msk [vmem:[#allocation2 + $0x70] sm:$0xff] %vm1248, %v1205
      %1264 = vst.msk [vmem:[#allocation2 + $0x78] sm:$0xff] %vm1248, %v1207
      %1265 = vst.msk [vmem:[#allocation2 + $0x80] sm:$0xff] %vm1248, %v1209
      %1266 = vst.msk [vmem:[#allocation2 + $0x88] sm:$0xff] %vm1248, %v1211
      %1267 = vst.msk [vmem:[#allocation2 + $0x90] sm:$0xff] %vm1248, %v1213
      %1268 = vst.msk [vmem:[#allocation2 + $0x98] sm:$0xff] %vm1248, %v1215
      %1269 = vst.msk [vmem:[#allocation2 + $0xa0] sm:$0xff] %vm1248, %v1217
      %1270 = vst.msk [vmem:[#allocation2 + $0xa8] sm:$0xff] %vm1248, %v1219
      %1271 = vst.msk [vmem:[#allocation2 + $0xb0] sm:$0xff] %vm1248, %v1221
      %1272 = vst.msk [vmem:[#allocation2 + $0xb8] sm:$0xff] %vm1248, %v1223
      %v1273 = vld [vmem:[%s982 + $0x2] sm:$0xff]
      %v1274 = vld [vmem:[%s982 + $0x12] sm:$0xff]
      %v1275 = vld [vmem:[%s982 + $0x22] sm:$0xff]
      %v1276 = vld [vmem:[%s982 + $0x32] sm:$0xff]
      %v1277 = vld [vmem:[%s982 + $0x42] sm:$0xff]
      %v1278 = vld [vmem:[%s982 + $0x52] sm:$0xff]
      %v1279 = vld [vmem:[%s982 + $0x62] sm:$0xff]
      %v1280 = vld [vmem:[%s982 + $0x72] sm:$0xff]
      %v1281 = vld [vmem:[%s982 + $0x82] sm:$0xff]
      %v1282 = vld [vmem:[%s982 + $0x92] sm:$0xff]
      %v1283 = vld [vmem:[%s982 + $0xa2] sm:$0xff]
      %v1284 = vld [vmem:[%s982 + $0xb2] sm:$0xff]
      %v1285 = vld [vmem:[%s982 + $0xc2] sm:$0xff]
      %v1286 = vld [vmem:[%s982 + $0xd2] sm:$0xff]
      %v1287 = vld [vmem:[%s982 + $0xe2] sm:$0xff]
      %v1288 = vld [vmem:[%s982 + $0xf2] sm:$0xff]
      %v1289 = vld [vmem:[%s982 + $0x102] sm:$0xff]
      %v1290 = vld [vmem:[%s982 + $0x112] sm:$0xff]
      %v1291 = vld [vmem:[%s982 + $0x122] sm:$0xff]
      %v1292 = vld [vmem:[%s982 + $0x132] sm:$0xff]
      %v1293 = vld [vmem:[%s982 + $0x142] sm:$0xff]
      %v1294 = vld [vmem:[%s982 + $0x152] sm:$0xff]
      %v1295 = vld [vmem:[%s982 + $0x162] sm:$0xff]
      %v1296 = vld [vmem:[%s982 + $0x172] sm:$0xff]
      %1321 = vrot.lane.b32.xlu0 %v1273, 32
      %v1322 = vpop.permute.xlu0 %1321
      %1323 = vrot.lane.b32.xlu0 %v1274, 32
      %v1324 = vpop.permute.xlu0 %1323
      %1325 = vrot.lane.b32.xlu0 %v1275, 32
      %v1326 = vpop.permute.xlu0 %1325
      %1327 = vrot.lane.b32.xlu0 %v1276, 32
      %v1328 = vpop.permute.xlu0 %1327
      %1329 = vrot.lane.b32.xlu0 %v1277, 32
      %v1330 = vpop.permute.xlu0 %1329
      %1331 = vrot.lane.b32.xlu0 %v1278, 32
      %v1332 = vpop.permute.xlu0 %1331
      %1333 = vrot.lane.b32.xlu0 %v1279, 32
      %v1334 = vpop.permute.xlu0 %1333
      %1335 = vrot.lane.b32.xlu0 %v1280, 32
      %v1336 = vpop.permute.xlu0 %1335
      %1337 = vrot.lane.b32.xlu0 %v1281, 32
      %v1338 = vpop.permute.xlu0 %1337
      %1339 = vrot.lane.b32.xlu0 %v1282, 32
      %v1340 = vpop.permute.xlu0 %1339
      %1341 = vrot.lane.b32.xlu0 %v1283, 32
      %v1342 = vpop.permute.xlu0 %1341
      %1343 = vrot.lane.b32.xlu0 %v1284, 32
      %v1344 = vpop.permute.xlu0 %1343
      %1345 = vrot.lane.b32.xlu0 %v1285, 32
      %v1346 = vpop.permute.xlu0 %1345
      %1347 = vrot.lane.b32.xlu0 %v1286, 32
      %v1348 = vpop.permute.xlu0 %1347
      %1349 = vrot.lane.b32.xlu0 %v1287, 32
      %v1350 = vpop.permute.xlu0 %1349
      %1351 = vrot.lane.b32.xlu0 %v1288, 32
      %v1352 = vpop.permute.xlu0 %1351
      %1353 = vrot.lane.b32.xlu0 %v1289, 32
      %v1354 = vpop.permute.xlu0 %1353
      %1355 = vrot.lane.b32.xlu0 %v1290, 32
      %v1356 = vpop.permute.xlu0 %1355
      %1357 = vrot.lane.b32.xlu0 %v1291, 32
      %v1358 = vpop.permute.xlu0 %1357
      %1359 = vrot.lane.b32.xlu0 %v1292, 32
      %v1360 = vpop.permute.xlu0 %1359
      %1361 = vrot.lane.b32.xlu0 %v1293, 32
      %v1362 = vpop.permute.xlu0 %1361
      %1363 = vrot.lane.b32.xlu0 %v1294, 32
      %v1364 = vpop.permute.xlu0 %1363
      %1365 = vrot.lane.b32.xlu0 %v1295, 32
      %v1366 = vpop.permute.xlu0 %1365
      %1367 = vrot.lane.b32.xlu0 %v1296, 32
      %v1368 = vpop.permute.xlu0 %1367
      %vm1393 = vcmask 294144
      %1394 = vst.msk [vmem:[#allocation2] sm:$0xff] %vm1393, %v1322
      %1395 = vst.msk [vmem:[#allocation2 + $0x8] sm:$0xff] %vm1393, %v1324
      %1396 = vst.msk [vmem:[#allocation2 + $0x10] sm:$0xff] %vm1393, %v1326
      %1397 = vst.msk [vmem:[#allocation2 + $0x18] sm:$0xff] %vm1393, %v1328
      %1398 = vst.msk [vmem:[#allocation2 + $0x20] sm:$0xff] %vm1393, %v1330
      %1399 = vst.msk [vmem:[#allocation2 + $0x28] sm:$0xff] %vm1393, %v1332
      %1400 = vst.msk [vmem:[#allocation2 + $0x30] sm:$0xff] %vm1393, %v1334
      %1401 = vst.msk [vmem:[#allocation2 + $0x38] sm:$0xff] %vm1393, %v1336
      %1402 = vst.msk [vmem:[#allocation2 + $0x40] sm:$0xff] %vm1393, %v1338
      %1403 = vst.msk [vmem:[#allocation2 + $0x48] sm:$0xff] %vm1393, %v1340
      %1404 = vst.msk [vmem:[#allocation2 + $0x50] sm:$0xff] %vm1393, %v1342
      %1405 = vst.msk [vmem:[#allocation2 + $0x58] sm:$0xff] %vm1393, %v1344
      %1406 = vst.msk [vmem:[#allocation2 + $0x60] sm:$0xff] %vm1393, %v1346
      %1407 = vst.msk [vmem:[#allocation2 + $0x68] sm:$0xff] %vm1393, %v1348
      %1408 = vst.msk [vmem:[#allocation2 + $0x70] sm:$0xff] %vm1393, %v1350
      %1409 = vst.msk [vmem:[#allocation2 + $0x78] sm:$0xff] %vm1393, %v1352
      %1410 = vst.msk [vmem:[#allocation2 + $0x80] sm:$0xff] %vm1393, %v1354
      %1411 = vst.msk [vmem:[#allocation2 + $0x88] sm:$0xff] %vm1393, %v1356
      %1412 = vst.msk [vmem:[#allocation2 + $0x90] sm:$0xff] %vm1393, %v1358
      %1413 = vst.msk [vmem:[#allocation2 + $0x98] sm:$0xff] %vm1393, %v1360
      %1414 = vst.msk [vmem:[#allocation2 + $0xa0] sm:$0xff] %vm1393, %v1362
      %1415 = vst.msk [vmem:[#allocation2 + $0xa8] sm:$0xff] %vm1393, %v1364
      %1416 = vst.msk [vmem:[#allocation2 + $0xb0] sm:$0xff] %vm1393, %v1366
      %1417 = vst.msk [vmem:[#allocation2 + $0xb8] sm:$0xff] %vm1393, %v1368
      %v1418 = vld [vmem:[#allocation2] sm:$0xff]
      %v1419 = vld [vmem:[#allocation2 + $0x8] sm:$0xff]
      %v1420 = vld [vmem:[#allocation2 + $0x10] sm:$0xff]
      %v1421 = vld [vmem:[#allocation2 + $0x18] sm:$0xff]
      %v1422 = vld [vmem:[#allocation2 + $0x20] sm:$0xff]
      %v1423 = vld [vmem:[#allocation2 + $0x28] sm:$0xff]
      %v1424 = vld [vmem:[#allocation2 + $0x30] sm:$0xff]
      %v1425 = vld [vmem:[#allocation2 + $0x38] sm:$0xff]
      %v1426 = vld [vmem:[#allocation2 + $0x40] sm:$0xff]
      %v1427 = vld [vmem:[#allocation2 + $0x48] sm:$0xff]
      %v1428 = vld [vmem:[#allocation2 + $0x50] sm:$0xff]
      %v1429 = vld [vmem:[#allocation2 + $0x58] sm:$0xff]
      %v1430 = vld [vmem:[#allocation2 + $0x60] sm:$0xff]
      %v1431 = vld [vmem:[#allocation2 + $0x68] sm:$0xff]
      %v1432 = vld [vmem:[#allocation2 + $0x70] sm:$0xff]
      %v1433 = vld [vmem:[#allocation2 + $0x78] sm:$0xff]
      %v1434 = vld [vmem:[#allocation2 + $0x80] sm:$0xff]
      %v1435 = vld [vmem:[#allocation2 + $0x88] sm:$0xff]
      %v1436 = vld [vmem:[#allocation2 + $0x90] sm:$0xff]
      %v1437 = vld [vmem:[#allocation2 + $0x98] sm:$0xff]
      %v1438 = vld [vmem:[#allocation2 + $0xa0] sm:$0xff]
      %v1439 = vld [vmem:[#allocation2 + $0xa8] sm:$0xff]
      %v1440 = vld [vmem:[#allocation2 + $0xb0] sm:$0xff]
      %v1441 = vld [vmem:[#allocation2 + $0xb8] sm:$0xff]
      %v1442 = vld [vmem:[%s1] sm:$0xff]
      %v1443 = vld [vmem:[%s1 + $0x8] sm:$0xff]
      %v1444 = vld [vmem:[%s1 + $0x10] sm:$0xff]
      %v1445 = vld [vmem:[%s1 + $0x18] sm:$0xff]
      %v1446 = vld [vmem:[%s1 + $0x20] sm:$0xf]
      %v1447 = vld [vmem:[%s2] sm:$0x1]
      %v1449 = vperm.slane %v1447, 0
      %vm1451 = vcmask 293888
      %v1453 = vsel %vm1451, %v1418, 0
      %v1456 = vsel %vm1451, %v1419, 0
      %v1459 = vsel %vm1451, %v1420, 0
      %v1462 = vsel %vm1451, %v1421, 0
      %v1465 = vsel %vm1451, %v1422, 0
      %v1468 = vsel %vm1451, %v1423, 0
      %v1471 = vsel %vm1451, %v1424, 0
      %v1474 = vsel %vm1451, %v1425, 0
      %v1477 = vsel %vm1451, %v1426, 0
      %v1480 = vsel %vm1451, %v1427, 0
      %v1483 = vsel %vm1451, %v1428, 0
      %v1486 = vsel %vm1451, %v1429, 0
      %v1489 = vsel %vm1451, %v1430, 0
      %v1492 = vsel %vm1451, %v1431, 0
      %v1495 = vsel %vm1451, %v1432, 0
      %v1498 = vsel %vm1451, %v1433, 0
      %v1501 = vsel %vm1451, %v1434, 0
      %v1504 = vsel %vm1451, %v1435, 0
      %v1507 = vsel %vm1451, %v1436, 0
      %v1510 = vsel %vm1451, %v1437, 0
      %v1513 = vsel %vm1451, %v1438, 0
      %v1516 = vsel %vm1451, %v1439, 0
      %v1519 = vsel %vm1451, %v1440, 0
      %v1522 = vsel %vm1451, %v1441, 0
      %vm1524 = vcmask 1043456
      %v1526 = vsel %vm1524, %v1446, 0
      %1528 = vmatpush.msra.mxu0 0.0
      %1529 = vmatpush.msra.mxu0 0.0
      %1530 = vmatpush.msra.mxu0 0.0
      %1531 = vmatpush.msra.mxu0 0.0
      %1532 = vmatpush.msra.mxu0 0.0
      %1533 = vmatpush.msra.mxu0 0.0
      %1534 = vmatpush.msra.mxu0 0.0
      %1535 = vmatpush.msra.mxu0 0.0
      %1536 = vmatpush.msra.mxu0 0.0
      %1537 = vmatpush.msra.mxu0 0.0
      %1538 = vmatpush.msra.mxu0 0.0
      %1539 = vmatpush.msra.mxu0 %v1526
      %1540 = vmatpush.msra.mxu0 %v1445
      %1541 = vmatpush.msra.mxu0 %v1444
      %1542 = vmatpush.msra.mxu0 %v1443
      %1543 = vmatpush.msra.mxu0 %v1442
      %1544 = vmatmul.f32.gmra.mxu0 %v1453
      %v1545 = vpop.f32.mrf.mxu0
      %v1546 = vadd.f32 %v1449, %v1545
      %1547 = vmatmul.f32.gmra.mxu0 %v1456
      %v1548 = vpop.f32.mrf.mxu0
      %v1549 = vadd.f32 %v1449, %v1548
      %1550 = vmatmul.f32.gmra.mxu0 %v1459
      %v1551 = vpop.f32.mrf.mxu0
      %v1552 = vadd.f32 %v1449, %v1551
      %1553 = vmatmul.f32.gmra.mxu0 %v1462
      %v1554 = vpop.f32.mrf.mxu0
      %v1555 = vadd.f32 %v1449, %v1554
      %1556 = vmatmul.f32.gmra.mxu0 %v1465
      %v1557 = vpop.f32.mrf.mxu0
      %v1558 = vadd.f32 %v1449, %v1557
      %1559 = vmatmul.f32.gmra.mxu0 %v1468
      %v1560 = vpop.f32.mrf.mxu0
      %v1561 = vadd.f32 %v1449, %v1560
      %1562 = vmatmul.f32.gmra.mxu0 %v1471
      %v1563 = vpop.f32.mrf.mxu0
      %v1564 = vadd.f32 %v1449, %v1563
      %1565 = vmatmul.f32.gmra.mxu0 %v1474
      %v1566 = vpop.f32.mrf.mxu0
      %v1567 = vadd.f32 %v1449, %v1566
      %1568 = vmatmul.f32.gmra.mxu0 %v1477
      %v1569 = vpop.f32.mrf.mxu0
      %v1570 = vadd.f32 %v1449, %v1569
      %1571 = vmatmul.f32.gmra.mxu0 %v1480
      %v1572 = vpop.f32.mrf.mxu0
      %v1573 = vadd.f32 %v1449, %v1572
      %1574 = vmatmul.f32.gmra.mxu0 %v1483
      %v1575 = vpop.f32.mrf.mxu0
      %v1576 = vadd.f32 %v1449, %v1575
      %1577 = vmatmul.f32.gmra.mxu0 %v1486
      %v1578 = vpop.f32.mrf.mxu0
      %v1579 = vadd.f32 %v1449, %v1578
      %1580 = vmatmul.f32.gmra.mxu0 %v1489
      %v1581 = vpop.f32.mrf.mxu0
      %v1582 = vadd.f32 %v1449, %v1581
      %1583 = vmatmul.f32.gmra.mxu0 %v1492
      %v1584 = vpop.f32.mrf.mxu0
      %v1585 = vadd.f32 %v1449, %v1584
      %1586 = vmatmul.f32.gmra.mxu0 %v1495
      %v1587 = vpop.f32.mrf.mxu0
      %v1588 = vadd.f32 %v1449, %v1587
      %1589 = vmatmul.f32.gmra.mxu0 %v1498
      %v1590 = vpop.f32.mrf.mxu0
      %v1591 = vadd.f32 %v1449, %v1590
      %1592 = vmatmul.f32.gmra.mxu0 %v1501
      %v1593 = vpop.f32.mrf.mxu0
      %v1594 = vadd.f32 %v1449, %v1593
      %1595 = vmatmul.f32.gmra.mxu0 %v1504
      %v1596 = vpop.f32.mrf.mxu0
      %v1597 = vadd.f32 %v1449, %v1596
      %1598 = vmatmul.f32.gmra.mxu0 %v1507
      %v1599 = vpop.f32.mrf.mxu0
      %v1600 = vadd.f32 %v1449, %v1599
      %1601 = vmatmul.f32.gmra.mxu0 %v1510
      %v1602 = vpop.f32.mrf.mxu0
      %v1603 = vadd.f32 %v1449, %v1602
      %1604 = vmatmul.f32.gmra.mxu0 %v1513
      %v1605 = vpop.f32.mrf.mxu0
      %v1606 = vadd.f32 %v1449, %v1605
      %1607 = vmatmul.f32.gmra.mxu0 %v1516
      %v1608 = vpop.f32.mrf.mxu0
      %v1609 = vadd.f32 %v1449, %v1608
      %1610 = vmatmul.f32.gmra.mxu0 %v1519
      %v1611 = vpop.f32.mrf.mxu0
      %v1612 = vadd.f32 %v1449, %v1611
      %1613 = vmatmul.f32.gmra.mxu0 %v1522
      %v1614 = vpop.f32.mrf.mxu0
      %v1615 = vadd.f32 %v1449, %v1614
      %1616 = vdwg.mxu0
      %vm1617 = vcmp.gt.f32.partialorder %v1546, 0.0
      %vm1618 = vcmp.gt.f32.partialorder %v1549, 0.0
      %vm1619 = vcmp.gt.f32.partialorder %v1552, 0.0
      %vm1620 = vcmp.gt.f32.partialorder %v1555, 0.0
      %vm1621 = vcmp.gt.f32.partialorder %v1558, 0.0
      %vm1622 = vcmp.gt.f32.partialorder %v1561, 0.0
      %vm1623 = vcmp.gt.f32.partialorder %v1564, 0.0
      %vm1624 = vcmp.gt.f32.partialorder %v1567, 0.0
      %vm1625 = vcmp.gt.f32.partialorder %v1570, 0.0
      %vm1626 = vcmp.gt.f32.partialorder %v1573, 0.0
      %vm1627 = vcmp.gt.f32.partialorder %v1576, 0.0
      %vm1628 = vcmp.gt.f32.partialorder %v1579, 0.0
      %vm1629 = vcmp.gt.f32.partialorder %v1582, 0.0
      %vm1630 = vcmp.gt.f32.partialorder %v1585, 0.0
      %vm1631 = vcmp.gt.f32.partialorder %v1588, 0.0
      %vm1632 = vcmp.gt.f32.partialorder %v1591, 0.0
      %vm1633 = vcmp.gt.f32.partialorder %v1594, 0.0
      %vm1634 = vcmp.gt.f32.partialorder %v1597, 0.0
      %vm1635 = vcmp.gt.f32.partialorder %v1600, 0.0
      %vm1636 = vcmp.gt.f32.partialorder %v1603, 0.0
      %vm1637 = vcmp.gt.f32.partialorder %v1606, 0.0
      %vm1638 = vcmp.gt.f32.partialorder %v1609, 0.0
      %vm1639 = vcmp.gt.f32.partialorder %v1612, 0.0
      %vm1640 = vcmp.gt.f32.partialorder %v1615, 0.0
      %v1641 = vmul.f32 %v1546, 0.1
      %v1642 = vmul.f32 %v1549, 0.1
      %v1643 = vmul.f32 %v1552, 0.1
      %v1644 = vmul.f32 %v1555, 0.1
      %v1645 = vmul.f32 %v1558, 0.1
      %v1646 = vmul.f32 %v1561, 0.1
      %v1647 = vmul.f32 %v1564, 0.1
      %v1648 = vmul.f32 %v1567, 0.1
      %v1649 = vmul.f32 %v1570, 0.1
      %v1650 = vmul.f32 %v1573, 0.1
      %v1651 = vmul.f32 %v1576, 0.1
      %v1652 = vmul.f32 %v1579, 0.1
      %v1653 = vmul.f32 %v1582, 0.1
      %v1654 = vmul.f32 %v1585, 0.1
      %v1655 = vmul.f32 %v1588, 0.1
      %v1656 = vmul.f32 %v1591, 0.1
      %v1657 = vmul.f32 %v1594, 0.1
      %v1658 = vmul.f32 %v1597, 0.1
      %v1659 = vmul.f32 %v1600, 0.1
      %v1660 = vmul.f32 %v1603, 0.1
      %v1661 = vmul.f32 %v1606, 0.1
      %v1662 = vmul.f32 %v1609, 0.1
      %v1663 = vmul.f32 %v1612, 0.1
      %v1664 = vmul.f32 %v1615, 0.1
      %v1665 = vsel %vm1617, %v1546, %v1641
      %v1666 = vsel %vm1618, %v1549, %v1642
      %v1667 = vsel %vm1619, %v1552, %v1643
      %v1668 = vsel %vm1620, %v1555, %v1644
      %v1669 = vsel %vm1621, %v1558, %v1645
      %v1670 = vsel %vm1622, %v1561, %v1646
      %v1671 = vsel %vm1623, %v1564, %v1647
      %v1672 = vsel %vm1624, %v1567, %v1648
      %v1673 = vsel %vm1625, %v1570, %v1649
      %v1674 = vsel %vm1626, %v1573, %v1650
      %v1675 = vsel %vm1627, %v1576, %v1651
      %v1676 = vsel %vm1628, %v1579, %v1652
      %v1677 = vsel %vm1629, %v1582, %v1653
      %v1678 = vsel %vm1630, %v1585, %v1654
      %v1679 = vsel %vm1631, %v1588, %v1655
      %v1680 = vsel %vm1632, %v1591, %v1656
      %v1681 = vsel %vm1633, %v1594, %v1657
      %v1682 = vsel %vm1634, %v1597, %v1658
      %v1683 = vsel %vm1635, %v1600, %v1659
      %v1684 = vsel %vm1636, %v1603, %v1660
      %v1685 = vsel %vm1637, %v1606, %v1661
      %v1686 = vsel %vm1638, %v1609, %v1662
      %v1687 = vsel %vm1639, %v1612, %v1663
      %v1688 = vsel %vm1640, %v1615, %v1664
      %1689 = vst [vmem:[%s206] sm:$0xff] %v1665
      %1690 = vst [vmem:[%s206 + $0x8] sm:$0xff] %v1666
      %1691 = vst [vmem:[%s206 + $0x10] sm:$0xff] %v1667
      %1692 = vst [vmem:[%s206 + $0x18] sm:$0xff] %v1668
      %1693 = vst [vmem:[%s206 + $0x20] sm:$0xff] %v1669
      %1694 = vst [vmem:[%s206 + $0x28] sm:$0xff] %v1670
      %1695 = vst [vmem:[%s206 + $0x30] sm:$0xff] %v1671
      %1696 = vst [vmem:[%s206 + $0x38] sm:$0xff] %v1672
      %1697 = vst [vmem:[%s206 + $0x40] sm:$0xff] %v1673
      %1698 = vst [vmem:[%s206 + $0x48] sm:$0xff] %v1674
      %1699 = vst [vmem:[%s206 + $0x50] sm:$0xff] %v1675
      %1700 = vst [vmem:[%s206 + $0x58] sm:$0xff] %v1676
      %1701 = vst [vmem:[%s206 + $0x60] sm:$0xff] %v1677
      %1702 = vst [vmem:[%s206 + $0x68] sm:$0xff] %v1678
      %1703 = vst [vmem:[%s206 + $0x70] sm:$0xff] %v1679
      %1704 = vst [vmem:[%s206 + $0x78] sm:$0xff] %v1680
      %1705 = vst [vmem:[%s206 + $0x80] sm:$0xff] %v1681
      %1706 = vst [vmem:[%s206 + $0x88] sm:$0xff] %v1682
      %1707 = vst [vmem:[%s206 + $0x90] sm:$0xff] %v1683
      %1708 = vst [vmem:[%s206 + $0x98] sm:$0xff] %v1684
      %1709 = vst [vmem:[%s206 + $0xa0] sm:$0xff] %v1685
      %1710 = vst [vmem:[%s206 + $0xa8] sm:$0xff] %v1686
      %1711 = vst [vmem:[%s206 + $0xb0] sm:$0xff] %v1687
      %1712 = vst [vmem:[%s206 + $0xb8] sm:$0xff] %v1688
      %p1713 = scmp.lt.s32.totalorder %s18, 1
      %s1714 = scalar_select %p1713, %s18, 1
      %p1715 = scmp.lt.s32.totalorder %s19, 0
      %s1716 = scalar_select %p1715, %s19, 0
      %s1717 = smul.addr %s1716, 24
      %s1718 = smul.addr %s1714, 24
      %s1719 = sadd.s32 %s1717, %s1718
      %s1720 = smul.addr %s1719, 8
      %s1721 = scalar_lea.vmem %s3, %s1720
      // Predicated region
      $region33: #{discriminator_r_forward.8} parent=31 // pred_check
        %p1722 = pneg %p116
      $region34: #{discriminator_r_forward.8} parent=31 // pred_check_branch
        %1724 = sbr.rel (%p1722) target = $region36
      $region35: #{discriminator_r_forward.8} parent=31 // pred_region
        _
      $region36: #{discriminator_r_forward.8} parent=31 // pred_fallthru
        _
    $region32: #{discriminator_r_forward.8} parent=5 // pred_fallthru
      _
    %p1725 = scmp.le.s32.totalorder 2, %s9
    // Predicated region
    $region37: #{discriminator_r_forward.8} parent=5 // pred_check
      %p1726 = pneg %p1725
    $region38: #{discriminator_r_forward.8} parent=5 // pred_check_branch
      %1728 = sbr.rel (%p1726) target = $region40
    $region39: #{discriminator_r_forward.8} parent=5 // pred_region
      %s1729 = ssub.s32 %s9, 2
      // Predicated region
      $region41: #{discriminator_r_forward.8} parent=39 // pred_check
        %p1730 = pneg %p122
      $region42: #{discriminator_r_forward.8} parent=39 // pred_check_branch
        %1732 = sbr.rel (%p1730) target = $region44
      $region43: #{discriminator_r_forward.8} parent=39 // pred_region
        %p1733 = scmp.lt.s32.totalorder %s20, 1
        %s1734 = scalar_select %p1733, %s20, 1
        %p1735 = scmp.lt.s32.totalorder %s21, 0
        %s1736 = scalar_select %p1735, %s21, 0
        %s1737 = smul.addr %s1736, 24
        %s1738 = smul.addr %s1734, 24
        %s1739 = sadd.s32 %s1737, %s1738
        %s1740 = smul.addr %s1739, 8
        %s1741 = scalar_lea.vmem %s3, %s1740
      $region44: #{discriminator_r_forward.8} parent=39 // pred_fallthru
        _
    $region40: #{discriminator_r_forward.8} parent=5 // pred_fallthru
      _
  $region6: #{discriminator_r_forward.8} parent=0 // loop_footer
    %s13 = sadd.s32 1, %s9
  $region7: #{discriminator_r_forward.8} parent=0 // loop_footer_branch
    %8 = sbr.rel target = $region3
  $region8: #{discriminator_r_forward.8} parent=0 // loop_exit
    _

// kernel: discriminator_r_forward.9
$region0: #{discriminator_r_forward.9}
  #allocation0 [shape = 'u32[]', space=smem, size = 0x4, offset = 0x4, fixed_abs, tag = 'smem constant byte address 0x4 - core index']
  #allocation1 [shape = 'u32[72,128]{1,0:T(1,128)}', space=vmem, size = 0x9000, scoped, tag = 'internal scratch']
  #allocation2 [shape = 'f32[192,1536]{1,0:T(8,128)}', space=vmem, size = 0x120000, scoped, tag = 'scratch operand']
  %s0 = inlined_call_operand.vmem [shape: f32[2,1,26,9,256], index: 0, kind: input, shape index: {}]
  %s1 = inlined_call_operand.vmem [shape: f32[1536,128], index: 1, kind: input, shape index: {}]
  %s2 = inlined_call_operand.vmem [shape: f32[1,128], index: 2, kind: input, shape index: {}]
  %s3 = inlined_call_operand.vmem [shape: f32[2,1,24,8,128], index: 3, kind: output, shape index: {}]
  %s4 = sld [smem:[#allocation0]]
  $region45: #{discriminator_r_forward.9} parent=0
    _
  %s6 = ssub.s32 1, %s4
  %s7 = scalar_select 0, %s6, %s4
  loop: start=0, step=1, limit=4
  $region2: #{discriminator_r_forward.9} parent=0 // loop_pre_header
    _
  $region3: #{discriminator_r_forward.9} parent=0 // loop_header
    %s9 = sphi 0, %s13
    %p10 = scmp.ge.s32.totalorder %s9, 4
    %s16 = sphi 0, %s28
    %s17 = sphi 0, %s24
    %s18 = sphi 0, %s16
    %s19 = sphi 0, %s17
    %s20 = sphi 0, %s18
    %s21 = sphi 0, %s19
    %s33 = sphi 0, %s35
    %s36 = sphi 0, %s33
    %s37 = sphi 0, %s36
    %s53 = sphi 0, %s37
    %s57 = sphi 0, %s57
    %s59 = sphi 0, %s57
    %s60 = sphi 0, %s59
    %s74 = sphi 0, %s60
    %s78 = sphi 0, %s78
    %s80 = sphi 0, %s78
    %s81 = sphi 0, %s80
    %s95 = sphi 0, %s81
    %s103 = sphi 0, %s105
    %s106 = sphi 0, %s103
    %s107 = sphi 0, %s106
    %s123 = sphi 0, %s107
  $region4: #{discriminator_r_forward.9} parent=0 // loop_header_branch
    %12 = sbr.rel (%p10) target = $region8
  $region5: #{discriminator_r_forward.9} parent=0 // loop_body
    %s14 = ssub.s32 %s9, 1
    %s15 = ssub.s32 %s9, 2
    %s22 = sadd.s32 1, %s17
    %p23 = scmp.ge.s32.totalorder %s22, 1
    %s24 = scalar_select %p23, 0, %s22
    %s25 = sadd.s32 1, %s16
    %s26 = scalar_select %p23, %s25, %s16
    %p27 = scmp.ge.s32.totalorder %s26, 2
    %s28 = scalar_select %p27, 0, %s26
    %s29 = ssub.s32 %s16, %s28
    %s30 = ssub.s32 %s17, %s24
    %s31 = sor.u32 %s29, %s30
    %p32 = scmp.eq.s32.totalorder %s31, 0
    %s34 = sadd.s32 %s33, 1
    %s35 = scalar_select %p32, %s33, %s34
    %p38 = pneg %p32
    %p39 = scmp.eq.s32.totalorder %s9, 1
    %p40 = por %p38, %p39
    %p41 = scmp.ne.s32.totalorder %s33, %s36
    %p42 = scmp.eq.s32.totalorder %s9, 0
    %p43 = por %p41, %p42
    %p44 = scmp.ne.s32.totalorder %s33, %s36
    %p45 = scmp.eq.s32.totalorder %s14, 1
    %p46 = por %p44, %p45
    %p47 = scmp.ne.s32.totalorder %s36, %s37
    %p48 = scmp.eq.s32.totalorder %s14, 0
    %p49 = por %p47, %p48
    %p50 = scmp.ne.s32.totalorder %s36, %s37
    %p51 = scmp.eq.s32.totalorder %s15, 1
    %p52 = por %p50, %p51
    %p54 = scmp.ne.s32.totalorder %s37, %s53
    %p55 = scmp.eq.s32.totalorder %s15, 0
    %p56 = por %p54, %p55
    %s58 = sadd.s32 %s57, 1
    %p61 = scmp.eq.s32.totalorder %s9, 1
    %p62 = scmp.ne.s32.totalorder %s57, %s59
    %p63 = scmp.eq.s32.totalorder %s9, 0
    %p64 = por %p62, %p63
    %p65 = scmp.ne.s32.totalorder %s57, %s59
    %p66 = scmp.eq.s32.totalorder %s14, 1
    %p67 = por %p65, %p66
    %p68 = scmp.ne.s32.totalorder %s59, %s60
    %p69 = scmp.eq.s32.totalorder %s14, 0
    %p70 = por %p68, %p69
    %p71 = scmp.ne.s32.totalorder %s59, %s60
    %p72 = scmp.eq.s32.totalorder %s15, 1
    %p73 = por %p71, %p72
    %p75 = scmp.ne.s32.totalorder %s60, %s74
    %p76 = scmp.eq.s32.totalorder %s15, 0
    %p77 = por %p75, %p76
    %s79 = sadd.s32 %s78, 1
    %p82 = scmp.eq.s32.totalorder %s9, 1
    %p83 = scmp.ne.s32.totalorder %s78, %s80
    %p84 = scmp.eq.s32.totalorder %s9, 0
    %p85 = por %p83, %p84
    %p86 = scmp.ne.s32.totalorder %s78, %s80
    %p87 = scmp.eq.s32.totalorder %s14, 1
    %p88 = por %p86, %p87
    %p89 = scmp.ne.s32.totalorder %s80, %s81
    %p90 = scmp.eq.s32.totalorder %s14, 0
    %p91 = por %p89, %p90
    %p92 = scmp.ne.s32.totalorder %s80, %s81
    %p93 = scmp.eq.s32.totalorder %s15, 1
    %p94 = por %p92, %p93
    %p96 = scmp.ne.s32.totalorder %s81, %s95
    %p97 = scmp.eq.s32.totalorder %s15, 0
    %p98 = por %p96, %p97
    %s99 = ssub.s32 %s16, %s28
    %s100 = ssub.s32 %s17, %s24
    %s101 = sor.u32 %s99, %s100
    %p102 = scmp.eq.s32.totalorder %s101, 0
    %s104 = sadd.s32 %s103, 1
    %s105 = scalar_select %p102, %s103, %s104
    %p108 = pneg %p102
    %p109 = scmp.eq.s32.totalorder %s9, 1
    %p110 = por %p108, %p109
    %p111 = scmp.ne.s32.totalorder %s103, %s106
    %p112 = scmp.eq.s32.totalorder %s9, 0
    %p113 = por %p111, %p112
    %p114 = scmp.ne.s32.totalorder %s103, %s106
    %p115 = scmp.eq.s32.totalorder %s14, 1
    %p116 = por %p114, %p115
    %p117 = scmp.ne.s32.totalorder %s106, %s107
    %p118 = scmp.eq.s32.totalorder %s14, 0
    %p119 = por %p117, %p118
    %p120 = scmp.ne.s32.totalorder %s106, %s107
    %p121 = scmp.eq.s32.totalorder %s15, 1
    %p122 = por %p120, %p121
    %p124 = scmp.ne.s32.totalorder %s107, %s123
    %p125 = scmp.eq.s32.totalorder %s15, 0
    %p126 = por %p124, %p125
    %p127 = scmp.le.s32.totalorder 1, %s9
    %p128 = scmp.lt.s32.totalorder %s9, 3
    %p129 = pnand %p127, %p128
    %p130 = pneg %p129
    // Predicated region
    $region9: #{discriminator_r_forward.9} parent=5 // pred_check
      _
    $region10: #{discriminator_r_forward.9} parent=5 // pred_check_branch
      %132 = sbr.rel (%p129) target = $region12
    $region11: #{discriminator_r_forward.9} parent=5 // pred_region
      %s133 = ssub.s32 %s9, 1
      // Predicated region
      $region13: #{discriminator_r_forward.9} parent=11 // pred_check
        %p134 = pneg %p70
      $region14: #{discriminator_r_forward.9} parent=11 // pred_check_branch
        %136 = sbr.rel (%p134) target = $region16
      $region15: #{discriminator_r_forward.9} parent=11 // pred_region
        _
      $region16: #{discriminator_r_forward.9} parent=11 // pred_fallthru
        _
      // Predicated region
      $region17: #{discriminator_r_forward.9} parent=11 // pred_check
        %p137 = pneg %p91
      $region18: #{discriminator_r_forward.9} parent=11 // pred_check_branch
        %139 = sbr.rel (%p137) target = $region20
      $region19: #{discriminator_r_forward.9} parent=11 // pred_region
        _
      $region20: #{discriminator_r_forward.9} parent=11 // pred_fallthru
        _
    $region12: #{discriminator_r_forward.9} parent=5 // pred_fallthru
      _
    %p140 = scmp.lt.s32.totalorder %s9, 2
    // Predicated region
    $region21: #{discriminator_r_forward.9} parent=5 // pred_check
      %p141 = pneg %p140
    $region22: #{discriminator_r_forward.9} parent=5 // pred_check_branch
      %143 = sbr.rel (%p141) target = $region24
    $region23: #{discriminator_r_forward.9} parent=5 // pred_region
      // Predicated region
      $region25: #{discriminator_r_forward.9} parent=23 // pred_check
        %p144 = pneg %p43
      $region26: #{discriminator_r_forward.9} parent=23 // pred_check_branch
        %146 = sbr.rel (%p144) target = $region28
      $region27: #{discriminator_r_forward.9} parent=23 // pred_region
        %p147 = scmp.lt.s32.totalorder %s16, 1
        %s148 = scalar_select %p147, %s16, 1
        %p149 = scmp.lt.s32.totalorder %s17, 0
        %s150 = scalar_select %p149, %s17, 0
        %s151 = smul.addr %s150, 104
        %s152 = smul.addr %s148, 104
        %s153 = sadd.s32 %s151, %s152
        %s154 = smul.addr %s153, 8
        %s155 = scalar_lea.vmem %s0, %s154
      $region28: #{discriminator_r_forward.9} parent=23 // pred_fallthru
        _
    $region24: #{discriminator_r_forward.9} parent=5 // pred_fallthru
      _
    %p156 = scmp.le.s32.totalorder 1, %s9
    %p157 = scmp.lt.s32.totalorder %s9, 3
    %p158 = pnand %p156, %p157
    %p159 = pneg %p158
    // Predicated region
    $region29: #{discriminator_r_forward.9} parent=5 // pred_check
      _
    $region30: #{discriminator_r_forward.9} parent=5 // pred_check_branch
      %161 = sbr.rel (%p158) target = $region32
    $region31: #{discriminator_r_forward.9} parent=5 // pred_region
      %s162 = ssub.s32 %s9, 1
      %p163 = scmp.lt.s32.totalorder %s18, 1
      %s164 = scalar_select %p163, %s18, 1
      %p165 = scmp.lt.s32.totalorder %s19, 0
      %s166 = scalar_select %p165, %s19, 0
      %s167 = smul.addr %s166, 104
      %s168 = smul.addr %s164, 104
      %s169 = sadd.s32 %s167, %s168
      %s170 = smul.addr %s169, 8
      %s171 = scalar_lea.vmem %s0, %s170
      %p172 = pneg %p49
      %p173 = pneg %p46
      %p174 = pneg %p70
      %p175 = pneg %p67
      %p176 = pneg %p91
      %p177 = pneg %p88
      %p178 = pneg %p119
      %p179 = pneg %p116
      %p180 = scmp.lt.s32.totalorder %s18, 1
      %s181 = scalar_select %p180, %s18, 1
      %p182 = scmp.lt.s32.totalorder %s19, 0
      %s183 = scalar_select %p182, %s19, 0
      %s184 = smul.addr %s183, 24
      %s185 = smul.addr %s181, 24
      %s186 = sadd.s32 %s184, %s185
      %s187 = smul.addr %s186, 8
      %s188 = scalar_lea.vmem %s3, %s187
      %p189 = scmp.lt.s32.totalorder %s18, 1
      %s190 = scalar_select %p189, %s18, 1
      %p191 = scmp.lt.s32.totalorder %s19, 0
      %s192 = scalar_select %p191, %s19, 0
      %s193 = smul.addr %s192, 104
      %s194 = smul.addr %s190, 104
      %s195 = sadd.s32 %s193, %s194
      %s196 = smul.addr %s195, 8
      %s197 = scalar_lea.vmem %s0, %s196
      %p198 = scmp.lt.s32.totalorder %s18, 1
      %s199 = scalar_select %p198, %s18, 1
      %p200 = scmp.lt.s32.totalorder %s19, 0
      %s201 = scalar_select %p200, %s19, 0
      %s202 = smul.addr %s201, 24
      %s203 = smul.addr %s199, 24
      %s204 = sadd.s32 %s202, %s203
      %s205 = smul.addr %s204, 8
      %s206 = scalar_lea.vmem %s3, %s205
      %v207 = vld [vmem:[%s197] sm:$0xff]
      %v208 = vld [vmem:[%s197 + $0x8] sm:$0xff]
      %v209 = vld [vmem:[%s197 + $0x20] sm:$0xff]
      %v210 = vld [vmem:[%s197 + $0x28] sm:$0xff]
      %v211 = vld [vmem:[%s197 + $0x40] sm:$0xff]
      %v212 = vld [vmem:[%s197 + $0x48] sm:$0xff]
      %v213 = vld [vmem:[%s197 + $0x60] sm:$0xff]
      %v214 = vld [vmem:[%s197 + $0x68] sm:$0xff]
      %v215 = vld [vmem:[%s197 + $0x80] sm:$0xff]
      %v216 = vld [vmem:[%s197 + $0x88] sm:$0xff]
      %v217 = vld [vmem:[%s197 + $0xa0] sm:$0xff]
      %v218 = vld [vmem:[%s197 + $0xa8] sm:$0xff]
      %v219 = vld [vmem:[%s197 + $0xc0] sm:$0xff]
      %v220 = vld [vmem:[%s197 + $0xc8] sm:$0xff]
      %v221 = vld [vmem:[%s197 + $0xe0] sm:$0xff]
      %v222 = vld [vmem:[%s197 + $0xe8] sm:$0xff]
      %v223 = vld [vmem:[%s197 + $0x100] sm:$0xff]
      %v224 = vld [vmem:[%s197 + $0x108] sm:$0xff]
      %v225 = vld [vmem:[%s197 + $0x120] sm:$0xff]
      %v226 = vld [vmem:[%s197 + $0x128] sm:$0xff]
      %v227 = vld [vmem:[%s197 + $0x140] sm:$0xff]
      %v228 = vld [vmem:[%s197 + $0x148] sm:$0xff]
      %v229 = vld [vmem:[%s197 + $0x160] sm:$0xff]
      %v230 = vld [vmem:[%s197 + $0x168] sm:$0xff]
      %v231 = vld [vmem:[%s197 + $0x180] sm:$0xff]
      %v232 = vld [vmem:[%s197 + $0x188] sm:$0xff]
      %v233 = vld [vmem:[%s197 + $0x1a0] sm:$0xff]
      %v234 = vld [vmem:[%s197 + $0x1a8] sm:$0xff]
      %v235 = vld [vmem:[%s197 + $0x1c0] sm:$0xff]
      %v236 = vld [vmem:[%s197 + $0x1c8] sm:$0xff]
      %v237 = vld [vmem:[%s197 + $0x1e0] sm:$0xff]
      %v238 = vld [vmem:[%s197 + $0x1e8] sm:$0xff]
      %v239 = vld [vmem:[%s197 + $0x200] sm:$0xff]
      %v240 = vld [vmem:[%s197 + $0x208] sm:$0xff]
      %v241 = vld [vmem:[%s197 + $0x220] sm:$0xff]
      %v242 = vld [vmem:[%s197 + $0x228] sm:$0xff]
      %v243 = vld [vmem:[%s197 + $0x240] sm:$0xff]
      %v244 = vld [vmem:[%s197 + $0x248] sm:$0xff]
      %v245 = vld [vmem:[%s197 + $0x260] sm:$0xff]
      %v246 = vld [vmem:[%s197 + $0x268] sm:$0xff]
      %v247 = vld [vmem:[%s197 + $0x280] sm:$0xff]
      %v248 = vld [vmem:[%s197 + $0x288] sm:$0xff]
      %v249 = vld [vmem:[%s197 + $0x2a0] sm:$0xff]
      %v250 = vld [vmem:[%s197 + $0x2a8] sm:$0xff]
      %v251 = vld [vmem:[%s197 + $0x2c0] sm:$0xff]
      %v252 = vld [vmem:[%s197 + $0x2c8] sm:$0xff]
      %v253 = vld [vmem:[%s197 + $0x2e0] sm:$0xff]
      %v254 = vld [vmem:[%s197 + $0x2e8] sm:$0xff]
      %255 = vst [vmem:[#allocation2] sm:$0xff] %v207
      %256 = vst [vmem:[#allocation2 + $0x8] sm:$0xff] %v208
      %257 = vst [vmem:[#allocation2 + $0x60] sm:$0xff] %v209
      %258 = vst [vmem:[#allocation2 + $0x68] sm:$0xff] %v210
      %259 = vst [vmem:[#allocation2 + $0xc0] sm:$0xff] %v211
      %260 = vst [vmem:[#allocation2 + $0xc8] sm:$0xff] %v212
      %261 = vst [vmem:[#allocation2 + $0x120] sm:$0xff] %v213
      %262 = vst [vmem:[#allocation2 + $0x128] sm:$0xff] %v214
      %263 = vst [vmem:[#allocation2 + $0x180] sm:$0xff] %v215
      %264 = vst [vmem:[#allocation2 + $0x188] sm:$0xff] %v216
      %265 = vst [vmem:[#allocation2 + $0x1e0] sm:$0xff] %v217
      %266 = vst [vmem:[#allocation2 + $0x1e8] sm:$0xff] %v218
      %267 = vst [vmem:[#allocation2 + $0x240] sm:$0xff] %v219
      %268 = vst [vmem:[#allocation2 + $0x248] sm:$0xff] %v220
      %269 = vst [vmem:[#allocation2 + $0x2a0] sm:$0xff] %v221
      %270 = vst [vmem:[#allocation2 + $0x2a8] sm:$0xff] %v222
      %271 = vst [vmem:[#allocation2 + $0x300] sm:$0xff] %v223
      %272 = vst [vmem:[#allocation2 + $0x308] sm:$0xff] %v224
      %273 = vst [vmem:[#allocation2 + $0x360] sm:$0xff] %v225
      %274 = vst [vmem:[#allocation2 + $0x368] sm:$0xff] %v226
      %275 = vst [vmem:[#allocation2 + $0x3c0] sm:$0xff] %v227
      %276 = vst [vmem:[#allocation2 + $0x3c8] sm:$0xff] %v228
      %277 = vst [vmem:[#allocation2 + $0x420] sm:$0xff] %v229
      %278 = vst [vmem:[#allocation2 + $0x428] sm:$0xff] %v230
      %279 = vst [vmem:[#allocation2 + $0x480] sm:$0xff] %v231
      %280 = vst [vmem:[#allocation2 + $0x488] sm:$0xff] %v232
      %281 = vst [vmem:[#allocation2 + $0x4e0] sm:$0xff] %v233
      %282 = vst [vmem:[#allocation2 + $0x4e8] sm:$0xff] %v234
      %283 = vst [vmem:[#allocation2 + $0x540] sm:$0xff] %v235
      %284 = vst [vmem:[#allocation2 + $0x548] sm:$0xff] %v236
      %285 = vst [vmem:[#allocation2 + $0x5a0] sm:$0xff] %v237
      %286 = vst [vmem:[#allocation2 + $0x5a8] sm:$0xff] %v238
      %287 = vst [vmem:[#allocation2 + $0x600] sm:$0xff] %v239
      %288 = vst [vmem:[#allocation2 + $0x608] sm:$0xff] %v240
      %289 = vst [vmem:[#allocation2 + $0x660] sm:$0xff] %v241
      %290 = vst [vmem:[#allocation2 + $0x668] sm:$0xff] %v242
      %291 = vst [vmem:[#allocation2 + $0x6c0] sm:$0xff] %v243
      %292 = vst [vmem:[#allocation2 + $0x6c8] sm:$0xff] %v244
      %293 = vst [vmem:[#allocation2 + $0x720] sm:$0xff] %v245
      %294 = vst [vmem:[#allocation2 + $0x728] sm:$0xff] %v246
      %295 = vst [vmem:[#allocation2 + $0x780] sm:$0xff] %v247
      %296 = vst [vmem:[#allocation2 + $0x788] sm:$0xff] %v248
      %297 = vst [vmem:[#allocation2 + $0x7e0] sm:$0xff] %v249
      %298 = vst [vmem:[#allocation2 + $0x7e8] sm:$0xff] %v250
      %299 = vst [vmem:[#allocation2 + $0x840] sm:$0xff] %v251
      %300 = vst [vmem:[#allocation2 + $0x848] sm:$0xff] %v252
      %301 = vst [vmem:[#allocation2 + $0x8a0] sm:$0xff] %v253
      %302 = vst [vmem:[#allocation2 + $0x8a8] sm:$0xff] %v254
      %v303 = vld [vmem:[%s197] sm:$0xfe]
      %v304 = vld [vmem:[%s197 + $0x8] sm:$0xfe]
      %v305 = vld [vmem:[%s197 + $0x10] sm:$0x1]
      %v306 = vld [vmem:[%s197 + $0x18] sm:$0x1]
      %v307 = vld [vmem:[%s197 + $0x20] sm:$0xfe]
      %v308 = vld [vmem:[%s197 + $0x28] sm:$0xfe]
      %v309 = vld [vmem:[%s197 + $0x30] sm:$0x1]
      %v310 = vld [vmem:[%s197 + $0x38] sm:$0x1]
      %v311 = vld [vmem:[%s197 + $0x40] sm:$0xfe]
      %v312 = vld [vmem:[%s197 + $0x48] sm:$0xfe]
      %v313 = vld [vmem:[%s197 + $0x50] sm:$0x1]
      %v314 = vld [vmem:[%s197 + $0x58] sm:$0x1]
      %v315 = vld [vmem:[%s197 + $0x60] sm:$0xfe]
      %v316 = vld [vmem:[%s197 + $0x68] sm:$0xfe]
      %v317 = vld [vmem:[%s197 + $0x70] sm:$0x1]
      %v318 = vld [vmem:[%s197 + $0x78] sm:$0x1]
      %v319 = vld [vmem:[%s197 + $0x80] sm:$0xfe]
      %v320 = vld [vmem:[%s197 + $0x88] sm:$0xfe]
      %v321 = vld [vmem:[%s197 + $0x90] sm:$0x1]
      %v322 = vld [vmem:[%s197 + $0x98] sm:$0x1]
      %v323 = vld [vmem:[%s197 + $0xa0] sm:$0xfe]
      %v324 = vld [vmem:[%s197 + $0xa8] sm:$0xfe]
      %v325 = vld [vmem:[%s197 + $0xb0] sm:$0x1]
      %v326 = vld [vmem:[%s197 + $0xb8] sm:$0x1]
      %v327 = vld [vmem:[%s197 + $0xc0] sm:$0xfe]
      %v328 = vld [vmem:[%s197 + $0xc8] sm:$0xfe]
      %v329 = vld [vmem:[%s197 + $0xd0] sm:$0x1]
      %v330 = vld [vmem:[%s197 + $0xd8] sm:$0x1]
      %v331 = vld [vmem:[%s197 + $0xe0] sm:$0xfe]
      %v332 = vld [vmem:[%s197 + $0xe8] sm:$0xfe]
      %v333 = vld [vmem:[%s197 + $0xf0] sm:$0x1]
      %v334 = vld [vmem:[%s197 + $0xf8] sm:$0x1]
      %v335 = vld [vmem:[%s197 + $0x100] sm:$0xfe]
      %v336 = vld [vmem:[%s197 + $0x108] sm:$0xfe]
      %v337 = vld [vmem:[%s197 + $0x110] sm:$0x1]
      %v338 = vld [vmem:[%s197 + $0x118] sm:$0x1]
      %v339 = vld [vmem:[%s197 + $0x120] sm:$0xfe]
      %v340 = vld [vmem:[%s197 + $0x128] sm:$0xfe]
      %v341 = vld [vmem:[%s197 + $0x130] sm:$0x1]
      %v342 = vld [vmem:[%s197 + $0x138] sm:$0x1]
      %v343 = vld [vmem:[%s197 + $0x140] sm:$0xfe]
      %v344 = vld [vmem:[%s197 + $0x148] sm:$0xfe]
      %v345 = vld [vmem:[%s197 + $0x150] sm:$0x1]
      %v346 = vld [vmem:[%s197 + $0x158] sm:$0x1]
      %v347 = vld [vmem:[%s197 + $0x160] sm:$0xfe]
      %v348 = vld [vmem:[%s197 + $0x168] sm:$0xfe]
      %v349 = vld [vmem:[%s197 + $0x170] sm:$0x1]
      %v350 = vld [vmem:[%s197 + $0x178] sm:$0x1]
      %v351 = vld [vmem:[%s197 + $0x180] sm:$0xfe]
      %v352 = vld [vmem:[%s197 + $0x188] sm:$0xfe]
      %v353 = vld [vmem:[%s197 + $0x190] sm:$0x1]
      %v354 = vld [vmem:[%s197 + $0x198] sm:$0x1]
      %v355 = vld [vmem:[%s197 + $0x1a0] sm:$0xfe]
      %v356 = vld [vmem:[%s197 + $0x1a8] sm:$0xfe]
      %v357 = vld [vmem:[%s197 + $0x1b0] sm:$0x1]
      %v358 = vld [vmem:[%s197 + $0x1b8] sm:$0x1]
      %v359 = vld [vmem:[%s197 + $0x1c0] sm:$0xfe]
      %v360 = vld [vmem:[%s197 + $0x1c8] sm:$0xfe]
      %v361 = vld [vmem:[%s197 + $0x1d0] sm:$0x1]
      %v362 = vld [vmem:[%s197 + $0x1d8] sm:$0x1]
      %v363 = vld [vmem:[%s197 + $0x1e0] sm:$0xfe]
      %v364 = vld [vmem:[%s197 + $0x1e8] sm:$0xfe]
      %v365 = vld [vmem:[%s197 + $0x1f0] sm:$0x1]
      %v366 = vld [vmem:[%s197 + $0x1f8] sm:$0x1]
      %v367 = vld [vmem:[%s197 + $0x200] sm:$0xfe]
      %v368 = vld [vmem:[%s197 + $0x208] sm:$0xfe]
      %v369 = vld [vmem:[%s197 + $0x210] sm:$0x1]
      %v370 = vld [vmem:[%s197 + $0x218] sm:$0x1]
      %v371 = vld [vmem:[%s197 + $0x220] sm:$0xfe]
      %v372 = vld [vmem:[%s197 + $0x228] sm:$0xfe]
      %v373 = vld [vmem:[%s197 + $0x230] sm:$0x1]
      %v374 = vld [vmem:[%s197 + $0x238] sm:$0x1]
      %v375 = vld [vmem:[%s197 + $0x240] sm:$0xfe]
      %v376 = vld [vmem:[%s197 + $0x248] sm:$0xfe]
      %v377 = vld [vmem:[%s197 + $0x250] sm:$0x1]
      %v378 = vld [vmem:[%s197 + $0x258] sm:$0x1]
      %v379 = vld [vmem:[%s197 + $0x260] sm:$0xfe]
      %v380 = vld [vmem:[%s197 + $0x268] sm:$0xfe]
      %v381 = vld [vmem:[%s197 + $0x270] sm:$0x1]
      %v382 = vld [vmem:[%s197 + $0x278] sm:$0x1]
      %v383 = vld [vmem:[%s197 + $0x280] sm:$0xfe]
      %v384 = vld [vmem:[%s197 + $0x288] sm:$0xfe]
      %v385 = vld [vmem:[%s197 + $0x290] sm:$0x1]
      %v386 = vld [vmem:[%s197 + $0x298] sm:$0x1]
      %v387 = vld [vmem:[%s197 + $0x2a0] sm:$0xfe]
      %v388 = vld [vmem:[%s197 + $0x2a8] sm:$0xfe]
      %v389 = vld [vmem:[%s197 + $0x2b0] sm:$0x1]
      %v390 = vld [vmem:[%s197 + $0x2b8] sm:$0x1]
      %v391 = vld [vmem:[%s197 + $0x2c0] sm:$0xfe]
      %v392 = vld [vmem:[%s197 + $0x2c8] sm:$0xfe]
      %v393 = vld [vmem:[%s197 + $0x2d0] sm:$0x1]
      %v394 = vld [vmem:[%s197 + $0x2d8] sm:$0x1]
      %v395 = vld [vmem:[%s197 + $0x2e0] sm:$0xfe]
      %v396 = vld [vmem:[%s197 + $0x2e8] sm:$0xfe]
      %v397 = vld [vmem:[%s197 + $0x2f0] sm:$0x1]
      %v398 = vld [vmem:[%s197 + $0x2f8] sm:$0x1]
      %vm495 = vcmask 1046528
      %v496 = vrot.slane %v303, 1
      %v497 = vrot.slane %v305, 1
      %v498 = vsel %vm495, %v496, %v497
      %v499 = vrot.slane %v304, 1
      %v500 = vrot.slane %v306, 1
      %v501 = vsel %vm495, %v499, %v500
      %v502 = vrot.slane %v307, 1
      %v503 = vrot.slane %v309, 1
      %v504 = vsel %vm495, %v502, %v503
      %v505 = vrot.slane %v308, 1
      %v506 = vrot.slane %v310, 1
      %v507 = vsel %vm495, %v505, %v506
      %v508 = vrot.slane %v311, 1
      %v509 = vrot.slane %v313, 1
      %v510 = vsel %vm495, %v508, %v509
      %v511 = vrot.slane %v312, 1
      %v512 = vrot.slane %v314, 1
      %v513 = vsel %vm495, %v511, %v512
      %v514 = vrot.slane %v315, 1
      %v515 = vrot.slane %v317, 1
      %v516 = vsel %vm495, %v514, %v515
      %v517 = vrot.slane %v316, 1
      %v518 = vrot.slane %v318, 1
      %v519 = vsel %vm495, %v517, %v518
      %v520 = vrot.slane %v319, 1
      %v521 = vrot.slane %v321, 1
      %v522 = vsel %vm495, %v520, %v521
      %v523 = vrot.slane %v320, 1
      %v524 = vrot.slane %v322, 1
      %v525 = vsel %vm495, %v523, %v524
      %v526 = vrot.slane %v323, 1
      %v527 = vrot.slane %v325, 1
      %v528 = vsel %vm495, %v526, %v527
      %v529 = vrot.slane %v324, 1
      %v530 = vrot.slane %v326, 1
      %v531 = vsel %vm495, %v529, %v530
      %v532 = vrot.slane %v327, 1
      %v533 = vrot.slane %v329, 1
      %v534 = vsel %vm495, %v532, %v533
      %v535 = vrot.slane %v328, 1
      %v536 = vrot.slane %v330, 1
      %v537 = vsel %vm495, %v535, %v536
      %v538 = vrot.slane %v331, 1
      %v539 = vrot.slane %v333, 1
      %v540 = vsel %vm495, %v538, %v539
      %v541 = vrot.slane %v332, 1
      %v542 = vrot.slane %v334, 1
      %v543 = vsel %vm495, %v541, %v542
      %v544 = vrot.slane %v335, 1
      %v545 = vrot.slane %v337, 1
      %v546 = vsel %vm495, %v544, %v545
      %v547 = vrot.slane %v336, 1
      %v548 = vrot.slane %v338, 1
      %v549 = vsel %vm495, %v547, %v548
      %v550 = vrot.slane %v339, 1
      %v551 = vrot.slane %v341, 1
      %v552 = vsel %vm495, %v550, %v551
      %v553 = vrot.slane %v340, 1
      %v554 = vrot.slane %v342, 1
      %v555 = vsel %vm495, %v553, %v554
      %v556 = vrot.slane %v343, 1
      %v557 = vrot.slane %v345, 1
      %v558 = vsel %vm495, %v556, %v557
      %v559 = vrot.slane %v344, 1
      %v560 = vrot.slane %v346, 1
      %v561 = vsel %vm495, %v559, %v560
      %v562 = vrot.slane %v347, 1
      %v563 = vrot.slane %v349, 1
      %v564 = vsel %vm495, %v562, %v563
      %v565 = vrot.slane %v348, 1
      %v566 = vrot.slane %v350, 1
      %v567 = vsel %vm495, %v565, %v566
      %v568 = vrot.slane %v351, 1
      %v569 = vrot.slane %v353, 1
      %v570 = vsel %vm495, %v568, %v569
      %v571 = vrot.slane %v352, 1
      %v572 = vrot.slane %v354, 1
      %v573 = vsel %vm495, %v571, %v572
      %v574 = vrot.slane %v355, 1
      %v575 = vrot.slane %v357, 1
      %v576 = vsel %vm495, %v574, %v575
      %v577 = vrot.slane %v356, 1
      %v578 = vrot.slane %v358, 1
      %v579 = vsel %vm495, %v577, %v578
      %v580 = vrot.slane %v359, 1
      %v581 = vrot.slane %v361, 1
      %v582 = vsel %vm495, %v580, %v581
      %v583 = vrot.slane %v360, 1
      %v584 = vrot.slane %v362, 1
      %v585 = vsel %vm495, %v583, %v584
      %v586 = vrot.slane %v363, 1
      %v587 = vrot.slane %v365, 1
      %v588 = vsel %vm495, %v586, %v587
      %v589 = vrot.slane %v364, 1
      %v590 = vrot.slane %v366, 1
      %v591 = vsel %vm495, %v589, %v590
      %v592 = vrot.slane %v367, 1
      %v593 = vrot.slane %v369, 1
      %v594 = vsel %vm495, %v592, %v593
      %v595 = vrot.slane %v368, 1
      %v596 = vrot.slane %v370, 1
      %v597 = vsel %vm495, %v595, %v596
      %v598 = vrot.slane %v371, 1
      %v599 = vrot.slane %v373, 1
      %v600 = vsel %vm495, %v598, %v599
      %v601 = vrot.slane %v372, 1
      %v602 = vrot.slane %v374, 1
      %v603 = vsel %vm495, %v601, %v602
      %v604 = vrot.slane %v375, 1
      %v605 = vrot.slane %v377, 1
      %v606 = vsel %vm495, %v604, %v605
      %v607 = vrot.slane %v376, 1
      %v608 = vrot.slane %v378, 1
      %v609 = vsel %vm495, %v607, %v608
      %v610 = vrot.slane %v379, 1
      %v611 = vrot.slane %v381, 1
      %v612 = vsel %vm495, %v610, %v611
      %v613 = vrot.slane %v380, 1
      %v614 = vrot.slane %v382, 1
      %v615 = vsel %vm495, %v613, %v614
      %v616 = vrot.slane %v383, 1
      %v617 = vrot.slane %v385, 1
      %v618 = vsel %vm495, %v616, %v617
      %v619 = vrot.slane %v384, 1
      %v620 = vrot.slane %v386, 1
      %v621 = vsel %vm495, %v619, %v620
      %v622 = vrot.slane %v387, 1
      %v623 = vrot.slane %v389, 1
      %v624 = vsel %vm495, %v622, %v623
      %v625 = vrot.slane %v388, 1
      %v626 = vrot.slane %v390, 1
      %v627 = vsel %vm495, %v625, %v626
      %v628 = vrot.slane %v391, 1
      %v629 = vrot.slane %v393, 1
      %v630 = vsel %vm495, %v628, %v629
      %v631 = vrot.slane %v392, 1
      %v632 = vrot.slane %v394, 1
      %v633 = vsel %vm495, %v631, %v632
      %v634 = vrot.slane %v395, 1
      %v635 = vrot.slane %v397, 1
      %v636 = vsel %vm495, %v634, %v635
      %v637 = vrot.slane %v396, 1
      %v638 = vrot.slane %v398, 1
      %v639 = vsel %vm495, %v637, %v638
      %688 = vst [vmem:[#allocation2 + $0x10] sm:$0xff] %v498
      %689 = vst [vmem:[#allocation2 + $0x18] sm:$0xff] %v501
      %690 = vst [vmem:[#allocation2 + $0x70] sm:$0xff] %v504
      %691 = vst [vmem:[#allocation2 + $0x78] sm:$0xff] %v507
      %692 = vst [vmem:[#allocation2 + $0xd0] sm:$0xff] %v510
      %693 = vst [vmem:[#allocation2 + $0xd8] sm:$0xff] %v513
      %694 = vst [vmem:[#allocation2 + $0x130] sm:$0xff] %v516
      %695 = vst [vmem:[#allocation2 + $0x138] sm:$0xff] %v519
      %696 = vst [vmem:[#allocation2 + $0x190] sm:$0xff] %v522
      %697 = vst [vmem:[#allocation2 + $0x198] sm:$0xff] %v525
      %698 = vst [vmem:[#allocation2 + $0x1f0] sm:$0xff] %v528
      %699 = vst [vmem:[#allocation2 + $0x1f8] sm:$0xff] %v531
      %700 = vst [vmem:[#allocation2 + $0x250] sm:$0xff] %v534
      %701 = vst [vmem:[#allocation2 + $0x258] sm:$0xff] %v537
      %702 = vst [vmem:[#allocation2 + $0x2b0] sm:$0xff] %v540
      %703 = vst [vmem:[#allocation2 + $0x2b8] sm:$0xff] %v543
      %704 = vst [vmem:[#allocation2 + $0x310] sm:$0xff] %v546
      %705 = vst [vmem:[#allocation2 + $0x318] sm:$0xff] %v549
      %706 = vst [vmem:[#allocation2 + $0x370] sm:$0xff] %v552
      %707 = vst [vmem:[#allocation2 + $0x378] sm:$0xff] %v555
      %708 = vst [vmem:[#allocation2 + $0x3d0] sm:$0xff] %v558
      %709 = vst [vmem:[#allocation2 + $0x3d8] sm:$0xff] %v561
      %710 = vst [vmem:[#allocation2 + $0x430] sm:$0xff] %v564
      %711 = vst [vmem:[#allocation2 + $0x438] sm:$0xff] %v567
      %712 = vst [vmem:[#allocation2 + $0x490] sm:$0xff] %v570
      %713 = vst [vmem:[#allocation2 + $0x498] sm:$0xff] %v573
      %714 = vst [vmem:[#allocation2 + $0x4f0] sm:$0xff] %v576
      %715 = vst [vmem:[#allocation2 + $0x4f8] sm:$0xff] %v579
      %716 = vst [vmem:[#allocation2 + $0x550] sm:$0xff] %v582
      %717 = vst [vmem:[#allocation2 + $0x558] sm:$0xff] %v585
      %718 = vst [vmem:[#allocation2 + $0x5b0] sm:$0xff] %v588
      %719 = vst [vmem:[#allocation2 + $0x5b8] sm:$0xff] %v591
      %720 = vst [vmem:[#allocation2 + $0x610] sm:$0xff] %v594
      %721 = vst [vmem:[#allocation2 + $0x618] sm:$0xff] %v597
      %722 = vst [vmem:[#allocation2 + $0x670] sm:$0xff] %v600
      %723 = vst [vmem:[#allocation2 + $0x678] sm:$0xff] %v603
      %724 = vst [vmem:[#allocation2 + $0x6d0] sm:$0xff] %v606
      %725 = vst [vmem:[#allocation2 + $0x6d8] sm:$0xff] %v609
      %726 = vst [vmem:[#allocation2 + $0x730] sm:$0xff] %v612
      %727 = vst [vmem:[#allocation2 + $0x738] sm:$0xff] %v615
      %728 = vst [vmem:[#allocation2 + $0x790] sm:$0xff] %v618
      %729 = vst [vmem:[#allocation2 + $0x798] sm:$0xff] %v621
      %730 = vst [vmem:[#allocation2 + $0x7f0] sm:$0xff] %v624
      %731 = vst [vmem:[#allocation2 + $0x7f8] sm:$0xff] %v627
      %732 = vst [vmem:[#allocation2 + $0x850] sm:$0xff] %v630
      %733 = vst [vmem:[#allocation2 + $0x858] sm:$0xff] %v633
      %734 = vst [vmem:[#allocation2 + $0x8b0] sm:$0xff] %v636
      %735 = vst [vmem:[#allocation2 + $0x8b8] sm:$0xff] %v639
      %s736 = scalar_lea.vmem %s197, 32
      %v737 = vld [vmem:[%s736] sm:$0xff]
      %v738 = vld [vmem:[%s736 + $0x8] sm:$0xff]
      %v739 = vld [vmem:[%s736 + $0x20] sm:$0xff]
      %v740 = vld [vmem:[%s736 + $0x28] sm:$0xff]
      %v741 = vld [vmem:[%s736 + $0x40] sm:$0xff]
      %v742 = vld [vmem:[%s736 + $0x48] sm:$0xff]
      %v743 = vld [vmem:[%s736 + $0x60] sm:$0xff]
      %v744 = vld [vmem:[%s736 + $0x68] sm:$0xff]
      %v745 = vld [vmem:[%s736 + $0x80] sm:$0xff]
      %v746 = vld [vmem:[%s736 + $0x88] sm:$0xff]
      %v747 = vld [vmem:[%s736 + $0xa0] sm:$0xff]
      %v748 = vld [vmem:[%s736 + $0xa8] sm:$0xff]
      %v749 = vld [vmem:[%s736 + $0xc0] sm:$0xff]
      %v750 = vld [vmem:[%s736 + $0xc8] sm:$0xff]
      %v751 = vld [vmem:[%s736 + $0xe0] sm:$0xff]
      %v752 = vld [vmem:[%s736 + $0xe8] sm:$0xff]
      %v753 = vld [vmem:[%s736 + $0x100] sm:$0xff]
      %v754 = vld [vmem:[%s736 + $0x108] sm:$0xff]
      %v755 = vld [vmem:[%s736 + $0x120] sm:$0xff]
      %v756 = vld [vmem:[%s736 + $0x128] sm:$0xff]
      %v757 = vld [vmem:[%s736 + $0x140] sm:$0xff]
      %v758 = vld [vmem:[%s736 + $0x148] sm:$0xff]
      %v759 = vld [vmem:[%s736 + $0x160] sm:$0xff]
      %v760 = vld [vmem:[%s736 + $0x168] sm:$0xff]
      %v761 = vld [vmem:[%s736 + $0x180] sm:$0xff]
      %v762 = vld [vmem:[%s736 + $0x188] sm:$0xff]
      %v763 = vld [vmem:[%s736 + $0x1a0] sm:$0xff]
      %v764 = vld [vmem:[%s736 + $0x1a8] sm:$0xff]
      %v765 = vld [vmem:[%s736 + $0x1c0] sm:$0xff]
      %v766 = vld [vmem:[%s736 + $0x1c8] sm:$0xff]
      %v767 = vld [vmem:[%s736 + $0x1e0] sm:$0xff]
      %v768 = vld [vmem:[%s736 + $0x1e8] sm:$0xff]
      %v769 = vld [vmem:[%s736 + $0x200] sm:$0xff]
      %v770 = vld [vmem:[%s736 + $0x208] sm:$0xff]
      %v771 = vld [vmem:[%s736 + $0x220] sm:$0xff]
      %v772 = vld [vmem:[%s736 + $0x228] sm:$0xff]
      %v773 = vld [vmem:[%s736 + $0x240] sm:$0xff]
      %v774 = vld [vmem:[%s736 + $0x248] sm:$0xff]
      %v775 = vld [vmem:[%s736 + $0x260] sm:$0xff]
      %v776 = vld [vmem:[%s736 + $0x268] sm:$0xff]
      %v777 = vld [vmem:[%s736 + $0x280] sm:$0xff]
      %v778 = vld [vmem:[%s736 + $0x288] sm:$0xff]
      %v779 = vld [vmem:[%s736 + $0x2a0] sm:$0xff]
      %v780 = vld [vmem:[%s736 + $0x2a8] sm:$0xff]
      %v781 = vld [vmem:[%s736 + $0x2c0] sm:$0xff]
      %v782 = vld [vmem:[%s736 + $0x2c8] sm:$0xff]
      %v783 = vld [vmem:[%s736 + $0x2e0] sm:$0xff]
      %v784 = vld [vmem:[%s736 + $0x2e8] sm:$0xff]
      %785 = vst [vmem:[#allocation2 + $0x20] sm:$0xff] %v737
      %786 = vst [vmem:[#allocation2 + $0x28] sm:$0xff] %v738
      %787 = vst [vmem:[#allocation2 + $0x80] sm:$0xff] %v739
      %788 = vst [vmem:[#allocation2 + $0x88] sm:$0xff] %v740
      %789 = vst [vmem:[#allocation2 + $0xe0] sm:$0xff] %v741
      %790 = vst [vmem:[#allocation2 + $0xe8] sm:$0xff] %v742
      %791 = vst [vmem:[#allocation2 + $0x140] sm:$0xff] %v743
      %792 = vst [vmem:[#allocation2 + $0x148] sm:$0xff] %v744
      %793 = vst [vmem:[#allocation2 + $0x1a0] sm:$0xff] %v745
      %794 = vst [vmem:[#allocation2 + $0x1a8] sm:$0xff] %v746
      %795 = vst [vmem:[#allocation2 + $0x200] sm:$0xff] %v747
      %796 = vst [vmem:[#allocation2 + $0x208] sm:$0xff] %v748
      %797 = vst [vmem:[#allocation2 + $0x260] sm:$0xff] %v749
      %798 = vst [vmem:[#allocation2 + $0x268] sm:$0xff] %v750
      %799 = vst [vmem:[#allocation2 + $0x2c0] sm:$0xff] %v751
      %800 = vst [vmem:[#allocation2 + $0x2c8] sm:$0xff] %v752
      %801 = vst [vmem:[#allocation2 + $0x320] sm:$0xff] %v753
      %802 = vst [vmem:[#allocation2 + $0x328] sm:$0xff] %v754
      %803 = vst [vmem:[#allocation2 + $0x380] sm:$0xff] %v755
      %804 = vst [vmem:[#allocation2 + $0x388] sm:$0xff] %v756
      %805 = vst [vmem:[#allocation2 + $0x3e0] sm:$0xff] %v757
      %806 = vst [vmem:[#allocation2 + $0x3e8] sm:$0xff] %v758
      %807 = vst [vmem:[#allocation2 + $0x440] sm:$0xff] %v759
      %808 = vst [vmem:[#allocation2 + $0x448] sm:$0xff] %v760
      %809 = vst [vmem:[#allocation2 + $0x4a0] sm:$0xff] %v761
      %810 = vst [vmem:[#allocation2 + $0x4a8] sm:$0xff] %v762
      %811 = vst [vmem:[#allocation2 + $0x500] sm:$0xff] %v763
      %812 = vst [vmem:[#allocation2 + $0x508] sm:$0xff] %v764
      %813 = vst [vmem:[#allocation2 + $0x560] sm:$0xff] %v765
      %814 = vst [vmem:[#allocation2 + $0x568] sm:$0xff] %v766
      %815 = vst [vmem:[#allocation2 + $0x5c0] sm:$0xff] %v767
      %816 = vst [vmem:[#allocation2 + $0x5c8] sm:$0xff] %v768
      %817 = vst [vmem:[#allocation2 + $0x620] sm:$0xff] %v769
      %818 = vst [vmem:[#allocation2 + $0x628] sm:$0xff] %v770
      %819 = vst [vmem:[#allocation2 + $0x680] sm:$0xff] %v771
      %820 = vst [vmem:[#allocation2 + $0x688] sm:$0xff] %v772
      %821 = vst [vmem:[#allocation2 + $0x6e0] sm:$0xff] %v773
      %822 = vst [vmem:[#allocation2 + $0x6e8] sm:$0xff] %v774
      %823 = vst [vmem:[#allocation2 + $0x740] sm:$0xff] %v775
      %824 = vst [vmem:[#allocation2 + $0x748] sm:$0xff] %v776
      %825 = vst [vmem:[#allocation2 + $0x7a0] sm:$0xff] %v777
      %826 = vst [vmem:[#allocation2 + $0x7a8] sm:$0xff] %v778
      %827 = vst [vmem:[#allocation2 + $0x800] sm:$0xff] %v779
      %828 = vst [vmem:[#allocation2 + $0x808] sm:$0xff] %v780
      %829 = vst [vmem:[#allocation2 + $0x860] sm:$0xff] %v781
      %830 = vst [vmem:[#allocation2 + $0x868] sm:$0xff] %v782
      %831 = vst [vmem:[#allocation2 + $0x8c0] sm:$0xff] %v783
      %832 = vst [vmem:[#allocation2 + $0x8c8] sm:$0xff] %v784
      %v833 = vld [vmem:[%s736] sm:$0xfe]
      %v834 = vld [vmem:[%s736 + $0x8] sm:$0xfe]
      %v835 = vld [vmem:[%s736 + $0x10] sm:$0x1]
      %v836 = vld [vmem:[%s736 + $0x18] sm:$0x1]
      %v837 = vld [vmem:[%s736 + $0x20] sm:$0xfe]
      %v838 = vld [vmem:[%s736 + $0x28] sm:$0xfe]
      %v839 = vld [vmem:[%s736 + $0x30] sm:$0x1]
      %v840 = vld [vmem:[%s736 + $0x38] sm:$0x1]
      %v841 = vld [vmem:[%s736 + $0x40] sm:$0xfe]
      %v842 = vld [vmem:[%s736 + $0x48] sm:$0xfe]
      %v843 = vld [vmem:[%s736 + $0x50] sm:$0x1]
      %v844 = vld [vmem:[%s736 + $0x58] sm:$0x1]
      %v845 = vld [vmem:[%s736 + $0x60] sm:$0xfe]
      %v846 = vld [vmem:[%s736 + $0x68] sm:$0xfe]
      %v847 = vld [vmem:[%s736 + $0x70] sm:$0x1]
      %v848 = vld [vmem:[%s736 + $0x78] sm:$0x1]
      %v849 = vld [vmem:[%s736 + $0x80] sm:$0xfe]
      %v850 = vld [vmem:[%s736 + $0x88] sm:$0xfe]
      %v851 = vld [vmem:[%s736 + $0x90] sm:$0x1]
      %v852 = vld [vmem:[%s736 + $0x98] sm:$0x1]
      %v853 = vld [vmem:[%s736 + $0xa0] sm:$0xfe]
      %v854 = vld [vmem:[%s736 + $0xa8] sm:$0xfe]
      %v855 = vld [vmem:[%s736 + $0xb0] sm:$0x1]
      %v856 = vld [vmem:[%s736 + $0xb8] sm:$0x1]
      %v857 = vld [vmem:[%s736 + $0xc0] sm:$0xfe]
      %v858 = vld [vmem:[%s736 + $0xc8] sm:$0xfe]
      %v859 = vld [vmem:[%s736 + $0xd0] sm:$0x1]
      %v860 = vld [vmem:[%s736 + $0xd8] sm:$0x1]
      %v861 = vld [vmem:[%s736 + $0xe0] sm:$0xfe]
      %v862 = vld [vmem:[%s736 + $0xe8] sm:$0xfe]
      %v863 = vld [vmem:[%s736 + $0xf0] sm:$0x1]
      %v864 = vld [vmem:[%s736 + $0xf8] sm:$0x1]
      %v865 = vld [vmem:[%s736 + $0x100] sm:$0xfe]
      %v866 = vld [vmem:[%s736 + $0x108] sm:$0xfe]
      %v867 = vld [vmem:[%s736 + $0x110] sm:$0x1]
      %v868 = vld [vmem:[%s736 + $0x118] sm:$0x1]
      %v869 = vld [vmem:[%s736 + $0x120] sm:$0xfe]
      %v870 = vld [vmem:[%s736 + $0x128] sm:$0xfe]
      %v871 = vld [vmem:[%s736 + $0x130] sm:$0x1]
      %v872 = vld [vmem:[%s736 + $0x138] sm:$0x1]
      %v873 = vld [vmem:[%s736 + $0x140] sm:$0xfe]
      %v874 = vld [vmem:[%s736 + $0x148] sm:$0xfe]
      %v875 = vld [vmem:[%s736 + $0x150] sm:$0x1]
      %v876 = vld [vmem:[%s736 + $0x158] sm:$0x1]
      %v877 = vld [vmem:[%s736 + $0x160] sm:$0xfe]
      %v878 = vld [vmem:[%s736 + $0x168] sm:$0xfe]
      %v879 = vld [vmem:[%s736 + $0x170] sm:$0x1]
      %v880 = vld [vmem:[%s736 + $0x178] sm:$0x1]
      %v881 = vld [vmem:[%s736 + $0x180] sm:$0xfe]
      %v882 = vld [vmem:[%s736 + $0x188] sm:$0xfe]
      %v883 = vld [vmem:[%s736 + $0x190] sm:$0x1]
      %v884 = vld [vmem:[%s736 + $0x198] sm:$0x1]
      %v885 = vld [vmem:[%s736 + $0x1a0] sm:$0xfe]
      %v886 = vld [vmem:[%s736 + $0x1a8] sm:$0xfe]
      %v887 = vld [vmem:[%s736 + $0x1b0] sm:$0x1]
      %v888 = vld [vmem:[%s736 + $0x1b8] sm:$0x1]
      %v889 = vld [vmem:[%s736 + $0x1c0] sm:$0xfe]
      %v890 = vld [vmem:[%s736 + $0x1c8] sm:$0xfe]
      %v891 = vld [vmem:[%s736 + $0x1d0] sm:$0x1]
      %v892 = vld [vmem:[%s736 + $0x1d8] sm:$0x1]
      %v893 = vld [vmem:[%s736 + $0x1e0] sm:$0xfe]
      %v894 = vld [vmem:[%s736 + $0x1e8] sm:$0xfe]
      %v895 = vld [vmem:[%s736 + $0x1f0] sm:$0x1]
      %v896 = vld [vmem:[%s736 + $0x1f8] sm:$0x1]
      %v897 = vld [vmem:[%s736 + $0x200] sm:$0xfe]
      %v898 = vld [vmem:[%s736 + $0x208] sm:$0xfe]
      %v899 = vld [vmem:[%s736 + $0x210] sm:$0x1]
      %v900 = vld [vmem:[%s736 + $0x218] sm:$0x1]
      %v901 = vld [vmem:[%s736 + $0x220] sm:$0xfe]
      %v902 = vld [vmem:[%s736 + $0x228] sm:$0xfe]
      %v903 = vld [vmem:[%s736 + $0x230] sm:$0x1]
      %v904 = vld [vmem:[%s736 + $0x238] sm:$0x1]
      %v905 = vld [vmem:[%s736 + $0x240] sm:$0xfe]
      %v906 = vld [vmem:[%s736 + $0x248] sm:$0xfe]
      %v907 = vld [vmem:[%s736 + $0x250] sm:$0x1]
      %v908 = vld [vmem:[%s736 + $0x258] sm:$0x1]
      %v909 = vld [vmem:[%s736 + $0x260] sm:$0xfe]
      %v910 = vld [vmem:[%s736 + $0x268] sm:$0xfe]
      %v911 = vld [vmem:[%s736 + $0x270] sm:$0x1]
      %v912 = vld [vmem:[%s736 + $0x278] sm:$0x1]
      %v913 = vld [vmem:[%s736 + $0x280] sm:$0xfe]
      %v914 = vld [vmem:[%s736 + $0x288] sm:$0xfe]
      %v915 = vld [vmem:[%s736 + $0x290] sm:$0x1]
      %v916 = vld [vmem:[%s736 + $0x298] sm:$0x1]
      %v917 = vld [vmem:[%s736 + $0x2a0] sm:$0xfe]
      %v918 = vld [vmem:[%s736 + $0x2a8] sm:$0xfe]
      %v919 = vld [vmem:[%s736 + $0x2b0] sm:$0x1]
      %v920 = vld [vmem:[%s736 + $0x2b8] sm:$0x1]
      %v921 = vld [vmem:[%s736 + $0x2c0] sm:$0xfe]
      %v922 = vld [vmem:[%s736 + $0x2c8] sm:$0xfe]
      %v923 = vld [vmem:[%s736 + $0x2d0] sm:$0x1]
      %v924 = vld [vmem:[%s736 + $0x2d8] sm:$0x1]
      %v925 = vld [vmem:[%s736 + $0x2e0] sm:$0xfe]
      %v926 = vld [vmem:[%s736 + $0x2e8] sm:$0xfe]
      %v927 = vld [vmem:[%s736 + $0x2f0] sm:$0x1]
      %v928 = vld [vmem:[%s736 + $0x2f8] sm:$0x1]
      %v1025 = vrot.slane %v833, 1
      %v1026 = vrot.slane %v835, 1
      %v1027 = vsel %vm495, %v1025, %v1026
      %v1028 = vrot.slane %v834, 1
      %v1029 = vrot.slane %v836, 1
      %v1030 = vsel %vm495, %v1028, %v1029
      %v1031 = vrot.slane %v837, 1
      %v1032 = vrot.slane %v839, 1
      %v1033 = vsel %vm495, %v1031, %v1032
      %v1034 = vrot.slane %v838, 1
      %v1035 = vrot.slane %v840, 1
      %v1036 = vsel %vm495, %v1034, %v1035
      %v1037 = vrot.slane %v841, 1
      %v1038 = vrot.slane %v843, 1
      %v1039 = vsel %vm495, %v1037, %v1038
      %v1040 = vrot.slane %v842, 1
      %v1041 = vrot.slane %v844, 1
      %v1042 = vsel %vm495, %v1040, %v1041
      %v1043 = vrot.slane %v845, 1
      %v1044 = vrot.slane %v847, 1
      %v1045 = vsel %vm495, %v1043, %v1044
      %v1046 = vrot.slane %v846, 1
      %v1047 = vrot.slane %v848, 1
      %v1048 = vsel %vm495, %v1046, %v1047
      %v1049 = vrot.slane %v849, 1
      %v1050 = vrot.slane %v851, 1
      %v1051 = vsel %vm495, %v1049, %v1050
      %v1052 = vrot.slane %v850, 1
      %v1053 = vrot.slane %v852, 1
      %v1054 = vsel %vm495, %v1052, %v1053
      %v1055 = vrot.slane %v853, 1
      %v1056 = vrot.slane %v855, 1
      %v1057 = vsel %vm495, %v1055, %v1056
      %v1058 = vrot.slane %v854, 1
      %v1059 = vrot.slane %v856, 1
      %v1060 = vsel %vm495, %v1058, %v1059
      %v1061 = vrot.slane %v857, 1
      %v1062 = vrot.slane %v859, 1
      %v1063 = vsel %vm495, %v1061, %v1062
      %v1064 = vrot.slane %v858, 1
      %v1065 = vrot.slane %v860, 1
      %v1066 = vsel %vm495, %v1064, %v1065
      %v1067 = vrot.slane %v861, 1
      %v1068 = vrot.slane %v863, 1
      %v1069 = vsel %vm495, %v1067, %v1068
      %v1070 = vrot.slane %v862, 1
      %v1071 = vrot.slane %v864, 1
      %v1072 = vsel %vm495, %v1070, %v1071
      %v1073 = vrot.slane %v865, 1
      %v1074 = vrot.slane %v867, 1
      %v1075 = vsel %vm495, %v1073, %v1074
      %v1076 = vrot.slane %v866, 1
      %v1077 = vrot.slane %v868, 1
      %v1078 = vsel %vm495, %v1076, %v1077
      %v1079 = vrot.slane %v869, 1
      %v1080 = vrot.slane %v871, 1
      %v1081 = vsel %vm495, %v1079, %v1080
      %v1082 = vrot.slane %v870, 1
      %v1083 = vrot.slane %v872, 1
      %v1084 = vsel %vm495, %v1082, %v1083
      %v1085 = vrot.slane %v873, 1
      %v1086 = vrot.slane %v875, 1
      %v1087 = vsel %vm495, %v1085, %v1086
      %v1088 = vrot.slane %v874, 1
      %v1089 = vrot.slane %v876, 1
      %v1090 = vsel %vm495, %v1088, %v1089
      %v1091 = vrot.slane %v877, 1
      %v1092 = vrot.slane %v879, 1
      %v1093 = vsel %vm495, %v1091, %v1092
      %v1094 = vrot.slane %v878, 1
      %v1095 = vrot.slane %v880, 1
      %v1096 = vsel %vm495, %v1094, %v1095
      %v1097 = vrot.slane %v881, 1
      %v1098 = vrot.slane %v883, 1
      %v1099 = vsel %vm495, %v1097, %v1098
      %v1100 = vrot.slane %v882, 1
      %v1101 = vrot.slane %v884, 1
      %v1102 = vsel %vm495, %v1100, %v1101
      %v1103 = vrot.slane %v885, 1
      %v1104 = vrot.slane %v887, 1
      %v1105 = vsel %vm495, %v1103, %v1104
      %v1106 = vrot.slane %v886, 1
      %v1107 = vrot.slane %v888, 1
      %v1108 = vsel %vm495, %v1106, %v1107
      %v1109 = vrot.slane %v889, 1
      %v1110 = vrot.slane %v891, 1
      %v1111 = vsel %vm495, %v1109, %v1110
      %v1112 = vrot.slane %v890, 1
      %v1113 = vrot.slane %v892, 1
      %v1114 = vsel %vm495, %v1112, %v1113
      %v1115 = vrot.slane %v893, 1
      %v1116 = vrot.slane %v895, 1
      %v1117 = vsel %vm495, %v1115, %v1116
      %v1118 = vrot.slane %v894, 1
      %v1119 = vrot.slane %v896, 1
      %v1120 = vsel %vm495, %v1118, %v1119
      %v1121 = vrot.slane %v897, 1
      %v1122 = vrot.slane %v899, 1
      %v1123 = vsel %vm495, %v1121, %v1122
      %v1124 = vrot.slane %v898, 1
      %v1125 = vrot.slane %v900, 1
      %v1126 = vsel %vm495, %v1124, %v1125
      %v1127 = vrot.slane %v901, 1
      %v1128 = vrot.slane %v903, 1
      %v1129 = vsel %vm495, %v1127, %v1128
      %v1130 = vrot.slane %v902, 1
      %v1131 = vrot.slane %v904, 1
      %v1132 = vsel %vm495, %v1130, %v1131
      %v1133 = vrot.slane %v905, 1
      %v1134 = vrot.slane %v907, 1
      %v1135 = vsel %vm495, %v1133, %v1134
      %v1136 = vrot.slane %v906, 1
      %v1137 = vrot.slane %v908, 1
      %v1138 = vsel %vm495, %v1136, %v1137
      %v1139 = vrot.slane %v909, 1
      %v1140 = vrot.slane %v911, 1
      %v1141 = vsel %vm495, %v1139, %v1140
      %v1142 = vrot.slane %v910, 1
      %v1143 = vrot.slane %v912, 1
      %v1144 = vsel %vm495, %v1142, %v1143
      %v1145 = vrot.slane %v913, 1
      %v1146 = vrot.slane %v915, 1
      %v1147 = vsel %vm495, %v1145, %v1146
      %v1148 = vrot.slane %v914, 1
      %v1149 = vrot.slane %v916, 1
      %v1150 = vsel %vm495, %v1148, %v1149
      %v1151 = vrot.slane %v917, 1
      %v1152 = vrot.slane %v919, 1
      %v1153 = vsel %vm495, %v1151, %v1152
      %v1154 = vrot.slane %v918, 1
      %v1155 = vrot.slane %v920, 1
      %v1156 = vsel %vm495, %v1154, %v1155
      %v1157 = vrot.slane %v921, 1
      %v1158 = vrot.slane %v923, 1
      %v1159 = vsel %vm495, %v1157, %v1158
      %v1160 = vrot.slane %v922, 1
      %v1161 = vrot.slane %v924, 1
      %v1162 = vsel %vm495, %v1160, %v1161
      %v1163 = vrot.slane %v925, 1
      %v1164 = vrot.slane %v927, 1
      %v1165 = vsel %vm495, %v1163, %v1164
      %v1166 = vrot.slane %v926, 1
      %v1167 = vrot.slane %v928, 1
      %v1168 = vsel %vm495, %v1166, %v1167
      %1217 = vst [vmem:[#allocation2 + $0x30] sm:$0xff] %v1027
      %1218 = vst [vmem:[#allocation2 + $0x38] sm:$0xff] %v1030
      %1219 = vst [vmem:[#allocation2 + $0x90] sm:$0xff] %v1033
      %1220 = vst [vmem:[#allocation2 + $0x98] sm:$0xff] %v1036
      %1221 = vst [vmem:[#allocation2 + $0xf0] sm:$0xff] %v1039
      %1222 = vst [vmem:[#allocation2 + $0xf8] sm:$0xff] %v1042
      %1223 = vst [vmem:[#allocation2 + $0x150] sm:$0xff] %v1045
      %1224 = vst [vmem:[#allocation2 + $0x158] sm:$0xff] %v1048
      %1225 = vst [vmem:[#allocation2 + $0x1b0] sm:$0xff] %v1051
      %1226 = vst [vmem:[#allocation2 + $0x1b8] sm:$0xff] %v1054
      %1227 = vst [vmem:[#allocation2 + $0x210] sm:$0xff] %v1057
      %1228 = vst [vmem:[#allocation2 + $0x218] sm:$0xff] %v1060
      %1229 = vst [vmem:[#allocation2 + $0x270] sm:$0xff] %v1063
      %1230 = vst [vmem:[#allocation2 + $0x278] sm:$0xff] %v1066
      %1231 = vst [vmem:[#allocation2 + $0x2d0] sm:$0xff] %v1069
      %1232 = vst [vmem:[#allocation2 + $0x2d8] sm:$0xff] %v1072
      %1233 = vst [vmem:[#allocation2 + $0x330] sm:$0xff] %v1075
      %1234 = vst [vmem:[#allocation2 + $0x338] sm:$0xff] %v1078
      %1235 = vst [vmem:[#allocation2 + $0x390] sm:$0xff] %v1081
      %1236 = vst [vmem:[#allocation2 + $0x398] sm:$0xff] %v1084
      %1237 = vst [vmem:[#allocation2 + $0x3f0] sm:$0xff] %v1087
      %1238 = vst [vmem:[#allocation2 + $0x3f8] sm:$0xff] %v1090
      %1239 = vst [vmem:[#allocation2 + $0x450] sm:$0xff] %v1093
      %1240 = vst [vmem:[#allocation2 + $0x458] sm:$0xff] %v1096
      %1241 = vst [vmem:[#allocation2 + $0x4b0] sm:$0xff] %v1099
      %1242 = vst [vmem:[#allocation2 + $0x4b8] sm:$0xff] %v1102
      %1243 = vst [vmem:[#allocation2 + $0x510] sm:$0xff] %v1105
      %1244 = vst [vmem:[#allocation2 + $0x518] sm:$0xff] %v1108
      %1245 = vst [vmem:[#allocation2 + $0x570] sm:$0xff] %v1111
      %1246 = vst [vmem:[#allocation2 + $0x578] sm:$0xff] %v1114
      %1247 = vst [vmem:[#allocation2 + $0x5d0] sm:$0xff] %v1117
      %1248 = vst [vmem:[#allocation2 + $0x5d8] sm:$0xff] %v1120
      %1249 = vst [vmem:[#allocation2 + $0x630] sm:$0xff] %v1123
      %1250 = vst [vmem:[#allocation2 + $0x638] sm:$0xff] %v1126
      %1251 = vst [vmem:[#allocation2 + $0x690] sm:$0xff] %v1129
      %1252 = vst [vmem:[#allocation2 + $0x698] sm:$0xff] %v1132
      %1253 = vst [vmem:[#allocation2 + $0x6f0] sm:$0xff] %v1135
      %1254 = vst [vmem:[#allocation2 + $0x6f8] sm:$0xff] %v1138
      %1255 = vst [vmem:[#allocation2 + $0x750] sm:$0xff] %v1141
      %1256 = vst [vmem:[#allocation2 + $0x758] sm:$0xff] %v1144
      %1257 = vst [vmem:[#allocation2 + $0x7b0] sm:$0xff] %v1147
      %1258 = vst [vmem:[#allocation2 + $0x7b8] sm:$0xff] %v1150
      %1259 = vst [vmem:[#allocation2 + $0x810] sm:$0xff] %v1153
      %1260 = vst [vmem:[#allocation2 + $0x818] sm:$0xff] %v1156
      %1261 = vst [vmem:[#allocation2 + $0x870] sm:$0xff] %v1159
      %1262 = vst [vmem:[#allocation2 + $0x878] sm:$0xff] %v1162
      %1263 = vst [vmem:[#allocation2 + $0x8d0] sm:$0xff] %v1165
      %1264 = vst [vmem:[#allocation2 + $0x8d8] sm:$0xff] %v1168
      %s1265 = scalar_lea.vmem %s197, 64
      %v1266 = vld [vmem:[%s1265] sm:$0xff]
      %v1267 = vld [vmem:[%s1265 + $0x8] sm:$0xff]
      %v1268 = vld [vmem:[%s1265 + $0x20] sm:$0xff]
      %v1269 = vld [vmem:[%s1265 + $0x28] sm:$0xff]
      %v1270 = vld [vmem:[%s1265 + $0x40] sm:$0xff]
      %v1271 = vld [vmem:[%s1265 + $0x48] sm:$0xff]
      %v1272 = vld [vmem:[%s1265 + $0x60] sm:$0xff]
      %v1273 = vld [vmem:[%s1265 + $0x68] sm:$0xff]
      %v1274 = vld [vmem:[%s1265 + $0x80] sm:$0xff]
      %v1275 = vld [vmem:[%s1265 + $0x88] sm:$0xff]
      %v1276 = vld [vmem:[%s1265 + $0xa0] sm:$0xff]
      %v1277 = vld [vmem:[%s1265 + $0xa8] sm:$0xff]
      %v1278 = vld [vmem:[%s1265 + $0xc0] sm:$0xff]
      %v1279 = vld [vmem:[%s1265 + $0xc8] sm:$0xff]
      %v1280 = vld [vmem:[%s1265 + $0xe0] sm:$0xff]
      %v1281 = vld [vmem:[%s1265 + $0xe8] sm:$0xff]
      %v1282 = vld [vmem:[%s1265 + $0x100] sm:$0xff]
      %v1283 = vld [vmem:[%s1265 + $0x108] sm:$0xff]
      %v1284 = vld [vmem:[%s1265 + $0x120] sm:$0xff]
      %v1285 = vld [vmem:[%s1265 + $0x128] sm:$0xff]
      %v1286 = vld [vmem:[%s1265 + $0x140] sm:$0xff]
      %v1287 = vld [vmem:[%s1265 + $0x148] sm:$0xff]
      %v1288 = vld [vmem:[%s1265 + $0x160] sm:$0xff]
      %v1289 = vld [vmem:[%s1265 + $0x168] sm:$0xff]
      %v1290 = vld [vmem:[%s1265 + $0x180] sm:$0xff]
      %v1291 = vld [vmem:[%s1265 + $0x188] sm:$0xff]
      %v1292 = vld [vmem:[%s1265 + $0x1a0] sm:$0xff]
      %v1293 = vld [vmem:[%s1265 + $0x1a8] sm:$0xff]
      %v1294 = vld [vmem:[%s1265 + $0x1c0] sm:$0xff]
      %v1295 = vld [vmem:[%s1265 + $0x1c8] sm:$0xff]
      %v1296 = vld [vmem:[%s1265 + $0x1e0] sm:$0xff]
      %v1297 = vld [vmem:[%s1265 + $0x1e8] sm:$0xff]
      %v1298 = vld [vmem:[%s1265 + $0x200] sm:$0xff]
      %v1299 = vld [vmem:[%s1265 + $0x208] sm:$0xff]
      %v1300 = vld [vmem:[%s1265 + $0x220] sm:$0xff]
      %v1301 = vld [vmem:[%s1265 + $0x228] sm:$0xff]
      %v1302 = vld [vmem:[%s1265 + $0x240] sm:$0xff]
      %v1303 = vld [vmem:[%s1265 + $0x248] sm:$0xff]
      %v1304 = vld [vmem:[%s1265 + $0x260] sm:$0xff]
      %v1305 = vld [vmem:[%s1265 + $0x268] sm:$0xff]
      %v1306 = vld [vmem:[%s1265 + $0x280] sm:$0xff]
      %v1307 = vld [vmem:[%s1265 + $0x288] sm:$0xff]
      %v1308 = vld [vmem:[%s1265 + $0x2a0] sm:$0xff]
      %v1309 = vld [vmem:[%s1265 + $0x2a8] sm:$0xff]
      %v1310 = vld [vmem:[%s1265 + $0x2c0] sm:$0xff]
      %v1311 = vld [vmem:[%s1265 + $0x2c8] sm:$0xff]
      %v1312 = vld [vmem:[%s1265 + $0x2e0] sm:$0xff]
      %v1313 = vld [vmem:[%s1265 + $0x2e8] sm:$0xff]
      %1314 = vst [vmem:[#allocation2 + $0x40] sm:$0xff] %v1266
      %1315 = vst [vmem:[#allocation2 + $0x48] sm:$0xff] %v1267
      %1316 = vst [vmem:[#allocation2 + $0xa0] sm:$0xff] %v1268
      %1317 = vst [vmem:[#allocation2 + $0xa8] sm:$0xff] %v1269
      %1318 = vst [vmem:[#allocation2 + $0x100] sm:$0xff] %v1270
      %1319 = vst [vmem:[#allocation2 + $0x108] sm:$0xff] %v1271
      %1320 = vst [vmem:[#allocation2 + $0x160] sm:$0xff] %v1272
      %1321 = vst [vmem:[#allocation2 + $0x168] sm:$0xff] %v1273
      %1322 = vst [vmem:[#allocation2 + $0x1c0] sm:$0xff] %v1274
      %1323 = vst [vmem:[#allocation2 + $0x1c8] sm:$0xff] %v1275
      %1324 = vst [vmem:[#allocation2 + $0x220] sm:$0xff] %v1276
      %1325 = vst [vmem:[#allocation2 + $0x228] sm:$0xff] %v1277
      %1326 = vst [vmem:[#allocation2 + $0x280] sm:$0xff] %v1278
      %1327 = vst [vmem:[#allocation2 + $0x288] sm:$0xff] %v1279
      %1328 = vst [vmem:[#allocation2 + $0x2e0] sm:$0xff] %v1280
      %1329 = vst [vmem:[#allocation2 + $0x2e8] sm:$0xff] %v1281
      %1330 = vst [vmem:[#allocation2 + $0x340] sm:$0xff] %v1282
      %1331 = vst [vmem:[#allocation2 + $0x348] sm:$0xff] %v1283
      %1332 = vst [vmem:[#allocation2 + $0x3a0] sm:$0xff] %v1284
      %1333 = vst [vmem:[#allocation2 + $0x3a8] sm:$0xff] %v1285
      %1334 = vst [vmem:[#allocation2 + $0x400] sm:$0xff] %v1286
      %1335 = vst [vmem:[#allocation2 + $0x408] sm:$0xff] %v1287
      %1336 = vst [vmem:[#allocation2 + $0x460] sm:$0xff] %v1288
      %1337 = vst [vmem:[#allocation2 + $0x468] sm:$0xff] %v1289
      %1338 = vst [vmem:[#allocation2 + $0x4c0] sm:$0xff] %v1290
      %1339 = vst [vmem:[#allocation2 + $0x4c8] sm:$0xff] %v1291
      %1340 = vst [vmem:[#allocation2 + $0x520] sm:$0xff] %v1292
      %1341 = vst [vmem:[#allocation2 + $0x528] sm:$0xff] %v1293
      %1342 = vst [vmem:[#allocation2 + $0x580] sm:$0xff] %v1294
      %1343 = vst [vmem:[#allocation2 + $0x588] sm:$0xff] %v1295
      %1344 = vst [vmem:[#allocation2 + $0x5e0] sm:$0xff] %v1296
      %1345 = vst [vmem:[#allocation2 + $0x5e8] sm:$0xff] %v1297
      %1346 = vst [vmem:[#allocation2 + $0x640] sm:$0xff] %v1298
      %1347 = vst [vmem:[#allocation2 + $0x648] sm:$0xff] %v1299
      %1348 = vst [vmem:[#allocation2 + $0x6a0] sm:$0xff] %v1300
      %1349 = vst [vmem:[#allocation2 + $0x6a8] sm:$0xff] %v1301
      %1350 = vst [vmem:[#allocation2 + $0x700] sm:$0xff] %v1302
      %1351 = vst [vmem:[#allocation2 + $0x708] sm:$0xff] %v1303
      %1352 = vst [vmem:[#allocation2 + $0x760] sm:$0xff] %v1304
      %1353 = vst [vmem:[#allocation2 + $0x768] sm:$0xff] %v1305
      %1354 = vst [vmem:[#allocation2 + $0x7c0] sm:$0xff] %v1306
      %1355 = vst [vmem:[#allocation2 + $0x7c8] sm:$0xff] %v1307
      %1356 = vst [vmem:[#allocation2 + $0x820] sm:$0xff] %v1308
      %1357 = vst [vmem:[#allocation2 + $0x828] sm:$0xff] %v1309
      %1358 = vst [vmem:[#allocation2 + $0x880] sm:$0xff] %v1310
      %1359 = vst [vmem:[#allocation2 + $0x888] sm:$0xff] %v1311
      %1360 = vst [vmem:[#allocation2 + $0x8e0] sm:$0xff] %v1312
      %1361 = vst [vmem:[#allocation2 + $0x8e8] sm:$0xff] %v1313
      %v1362 = vld [vmem:[%s1265] sm:$0xfe]
      %v1363 = vld [vmem:[%s1265 + $0x8] sm:$0xfe]
      %v1364 = vld [vmem:[%s1265 + $0x10] sm:$0x1]
      %v1365 = vld [vmem:[%s1265 + $0x18] sm:$0x1]
      %v1366 = vld [vmem:[%s1265 + $0x20] sm:$0xfe]
      %v1367 = vld [vmem:[%s1265 + $0x28] sm:$0xfe]
      %v1368 = vld [vmem:[%s1265 + $0x30] sm:$0x1]
      %v1369 = vld [vmem:[%s1265 + $0x38] sm:$0x1]
      %v1370 = vld [vmem:[%s1265 + $0x40] sm:$0xfe]
      %v1371 = vld [vmem:[%s1265 + $0x48] sm:$0xfe]
      %v1372 = vld [vmem:[%s1265 + $0x50] sm:$0x1]
      %v1373 = vld [vmem:[%s1265 + $0x58] sm:$0x1]
      %v1374 = vld [vmem:[%s1265 + $0x60] sm:$0xfe]
      %v1375 = vld [vmem:[%s1265 + $0x68] sm:$0xfe]
      %v1376 = vld [vmem:[%s1265 + $0x70] sm:$0x1]
      %v1377 = vld [vmem:[%s1265 + $0x78] sm:$0x1]
      %v1378 = vld [vmem:[%s1265 + $0x80] sm:$0xfe]
      %v1379 = vld [vmem:[%s1265 + $0x88] sm:$0xfe]
      %v1380 = vld [vmem:[%s1265 + $0x90] sm:$0x1]
      %v1381 = vld [vmem:[%s1265 + $0x98] sm:$0x1]
      %v1382 = vld [vmem:[%s1265 + $0xa0] sm:$0xfe]
      %v1383 = vld [vmem:[%s1265 + $0xa8] sm:$0xfe]
      %v1384 = vld [vmem:[%s1265 + $0xb0] sm:$0x1]
      %v1385 = vld [vmem:[%s1265 + $0xb8] sm:$0x1]
      %v1386 = vld [vmem:[%s1265 + $0xc0] sm:$0xfe]
      %v1387 = vld [vmem:[%s1265 + $0xc8] sm:$0xfe]
      %v1388 = vld [vmem:[%s1265 + $0xd0] sm:$0x1]
      %v1389 = vld [vmem:[%s1265 + $0xd8] sm:$0x1]
      %v1390 = vld [vmem:[%s1265 + $0xe0] sm:$0xfe]
      %v1391 = vld [vmem:[%s1265 + $0xe8] sm:$0xfe]
      %v1392 = vld [vmem:[%s1265 + $0xf0] sm:$0x1]
      %v1393 = vld [vmem:[%s1265 + $0xf8] sm:$0x1]
      %v1394 = vld [vmem:[%s1265 + $0x100] sm:$0xfe]
      %v1395 = vld [vmem:[%s1265 + $0x108] sm:$0xfe]
      %v1396 = vld [vmem:[%s1265 + $0x110] sm:$0x1]
      %v1397 = vld [vmem:[%s1265 + $0x118] sm:$0x1]
      %v1398 = vld [vmem:[%s1265 + $0x120] sm:$0xfe]
      %v1399 = vld [vmem:[%s1265 + $0x128] sm:$0xfe]
      %v1400 = vld [vmem:[%s1265 + $0x130] sm:$0x1]
      %v1401 = vld [vmem:[%s1265 + $0x138] sm:$0x1]
      %v1402 = vld [vmem:[%s1265 + $0x140] sm:$0xfe]
      %v1403 = vld [vmem:[%s1265 + $0x148] sm:$0xfe]
      %v1404 = vld [vmem:[%s1265 + $0x150] sm:$0x1]
      %v1405 = vld [vmem:[%s1265 + $0x158] sm:$0x1]
      %v1406 = vld [vmem:[%s1265 + $0x160] sm:$0xfe]
      %v1407 = vld [vmem:[%s1265 + $0x168] sm:$0xfe]
      %v1408 = vld [vmem:[%s1265 + $0x170] sm:$0x1]
      %v1409 = vld [vmem:[%s1265 + $0x178] sm:$0x1]
      %v1410 = vld [vmem:[%s1265 + $0x180] sm:$0xfe]
      %v1411 = vld [vmem:[%s1265 + $0x188] sm:$0xfe]
      %v1412 = vld [vmem:[%s1265 + $0x190] sm:$0x1]
      %v1413 = vld [vmem:[%s1265 + $0x198] sm:$0x1]
      %v1414 = vld [vmem:[%s1265 + $0x1a0] sm:$0xfe]
      %v1415 = vld [vmem:[%s1265 + $0x1a8] sm:$0xfe]
      %v1416 = vld [vmem:[%s1265 + $0x1b0] sm:$0x1]
      %v1417 = vld [vmem:[%s1265 + $0x1b8] sm:$0x1]
      %v1418 = vld [vmem:[%s1265 + $0x1c0] sm:$0xfe]
      %v1419 = vld [vmem:[%s1265 + $0x1c8] sm:$0xfe]
      %v1420 = vld [vmem:[%s1265 + $0x1d0] sm:$0x1]
      %v1421 = vld [vmem:[%s1265 + $0x1d8] sm:$0x1]
      %v1422 = vld [vmem:[%s1265 + $0x1e0] sm:$0xfe]
      %v1423 = vld [vmem:[%s1265 + $0x1e8] sm:$0xfe]
      %v1424 = vld [vmem:[%s1265 + $0x1f0] sm:$0x1]
      %v1425 = vld [vmem:[%s1265 + $0x1f8] sm:$0x1]
      %v1426 = vld [vmem:[%s1265 + $0x200] sm:$0xfe]
      %v1427 = vld [vmem:[%s1265 + $0x208] sm:$0xfe]
      %v1428 = vld [vmem:[%s1265 + $0x210] sm:$0x1]
      %v1429 = vld [vmem:[%s1265 + $0x218] sm:$0x1]
      %v1430 = vld [vmem:[%s1265 + $0x220] sm:$0xfe]
      %v1431 = vld [vmem:[%s1265 + $0x228] sm:$0xfe]
      %v1432 = vld [vmem:[%s1265 + $0x230] sm:$0x1]
      %v1433 = vld [vmem:[%s1265 + $0x238] sm:$0x1]
      %v1434 = vld [vmem:[%s1265 + $0x240] sm:$0xfe]
      %v1435 = vld [vmem:[%s1265 + $0x248] sm:$0xfe]
      %v1436 = vld [vmem:[%s1265 + $0x250] sm:$0x1]
      %v1437 = vld [vmem:[%s1265 + $0x258] sm:$0x1]
      %v1438 = vld [vmem:[%s1265 + $0x260] sm:$0xfe]
      %v1439 = vld [vmem:[%s1265 + $0x268] sm:$0xfe]
      %v1440 = vld [vmem:[%s1265 + $0x270] sm:$0x1]
      %v1441 = vld [vmem:[%s1265 + $0x278] sm:$0x1]
      %v1442 = vld [vmem:[%s1265 + $0x280] sm:$0xfe]
      %v1443 = vld [vmem:[%s1265 + $0x288] sm:$0xfe]
      %v1444 = vld [vmem:[%s1265 + $0x290] sm:$0x1]
      %v1445 = vld [vmem:[%s1265 + $0x298] sm:$0x1]
      %v1446 = vld [vmem:[%s1265 + $0x2a0] sm:$0xfe]
      %v1447 = vld [vmem:[%s1265 + $0x2a8] sm:$0xfe]
      %v1448 = vld [vmem:[%s1265 + $0x2b0] sm:$0x1]
      %v1449 = vld [vmem:[%s1265 + $0x2b8] sm:$0x1]
      %v1450 = vld [vmem:[%s1265 + $0x2c0] sm:$0xfe]
      %v1451 = vld [vmem:[%s1265 + $0x2c8] sm:$0xfe]
      %v1452 = vld [vmem:[%s1265 + $0x2d0] sm:$0x1]
      %v1453 = vld [vmem:[%s1265 + $0x2d8] sm:$0x1]
      %v1454 = vld [vmem:[%s1265 + $0x2e0] sm:$0xfe]
      %v1455 = vld [vmem:[%s1265 + $0x2e8] sm:$0xfe]
      %v1456 = vld [vmem:[%s1265 + $0x2f0] sm:$0x1]
      %v1457 = vld [vmem:[%s1265 + $0x2f8] sm:$0x1]
      %v1554 = vrot.slane %v1362, 1
      %v1555 = vrot.slane %v1364, 1
      %v1556 = vsel %vm495, %v1554, %v1555
      %v1557 = vrot.slane %v1363, 1
      %v1558 = vrot.slane %v1365, 1
      %v1559 = vsel %vm495, %v1557, %v1558
      %v1560 = vrot.slane %v1366, 1
      %v1561 = vrot.slane %v1368, 1
      %v1562 = vsel %vm495, %v1560, %v1561
      %v1563 = vrot.slane %v1367, 1
      %v1564 = vrot.slane %v1369, 1
      %v1565 = vsel %vm495, %v1563, %v1564
      %v1566 = vrot.slane %v1370, 1
      %v1567 = vrot.slane %v1372, 1
      %v1568 = vsel %vm495, %v1566, %v1567
      %v1569 = vrot.slane %v1371, 1
      %v1570 = vrot.slane %v1373, 1
      %v1571 = vsel %vm495, %v1569, %v1570
      %v1572 = vrot.slane %v1374, 1
      %v1573 = vrot.slane %v1376, 1
      %v1574 = vsel %vm495, %v1572, %v1573
      %v1575 = vrot.slane %v1375, 1
      %v1576 = vrot.slane %v1377, 1
      %v1577 = vsel %vm495, %v1575, %v1576
      %v1578 = vrot.slane %v1378, 1
      %v1579 = vrot.slane %v1380, 1
      %v1580 = vsel %vm495, %v1578, %v1579
      %v1581 = vrot.slane %v1379, 1
      %v1582 = vrot.slane %v1381, 1
      %v1583 = vsel %vm495, %v1581, %v1582
      %v1584 = vrot.slane %v1382, 1
      %v1585 = vrot.slane %v1384, 1
      %v1586 = vsel %vm495, %v1584, %v1585
      %v1587 = vrot.slane %v1383, 1
      %v1588 = vrot.slane %v1385, 1
      %v1589 = vsel %vm495, %v1587, %v1588
      %v1590 = vrot.slane %v1386, 1
      %v1591 = vrot.slane %v1388, 1
      %v1592 = vsel %vm495, %v1590, %v1591
      %v1593 = vrot.slane %v1387, 1
      %v1594 = vrot.slane %v1389, 1
      %v1595 = vsel %vm495, %v1593, %v1594
      %v1596 = vrot.slane %v1390, 1
      %v1597 = vrot.slane %v1392, 1
      %v1598 = vsel %vm495, %v1596, %v1597
      %v1599 = vrot.slane %v1391, 1
      %v1600 = vrot.slane %v1393, 1
      %v1601 = vsel %vm495, %v1599, %v1600
      %v1602 = vrot.slane %v1394, 1
      %v1603 = vrot.slane %v1396, 1
      %v1604 = vsel %vm495, %v1602, %v1603
      %v1605 = vrot.slane %v1395, 1
      %v1606 = vrot.slane %v1397, 1
      %v1607 = vsel %vm495, %v1605, %v1606
      %v1608 = vrot.slane %v1398, 1
      %v1609 = vrot.slane %v1400, 1
      %v1610 = vsel %vm495, %v1608, %v1609
      %v1611 = vrot.slane %v1399, 1
      %v1612 = vrot.slane %v1401, 1
      %v1613 = vsel %vm495, %v1611, %v1612
      %v1614 = vrot.slane %v1402, 1
      %v1615 = vrot.slane %v1404, 1
      %v1616 = vsel %vm495, %v1614, %v1615
      %v1617 = vrot.slane %v1403, 1
      %v1618 = vrot.slane %v1405, 1
      %v1619 = vsel %vm495, %v1617, %v1618
      %v1620 = vrot.slane %v1406, 1
      %v1621 = vrot.slane %v1408, 1
      %v1622 = vsel %vm495, %v1620, %v1621
      %v1623 = vrot.slane %v1407, 1
      %v1624 = vrot.slane %v1409, 1
      %v1625 = vsel %vm495, %v1623, %v1624
      %v1626 = vrot.slane %v1410, 1
      %v1627 = vrot.slane %v1412, 1
      %v1628 = vsel %vm495, %v1626, %v1627
      %v1629 = vrot.slane %v1411, 1
      %v1630 = vrot.slane %v1413, 1
      %v1631 = vsel %vm495, %v1629, %v1630
      %v1632 = vrot.slane %v1414, 1
      %v1633 = vrot.slane %v1416, 1
      %v1634 = vsel %vm495, %v1632, %v1633
      %v1635 = vrot.slane %v1415, 1
      %v1636 = vrot.slane %v1417, 1
      %v1637 = vsel %vm495, %v1635, %v1636
      %v1638 = vrot.slane %v1418, 1
      %v1639 = vrot.slane %v1420, 1
      %v1640 = vsel %vm495, %v1638, %v1639
      %v1641 = vrot.slane %v1419, 1
      %v1642 = vrot.slane %v1421, 1
      %v1643 = vsel %vm495, %v1641, %v1642
      %v1644 = vrot.slane %v1422, 1
      %v1645 = vrot.slane %v1424, 1
      %v1646 = vsel %vm495, %v1644, %v1645
      %v1647 = vrot.slane %v1423, 1
      %v1648 = vrot.slane %v1425, 1
      %v1649 = vsel %vm495, %v1647, %v1648
      %v1650 = vrot.slane %v1426, 1
      %v1651 = vrot.slane %v1428, 1
      %v1652 = vsel %vm495, %v1650, %v1651
      %v1653 = vrot.slane %v1427, 1
      %v1654 = vrot.slane %v1429, 1
      %v1655 = vsel %vm495, %v1653, %v1654
      %v1656 = vrot.slane %v1430, 1
      %v1657 = vrot.slane %v1432, 1
      %v1658 = vsel %vm495, %v1656, %v1657
      %v1659 = vrot.slane %v1431, 1
      %v1660 = vrot.slane %v1433, 1
      %v1661 = vsel %vm495, %v1659, %v1660
      %v1662 = vrot.slane %v1434, 1
      %v1663 = vrot.slane %v1436, 1
      %v1664 = vsel %vm495, %v1662, %v1663
      %v1665 = vrot.slane %v1435, 1
      %v1666 = vrot.slane %v1437, 1
      %v1667 = vsel %vm495, %v1665, %v1666
      %v1668 = vrot.slane %v1438, 1
      %v1669 = vrot.slane %v1440, 1
      %v1670 = vsel %vm495, %v1668, %v1669
      %v1671 = vrot.slane %v1439, 1
      %v1672 = vrot.slane %v1441, 1
      %v1673 = vsel %vm495, %v1671, %v1672
      %v1674 = vrot.slane %v1442, 1
      %v1675 = vrot.slane %v1444, 1
      %v1676 = vsel %vm495, %v1674, %v1675
      %v1677 = vrot.slane %v1443, 1
      %v1678 = vrot.slane %v1445, 1
      %v1679 = vsel %vm495, %v1677, %v1678
      %v1680 = vrot.slane %v1446, 1
      %v1681 = vrot.slane %v1448, 1
      %v1682 = vsel %vm495, %v1680, %v1681
      %v1683 = vrot.slane %v1447, 1
      %v1684 = vrot.slane %v1449, 1
      %v1685 = vsel %vm495, %v1683, %v1684
      %v1686 = vrot.slane %v1450, 1
      %v1687 = vrot.slane %v1452, 1
      %v1688 = vsel %vm495, %v1686, %v1687
      %v1689 = vrot.slane %v1451, 1
      %v1690 = vrot.slane %v1453, 1
      %v1691 = vsel %vm495, %v1689, %v1690
      %v1692 = vrot.slane %v1454, 1
      %v1693 = vrot.slane %v1456, 1
      %v1694 = vsel %vm495, %v1692, %v1693
      %v1695 = vrot.slane %v1455, 1
      %v1696 = vrot.slane %v1457, 1
      %v1697 = vsel %vm495, %v1695, %v1696
      %1746 = vst [vmem:[#allocation2 + $0x50] sm:$0xff] %v1556
      %1747 = vst [vmem:[#allocation2 + $0x58] sm:$0xff] %v1559
      %1748 = vst [vmem:[#allocation2 + $0xb0] sm:$0xff] %v1562
      %1749 = vst [vmem:[#allocation2 + $0xb8] sm:$0xff] %v1565
      %1750 = vst [vmem:[#allocation2 + $0x110] sm:$0xff] %v1568
      %1751 = vst [vmem:[#allocation2 + $0x118] sm:$0xff] %v1571
      %1752 = vst [vmem:[#allocation2 + $0x170] sm:$0xff] %v1574
      %1753 = vst [vmem:[#allocation2 + $0x178] sm:$0xff] %v1577
      %1754 = vst [vmem:[#allocation2 + $0x1d0] sm:$0xff] %v1580
      %1755 = vst [vmem:[#allocation2 + $0x1d8] sm:$0xff] %v1583
      %1756 = vst [vmem:[#allocation2 + $0x230] sm:$0xff] %v1586
      %1757 = vst [vmem:[#allocation2 + $0x238] sm:$0xff] %v1589
      %1758 = vst [vmem:[#allocation2 + $0x290] sm:$0xff] %v1592
      %1759 = vst [vmem:[#allocation2 + $0x298] sm:$0xff] %v1595
      %1760 = vst [vmem:[#allocation2 + $0x2f0] sm:$0xff] %v1598
      %1761 = vst [vmem:[#allocation2 + $0x2f8] sm:$0xff] %v1601
      %1762 = vst [vmem:[#allocation2 + $0x350] sm:$0xff] %v1604
      %1763 = vst [vmem:[#allocation2 + $0x358] sm:$0xff] %v1607
      %1764 = vst [vmem:[#allocation2 + $0x3b0] sm:$0xff] %v1610
      %1765 = vst [vmem:[#allocation2 + $0x3b8] sm:$0xff] %v1613
      %1766 = vst [vmem:[#allocation2 + $0x410] sm:$0xff] %v1616
      %1767 = vst [vmem:[#allocation2 + $0x418] sm:$0xff] %v1619
      %1768 = vst [vmem:[#allocation2 + $0x470] sm:$0xff] %v1622
      %1769 = vst [vmem:[#allocation2 + $0x478] sm:$0xff] %v1625
      %1770 = vst [vmem:[#allocation2 + $0x4d0] sm:$0xff] %v1628
      %1771 = vst [vmem:[#allocation2 + $0x4d8] sm:$0xff] %v1631
      %1772 = vst [vmem:[#allocation2 + $0x530] sm:$0xff] %v1634
      %1773 = vst [vmem:[#allocation2 + $0x538] sm:$0xff] %v1637
      %1774 = vst [vmem:[#allocation2 + $0x590] sm:$0xff] %v1640
      %1775 = vst [vmem:[#allocation2 + $0x598] sm:$0xff] %v1643
      %1776 = vst [vmem:[#allocation2 + $0x5f0] sm:$0xff] %v1646
      %1777 = vst [vmem:[#allocation2 + $0x5f8] sm:$0xff] %v1649
      %1778 = vst [vmem:[#allocation2 + $0x650] sm:$0xff] %v1652
      %1779 = vst [vmem:[#allocation2 + $0x658] sm:$0xff] %v1655
      %1780 = vst [vmem:[#allocation2 + $0x6b0] sm:$0xff] %v1658
      %1781 = vst [vmem:[#allocation2 + $0x6b8] sm:$0xff] %v1661
      %1782 = vst [vmem:[#allocation2 + $0x710] sm:$0xff] %v1664
      %1783 = vst [vmem:[#allocation2 + $0x718] sm:$0xff] %v1667
      %1784 = vst [vmem:[#allocation2 + $0x770] sm:$0xff] %v1670
      %1785 = vst [vmem:[#allocation2 + $0x778] sm:$0xff] %v1673
      %1786 = vst [vmem:[#allocation2 + $0x7d0] sm:$0xff] %v1676
      %1787 = vst [vmem:[#allocation2 + $0x7d8] sm:$0xff] %v1679
      %1788 = vst [vmem:[#allocation2 + $0x830] sm:$0xff] %v1682
      %1789 = vst [vmem:[#allocation2 + $0x838] sm:$0xff] %v1685
      %1790 = vst [vmem:[#allocation2 + $0x890] sm:$0xff] %v1688
      %1791 = vst [vmem:[#allocation2 + $0x898] sm:$0xff] %v1691
      %1792 = vst [vmem:[#allocation2 + $0x8f0] sm:$0xff] %v1694
      %1793 = vst [vmem:[#allocation2 + $0x8f8] sm:$0xff] %v1697
      %v1794 = vld [vmem:[#allocation2] sm:$0xff]
      %v1795 = vld [vmem:[#allocation2 + $0x8] sm:$0xff]
      %v1796 = vld [vmem:[#allocation2 + $0x10] sm:$0xff]
      %v1797 = vld [vmem:[#allocation2 + $0x18] sm:$0xff]
      %v1798 = vld [vmem:[#allocation2 + $0x20] sm:$0xff]
      %v1799 = vld [vmem:[#allocation2 + $0x28] sm:$0xff]
      %v1800 = vld [vmem:[#allocation2 + $0x30] sm:$0xff]
      %v1801 = vld [vmem:[#allocation2 + $0x38] sm:$0xff]
      %v1802 = vld [vmem:[#allocation2 + $0x40] sm:$0xff]
      %v1803 = vld [vmem:[#allocation2 + $0x48] sm:$0xff]
      %v1804 = vld [vmem:[#allocation2 + $0x50] sm:$0xff]
      %v1805 = vld [vmem:[#allocation2 + $0x58] sm:$0xff]
      %v1806 = vld [vmem:[#allocation2 + $0x60] sm:$0xff]
      %v1807 = vld [vmem:[#allocation2 + $0x68] sm:$0xff]
      %v1808 = vld [vmem:[#allocation2 + $0x70] sm:$0xff]
      %v1809 = vld [vmem:[#allocation2 + $0x78] sm:$0xff]
      %v1810 = vld [vmem:[#allocation2 + $0x80] sm:$0xff]
      %v1811 = vld [vmem:[#allocation2 + $0x88] sm:$0xff]
      %v1812 = vld [vmem:[#allocation2 + $0x90] sm:$0xff]
      %v1813 = vld [vmem:[#allocation2 + $0x98] sm:$0xff]
      %v1814 = vld [vmem:[#allocation2 + $0xa0] sm:$0xff]
      %v1815 = vld [vmem:[#allocation2 + $0xa8] sm:$0xff]
      %v1816 = vld [vmem:[#allocation2 + $0xb0] sm:$0xff]
      %v1817 = vld [vmem:[#allocation2 + $0xb8] sm:$0xff]
      %v1818 = vld [vmem:[#allocation2 + $0xc0] sm:$0xff]
      %v1819 = vld [vmem:[#allocation2 + $0xc8] sm:$0xff]
      %v1820 = vld [vmem:[#allocation2 + $0xd0] sm:$0xff]
      %v1821 = vld [vmem:[#allocation2 + $0xd8] sm:$0xff]
      %v1822 = vld [vmem:[#allocation2 + $0xe0] sm:$0xff]
      %v1823 = vld [vmem:[#allocation2 + $0xe8] sm:$0xff]
      %v1824 = vld [vmem:[#allocation2 + $0xf0] sm:$0xff]
      %v1825 = vld [vmem:[#allocation2 + $0xf8] sm:$0xff]
      %v1826 = vld [vmem:[#allocation2 + $0x100] sm:$0xff]
      %v1827 = vld [vmem:[#allocation2 + $0x108] sm:$0xff]
      %v1828 = vld [vmem:[#allocation2 + $0x110] sm:$0xff]
      %v1829 = vld [vmem:[#allocation2 + $0x118] sm:$0xff]
      %v1830 = vld [vmem:[#allocation2 + $0x120] sm:$0xff]
      %v1831 = vld [vmem:[#allocation2 + $0x128] sm:$0xff]
      %v1832 = vld [vmem:[#allocation2 + $0x130] sm:$0xff]
      %v1833 = vld [vmem:[#allocation2 + $0x138] sm:$0xff]
      %v1834 = vld [vmem:[#allocation2 + $0x140] sm:$0xff]
      %v1835 = vld [vmem:[#allocation2 + $0x148] sm:$0xff]
      %v1836 = vld [vmem:[#allocation2 + $0x150] sm:$0xff]
      %v1837 = vld [vmem:[#allocation2 + $0x158] sm:$0xff]
      %v1838 = vld [vmem:[#allocation2 + $0x160] sm:$0xff]
      %v1839 = vld [vmem:[#allocation2 + $0x168] sm:$0xff]
      %v1840 = vld [vmem:[#allocation2 + $0x170] sm:$0xff]
      %v1841 = vld [vmem:[#allocation2 + $0x178] sm:$0xff]
      %v1842 = vld [vmem:[#allocation2 + $0x180] sm:$0xff]
      %v1843 = vld [vmem:[#allocation2 + $0x188] sm:$0xff]
      %v1844 = vld [vmem:[#allocation2 + $0x190] sm:$0xff]
      %v1845 = vld [vmem:[#allocation2 + $0x198] sm:$0xff]
      %v1846 = vld [vmem:[#allocation2 + $0x1a0] sm:$0xff]
      %v1847 = vld [vmem:[#allocation2 + $0x1a8] sm:$0xff]
      %v1848 = vld [vmem:[#allocation2 + $0x1b0] sm:$0xff]
      %v1849 = vld [vmem:[#allocation2 + $0x1b8] sm:$0xff]
      %v1850 = vld [vmem:[#allocation2 + $0x1c0] sm:$0xff]
      %v1851 = vld [vmem:[#allocation2 + $0x1c8] sm:$0xff]
      %v1852 = vld [vmem:[#allocation2 + $0x1d0] sm:$0xff]
      %v1853 = vld [vmem:[#allocation2 + $0x1d8] sm:$0xff]
      %v1854 = vld [vmem:[#allocation2 + $0x1e0] sm:$0xff]
      %v1855 = vld [vmem:[#allocation2 + $0x1e8] sm:$0xff]
      %v1856 = vld [vmem:[#allocation2 + $0x1f0] sm:$0xff]
      %v1857 = vld [vmem:[#allocation2 + $0x1f8] sm:$0xff]
      %v1858 = vld [vmem:[#allocation2 + $0x200] sm:$0xff]
      %v1859 = vld [vmem:[#allocation2 + $0x208] sm:$0xff]
      %v1860 = vld [vmem:[#allocation2 + $0x210] sm:$0xff]
      %v1861 = vld [vmem:[#allocation2 + $0x218] sm:$0xff]
      %v1862 = vld [vmem:[#allocation2 + $0x220] sm:$0xff]
      %v1863 = vld [vmem:[#allocation2 + $0x228] sm:$0xff]
      %v1864 = vld [vmem:[#allocation2 + $0x230] sm:$0xff]
      %v1865 = vld [vmem:[#allocation2 + $0x238] sm:$0xff]
      %v1866 = vld [vmem:[#allocation2 + $0x240] sm:$0xff]
      %v1867 = vld [vmem:[#allocation2 + $0x248] sm:$0xff]
      %v1868 = vld [vmem:[#allocation2 + $0x250] sm:$0xff]
      %v1869 = vld [vmem:[#allocation2 + $0x258] sm:$0xff]
      %v1870 = vld [vmem:[#allocation2 + $0x260] sm:$0xff]
      %v1871 = vld [vmem:[#allocation2 + $0x268] sm:$0xff]
      %v1872 = vld [vmem:[#allocation2 + $0x270] sm:$0xff]
      %v1873 = vld [vmem:[#allocation2 + $0x278] sm:$0xff]
      %v1874 = vld [vmem:[#allocation2 + $0x280] sm:$0xff]
      %v1875 = vld [vmem:[#allocation2 + $0x288] sm:$0xff]
      %v1876 = vld [vmem:[#allocation2 + $0x290] sm:$0xff]
      %v1877 = vld [vmem:[#allocation2 + $0x298] sm:$0xff]
      %v1878 = vld [vmem:[#allocation2 + $0x2a0] sm:$0xff]
      %v1879 = vld [vmem:[#allocation2 + $0x2a8] sm:$0xff]
      %v1880 = vld [vmem:[#allocation2 + $0x2b0] sm:$0xff]
      %v1881 = vld [vmem:[#allocation2 + $0x2b8] sm:$0xff]
      %v1882 = vld [vmem:[#allocation2 + $0x2c0] sm:$0xff]
      %v1883 = vld [vmem:[#allocation2 + $0x2c8] sm:$0xff]
      %v1884 = vld [vmem:[#allocation2 + $0x2d0] sm:$0xff]
      %v1885 = vld [vmem:[#allocation2 + $0x2d8] sm:$0xff]
      %v1886 = vld [vmem:[#allocation2 + $0x2e0] sm:$0xff]
      %v1887 = vld [vmem:[#allocation2 + $0x2e8] sm:$0xff]
      %v1888 = vld [vmem:[#allocation2 + $0x2f0] sm:$0xff]
      %v1889 = vld [vmem:[#allocation2 + $0x2f8] sm:$0xff]
      %v1890 = vld [vmem:[#allocation2 + $0x300] sm:$0xff]
      %v1891 = vld [vmem:[#allocation2 + $0x308] sm:$0xff]
      %v1892 = vld [vmem:[#allocation2 + $0x310] sm:$0xff]
      %v1893 = vld [vmem:[#allocation2 + $0x318] sm:$0xff]
      %v1894 = vld [vmem:[#allocation2 + $0x320] sm:$0xff]
      %v1895 = vld [vmem:[#allocation2 + $0x328] sm:$0xff]
      %v1896 = vld [vmem:[#allocation2 + $0x330] sm:$0xff]
      %v1897 = vld [vmem:[#allocation2 + $0x338] sm:$0xff]
      %v1898 = vld [vmem:[#allocation2 + $0x340] sm:$0xff]
      %v1899 = vld [vmem:[#allocation2 + $0x348] sm:$0xff]
      %v1900 = vld [vmem:[#allocation2 + $0x350] sm:$0xff]
      %v1901 = vld [vmem:[#allocation2 + $0x358] sm:$0xff]
      %v1902 = vld [vmem:[#allocation2 + $0x360] sm:$0xff]
      %v1903 = vld [vmem:[#allocation2 + $0x368] sm:$0xff]
      %v1904 = vld [vmem:[#allocation2 + $0x370] sm:$0xff]
      %v1905 = vld [vmem:[#allocation2 + $0x378] sm:$0xff]
      %v1906 = vld [vmem:[#allocation2 + $0x380] sm:$0xff]
      %v1907 = vld [vmem:[#allocation2 + $0x388] sm:$0xff]
      %v1908 = vld [vmem:[#allocation2 + $0x390] sm:$0xff]
      %v1909 = vld [vmem:[#allocation2 + $0x398] sm:$0xff]
      %v1910 = vld [vmem:[#allocation2 + $0x3a0] sm:$0xff]
      %v1911 = vld [vmem:[#allocation2 + $0x3a8] sm:$0xff]
      %v1912 = vld [vmem:[#allocation2 + $0x3b0] sm:$0xff]
      %v1913 = vld [vmem:[#allocation2 + $0x3b8] sm:$0xff]
      %v1914 = vld [vmem:[#allocation2 + $0x3c0] sm:$0xff]
      %v1915 = vld [vmem:[#allocation2 + $0x3c8] sm:$0xff]
      %v1916 = vld [vmem:[#allocation2 + $0x3d0] sm:$0xff]
      %v1917 = vld [vmem:[#allocation2 + $0x3d8] sm:$0xff]
      %v1918 = vld [vmem:[#allocation2 + $0x3e0] sm:$0xff]
      %v1919 = vld [vmem:[#allocation2 + $0x3e8] sm:$0xff]
      %v1920 = vld [vmem:[#allocation2 + $0x3f0] sm:$0xff]
      %v1921 = vld [vmem:[#allocation2 + $0x3f8] sm:$0xff]
      %v1922 = vld [vmem:[#allocation2 + $0x400] sm:$0xff]
      %v1923 = vld [vmem:[#allocation2 + $0x408] sm:$0xff]
      %v1924 = vld [vmem:[#allocation2 + $0x410] sm:$0xff]
      %v1925 = vld [vmem:[#allocation2 + $0x418] sm:$0xff]
      %v1926 = vld [vmem:[#allocation2 + $0x420] sm:$0xff]
      %v1927 = vld [vmem:[#allocation2 + $0x428] sm:$0xff]
      %v1928 = vld [vmem:[#allocation2 + $0x430] sm:$0xff]
      %v1929 = vld [vmem:[#allocation2 + $0x438] sm:$0xff]
      %v1930 = vld [vmem:[#allocation2 + $0x440] sm:$0xff]
      %v1931 = vld [vmem:[#allocation2 + $0x448] sm:$0xff]
      %v1932 = vld [vmem:[#allocation2 + $0x450] sm:$0xff]
      %v1933 = vld [vmem:[#allocation2 + $0x458] sm:$0xff]
      %v1934 = vld [vmem:[#allocation2 + $0x460] sm:$0xff]
      %v1935 = vld [vmem:[#allocation2 + $0x468] sm:$0xff]
      %v1936 = vld [vmem:[#allocation2 + $0x470] sm:$0xff]
      %v1937 = vld [vmem:[#allocation2 + $0x478] sm:$0xff]
      %v1938 = vld [vmem:[#allocation2 + $0x480] sm:$0xff]
      %v1939 = vld [vmem:[#allocation2 + $0x488] sm:$0xff]
      %v1940 = vld [vmem:[#allocation2 + $0x490] sm:$0xff]
      %v1941 = vld [vmem:[#allocation2 + $0x498] sm:$0xff]
      %v1942 = vld [vmem:[#allocation2 + $0x4a0] sm:$0xff]
      %v1943 = vld [vmem:[#allocation2 + $0x4a8] sm:$0xff]
      %v1944 = vld [vmem:[#allocation2 + $0x4b0] sm:$0xff]
      %v1945 = vld [vmem:[#allocation2 + $0x4b8] sm:$0xff]
      %v1946 = vld [vmem:[#allocation2 + $0x4c0] sm:$0xff]
      %v1947 = vld [vmem:[#allocation2 + $0x4c8] sm:$0xff]
      %v1948 = vld [vmem:[#allocation2 + $0x4d0] sm:$0xff]
      %v1949 = vld [vmem:[#allocation2 + $0x4d8] sm:$0xff]
      %v1950 = vld [vmem:[#allocation2 + $0x4e0] sm:$0xff]
      %v1951 = vld [vmem:[#allocation2 + $0x4e8] sm:$0xff]
      %v1952 = vld [vmem:[#allocation2 + $0x4f0] sm:$0xff]
      %v1953 = vld [vmem:[#allocation2 + $0x4f8] sm:$0xff]
      %v1954 = vld [vmem:[#allocation2 + $0x500] sm:$0xff]
      %v1955 = vld [vmem:[#allocation2 + $0x508] sm:$0xff]
      %v1956 = vld [vmem:[#allocation2 + $0x510] sm:$0xff]
      %v1957 = vld [vmem:[#allocation2 + $0x518] sm:$0xff]
      %v1958 = vld [vmem:[#allocation2 + $0x520] sm:$0xff]
      %v1959 = vld [vmem:[#allocation2 + $0x528] sm:$0xff]
      %v1960 = vld [vmem:[#allocation2 + $0x530] sm:$0xff]
      %v1961 = vld [vmem:[#allocation2 + $0x538] sm:$0xff]
      %v1962 = vld [vmem:[#allocation2 + $0x540] sm:$0xff]
      %v1963 = vld [vmem:[#allocation2 + $0x548] sm:$0xff]
      %v1964 = vld [vmem:[#allocation2 + $0x550] sm:$0xff]
      %v1965 = vld [vmem:[#allocation2 + $0x558] sm:$0xff]
      %v1966 = vld [vmem:[#allocation2 + $0x560] sm:$0xff]
      %v1967 = vld [vmem:[#allocation2 + $0x568] sm:$0xff]
      %v1968 = vld [vmem:[#allocation2 + $0x570] sm:$0xff]
      %v1969 = vld [vmem:[#allocation2 + $0x578] sm:$0xff]
      %v1970 = vld [vmem:[#allocation2 + $0x580] sm:$0xff]
      %v1971 = vld [vmem:[#allocation2 + $0x588] sm:$0xff]
      %v1972 = vld [vmem:[#allocation2 + $0x590] sm:$0xff]
      %v1973 = vld [vmem:[#allocation2 + $0x598] sm:$0xff]
      %v1974 = vld [vmem:[#allocation2 + $0x5a0] sm:$0xff]
      %v1975 = vld [vmem:[#allocation2 + $0x5a8] sm:$0xff]
      %v1976 = vld [vmem:[#allocation2 + $0x5b0] sm:$0xff]
      %v1977 = vld [vmem:[#allocation2 + $0x5b8] sm:$0xff]
      %v1978 = vld [vmem:[#allocation2 + $0x5c0] sm:$0xff]
      %v1979 = vld [vmem:[#allocation2 + $0x5c8] sm:$0xff]
      %v1980 = vld [vmem:[#allocation2 + $0x5d0] sm:$0xff]
      %v1981 = vld [vmem:[#allocation2 + $0x5d8] sm:$0xff]
      %v1982 = vld [vmem:[#allocation2 + $0x5e0] sm:$0xff]
      %v1983 = vld [vmem:[#allocation2 + $0x5e8] sm:$0xff]
      %v1984 = vld [vmem:[#allocation2 + $0x5f0] sm:$0xff]
      %v1985 = vld [vmem:[#allocation2 + $0x5f8] sm:$0xff]
      %v1986 = vld [vmem:[#allocation2 + $0x600] sm:$0xff]
      %v1987 = vld [vmem:[#allocation2 + $0x608] sm:$0xff]
      %v1988 = vld [vmem:[#allocation2 + $0x610] sm:$0xff]
      %v1989 = vld [vmem:[#allocation2 + $0x618] sm:$0xff]
      %v1990 = vld [vmem:[#allocation2 + $0x620] sm:$0xff]
      %v1991 = vld [vmem:[#allocation2 + $0x628] sm:$0xff]
      %v1992 = vld [vmem:[#allocation2 + $0x630] sm:$0xff]
      %v1993 = vld [vmem:[#allocation2 + $0x638] sm:$0xff]
      %v1994 = vld [vmem:[#allocation2 + $0x640] sm:$0xff]
      %v1995 = vld [vmem:[#allocation2 + $0x648] sm:$0xff]
      %v1996 = vld [vmem:[#allocation2 + $0x650] sm:$0xff]
      %v1997 = vld [vmem:[#allocation2 + $0x658] sm:$0xff]
      %v1998 = vld [vmem:[#allocation2 + $0x660] sm:$0xff]
      %v1999 = vld [vmem:[#allocation2 + $0x668] sm:$0xff]
      %v2000 = vld [vmem:[#allocation2 + $0x670] sm:$0xff]
      %v2001 = vld [vmem:[#allocation2 + $0x678] sm:$0xff]
      %v2002 = vld [vmem:[#allocation2 + $0x680] sm:$0xff]
      %v2003 = vld [vmem:[#allocation2 + $0x688] sm:$0xff]
      %v2004 = vld [vmem:[#allocation2 + $0x690] sm:$0xff]
      %v2005 = vld [vmem:[#allocation2 + $0x698] sm:$0xff]
      %v2006 = vld [vmem:[#allocation2 + $0x6a0] sm:$0xff]
      %v2007 = vld [vmem:[#allocation2 + $0x6a8] sm:$0xff]
      %v2008 = vld [vmem:[#allocation2 + $0x6b0] sm:$0xff]
      %v2009 = vld [vmem:[#allocation2 + $0x6b8] sm:$0xff]
      %v2010 = vld [vmem:[#allocation2 + $0x6c0] sm:$0xff]
      %v2011 = vld [vmem:[#allocation2 + $0x6c8] sm:$0xff]
      %v2012 = vld [vmem:[#allocation2 + $0x6d0] sm:$0xff]
      %v2013 = vld [vmem:[#allocation2 + $0x6d8] sm:$0xff]
      %v2014 = vld [vmem:[#allocation2 + $0x6e0] sm:$0xff]
      %v2015 = vld [vmem:[#allocation2 + $0x6e8] sm:$0xff]
      %v2016 = vld [vmem:[#allocation2 + $0x6f0] sm:$0xff]
      %v2017 = vld [vmem:[#allocation2 + $0x6f8] sm:$0xff]
      %v2018 = vld [vmem:[#allocation2 + $0x700] sm:$0xff]
      %v2019 = vld [vmem:[#allocation2 + $0x708] sm:$0xff]
      %v2020 = vld [vmem:[#allocation2 + $0x710] sm:$0xff]
      %v2021 = vld [vmem:[#allocation2 + $0x718] sm:$0xff]
      %v2022 = vld [vmem:[#allocation2 + $0x720] sm:$0xff]
      %v2023 = vld [vmem:[#allocation2 + $0x728] sm:$0xff]
      %v2024 = vld [vmem:[#allocation2 + $0x730] sm:$0xff]
      %v2025 = vld [vmem:[#allocation2 + $0x738] sm:$0xff]
      %v2026 = vld [vmem:[#allocation2 + $0x740] sm:$0xff]
      %v2027 = vld [vmem:[#allocation2 + $0x748] sm:$0xff]
      %v2028 = vld [vmem:[#allocation2 + $0x750] sm:$0xff]
      %v2029 = vld [vmem:[#allocation2 + $0x758] sm:$0xff]
      %v2030 = vld [vmem:[#allocation2 + $0x760] sm:$0xff]
      %v2031 = vld [vmem:[#allocation2 + $0x768] sm:$0xff]
      %v2032 = vld [vmem:[#allocation2 + $0x770] sm:$0xff]
      %v2033 = vld [vmem:[#allocation2 + $0x778] sm:$0xff]
      %v2034 = vld [vmem:[#allocation2 + $0x780] sm:$0xff]
      %v2035 = vld [vmem:[#allocation2 + $0x788] sm:$0xff]
      %v2036 = vld [vmem:[#allocation2 + $0x790] sm:$0xff]
      %v2037 = vld [vmem:[#allocation2 + $0x798] sm:$0xff]
      %v2038 = vld [vmem:[#allocation2 + $0x7a0] sm:$0xff]
      %v2039 = vld [vmem:[#allocation2 + $0x7a8] sm:$0xff]
      %v2040 = vld [vmem:[#allocation2 + $0x7b0] sm:$0xff]
      %v2041 = vld [vmem:[#allocation2 + $0x7b8] sm:$0xff]
      %v2042 = vld [vmem:[#allocation2 + $0x7c0] sm:$0xff]
      %v2043 = vld [vmem:[#allocation2 + $0x7c8] sm:$0xff]
      %v2044 = vld [vmem:[#allocation2 + $0x7d0] sm:$0xff]
      %v2045 = vld [vmem:[#allocation2 + $0x7d8] sm:$0xff]
      %v2046 = vld [vmem:[#allocation2 + $0x7e0] sm:$0xff]
      %v2047 = vld [vmem:[#allocation2 + $0x7e8] sm:$0xff]
      %v2048 = vld [vmem:[#allocation2 + $0x7f0] sm:$0xff]
      %v2049 = vld [vmem:[#allocation2 + $0x7f8] sm:$0xff]
      %v2050 = vld [vmem:[#allocation2 + $0x800] sm:$0xff]
      %v2051 = vld [vmem:[#allocation2 + $0x808] sm:$0xff]
      %v2052 = vld [vmem:[#allocation2 + $0x810] sm:$0xff]
      %v2053 = vld [vmem:[#allocation2 + $0x818] sm:$0xff]
      %v2054 = vld [vmem:[#allocation2 + $0x820] sm:$0xff]
      %v2055 = vld [vmem:[#allocation2 + $0x828] sm:$0xff]
      %v2056 = vld [vmem:[#allocation2 + $0x830] sm:$0xff]
      %v2057 = vld [vmem:[#allocation2 + $0x838] sm:$0xff]
      %v2058 = vld [vmem:[#allocation2 + $0x840] sm:$0xff]
      %v2059 = vld [vmem:[#allocation2 + $0x848] sm:$0xff]
      %v2060 = vld [vmem:[#allocation2 + $0x850] sm:$0xff]
      %v2061 = vld [vmem:[#allocation2 + $0x858] sm:$0xff]
      %v2062 = vld [vmem:[#allocation2 + $0x860] sm:$0xff]
      %v2063 = vld [vmem:[#allocation2 + $0x868] sm:$0xff]
      %v2064 = vld [vmem:[#allocation2 + $0x870] sm:$0xff]
      %v2065 = vld [vmem:[#allocation2 + $0x878] sm:$0xff]
      %v2066 = vld [vmem:[#allocation2 + $0x880] sm:$0xff]
      %v2067 = vld [vmem:[#allocation2 + $0x888] sm:$0xff]
      %v2068 = vld [vmem:[#allocation2 + $0x890] sm:$0xff]
      %v2069 = vld [vmem:[#allocation2 + $0x898] sm:$0xff]
      %v2070 = vld [vmem:[#allocation2 + $0x8a0] sm:$0xff]
      %v2071 = vld [vmem:[#allocation2 + $0x8a8] sm:$0xff]
      %v2072 = vld [vmem:[#allocation2 + $0x8b0] sm:$0xff]
      %v2073 = vld [vmem:[#allocation2 + $0x8b8] sm:$0xff]
      %v2074 = vld [vmem:[#allocation2 + $0x8c0] sm:$0xff]
      %v2075 = vld [vmem:[#allocation2 + $0x8c8] sm:$0xff]
      %v2076 = vld [vmem:[#allocation2 + $0x8d0] sm:$0xff]
      %v2077 = vld [vmem:[#allocation2 + $0x8d8] sm:$0xff]
      %v2078 = vld [vmem:[#allocation2 + $0x8e0] sm:$0xff]
      %v2079 = vld [vmem:[#allocation2 + $0x8e8] sm:$0xff]
      %v2080 = vld [vmem:[#allocation2 + $0x8f0] sm:$0xff]
      %v2081 = vld [vmem:[#allocation2 + $0x8f8] sm:$0xff]
      %v2082 = vld [vmem:[%s1] sm:$0xff]
      %v2083 = vld [vmem:[%s1 + $0x8] sm:$0xff]
      %v2084 = vld [vmem:[%s1 + $0x10] sm:$0xff]
      %v2085 = vld [vmem:[%s1 + $0x18] sm:$0xff]
      %v2086 = vld [vmem:[%s1 + $0x20] sm:$0xff]
      %v2087 = vld [vmem:[%s1 + $0x28] sm:$0xff]
      %v2088 = vld [vmem:[%s1 + $0x30] sm:$0xff]
      %v2089 = vld [vmem:[%s1 + $0x38] sm:$0xff]
      %v2090 = vld [vmem:[%s1 + $0x40] sm:$0xff]
      %v2091 = vld [vmem:[%s1 + $0x48] sm:$0xff]
      %v2092 = vld [vmem:[%s1 + $0x50] sm:$0xff]
      %v2093 = vld [vmem:[%s1 + $0x58] sm:$0xff]
      %v2094 = vld [vmem:[%s1 + $0x60] sm:$0xff]
      %v2095 = vld [vmem:[%s1 + $0x68] sm:$0xff]
      %v2096 = vld [vmem:[%s1 + $0x70] sm:$0xff]
      %v2097 = vld [vmem:[%s1 + $0x78] sm:$0xff]
      %v2098 = vld [vmem:[%s1 + $0x80] sm:$0xff]
      %v2099 = vld [vmem:[%s1 + $0x88] sm:$0xff]
      %v2100 = vld [vmem:[%s1 + $0x90] sm:$0xff]
      %v2101 = vld [vmem:[%s1 + $0x98] sm:$0xff]
      %v2102 = vld [vmem:[%s1 + $0xa0] sm:$0xff]
      %v2103 = vld [vmem:[%s1 + $0xa8] sm:$0xff]
      %v2104 = vld [vmem:[%s1 + $0xb0] sm:$0xff]
      %v2105 = vld [vmem:[%s1 + $0xb8] sm:$0xff]
      %v2106 = vld [vmem:[%s1 + $0xc0] sm:$0xff]
      %v2107 = vld [vmem:[%s1 + $0xc8] sm:$0xff]
      %v2108 = vld [vmem:[%s1 + $0xd0] sm:$0xff]
      %v2109 = vld [vmem:[%s1 + $0xd8] sm:$0xff]
      %v2110 = vld [vmem:[%s1 + $0xe0] sm:$0xff]
      %v2111 = vld [vmem:[%s1 + $0xe8] sm:$0xff]
      %v2112 = vld [vmem:[%s1 + $0xf0] sm:$0xff]
      %v2113 = vld [vmem:[%s1 + $0xf8] sm:$0xff]
      %v2114 = vld [vmem:[%s1 + $0x100] sm:$0xff]
      %v2115 = vld [vmem:[%s1 + $0x108] sm:$0xff]
      %v2116 = vld [vmem:[%s1 + $0x110] sm:$0xff]
      %v2117 = vld [vmem:[%s1 + $0x118] sm:$0xff]
      %v2118 = vld [vmem:[%s1 + $0x120] sm:$0xff]
      %v2119 = vld [vmem:[%s1 + $0x128] sm:$0xff]
      %v2120 = vld [vmem:[%s1 + $0x130] sm:$0xff]
      %v2121 = vld [vmem:[%s1 + $0x138] sm:$0xff]
      %v2122 = vld [vmem:[%s1 + $0x140] sm:$0xff]
      %v2123 = vld [vmem:[%s1 + $0x148] sm:$0xff]
      %v2124 = vld [vmem:[%s1 + $0x150] sm:$0xff]
      %v2125 = vld [vmem:[%s1 + $0x158] sm:$0xff]
      %v2126 = vld [vmem:[%s1 + $0x160] sm:$0xff]
      %v2127 = vld [vmem:[%s1 + $0x168] sm:$0xff]
      %v2128 = vld [vmem:[%s1 + $0x170] sm:$0xff]
      %v2129 = vld [vmem:[%s1 + $0x178] sm:$0xff]
      %v2130 = vld [vmem:[%s1 + $0x180] sm:$0xff]
      %v2131 = vld [vmem:[%s1 + $0x188] sm:$0xff]
      %v2132 = vld [vmem:[%s1 + $0x190] sm:$0xff]
      %v2133 = vld [vmem:[%s1 + $0x198] sm:$0xff]
      %v2134 = vld [vmem:[%s1 + $0x1a0] sm:$0xff]
      %v2135 = vld [vmem:[%s1 + $0x1a8] sm:$0xff]
      %v2136 = vld [vmem:[%s1 + $0x1b0] sm:$0xff]
      %v2137 = vld [vmem:[%s1 + $0x1b8] sm:$0xff]
      %v2138 = vld [vmem:[%s1 + $0x1c0] sm:$0xff]
      %v2139 = vld [vmem:[%s1 + $0x1c8] sm:$0xff]
      %v2140 = vld [vmem:[%s1 + $0x1d0] sm:$0xff]
      %v2141 = vld [vmem:[%s1 + $0x1d8] sm:$0xff]
      %v2142 = vld [vmem:[%s1 + $0x1e0] sm:$0xff]
      %v2143 = vld [vmem:[%s1 + $0x1e8] sm:$0xff]
      %v2144 = vld [vmem:[%s1 + $0x1f0] sm:$0xff]
      %v2145 = vld [vmem:[%s1 + $0x1f8] sm:$0xff]
      %v2146 = vld [vmem:[%s1 + $0x200] sm:$0xff]
      %v2147 = vld [vmem:[%s1 + $0x208] sm:$0xff]
      %v2148 = vld [vmem:[%s1 + $0x210] sm:$0xff]
      %v2149 = vld [vmem:[%s1 + $0x218] sm:$0xff]
      %v2150 = vld [vmem:[%s1 + $0x220] sm:$0xff]
      %v2151 = vld [vmem:[%s1 + $0x228] sm:$0xff]
      %v2152 = vld [vmem:[%s1 + $0x230] sm:$0xff]
      %v2153 = vld [vmem:[%s1 + $0x238] sm:$0xff]
      %v2154 = vld [vmem:[%s1 + $0x240] sm:$0xff]
      %v2155 = vld [vmem:[%s1 + $0x248] sm:$0xff]
      %v2156 = vld [vmem:[%s1 + $0x250] sm:$0xff]
      %v2157 = vld [vmem:[%s1 + $0x258] sm:$0xff]
      %v2158 = vld [vmem:[%s1 + $0x260] sm:$0xff]
      %v2159 = vld [vmem:[%s1 + $0x268] sm:$0xff]
      %v2160 = vld [vmem:[%s1 + $0x270] sm:$0xff]
      %v2161 = vld [vmem:[%s1 + $0x278] sm:$0xff]
      %v2162 = vld [vmem:[%s1 + $0x280] sm:$0xff]
      %v2163 = vld [vmem:[%s1 + $0x288] sm:$0xff]
      %v2164 = vld [vmem:[%s1 + $0x290] sm:$0xff]
      %v2165 = vld [vmem:[%s1 + $0x298] sm:$0xff]
      %v2166 = vld [vmem:[%s1 + $0x2a0] sm:$0xff]
      %v2167 = vld [vmem:[%s1 + $0x2a8] sm:$0xff]
      %v2168 = vld [vmem:[%s1 + $0x2b0] sm:$0xff]
      %v2169 = vld [vmem:[%s1 + $0x2b8] sm:$0xff]
      %v2170 = vld [vmem:[%s1 + $0x2c0] sm:$0xff]
      %v2171 = vld [vmem:[%s1 + $0x2c8] sm:$0xff]
      %v2172 = vld [vmem:[%s1 + $0x2d0] sm:$0xff]
      %v2173 = vld [vmem:[%s1 + $0x2d8] sm:$0xff]
      %v2174 = vld [vmem:[%s1 + $0x2e0] sm:$0xff]
      %v2175 = vld [vmem:[%s1 + $0x2e8] sm:$0xff]
      %v2176 = vld [vmem:[%s1 + $0x2f0] sm:$0xff]
      %v2177 = vld [vmem:[%s1 + $0x2f8] sm:$0xff]
      %v2178 = vld [vmem:[%s1 + $0x300] sm:$0xff]
      %v2179 = vld [vmem:[%s1 + $0x308] sm:$0xff]
      %v2180 = vld [vmem:[%s1 + $0x310] sm:$0xff]
      %v2181 = vld [vmem:[%s1 + $0x318] sm:$0xff]
      %v2182 = vld [vmem:[%s1 + $0x320] sm:$0xff]
      %v2183 = vld [vmem:[%s1 + $0x328] sm:$0xff]
      %v2184 = vld [vmem:[%s1 + $0x330] sm:$0xff]
      %v2185 = vld [vmem:[%s1 + $0x338] sm:$0xff]
      %v2186 = vld [vmem:[%s1 + $0x340] sm:$0xff]
      %v2187 = vld [vmem:[%s1 + $0x348] sm:$0xff]
      %v2188 = vld [vmem:[%s1 + $0x350] sm:$0xff]
      %v2189 = vld [vmem:[%s1 + $0x358] sm:$0xff]
      %v2190 = vld [vmem:[%s1 + $0x360] sm:$0xff]
      %v2191 = vld [vmem:[%s1 + $0x368] sm:$0xff]
      %v2192 = vld [vmem:[%s1 + $0x370] sm:$0xff]
      %v2193 = vld [vmem:[%s1 + $0x378] sm:$0xff]
      %v2194 = vld [vmem:[%s1 + $0x380] sm:$0xff]
      %v2195 = vld [vmem:[%s1 + $0x388] sm:$0xff]
      %v2196 = vld [vmem:[%s1 + $0x390] sm:$0xff]
      %v2197 = vld [vmem:[%s1 + $0x398] sm:$0xff]
      %v2198 = vld [vmem:[%s1 + $0x3a0] sm:$0xff]
      %v2199 = vld [vmem:[%s1 + $0x3a8] sm:$0xff]
      %v2200 = vld [vmem:[%s1 + $0x3b0] sm:$0xff]
      %v2201 = vld [vmem:[%s1 + $0x3b8] sm:$0xff]
      %v2202 = vld [vmem:[%s1 + $0x3c0] sm:$0xff]
      %v2203 = vld [vmem:[%s1 + $0x3c8] sm:$0xff]
      %v2204 = vld [vmem:[%s1 + $0x3d0] sm:$0xff]
      %v2205 = vld [vmem:[%s1 + $0x3d8] sm:$0xff]
      %v2206 = vld [vmem:[%s1 + $0x3e0] sm:$0xff]
      %v2207 = vld [vmem:[%s1 + $0x3e8] sm:$0xff]
      %v2208 = vld [vmem:[%s1 + $0x3f0] sm:$0xff]
      %v2209 = vld [vmem:[%s1 + $0x3f8] sm:$0xff]
      %v2210 = vld [vmem:[%s1 + $0x400] sm:$0xff]
      %v2211 = vld [vmem:[%s1 + $0x408] sm:$0xff]
      %v2212 = vld [vmem:[%s1 + $0x410] sm:$0xff]
      %v2213 = vld [vmem:[%s1 + $0x418] sm:$0xff]
      %v2214 = vld [vmem:[%s1 + $0x420] sm:$0xff]
      %v2215 = vld [vmem:[%s1 + $0x428] sm:$0xff]
      %v2216 = vld [vmem:[%s1 + $0x430] sm:$0xff]
      %v2217 = vld [vmem:[%s1 + $0x438] sm:$0xff]
      %v2218 = vld [vmem:[%s1 + $0x440] sm:$0xff]
      %v2219 = vld [vmem:[%s1 + $0x448] sm:$0xff]
      %v2220 = vld [vmem:[%s1 + $0x450] sm:$0xff]
      %v2221 = vld [vmem:[%s1 + $0x458] sm:$0xff]
      %v2222 = vld [vmem:[%s1 + $0x460] sm:$0xff]
      %v2223 = vld [vmem:[%s1 + $0x468] sm:$0xff]
      %v2224 = vld [vmem:[%s1 + $0x470] sm:$0xff]
      %v2225 = vld [vmem:[%s1 + $0x478] sm:$0xff]
      %v2226 = vld [vmem:[%s1 + $0x480] sm:$0xff]
      %v2227 = vld [vmem:[%s1 + $0x488] sm:$0xff]
      %v2228 = vld [vmem:[%s1 + $0x490] sm:$0xff]
      %v2229 = vld [vmem:[%s1 + $0x498] sm:$0xff]
      %v2230 = vld [vmem:[%s1 + $0x4a0] sm:$0xff]
      %v2231 = vld [vmem:[%s1 + $0x4a8] sm:$0xff]
      %v2232 = vld [vmem:[%s1 + $0x4b0] sm:$0xff]
      %v2233 = vld [vmem:[%s1 + $0x4b8] sm:$0xff]
      %v2234 = vld [vmem:[%s1 + $0x4c0] sm:$0xff]
      %v2235 = vld [vmem:[%s1 + $0x4c8] sm:$0xff]
      %v2236 = vld [vmem:[%s1 + $0x4d0] sm:$0xff]
      %v2237 = vld [vmem:[%s1 + $0x4d8] sm:$0xff]
      %v2238 = vld [vmem:[%s1 + $0x4e0] sm:$0xff]
      %v2239 = vld [vmem:[%s1 + $0x4e8] sm:$0xff]
      %v2240 = vld [vmem:[%s1 + $0x4f0] sm:$0xff]
      %v2241 = vld [vmem:[%s1 + $0x4f8] sm:$0xff]
      %v2242 = vld [vmem:[%s1 + $0x500] sm:$0xff]
      %v2243 = vld [vmem:[%s1 + $0x508] sm:$0xff]
      %v2244 = vld [vmem:[%s1 + $0x510] sm:$0xff]
      %v2245 = vld [vmem:[%s1 + $0x518] sm:$0xff]
      %v2246 = vld [vmem:[%s1 + $0x520] sm:$0xff]
      %v2247 = vld [vmem:[%s1 + $0x528] sm:$0xff]
      %v2248 = vld [vmem:[%s1 + $0x530] sm:$0xff]
      %v2249 = vld [vmem:[%s1 + $0x538] sm:$0xff]
      %v2250 = vld [vmem:[%s1 + $0x540] sm:$0xff]
      %v2251 = vld [vmem:[%s1 + $0x548] sm:$0xff]
      %v2252 = vld [vmem:[%s1 + $0x550] sm:$0xff]
      %v2253 = vld [vmem:[%s1 + $0x558] sm:$0xff]
      %v2254 = vld [vmem:[%s1 + $0x560] sm:$0xff]
      %v2255 = vld [vmem:[%s1 + $0x568] sm:$0xff]
      %v2256 = vld [vmem:[%s1 + $0x570] sm:$0xff]
      %v2257 = vld [vmem:[%s1 + $0x578] sm:$0xff]
      %v2258 = vld [vmem:[%s1 + $0x580] sm:$0xff]
      %v2259 = vld [vmem:[%s1 + $0x588] sm:$0xff]
      %v2260 = vld [vmem:[%s1 + $0x590] sm:$0xff]
      %v2261 = vld [vmem:[%s1 + $0x598] sm:$0xff]
      %v2262 = vld [vmem:[%s1 + $0x5a0] sm:$0xff]
      %v2263 = vld [vmem:[%s1 + $0x5a8] sm:$0xff]
      %v2264 = vld [vmem:[%s1 + $0x5b0] sm:$0xff]
      %v2265 = vld [vmem:[%s1 + $0x5b8] sm:$0xff]
      %v2266 = vld [vmem:[%s1 + $0x5c0] sm:$0xff]
      %v2267 = vld [vmem:[%s1 + $0x5c8] sm:$0xff]
      %v2268 = vld [vmem:[%s1 + $0x5d0] sm:$0xff]
      %v2269 = vld [vmem:[%s1 + $0x5d8] sm:$0xff]
      %v2270 = vld [vmem:[%s1 + $0x5e0] sm:$0xff]
      %v2271 = vld [vmem:[%s1 + $0x5e8] sm:$0xff]
      %v2272 = vld [vmem:[%s1 + $0x5f0] sm:$0xff]
      %v2273 = vld [vmem:[%s1 + $0x5f8] sm:$0xff]
      %v2274 = vld [vmem:[%s2] sm:$0x1]
      %v2276 = vperm.slane %v2274, 0
      %2278 = vmatpush.msra.mxu0 %v2097
      %2279 = vmatpush.msra.mxu0 %v2096
      %2280 = vmatpush.msra.mxu0 %v2095
      %2281 = vmatpush.msra.mxu0 %v2094
      %2282 = vmatpush.msra.mxu0 %v2093
      %2283 = vmatpush.msra.mxu0 %v2092
      %2284 = vmatpush.msra.mxu0 %v2091
      %2285 = vmatpush.msra.mxu0 %v2090
      %2286 = vmatpush.msra.mxu0 %v2089
      %2287 = vmatpush.msra.mxu0 %v2088
      %2288 = vmatpush.msra.mxu0 %v2087
      %2289 = vmatpush.msra.mxu0 %v2086
      %2290 = vmatpush.msra.mxu0 %v2085
      %2291 = vmatpush.msra.mxu0 %v2084
      %2292 = vmatpush.msra.mxu0 %v2083
      %2293 = vmatpush.msra.mxu0 %v2082
      %2294 = vmatmul.f32.gmra.mxu0 %v1794
      %v2295 = vpop.f32.mrf.mxu0
      %v2296 = vadd.f32 %v2276, %v2295
      %2297 = vmatmul.f32.gmra.mxu0 %v1806
      %v2298 = vpop.f32.mrf.mxu0
      %v2299 = vadd.f32 %v2276, %v2298
      %2300 = vmatmul.f32.gmra.mxu0 %v1818
      %v2301 = vpop.f32.mrf.mxu0
      %v2302 = vadd.f32 %v2276, %v2301
      %2303 = vmatmul.f32.gmra.mxu0 %v1830
      %v2304 = vpop.f32.mrf.mxu0
      %v2305 = vadd.f32 %v2276, %v2304
      %2306 = vmatmul.f32.gmra.mxu0 %v1842
      %v2307 = vpop.f32.mrf.mxu0
      %v2308 = vadd.f32 %v2276, %v2307
      %2309 = vmatmul.f32.gmra.mxu0 %v1854
      %v2310 = vpop.f32.mrf.mxu0
      %v2311 = vadd.f32 %v2276, %v2310
      %2312 = vmatmul.f32.gmra.mxu0 %v1866
      %v2313 = vpop.f32.mrf.mxu0
      %v2314 = vadd.f32 %v2276, %v2313
      %2315 = vmatmul.f32.gmra.mxu0 %v1878
      %v2316 = vpop.f32.mrf.mxu0
      %v2317 = vadd.f32 %v2276, %v2316
      %2318 = vmatmul.f32.gmra.mxu0 %v1890
      %v2319 = vpop.f32.mrf.mxu0
      %v2320 = vadd.f32 %v2276, %v2319
      %2321 = vmatmul.f32.gmra.mxu0 %v1902
      %v2322 = vpop.f32.mrf.mxu0
      %v2323 = vadd.f32 %v2276, %v2322
      %2324 = vmatmul.f32.gmra.mxu0 %v1914
      %v2325 = vpop.f32.mrf.mxu0
      %v2326 = vadd.f32 %v2276, %v2325
      %2327 = vmatmul.f32.gmra.mxu0 %v1926
      %v2328 = vpop.f32.mrf.mxu0
      %v2329 = vadd.f32 %v2276, %v2328
      %2330 = vmatmul.f32.gmra.mxu0 %v1938
      %v2331 = vpop.f32.mrf.mxu0
      %v2332 = vadd.f32 %v2276, %v2331
      %2333 = vmatmul.f32.gmra.mxu0 %v1950
      %v2334 = vpop.f32.mrf.mxu0
      %v2335 = vadd.f32 %v2276, %v2334
      %2336 = vmatmul.f32.gmra.mxu0 %v1962
      %v2337 = vpop.f32.mrf.mxu0
      %v2338 = vadd.f32 %v2276, %v2337
      %2339 = vmatmul.f32.gmra.mxu0 %v1974
      %v2340 = vpop.f32.mrf.mxu0
      %v2341 = vadd.f32 %v2276, %v2340
      %2342 = vmatmul.f32.gmra.mxu0 %v1986
      %v2343 = vpop.f32.mrf.mxu0
      %v2344 = vadd.f32 %v2276, %v2343
      %2345 = vmatmul.f32.gmra.mxu0 %v1998
      %v2346 = vpop.f32.mrf.mxu0
      %v2347 = vadd.f32 %v2276, %v2346
      %2348 = vmatmul.f32.gmra.mxu0 %v2010
      %v2349 = vpop.f32.mrf.mxu0
      %v2350 = vadd.f32 %v2276, %v2349
      %2351 = vmatmul.f32.gmra.mxu0 %v2022
      %v2352 = vpop.f32.mrf.mxu0
      %v2353 = vadd.f32 %v2276, %v2352
      %2354 = vmatmul.f32.gmra.mxu0 %v2034
      %v2355 = vpop.f32.mrf.mxu0
      %v2356 = vadd.f32 %v2276, %v2355
      %2357 = vmatmul.f32.gmra.mxu0 %v2046
      %v2358 = vpop.f32.mrf.mxu0
      %v2359 = vadd.f32 %v2276, %v2358
      %2360 = vmatmul.f32.gmra.mxu0 %v2058
      %v2361 = vpop.f32.mrf.mxu0
      %v2362 = vadd.f32 %v2276, %v2361
      %2363 = vmatmul.f32.gmra.mxu0 %v2070
      %v2364 = vpop.f32.mrf.mxu0
      %v2365 = vadd.f32 %v2276, %v2364
      %2366 = vdwg.mxu0
      %2367 = vmatpush.msra.mxu0 %v2113
      %2368 = vmatpush.msra.mxu0 %v2112
      %2369 = vmatpush.msra.mxu0 %v2111
      %2370 = vmatpush.msra.mxu0 %v2110
      %2371 = vmatpush.msra.mxu0 %v2109
      %2372 = vmatpush.msra.mxu0 %v2108
      %2373 = vmatpush.msra.mxu0 %v2107
      %2374 = vmatpush.msra.mxu0 %v2106
      %2375 = vmatpush.msra.mxu0 %v2105
      %2376 = vmatpush.msra.mxu0 %v2104
      %2377 = vmatpush.msra.mxu0 %v2103
      %2378 = vmatpush.msra.mxu0 %v2102
      %2379 = vmatpush.msra.mxu0 %v2101
      %2380 = vmatpush.msra.mxu0 %v2100
      %2381 = vmatpush.msra.mxu0 %v2099
      %2382 = vmatpush.msra.mxu0 %v2098
      %2383 = vmatmul.f32.gmra.mxu0 %v1795
      %v2384 = vpop.f32.mrf.mxu0
      %v2385 = vadd.f32 %v2296, %v2384
      %2386 = vmatmul.f32.gmra.mxu0 %v1807
      %v2387 = vpop.f32.mrf.mxu0
      %v2388 = vadd.f32 %v2299, %v2387
      %2389 = vmatmul.f32.gmra.mxu0 %v1819
      %v2390 = vpop.f32.mrf.mxu0
      %v2391 = vadd.f32 %v2302, %v2390
      %2392 = vmatmul.f32.gmra.mxu0 %v1831
      %v2393 = vpop.f32.mrf.mxu0
      %v2394 = vadd.f32 %v2305, %v2393
      %2395 = vmatmul.f32.gmra.mxu0 %v1843
      %v2396 = vpop.f32.mrf.mxu0
      %v2397 = vadd.f32 %v2308, %v2396
      %2398 = vmatmul.f32.gmra.mxu0 %v1855
      %v2399 = vpop.f32.mrf.mxu0
      %v2400 = vadd.f32 %v2311, %v2399
      %2401 = vmatmul.f32.gmra.mxu0 %v1867
      %v2402 = vpop.f32.mrf.mxu0
      %v2403 = vadd.f32 %v2314, %v2402
      %2404 = vmatmul.f32.gmra.mxu0 %v1879
      %v2405 = vpop.f32.mrf.mxu0
      %v2406 = vadd.f32 %v2317, %v2405
      %2407 = vmatmul.f32.gmra.mxu0 %v1891
      %v2408 = vpop.f32.mrf.mxu0
      %v2409 = vadd.f32 %v2320, %v2408
      %2410 = vmatmul.f32.gmra.mxu0 %v1903
      %v2411 = vpop.f32.mrf.mxu0
      %v2412 = vadd.f32 %v2323, %v2411
      %2413 = vmatmul.f32.gmra.mxu0 %v1915
      %v2414 = vpop.f32.mrf.mxu0
      %v2415 = vadd.f32 %v2326, %v2414
      %2416 = vmatmul.f32.gmra.mxu0 %v1927
      %v2417 = vpop.f32.mrf.mxu0
      %v2418 = vadd.f32 %v2329, %v2417
      %2419 = vmatmul.f32.gmra.mxu0 %v1939
      %v2420 = vpop.f32.mrf.mxu0
      %v2421 = vadd.f32 %v2332, %v2420
      %2422 = vmatmul.f32.gmra.mxu0 %v1951
      %v2423 = vpop.f32.mrf.mxu0
      %v2424 = vadd.f32 %v2335, %v2423
      %2425 = vmatmul.f32.gmra.mxu0 %v1963
      %v2426 = vpop.f32.mrf.mxu0
      %v2427 = vadd.f32 %v2338, %v2426
      %2428 = vmatmul.f32.gmra.mxu0 %v1975
      %v2429 = vpop.f32.mrf.mxu0
      %v2430 = vadd.f32 %v2341, %v2429
      %2431 = vmatmul.f32.gmra.mxu0 %v1987
      %v2432 = vpop.f32.mrf.mxu0
      %v2433 = vadd.f32 %v2344, %v2432
      %2434 = vmatmul.f32.gmra.mxu0 %v1999
      %v2435 = vpop.f32.mrf.mxu0
      %v2436 = vadd.f32 %v2347, %v2435
      %2437 = vmatmul.f32.gmra.mxu0 %v2011
      %v2438 = vpop.f32.mrf.mxu0
      %v2439 = vadd.f32 %v2350, %v2438
      %2440 = vmatmul.f32.gmra.mxu0 %v2023
      %v2441 = vpop.f32.mrf.mxu0
      %v2442 = vadd.f32 %v2353, %v2441
      %2443 = vmatmul.f32.gmra.mxu0 %v2035
      %v2444 = vpop.f32.mrf.mxu0
      %v2445 = vadd.f32 %v2356, %v2444
      %2446 = vmatmul.f32.gmra.mxu0 %v2047
      %v2447 = vpop.f32.mrf.mxu0
      %v2448 = vadd.f32 %v2359, %v2447
      %2449 = vmatmul.f32.gmra.mxu0 %v2059
      %v2450 = vpop.f32.mrf.mxu0
      %v2451 = vadd.f32 %v2362, %v2450
      %2452 = vmatmul.f32.gmra.mxu0 %v2071
      %v2453 = vpop.f32.mrf.mxu0
      %v2454 = vadd.f32 %v2365, %v2453
      %2455 = vdwg.mxu0
      %2456 = vmatpush.msra.mxu0 %v2129
      %2457 = vmatpush.msra.mxu0 %v2128
      %2458 = vmatpush.msra.mxu0 %v2127
      %2459 = vmatpush.msra.mxu0 %v2126
      %2460 = vmatpush.msra.mxu0 %v2125
      %2461 = vmatpush.msra.mxu0 %v2124
      %2462 = vmatpush.msra.mxu0 %v2123
      %2463 = vmatpush.msra.mxu0 %v2122
      %2464 = vmatpush.msra.mxu0 %v2121
      %2465 = vmatpush.msra.mxu0 %v2120
      %2466 = vmatpush.msra.mxu0 %v2119
      %2467 = vmatpush.msra.mxu0 %v2118
      %2468 = vmatpush.msra.mxu0 %v2117
      %2469 = vmatpush.msra.mxu0 %v2116
      %2470 = vmatpush.msra.mxu0 %v2115
      %2471 = vmatpush.msra.mxu0 %v2114
      %2472 = vmatmul.f32.gmra.mxu0 %v1796
      %v2473 = vpop.f32.mrf.mxu0
      %v2474 = vadd.f32 %v2385, %v2473
      %2475 = vmatmul.f32.gmra.mxu0 %v1808
      %v2476 = vpop.f32.mrf.mxu0
      %v2477 = vadd.f32 %v2388, %v2476
      %2478 = vmatmul.f32.gmra.mxu0 %v1820
      %v2479 = vpop.f32.mrf.mxu0
      %v2480 = vadd.f32 %v2391, %v2479
      %2481 = vmatmul.f32.gmra.mxu0 %v1832
      %v2482 = vpop.f32.mrf.mxu0
      %v2483 = vadd.f32 %v2394, %v2482
      %2484 = vmatmul.f32.gmra.mxu0 %v1844
      %v2485 = vpop.f32.mrf.mxu0
      %v2486 = vadd.f32 %v2397, %v2485
      %2487 = vmatmul.f32.gmra.mxu0 %v1856
      %v2488 = vpop.f32.mrf.mxu0
      %v2489 = vadd.f32 %v2400, %v2488
      %2490 = vmatmul.f32.gmra.mxu0 %v1868
      %v2491 = vpop.f32.mrf.mxu0
      %v2492 = vadd.f32 %v2403, %v2491
      %2493 = vmatmul.f32.gmra.mxu0 %v1880
      %v2494 = vpop.f32.mrf.mxu0
      %v2495 = vadd.f32 %v2406, %v2494
      %2496 = vmatmul.f32.gmra.mxu0 %v1892
      %v2497 = vpop.f32.mrf.mxu0
      %v2498 = vadd.f32 %v2409, %v2497
      %2499 = vmatmul.f32.gmra.mxu0 %v1904
      %v2500 = vpop.f32.mrf.mxu0
      %v2501 = vadd.f32 %v2412, %v2500
      %2502 = vmatmul.f32.gmra.mxu0 %v1916
      %v2503 = vpop.f32.mrf.mxu0
      %v2504 = vadd.f32 %v2415, %v2503
      %2505 = vmatmul.f32.gmra.mxu0 %v1928
      %v2506 = vpop.f32.mrf.mxu0
      %v2507 = vadd.f32 %v2418, %v2506
      %2508 = vmatmul.f32.gmra.mxu0 %v1940
      %v2509 = vpop.f32.mrf.mxu0
      %v2510 = vadd.f32 %v2421, %v2509
      %2511 = vmatmul.f32.gmra.mxu0 %v1952
      %v2512 = vpop.f32.mrf.mxu0
      %v2513 = vadd.f32 %v2424, %v2512
      %2514 = vmatmul.f32.gmra.mxu0 %v1964
      %v2515 = vpop.f32.mrf.mxu0
      %v2516 = vadd.f32 %v2427, %v2515
      %2517 = vmatmul.f32.gmra.mxu0 %v1976
      %v2518 = vpop.f32.mrf.mxu0
      %v2519 = vadd.f32 %v2430, %v2518
      %2520 = vmatmul.f32.gmra.mxu0 %v1988
      %v2521 = vpop.f32.mrf.mxu0
      %v2522 = vadd.f32 %v2433, %v2521
      %2523 = vmatmul.f32.gmra.mxu0 %v2000
      %v2524 = vpop.f32.mrf.mxu0
      %v2525 = vadd.f32 %v2436, %v2524
      %2526 = vmatmul.f32.gmra.mxu0 %v2012
      %v2527 = vpop.f32.mrf.mxu0
      %v2528 = vadd.f32 %v2439, %v2527
      %2529 = vmatmul.f32.gmra.mxu0 %v2024
      %v2530 = vpop.f32.mrf.mxu0
      %v2531 = vadd.f32 %v2442, %v2530
      %2532 = vmatmul.f32.gmra.mxu0 %v2036
      %v2533 = vpop.f32.mrf.mxu0
      %v2534 = vadd.f32 %v2445, %v2533
      %2535 = vmatmul.f32.gmra.mxu0 %v2048
      %v2536 = vpop.f32.mrf.mxu0
      %v2537 = vadd.f32 %v2448, %v2536
      %2538 = vmatmul.f32.gmra.mxu0 %v2060
      %v2539 = vpop.f32.mrf.mxu0
      %v2540 = vadd.f32 %v2451, %v2539
      %2541 = vmatmul.f32.gmra.mxu0 %v2072
      %v2542 = vpop.f32.mrf.mxu0
      %v2543 = vadd.f32 %v2454, %v2542
      %2544 = vdwg.mxu0
      %2545 = vmatpush.msra.mxu0 %v2145
      %2546 = vmatpush.msra.mxu0 %v2144
      %2547 = vmatpush.msra.mxu0 %v2143
      %2548 = vmatpush.msra.mxu0 %v2142
      %2549 = vmatpush.msra.mxu0 %v2141
      %2550 = vmatpush.msra.mxu0 %v2140
      %2551 = vmatpush.msra.mxu0 %v2139
      %2552 = vmatpush.msra.mxu0 %v2138
      %2553 = vmatpush.msra.mxu0 %v2137
      %2554 = vmatpush.msra.mxu0 %v2136
      %2555 = vmatpush.msra.mxu0 %v2135
      %2556 = vmatpush.msra.mxu0 %v2134
      %2557 = vmatpush.msra.mxu0 %v2133
      %2558 = vmatpush.msra.mxu0 %v2132
      %2559 = vmatpush.msra.mxu0 %v2131
      %2560 = vmatpush.msra.mxu0 %v2130
      %2561 = vmatmul.f32.gmra.mxu0 %v1797
      %v2562 = vpop.f32.mrf.mxu0
      %v2563 = vadd.f32 %v2474, %v2562
      %2564 = vmatmul.f32.gmra.mxu0 %v1809
      %v2565 = vpop.f32.mrf.mxu0
      %v2566 = vadd.f32 %v2477, %v2565
      %2567 = vmatmul.f32.gmra.mxu0 %v1821
      %v2568 = vpop.f32.mrf.mxu0
      %v2569 = vadd.f32 %v2480, %v2568
      %2570 = vmatmul.f32.gmra.mxu0 %v1833
      %v2571 = vpop.f32.mrf.mxu0
      %v2572 = vadd.f32 %v2483, %v2571
      %2573 = vmatmul.f32.gmra.mxu0 %v1845
      %v2574 = vpop.f32.mrf.mxu0
      %v2575 = vadd.f32 %v2486, %v2574
      %2576 = vmatmul.f32.gmra.mxu0 %v1857
      %v2577 = vpop.f32.mrf.mxu0
      %v2578 = vadd.f32 %v2489, %v2577
      %2579 = vmatmul.f32.gmra.mxu0 %v1869
      %v2580 = vpop.f32.mrf.mxu0
      %v2581 = vadd.f32 %v2492, %v2580
      %2582 = vmatmul.f32.gmra.mxu0 %v1881
      %v2583 = vpop.f32.mrf.mxu0
      %v2584 = vadd.f32 %v2495, %v2583
      %2585 = vmatmul.f32.gmra.mxu0 %v1893
      %v2586 = vpop.f32.mrf.mxu0
      %v2587 = vadd.f32 %v2498, %v2586
      %2588 = vmatmul.f32.gmra.mxu0 %v1905
      %v2589 = vpop.f32.mrf.mxu0
      %v2590 = vadd.f32 %v2501, %v2589
      %2591 = vmatmul.f32.gmra.mxu0 %v1917
      %v2592 = vpop.f32.mrf.mxu0
      %v2593 = vadd.f32 %v2504, %v2592
      %2594 = vmatmul.f32.gmra.mxu0 %v1929
      %v2595 = vpop.f32.mrf.mxu0
      %v2596 = vadd.f32 %v2507, %v2595
      %2597 = vmatmul.f32.gmra.mxu0 %v1941
      %v2598 = vpop.f32.mrf.mxu0
      %v2599 = vadd.f32 %v2510, %v2598
      %2600 = vmatmul.f32.gmra.mxu0 %v1953
      %v2601 = vpop.f32.mrf.mxu0
      %v2602 = vadd.f32 %v2513, %v2601
      %2603 = vmatmul.f32.gmra.mxu0 %v1965
      %v2604 = vpop.f32.mrf.mxu0
      %v2605 = vadd.f32 %v2516, %v2604
      %2606 = vmatmul.f32.gmra.mxu0 %v1977
      %v2607 = vpop.f32.mrf.mxu0
      %v2608 = vadd.f32 %v2519, %v2607
      %2609 = vmatmul.f32.gmra.mxu0 %v1989
      %v2610 = vpop.f32.mrf.mxu0
      %v2611 = vadd.f32 %v2522, %v2610
      %2612 = vmatmul.f32.gmra.mxu0 %v2001
      %v2613 = vpop.f32.mrf.mxu0
      %v2614 = vadd.f32 %v2525, %v2613
      %2615 = vmatmul.f32.gmra.mxu0 %v2013
      %v2616 = vpop.f32.mrf.mxu0
      %v2617 = vadd.f32 %v2528, %v2616
      %2618 = vmatmul.f32.gmra.mxu0 %v2025
      %v2619 = vpop.f32.mrf.mxu0
      %v2620 = vadd.f32 %v2531, %v2619
      %2621 = vmatmul.f32.gmra.mxu0 %v2037
      %v2622 = vpop.f32.mrf.mxu0
      %v2623 = vadd.f32 %v2534, %v2622
      %2624 = vmatmul.f32.gmra.mxu0 %v2049
      %v2625 = vpop.f32.mrf.mxu0
      %v2626 = vadd.f32 %v2537, %v2625
      %2627 = vmatmul.f32.gmra.mxu0 %v2061
      %v2628 = vpop.f32.mrf.mxu0
      %v2629 = vadd.f32 %v2540, %v2628
      %2630 = vmatmul.f32.gmra.mxu0 %v2073
      %v2631 = vpop.f32.mrf.mxu0
      %v2632 = vadd.f32 %v2543, %v2631
      %2633 = vdwg.mxu0
      %2634 = vmatpush.msra.mxu0 %v2161
      %2635 = vmatpush.msra.mxu0 %v2160
      %2636 = vmatpush.msra.mxu0 %v2159
      %2637 = vmatpush.msra.mxu0 %v2158
      %2638 = vmatpush.msra.mxu0 %v2157
      %2639 = vmatpush.msra.mxu0 %v2156
      %2640 = vmatpush.msra.mxu0 %v2155
      %2641 = vmatpush.msra.mxu0 %v2154
      %2642 = vmatpush.msra.mxu0 %v2153
      %2643 = vmatpush.msra.mxu0 %v2152
      %2644 = vmatpush.msra.mxu0 %v2151
      %2645 = vmatpush.msra.mxu0 %v2150
      %2646 = vmatpush.msra.mxu0 %v2149
      %2647 = vmatpush.msra.mxu0 %v2148
      %2648 = vmatpush.msra.mxu0 %v2147
      %2649 = vmatpush.msra.mxu0 %v2146
      %2650 = vmatmul.f32.gmra.mxu0 %v1798
      %v2651 = vpop.f32.mrf.mxu0
      %v2652 = vadd.f32 %v2563, %v2651
      %2653 = vmatmul.f32.gmra.mxu0 %v1810
      %v2654 = vpop.f32.mrf.mxu0
      %v2655 = vadd.f32 %v2566, %v2654
      %2656 = vmatmul.f32.gmra.mxu0 %v1822
      %v2657 = vpop.f32.mrf.mxu0
      %v2658 = vadd.f32 %v2569, %v2657
      %2659 = vmatmul.f32.gmra.mxu0 %v1834
      %v2660 = vpop.f32.mrf.mxu0
      %v2661 = vadd.f32 %v2572, %v2660
      %2662 = vmatmul.f32.gmra.mxu0 %v1846
      %v2663 = vpop.f32.mrf.mxu0
      %v2664 = vadd.f32 %v2575, %v2663
      %2665 = vmatmul.f32.gmra.mxu0 %v1858
      %v2666 = vpop.f32.mrf.mxu0
      %v2667 = vadd.f32 %v2578, %v2666
      %2668 = vmatmul.f32.gmra.mxu0 %v1870
      %v2669 = vpop.f32.mrf.mxu0
      %v2670 = vadd.f32 %v2581, %v2669
      %2671 = vmatmul.f32.gmra.mxu0 %v1882
      %v2672 = vpop.f32.mrf.mxu0
      %v2673 = vadd.f32 %v2584, %v2672
      %2674 = vmatmul.f32.gmra.mxu0 %v1894
      %v2675 = vpop.f32.mrf.mxu0
      %v2676 = vadd.f32 %v2587, %v2675
      %2677 = vmatmul.f32.gmra.mxu0 %v1906
      %v2678 = vpop.f32.mrf.mxu0
      %v2679 = vadd.f32 %v2590, %v2678
      %2680 = vmatmul.f32.gmra.mxu0 %v1918
      %v2681 = vpop.f32.mrf.mxu0
      %v2682 = vadd.f32 %v2593, %v2681
      %2683 = vmatmul.f32.gmra.mxu0 %v1930
      %v2684 = vpop.f32.mrf.mxu0
      %v2685 = vadd.f32 %v2596, %v2684
      %2686 = vmatmul.f32.gmra.mxu0 %v1942
      %v2687 = vpop.f32.mrf.mxu0
      %v2688 = vadd.f32 %v2599, %v2687
      %2689 = vmatmul.f32.gmra.mxu0 %v1954
      %v2690 = vpop.f32.mrf.mxu0
      %v2691 = vadd.f32 %v2602, %v2690
      %2692 = vmatmul.f32.gmra.mxu0 %v1966
      %v2693 = vpop.f32.mrf.mxu0
      %v2694 = vadd.f32 %v2605, %v2693
      %2695 = vmatmul.f32.gmra.mxu0 %v1978
      %v2696 = vpop.f32.mrf.mxu0
      %v2697 = vadd.f32 %v2608, %v2696
      %2698 = vmatmul.f32.gmra.mxu0 %v1990
      %v2699 = vpop.f32.mrf.mxu0
      %v2700 = vadd.f32 %v2611, %v2699
      %2701 = vmatmul.f32.gmra.mxu0 %v2002
      %v2702 = vpop.f32.mrf.mxu0
      %v2703 = vadd.f32 %v2614, %v2702
      %2704 = vmatmul.f32.gmra.mxu0 %v2014
      %v2705 = vpop.f32.mrf.mxu0
      %v2706 = vadd.f32 %v2617, %v2705
      %2707 = vmatmul.f32.gmra.mxu0 %v2026
      %v2708 = vpop.f32.mrf.mxu0
      %v2709 = vadd.f32 %v2620, %v2708
      %2710 = vmatmul.f32.gmra.mxu0 %v2038
      %v2711 = vpop.f32.mrf.mxu0
      %v2712 = vadd.f32 %v2623, %v2711
      %2713 = vmatmul.f32.gmra.mxu0 %v2050
      %v2714 = vpop.f32.mrf.mxu0
      %v2715 = vadd.f32 %v2626, %v2714
      %2716 = vmatmul.f32.gmra.mxu0 %v2062
      %v2717 = vpop.f32.mrf.mxu0
      %v2718 = vadd.f32 %v2629, %v2717
      %2719 = vmatmul.f32.gmra.mxu0 %v2074
      %v2720 = vpop.f32.mrf.mxu0
      %v2721 = vadd.f32 %v2632, %v2720
      %2722 = vdwg.mxu0
      %2723 = vmatpush.msra.mxu0 %v2177
      %2724 = vmatpush.msra.mxu0 %v2176
      %2725 = vmatpush.msra.mxu0 %v2175
      %2726 = vmatpush.msra.mxu0 %v2174
      %2727 = vmatpush.msra.mxu0 %v2173
      %2728 = vmatpush.msra.mxu0 %v2172
      %2729 = vmatpush.msra.mxu0 %v2171
      %2730 = vmatpush.msra.mxu0 %v2170
      %2731 = vmatpush.msra.mxu0 %v2169
      %2732 = vmatpush.msra.mxu0 %v2168
      %2733 = vmatpush.msra.mxu0 %v2167
      %2734 = vmatpush.msra.mxu0 %v2166
      %2735 = vmatpush.msra.mxu0 %v2165
      %2736 = vmatpush.msra.mxu0 %v2164
      %2737 = vmatpush.msra.mxu0 %v2163
      %2738 = vmatpush.msra.mxu0 %v2162
      %2739 = vmatmul.f32.gmra.mxu0 %v1799
      %v2740 = vpop.f32.mrf.mxu0
      %v2741 = vadd.f32 %v2652, %v2740
      %2742 = vmatmul.f32.gmra.mxu0 %v1811
      %v2743 = vpop.f32.mrf.mxu0
      %v2744 = vadd.f32 %v2655, %v2743
      %2745 = vmatmul.f32.gmra.mxu0 %v1823
      %v2746 = vpop.f32.mrf.mxu0
      %v2747 = vadd.f32 %v2658, %v2746
      %2748 = vmatmul.f32.gmra.mxu0 %v1835
      %v2749 = vpop.f32.mrf.mxu0
      %v2750 = vadd.f32 %v2661, %v2749
      %2751 = vmatmul.f32.gmra.mxu0 %v1847
      %v2752 = vpop.f32.mrf.mxu0
      %v2753 = vadd.f32 %v2664, %v2752
      %2754 = vmatmul.f32.gmra.mxu0 %v1859
      %v2755 = vpop.f32.mrf.mxu0
      %v2756 = vadd.f32 %v2667, %v2755
      %2757 = vmatmul.f32.gmra.mxu0 %v1871
      %v2758 = vpop.f32.mrf.mxu0
      %v2759 = vadd.f32 %v2670, %v2758
      %2760 = vmatmul.f32.gmra.mxu0 %v1883
      %v2761 = vpop.f32.mrf.mxu0
      %v2762 = vadd.f32 %v2673, %v2761
      %2763 = vmatmul.f32.gmra.mxu0 %v1895
      %v2764 = vpop.f32.mrf.mxu0
      %v2765 = vadd.f32 %v2676, %v2764
      %2766 = vmatmul.f32.gmra.mxu0 %v1907
      %v2767 = vpop.f32.mrf.mxu0
      %v2768 = vadd.f32 %v2679, %v2767
      %2769 = vmatmul.f32.gmra.mxu0 %v1919
      %v2770 = vpop.f32.mrf.mxu0
      %v2771 = vadd.f32 %v2682, %v2770
      %2772 = vmatmul.f32.gmra.mxu0 %v1931
      %v2773 = vpop.f32.mrf.mxu0
      %v2774 = vadd.f32 %v2685, %v2773
      %2775 = vmatmul.f32.gmra.mxu0 %v1943
      %v2776 = vpop.f32.mrf.mxu0
      %v2777 = vadd.f32 %v2688, %v2776
      %2778 = vmatmul.f32.gmra.mxu0 %v1955
      %v2779 = vpop.f32.mrf.mxu0
      %v2780 = vadd.f32 %v2691, %v2779
      %2781 = vmatmul.f32.gmra.mxu0 %v1967
      %v2782 = vpop.f32.mrf.mxu0
      %v2783 = vadd.f32 %v2694, %v2782
      %2784 = vmatmul.f32.gmra.mxu0 %v1979
      %v2785 = vpop.f32.mrf.mxu0
      %v2786 = vadd.f32 %v2697, %v2785
      %2787 = vmatmul.f32.gmra.mxu0 %v1991
      %v2788 = vpop.f32.mrf.mxu0
      %v2789 = vadd.f32 %v2700, %v2788
      %2790 = vmatmul.f32.gmra.mxu0 %v2003
      %v2791 = vpop.f32.mrf.mxu0
      %v2792 = vadd.f32 %v2703, %v2791
      %2793 = vmatmul.f32.gmra.mxu0 %v2015
      %v2794 = vpop.f32.mrf.mxu0
      %v2795 = vadd.f32 %v2706, %v2794
      %2796 = vmatmul.f32.gmra.mxu0 %v2027
      %v2797 = vpop.f32.mrf.mxu0
      %v2798 = vadd.f32 %v2709, %v2797
      %2799 = vmatmul.f32.gmra.mxu0 %v2039
      %v2800 = vpop.f32.mrf.mxu0
      %v2801 = vadd.f32 %v2712, %v2800
      %2802 = vmatmul.f32.gmra.mxu0 %v2051
      %v2803 = vpop.f32.mrf.mxu0
      %v2804 = vadd.f32 %v2715, %v2803
      %2805 = vmatmul.f32.gmra.mxu0 %v2063
      %v2806 = vpop.f32.mrf.mxu0
      %v2807 = vadd.f32 %v2718, %v2806
      %2808 = vmatmul.f32.gmra.mxu0 %v2075
      %v2809 = vpop.f32.mrf.mxu0
      %v2810 = vadd.f32 %v2721, %v2809
      %2811 = vdwg.mxu0
      %2812 = vmatpush.msra.mxu0 %v2193
      %2813 = vmatpush.msra.mxu0 %v2192
      %2814 = vmatpush.msra.mxu0 %v2191
      %2815 = vmatpush.msra.mxu0 %v2190
      %2816 = vmatpush.msra.mxu0 %v2189
      %2817 = vmatpush.msra.mxu0 %v2188
      %2818 = vmatpush.msra.mxu0 %v2187
      %2819 = vmatpush.msra.mxu0 %v2186
      %2820 = vmatpush.msra.mxu0 %v2185
      %2821 = vmatpush.msra.mxu0 %v2184
      %2822 = vmatpush.msra.mxu0 %v2183
      %2823 = vmatpush.msra.mxu0 %v2182
      %2824 = vmatpush.msra.mxu0 %v2181
      %2825 = vmatpush.msra.mxu0 %v2180
      %2826 = vmatpush.msra.mxu0 %v2179
      %2827 = vmatpush.msra.mxu0 %v2178
      %2828 = vmatmul.f32.gmra.mxu0 %v1800
      %v2829 = vpop.f32.mrf.mxu0
      %v2830 = vadd.f32 %v2741, %v2829
      %2831 = vmatmul.f32.gmra.mxu0 %v1812
      %v2832 = vpop.f32.mrf.mxu0
      %v2833 = vadd.f32 %v2744, %v2832
      %2834 = vmatmul.f32.gmra.mxu0 %v1824
      %v2835 = vpop.f32.mrf.mxu0
      %v2836 = vadd.f32 %v2747, %v2835
      %2837 = vmatmul.f32.gmra.mxu0 %v1836
      %v2838 = vpop.f32.mrf.mxu0
      %v2839 = vadd.f32 %v2750, %v2838
      %2840 = vmatmul.f32.gmra.mxu0 %v1848
      %v2841 = vpop.f32.mrf.mxu0
      %v2842 = vadd.f32 %v2753, %v2841
      %2843 = vmatmul.f32.gmra.mxu0 %v1860
      %v2844 = vpop.f32.mrf.mxu0
      %v2845 = vadd.f32 %v2756, %v2844
      %2846 = vmatmul.f32.gmra.mxu0 %v1872
      %v2847 = vpop.f32.mrf.mxu0
      %v2848 = vadd.f32 %v2759, %v2847
      %2849 = vmatmul.f32.gmra.mxu0 %v1884
      %v2850 = vpop.f32.mrf.mxu0
      %v2851 = vadd.f32 %v2762, %v2850
      %2852 = vmatmul.f32.gmra.mxu0 %v1896
      %v2853 = vpop.f32.mrf.mxu0
      %v2854 = vadd.f32 %v2765, %v2853
      %2855 = vmatmul.f32.gmra.mxu0 %v1908
      %v2856 = vpop.f32.mrf.mxu0
      %v2857 = vadd.f32 %v2768, %v2856
      %2858 = vmatmul.f32.gmra.mxu0 %v1920
      %v2859 = vpop.f32.mrf.mxu0
      %v2860 = vadd.f32 %v2771, %v2859
      %2861 = vmatmul.f32.gmra.mxu0 %v1932
      %v2862 = vpop.f32.mrf.mxu0
      %v2863 = vadd.f32 %v2774, %v2862
      %2864 = vmatmul.f32.gmra.mxu0 %v1944
      %v2865 = vpop.f32.mrf.mxu0
      %v2866 = vadd.f32 %v2777, %v2865
      %2867 = vmatmul.f32.gmra.mxu0 %v1956
      %v2868 = vpop.f32.mrf.mxu0
      %v2869 = vadd.f32 %v2780, %v2868
      %2870 = vmatmul.f32.gmra.mxu0 %v1968
      %v2871 = vpop.f32.mrf.mxu0
      %v2872 = vadd.f32 %v2783, %v2871
      %2873 = vmatmul.f32.gmra.mxu0 %v1980
      %v2874 = vpop.f32.mrf.mxu0
      %v2875 = vadd.f32 %v2786, %v2874
      %2876 = vmatmul.f32.gmra.mxu0 %v1992
      %v2877 = vpop.f32.mrf.mxu0
      %v2878 = vadd.f32 %v2789, %v2877
      %2879 = vmatmul.f32.gmra.mxu0 %v2004
      %v2880 = vpop.f32.mrf.mxu0
      %v2881 = vadd.f32 %v2792, %v2880
      %2882 = vmatmul.f32.gmra.mxu0 %v2016
      %v2883 = vpop.f32.mrf.mxu0
      %v2884 = vadd.f32 %v2795, %v2883
      %2885 = vmatmul.f32.gmra.mxu0 %v2028
      %v2886 = vpop.f32.mrf.mxu0
      %v2887 = vadd.f32 %v2798, %v2886
      %2888 = vmatmul.f32.gmra.mxu0 %v2040
      %v2889 = vpop.f32.mrf.mxu0
      %v2890 = vadd.f32 %v2801, %v2889
      %2891 = vmatmul.f32.gmra.mxu0 %v2052
      %v2892 = vpop.f32.mrf.mxu0
      %v2893 = vadd.f32 %v2804, %v2892
      %2894 = vmatmul.f32.gmra.mxu0 %v2064
      %v2895 = vpop.f32.mrf.mxu0
      %v2896 = vadd.f32 %v2807, %v2895
      %2897 = vmatmul.f32.gmra.mxu0 %v2076
      %v2898 = vpop.f32.mrf.mxu0
      %v2899 = vadd.f32 %v2810, %v2898
      %2900 = vdwg.mxu0
      %2901 = vmatpush.msra.mxu0 %v2209
      %2902 = vmatpush.msra.mxu0 %v2208
      %2903 = vmatpush.msra.mxu0 %v2207
      %2904 = vmatpush.msra.mxu0 %v2206
      %2905 = vmatpush.msra.mxu0 %v2205
      %2906 = vmatpush.msra.mxu0 %v2204
      %2907 = vmatpush.msra.mxu0 %v2203
      %2908 = vmatpush.msra.mxu0 %v2202
      %2909 = vmatpush.msra.mxu0 %v2201
      %2910 = vmatpush.msra.mxu0 %v2200
      %2911 = vmatpush.msra.mxu0 %v2199
      %2912 = vmatpush.msra.mxu0 %v2198
      %2913 = vmatpush.msra.mxu0 %v2197
      %2914 = vmatpush.msra.mxu0 %v2196
      %2915 = vmatpush.msra.mxu0 %v2195
      %2916 = vmatpush.msra.mxu0 %v2194
      %2917 = vmatmul.f32.gmra.mxu0 %v1801
      %v2918 = vpop.f32.mrf.mxu0
      %v2919 = vadd.f32 %v2830, %v2918
      %2920 = vmatmul.f32.gmra.mxu0 %v1813
      %v2921 = vpop.f32.mrf.mxu0
      %v2922 = vadd.f32 %v2833, %v2921
      %2923 = vmatmul.f32.gmra.mxu0 %v1825
      %v2924 = vpop.f32.mrf.mxu0
      %v2925 = vadd.f32 %v2836, %v2924
      %2926 = vmatmul.f32.gmra.mxu0 %v1837
      %v2927 = vpop.f32.mrf.mxu0
      %v2928 = vadd.f32 %v2839, %v2927
      %2929 = vmatmul.f32.gmra.mxu0 %v1849
      %v2930 = vpop.f32.mrf.mxu0
      %v2931 = vadd.f32 %v2842, %v2930
      %2932 = vmatmul.f32.gmra.mxu0 %v1861
      %v2933 = vpop.f32.mrf.mxu0
      %v2934 = vadd.f32 %v2845, %v2933
      %2935 = vmatmul.f32.gmra.mxu0 %v1873
      %v2936 = vpop.f32.mrf.mxu0
      %v2937 = vadd.f32 %v2848, %v2936
      %2938 = vmatmul.f32.gmra.mxu0 %v1885
      %v2939 = vpop.f32.mrf.mxu0
      %v2940 = vadd.f32 %v2851, %v2939
      %2941 = vmatmul.f32.gmra.mxu0 %v1897
      %v2942 = vpop.f32.mrf.mxu0
      %v2943 = vadd.f32 %v2854, %v2942
      %2944 = vmatmul.f32.gmra.mxu0 %v1909
      %v2945 = vpop.f32.mrf.mxu0
      %v2946 = vadd.f32 %v2857, %v2945
      %2947 = vmatmul.f32.gmra.mxu0 %v1921
      %v2948 = vpop.f32.mrf.mxu0
      %v2949 = vadd.f32 %v2860, %v2948
      %2950 = vmatmul.f32.gmra.mxu0 %v1933
      %v2951 = vpop.f32.mrf.mxu0
      %v2952 = vadd.f32 %v2863, %v2951
      %2953 = vmatmul.f32.gmra.mxu0 %v1945
      %v2954 = vpop.f32.mrf.mxu0
      %v2955 = vadd.f32 %v2866, %v2954
      %2956 = vmatmul.f32.gmra.mxu0 %v1957
      %v2957 = vpop.f32.mrf.mxu0
      %v2958 = vadd.f32 %v2869, %v2957
      %2959 = vmatmul.f32.gmra.mxu0 %v1969
      %v2960 = vpop.f32.mrf.mxu0
      %v2961 = vadd.f32 %v2872, %v2960
      %2962 = vmatmul.f32.gmra.mxu0 %v1981
      %v2963 = vpop.f32.mrf.mxu0
      %v2964 = vadd.f32 %v2875, %v2963
      %2965 = vmatmul.f32.gmra.mxu0 %v1993
      %v2966 = vpop.f32.mrf.mxu0
      %v2967 = vadd.f32 %v2878, %v2966
      %2968 = vmatmul.f32.gmra.mxu0 %v2005
      %v2969 = vpop.f32.mrf.mxu0
      %v2970 = vadd.f32 %v2881, %v2969
      %2971 = vmatmul.f32.gmra.mxu0 %v2017
      %v2972 = vpop.f32.mrf.mxu0
      %v2973 = vadd.f32 %v2884, %v2972
      %2974 = vmatmul.f32.gmra.mxu0 %v2029
      %v2975 = vpop.f32.mrf.mxu0
      %v2976 = vadd.f32 %v2887, %v2975
      %2977 = vmatmul.f32.gmra.mxu0 %v2041
      %v2978 = vpop.f32.mrf.mxu0
      %v2979 = vadd.f32 %v2890, %v2978
      %2980 = vmatmul.f32.gmra.mxu0 %v2053
      %v2981 = vpop.f32.mrf.mxu0
      %v2982 = vadd.f32 %v2893, %v2981
      %2983 = vmatmul.f32.gmra.mxu0 %v2065
      %v2984 = vpop.f32.mrf.mxu0
      %v2985 = vadd.f32 %v2896, %v2984
      %2986 = vmatmul.f32.gmra.mxu0 %v2077
      %v2987 = vpop.f32.mrf.mxu0
      %v2988 = vadd.f32 %v2899, %v2987
      %2989 = vdwg.mxu0
      %2990 = vmatpush.msra.mxu0 %v2225
      %2991 = vmatpush.msra.mxu0 %v2224
      %2992 = vmatpush.msra.mxu0 %v2223
      %2993 = vmatpush.msra.mxu0 %v2222
      %2994 = vmatpush.msra.mxu0 %v2221
      %2995 = vmatpush.msra.mxu0 %v2220
      %2996 = vmatpush.msra.mxu0 %v2219
      %2997 = vmatpush.msra.mxu0 %v2218
      %2998 = vmatpush.msra.mxu0 %v2217
      %2999 = vmatpush.msra.mxu0 %v2216
      %3000 = vmatpush.msra.mxu0 %v2215
      %3001 = vmatpush.msra.mxu0 %v2214
      %3002 = vmatpush.msra.mxu0 %v2213
      %3003 = vmatpush.msra.mxu0 %v2212
      %3004 = vmatpush.msra.mxu0 %v2211
      %3005 = vmatpush.msra.mxu0 %v2210
      %3006 = vmatmul.f32.gmra.mxu0 %v1802
      %v3007 = vpop.f32.mrf.mxu0
      %v3008 = vadd.f32 %v2919, %v3007
      %3009 = vmatmul.f32.gmra.mxu0 %v1814
      %v3010 = vpop.f32.mrf.mxu0
      %v3011 = vadd.f32 %v2922, %v3010
      %3012 = vmatmul.f32.gmra.mxu0 %v1826
      %v3013 = vpop.f32.mrf.mxu0
      %v3014 = vadd.f32 %v2925, %v3013
      %3015 = vmatmul.f32.gmra.mxu0 %v1838
      %v3016 = vpop.f32.mrf.mxu0
      %v3017 = vadd.f32 %v2928, %v3016
      %3018 = vmatmul.f32.gmra.mxu0 %v1850
      %v3019 = vpop.f32.mrf.mxu0
      %v3020 = vadd.f32 %v2931, %v3019
      %3021 = vmatmul.f32.gmra.mxu0 %v1862
      %v3022 = vpop.f32.mrf.mxu0
      %v3023 = vadd.f32 %v2934, %v3022
      %3024 = vmatmul.f32.gmra.mxu0 %v1874
      %v3025 = vpop.f32.mrf.mxu0
      %v3026 = vadd.f32 %v2937, %v3025
      %3027 = vmatmul.f32.gmra.mxu0 %v1886
      %v3028 = vpop.f32.mrf.mxu0
      %v3029 = vadd.f32 %v2940, %v3028
      %3030 = vmatmul.f32.gmra.mxu0 %v1898
      %v3031 = vpop.f32.mrf.mxu0
      %v3032 = vadd.f32 %v2943, %v3031
      %3033 = vmatmul.f32.gmra.mxu0 %v1910
      %v3034 = vpop.f32.mrf.mxu0
      %v3035 = vadd.f32 %v2946, %v3034
      %3036 = vmatmul.f32.gmra.mxu0 %v1922
      %v3037 = vpop.f32.mrf.mxu0
      %v3038 = vadd.f32 %v2949, %v3037
      %3039 = vmatmul.f32.gmra.mxu0 %v1934
      %v3040 = vpop.f32.mrf.mxu0
      %v3041 = vadd.f32 %v2952, %v3040
      %3042 = vmatmul.f32.gmra.mxu0 %v1946
      %v3043 = vpop.f32.mrf.mxu0
      %v3044 = vadd.f32 %v2955, %v3043
      %3045 = vmatmul.f32.gmra.mxu0 %v1958
      %v3046 = vpop.f32.mrf.mxu0
      %v3047 = vadd.f32 %v2958, %v3046
      %3048 = vmatmul.f32.gmra.mxu0 %v1970
      %v3049 = vpop.f32.mrf.mxu0
      %v3050 = vadd.f32 %v2961, %v3049
      %3051 = vmatmul.f32.gmra.mxu0 %v1982
      %v3052 = vpop.f32.mrf.mxu0
      %v3053 = vadd.f32 %v2964, %v3052
      %3054 = vmatmul.f32.gmra.mxu0 %v1994
      %v3055 = vpop.f32.mrf.mxu0
      %v3056 = vadd.f32 %v2967, %v3055
      %3057 = vmatmul.f32.gmra.mxu0 %v2006
      %v3058 = vpop.f32.mrf.mxu0
      %v3059 = vadd.f32 %v2970, %v3058
      %3060 = vmatmul.f32.gmra.mxu0 %v2018
      %v3061 = vpop.f32.mrf.mxu0
      %v3062 = vadd.f32 %v2973, %v3061
      %3063 = vmatmul.f32.gmra.mxu0 %v2030
      %v3064 = vpop.f32.mrf.mxu0
      %v3065 = vadd.f32 %v2976, %v3064
      %3066 = vmatmul.f32.gmra.mxu0 %v2042
      %v3067 = vpop.f32.mrf.mxu0
      %v3068 = vadd.f32 %v2979, %v3067
      %3069 = vmatmul.f32.gmra.mxu0 %v2054
      %v3070 = vpop.f32.mrf.mxu0
      %v3071 = vadd.f32 %v2982, %v3070
      %3072 = vmatmul.f32.gmra.mxu0 %v2066
      %v3073 = vpop.f32.mrf.mxu0
      %v3074 = vadd.f32 %v2985, %v3073
      %3075 = vmatmul.f32.gmra.mxu0 %v2078
      %v3076 = vpop.f32.mrf.mxu0
      %v3077 = vadd.f32 %v2988, %v3076
      %3078 = vdwg.mxu0
      %3079 = vmatpush.msra.mxu0 %v2241
      %3080 = vmatpush.msra.mxu0 %v2240
      %3081 = vmatpush.msra.mxu0 %v2239
      %3082 = vmatpush.msra.mxu0 %v2238
      %3083 = vmatpush.msra.mxu0 %v2237
      %3084 = vmatpush.msra.mxu0 %v2236
      %3085 = vmatpush.msra.mxu0 %v2235
      %3086 = vmatpush.msra.mxu0 %v2234
      %3087 = vmatpush.msra.mxu0 %v2233
      %3088 = vmatpush.msra.mxu0 %v2232
      %3089 = vmatpush.msra.mxu0 %v2231
      %3090 = vmatpush.msra.mxu0 %v2230
      %3091 = vmatpush.msra.mxu0 %v2229
      %3092 = vmatpush.msra.mxu0 %v2228
      %3093 = vmatpush.msra.mxu0 %v2227
      %3094 = vmatpush.msra.mxu0 %v2226
      %3095 = vmatmul.f32.gmra.mxu0 %v1803
      %v3096 = vpop.f32.mrf.mxu0
      %v3097 = vadd.f32 %v3008, %v3096
      %3098 = vmatmul.f32.gmra.mxu0 %v1815
      %v3099 = vpop.f32.mrf.mxu0
      %v3100 = vadd.f32 %v3011, %v3099
      %3101 = vmatmul.f32.gmra.mxu0 %v1827
      %v3102 = vpop.f32.mrf.mxu0
      %v3103 = vadd.f32 %v3014, %v3102
      %3104 = vmatmul.f32.gmra.mxu0 %v1839
      %v3105 = vpop.f32.mrf.mxu0
      %v3106 = vadd.f32 %v3017, %v3105
      %3107 = vmatmul.f32.gmra.mxu0 %v1851
      %v3108 = vpop.f32.mrf.mxu0
      %v3109 = vadd.f32 %v3020, %v3108
      %3110 = vmatmul.f32.gmra.mxu0 %v1863
      %v3111 = vpop.f32.mrf.mxu0
      %v3112 = vadd.f32 %v3023, %v3111
      %3113 = vmatmul.f32.gmra.mxu0 %v1875
      %v3114 = vpop.f32.mrf.mxu0
      %v3115 = vadd.f32 %v3026, %v3114
      %3116 = vmatmul.f32.gmra.mxu0 %v1887
      %v3117 = vpop.f32.mrf.mxu0
      %v3118 = vadd.f32 %v3029, %v3117
      %3119 = vmatmul.f32.gmra.mxu0 %v1899
      %v3120 = vpop.f32.mrf.mxu0
      %v3121 = vadd.f32 %v3032, %v3120
      %3122 = vmatmul.f32.gmra.mxu0 %v1911
      %v3123 = vpop.f32.mrf.mxu0
      %v3124 = vadd.f32 %v3035, %v3123
      %3125 = vmatmul.f32.gmra.mxu0 %v1923
      %v3126 = vpop.f32.mrf.mxu0
      %v3127 = vadd.f32 %v3038, %v3126
      %3128 = vmatmul.f32.gmra.mxu0 %v1935
      %v3129 = vpop.f32.mrf.mxu0
      %v3130 = vadd.f32 %v3041, %v3129
      %3131 = vmatmul.f32.gmra.mxu0 %v1947
      %v3132 = vpop.f32.mrf.mxu0
      %v3133 = vadd.f32 %v3044, %v3132
      %3134 = vmatmul.f32.gmra.mxu0 %v1959
      %v3135 = vpop.f32.mrf.mxu0
      %v3136 = vadd.f32 %v3047, %v3135
      %3137 = vmatmul.f32.gmra.mxu0 %v1971
      %v3138 = vpop.f32.mrf.mxu0
      %v3139 = vadd.f32 %v3050, %v3138
      %3140 = vmatmul.f32.gmra.mxu0 %v1983
      %v3141 = vpop.f32.mrf.mxu0
      %v3142 = vadd.f32 %v3053, %v3141
      %3143 = vmatmul.f32.gmra.mxu0 %v1995
      %v3144 = vpop.f32.mrf.mxu0
      %v3145 = vadd.f32 %v3056, %v3144
      %3146 = vmatmul.f32.gmra.mxu0 %v2007
      %v3147 = vpop.f32.mrf.mxu0
      %v3148 = vadd.f32 %v3059, %v3147
      %3149 = vmatmul.f32.gmra.mxu0 %v2019
      %v3150 = vpop.f32.mrf.mxu0
      %v3151 = vadd.f32 %v3062, %v3150
      %3152 = vmatmul.f32.gmra.mxu0 %v2031
      %v3153 = vpop.f32.mrf.mxu0
      %v3154 = vadd.f32 %v3065, %v3153
      %3155 = vmatmul.f32.gmra.mxu0 %v2043
      %v3156 = vpop.f32.mrf.mxu0
      %v3157 = vadd.f32 %v3068, %v3156
      %3158 = vmatmul.f32.gmra.mxu0 %v2055
      %v3159 = vpop.f32.mrf.mxu0
      %v3160 = vadd.f32 %v3071, %v3159
      %3161 = vmatmul.f32.gmra.mxu0 %v2067
      %v3162 = vpop.f32.mrf.mxu0
      %v3163 = vadd.f32 %v3074, %v3162
      %3164 = vmatmul.f32.gmra.mxu0 %v2079
      %v3165 = vpop.f32.mrf.mxu0
      %v3166 = vadd.f32 %v3077, %v3165
      %3167 = vdwg.mxu0
      %3168 = vmatpush.msra.mxu0 %v2257
      %3169 = vmatpush.msra.mxu0 %v2256
      %3170 = vmatpush.msra.mxu0 %v2255
      %3171 = vmatpush.msra.mxu0 %v2254
      %3172 = vmatpush.msra.mxu0 %v2253
      %3173 = vmatpush.msra.mxu0 %v2252
      %3174 = vmatpush.msra.mxu0 %v2251
      %3175 = vmatpush.msra.mxu0 %v2250
      %3176 = vmatpush.msra.mxu0 %v2249
      %3177 = vmatpush.msra.mxu0 %v2248
      %3178 = vmatpush.msra.mxu0 %v2247
      %3179 = vmatpush.msra.mxu0 %v2246
      %3180 = vmatpush.msra.mxu0 %v2245
      %3181 = vmatpush.msra.mxu0 %v2244
      %3182 = vmatpush.msra.mxu0 %v2243
      %3183 = vmatpush.msra.mxu0 %v2242
      %3184 = vmatmul.f32.gmra.mxu0 %v1804
      %v3185 = vpop.f32.mrf.mxu0
      %v3186 = vadd.f32 %v3097, %v3185
      %3187 = vmatmul.f32.gmra.mxu0 %v1816
      %v3188 = vpop.f32.mrf.mxu0
      %v3189 = vadd.f32 %v3100, %v3188
      %3190 = vmatmul.f32.gmra.mxu0 %v1828
      %v3191 = vpop.f32.mrf.mxu0
      %v3192 = vadd.f32 %v3103, %v3191
      %3193 = vmatmul.f32.gmra.mxu0 %v1840
      %v3194 = vpop.f32.mrf.mxu0
      %v3195 = vadd.f32 %v3106, %v3194
      %3196 = vmatmul.f32.gmra.mxu0 %v1852
      %v3197 = vpop.f32.mrf.mxu0
      %v3198 = vadd.f32 %v3109, %v3197
      %3199 = vmatmul.f32.gmra.mxu0 %v1864
      %v3200 = vpop.f32.mrf.mxu0
      %v3201 = vadd.f32 %v3112, %v3200
      %3202 = vmatmul.f32.gmra.mxu0 %v1876
      %v3203 = vpop.f32.mrf.mxu0
      %v3204 = vadd.f32 %v3115, %v3203
      %3205 = vmatmul.f32.gmra.mxu0 %v1888
      %v3206 = vpop.f32.mrf.mxu0
      %v3207 = vadd.f32 %v3118, %v3206
      %3208 = vmatmul.f32.gmra.mxu0 %v1900
      %v3209 = vpop.f32.mrf.mxu0
      %v3210 = vadd.f32 %v3121, %v3209
      %3211 = vmatmul.f32.gmra.mxu0 %v1912
      %v3212 = vpop.f32.mrf.mxu0
      %v3213 = vadd.f32 %v3124, %v3212
      %3214 = vmatmul.f32.gmra.mxu0 %v1924
      %v3215 = vpop.f32.mrf.mxu0
      %v3216 = vadd.f32 %v3127, %v3215
      %3217 = vmatmul.f32.gmra.mxu0 %v1936
      %v3218 = vpop.f32.mrf.mxu0
      %v3219 = vadd.f32 %v3130, %v3218
      %3220 = vmatmul.f32.gmra.mxu0 %v1948
      %v3221 = vpop.f32.mrf.mxu0
      %v3222 = vadd.f32 %v3133, %v3221
      %3223 = vmatmul.f32.gmra.mxu0 %v1960
      %v3224 = vpop.f32.mrf.mxu0
      %v3225 = vadd.f32 %v3136, %v3224
      %3226 = vmatmul.f32.gmra.mxu0 %v1972
      %v3227 = vpop.f32.mrf.mxu0
      %v3228 = vadd.f32 %v3139, %v3227
      %3229 = vmatmul.f32.gmra.mxu0 %v1984
      %v3230 = vpop.f32.mrf.mxu0
      %v3231 = vadd.f32 %v3142, %v3230
      %3232 = vmatmul.f32.gmra.mxu0 %v1996
      %v3233 = vpop.f32.mrf.mxu0
      %v3234 = vadd.f32 %v3145, %v3233
      %3235 = vmatmul.f32.gmra.mxu0 %v2008
      %v3236 = vpop.f32.mrf.mxu0
      %v3237 = vadd.f32 %v3148, %v3236
      %3238 = vmatmul.f32.gmra.mxu0 %v2020
      %v3239 = vpop.f32.mrf.mxu0
      %v3240 = vadd.f32 %v3151, %v3239
      %3241 = vmatmul.f32.gmra.mxu0 %v2032
      %v3242 = vpop.f32.mrf.mxu0
      %v3243 = vadd.f32 %v3154, %v3242
      %3244 = vmatmul.f32.gmra.mxu0 %v2044
      %v3245 = vpop.f32.mrf.mxu0
      %v3246 = vadd.f32 %v3157, %v3245
      %3247 = vmatmul.f32.gmra.mxu0 %v2056
      %v3248 = vpop.f32.mrf.mxu0
      %v3249 = vadd.f32 %v3160, %v3248
      %3250 = vmatmul.f32.gmra.mxu0 %v2068
      %v3251 = vpop.f32.mrf.mxu0
      %v3252 = vadd.f32 %v3163, %v3251
      %3253 = vmatmul.f32.gmra.mxu0 %v2080
      %v3254 = vpop.f32.mrf.mxu0
      %v3255 = vadd.f32 %v3166, %v3254
      %3256 = vdwg.mxu0
      %3257 = vmatpush.msra.mxu0 %v2273
      %3258 = vmatpush.msra.mxu0 %v2272
      %3259 = vmatpush.msra.mxu0 %v2271
      %3260 = vmatpush.msra.mxu0 %v2270
      %3261 = vmatpush.msra.mxu0 %v2269
      %3262 = vmatpush.msra.mxu0 %v2268
      %3263 = vmatpush.msra.mxu0 %v2267
      %3264 = vmatpush.msra.mxu0 %v2266
      %3265 = vmatpush.msra.mxu0 %v2265
      %3266 = vmatpush.msra.mxu0 %v2264
      %3267 = vmatpush.msra.mxu0 %v2263
      %3268 = vmatpush.msra.mxu0 %v2262
      %3269 = vmatpush.msra.mxu0 %v2261
      %3270 = vmatpush.msra.mxu0 %v2260
      %3271 = vmatpush.msra.mxu0 %v2259
      %3272 = vmatpush.msra.mxu0 %v2258
      %3273 = vmatmul.f32.gmra.mxu0 %v1805
      %v3274 = vpop.f32.mrf.mxu0
      %v3275 = vadd.f32 %v3186, %v3274
      %3276 = vmatmul.f32.gmra.mxu0 %v1817
      %v3277 = vpop.f32.mrf.mxu0
      %v3278 = vadd.f32 %v3189, %v3277
      %3279 = vmatmul.f32.gmra.mxu0 %v1829
      %v3280 = vpop.f32.mrf.mxu0
      %v3281 = vadd.f32 %v3192, %v3280
      %3282 = vmatmul.f32.gmra.mxu0 %v1841
      %v3283 = vpop.f32.mrf.mxu0
      %v3284 = vadd.f32 %v3195, %v3283
      %3285 = vmatmul.f32.gmra.mxu0 %v1853
      %v3286 = vpop.f32.mrf.mxu0
      %v3287 = vadd.f32 %v3198, %v3286
      %3288 = vmatmul.f32.gmra.mxu0 %v1865
      %v3289 = vpop.f32.mrf.mxu0
      %v3290 = vadd.f32 %v3201, %v3289
      %3291 = vmatmul.f32.gmra.mxu0 %v1877
      %v3292 = vpop.f32.mrf.mxu0
      %v3293 = vadd.f32 %v3204, %v3292
      %3294 = vmatmul.f32.gmra.mxu0 %v1889
      %v3295 = vpop.f32.mrf.mxu0
      %v3296 = vadd.f32 %v3207, %v3295
      %3297 = vmatmul.f32.gmra.mxu0 %v1901
      %v3298 = vpop.f32.mrf.mxu0
      %v3299 = vadd.f32 %v3210, %v3298
      %3300 = vmatmul.f32.gmra.mxu0 %v1913
      %v3301 = vpop.f32.mrf.mxu0
      %v3302 = vadd.f32 %v3213, %v3301
      %3303 = vmatmul.f32.gmra.mxu0 %v1925
      %v3304 = vpop.f32.mrf.mxu0
      %v3305 = vadd.f32 %v3216, %v3304
      %3306 = vmatmul.f32.gmra.mxu0 %v1937
      %v3307 = vpop.f32.mrf.mxu0
      %v3308 = vadd.f32 %v3219, %v3307
      %3309 = vmatmul.f32.gmra.mxu0 %v1949
      %v3310 = vpop.f32.mrf.mxu0
      %v3311 = vadd.f32 %v3222, %v3310
      %3312 = vmatmul.f32.gmra.mxu0 %v1961
      %v3313 = vpop.f32.mrf.mxu0
      %v3314 = vadd.f32 %v3225, %v3313
      %3315 = vmatmul.f32.gmra.mxu0 %v1973
      %v3316 = vpop.f32.mrf.mxu0
      %v3317 = vadd.f32 %v3228, %v3316
      %3318 = vmatmul.f32.gmra.mxu0 %v1985
      %v3319 = vpop.f32.mrf.mxu0
      %v3320 = vadd.f32 %v3231, %v3319
      %3321 = vmatmul.f32.gmra.mxu0 %v1997
      %v3322 = vpop.f32.mrf.mxu0
      %v3323 = vadd.f32 %v3234, %v3322
      %3324 = vmatmul.f32.gmra.mxu0 %v2009
      %v3325 = vpop.f32.mrf.mxu0
      %v3326 = vadd.f32 %v3237, %v3325
      %3327 = vmatmul.f32.gmra.mxu0 %v2021
      %v3328 = vpop.f32.mrf.mxu0
      %v3329 = vadd.f32 %v3240, %v3328
      %3330 = vmatmul.f32.gmra.mxu0 %v2033
      %v3331 = vpop.f32.mrf.mxu0
      %v3332 = vadd.f32 %v3243, %v3331
      %3333 = vmatmul.f32.gmra.mxu0 %v2045
      %v3334 = vpop.f32.mrf.mxu0
      %v3335 = vadd.f32 %v3246, %v3334
      %3336 = vmatmul.f32.gmra.mxu0 %v2057
      %v3337 = vpop.f32.mrf.mxu0
      %v3338 = vadd.f32 %v3249, %v3337
      %3339 = vmatmul.f32.gmra.mxu0 %v2069
      %v3340 = vpop.f32.mrf.mxu0
      %v3341 = vadd.f32 %v3252, %v3340
      %3342 = vmatmul.f32.gmra.mxu0 %v2081
      %v3343 = vpop.f32.mrf.mxu0
      %v3344 = vadd.f32 %v3255, %v3343
      %3345 = vdwg.mxu0
      %vm3346 = vcmp.gt.f32.partialorder %v3275, 0.0
      %vm3347 = vcmp.gt.f32.partialorder %v3278, 0.0
      %vm3348 = vcmp.gt.f32.partialorder %v3281, 0.0
      %vm3349 = vcmp.gt.f32.partialorder %v3284, 0.0
      %vm3350 = vcmp.gt.f32.partialorder %v3287, 0.0
      %vm3351 = vcmp.gt.f32.partialorder %v3290, 0.0
      %vm3352 = vcmp.gt.f32.partialorder %v3293, 0.0
      %vm3353 = vcmp.gt.f32.partialorder %v3296, 0.0
      %vm3354 = vcmp.gt.f32.partialorder %v3299, 0.0
      %vm3355 = vcmp.gt.f32.partialorder %v3302, 0.0
      %vm3356 = vcmp.gt.f32.partialorder %v3305, 0.0
      %vm3357 = vcmp.gt.f32.partialorder %v3308, 0.0
      %vm3358 = vcmp.gt.f32.partialorder %v3311, 0.0
      %vm3359 = vcmp.gt.f32.partialorder %v3314, 0.0
      %vm3360 = vcmp.gt.f32.partialorder %v3317, 0.0
      %vm3361 = vcmp.gt.f32.partialorder %v3320, 0.0
      %vm3362 = vcmp.gt.f32.partialorder %v3323, 0.0
      %vm3363 = vcmp.gt.f32.partialorder %v3326, 0.0
      %vm3364 = vcmp.gt.f32.partialorder %v3329, 0.0
      %vm3365 = vcmp.gt.f32.partialorder %v3332, 0.0
      %vm3366 = vcmp.gt.f32.partialorder %v3335, 0.0
      %vm3367 = vcmp.gt.f32.partialorder %v3338, 0.0
      %vm3368 = vcmp.gt.f32.partialorder %v3341, 0.0
      %vm3369 = vcmp.gt.f32.partialorder %v3344, 0.0
      %v3370 = vmul.f32 %v3275, 0.1
      %v3371 = vmul.f32 %v3278, 0.1
      %v3372 = vmul.f32 %v3281, 0.1
      %v3373 = vmul.f32 %v3284, 0.1
      %v3374 = vmul.f32 %v3287, 0.1
      %v3375 = vmul.f32 %v3290, 0.1
      %v3376 = vmul.f32 %v3293, 0.1
      %v3377 = vmul.f32 %v3296, 0.1
      %v3378 = vmul.f32 %v3299, 0.1
      %v3379 = vmul.f32 %v3302, 0.1
      %v3380 = vmul.f32 %v3305, 0.1
      %v3381 = vmul.f32 %v3308, 0.1
      %v3382 = vmul.f32 %v3311, 0.1
      %v3383 = vmul.f32 %v3314, 0.1
      %v3384 = vmul.f32 %v3317, 0.1
      %v3385 = vmul.f32 %v3320, 0.1
      %v3386 = vmul.f32 %v3323, 0.1
      %v3387 = vmul.f32 %v3326, 0.1
      %v3388 = vmul.f32 %v3329, 0.1
      %v3389 = vmul.f32 %v3332, 0.1
      %v3390 = vmul.f32 %v3335, 0.1
      %v3391 = vmul.f32 %v3338, 0.1
      %v3392 = vmul.f32 %v3341, 0.1
      %v3393 = vmul.f32 %v3344, 0.1
      %v3394 = vsel %vm3346, %v3275, %v3370
      %v3395 = vsel %vm3347, %v3278, %v3371
      %v3396 = vsel %vm3348, %v3281, %v3372
      %v3397 = vsel %vm3349, %v3284, %v3373
      %v3398 = vsel %vm3350, %v3287, %v3374
      %v3399 = vsel %vm3351, %v3290, %v3375
      %v3400 = vsel %vm3352, %v3293, %v3376
      %v3401 = vsel %vm3353, %v3296, %v3377
      %v3402 = vsel %vm3354, %v3299, %v3378
      %v3403 = vsel %vm3355, %v3302, %v3379
      %v3404 = vsel %vm3356, %v3305, %v3380
      %v3405 = vsel %vm3357, %v3308, %v3381
      %v3406 = vsel %vm3358, %v3311, %v3382
      %v3407 = vsel %vm3359, %v3314, %v3383
      %v3408 = vsel %vm3360, %v3317, %v3384
      %v3409 = vsel %vm3361, %v3320, %v3385
      %v3410 = vsel %vm3362, %v3323, %v3386
      %v3411 = vsel %vm3363, %v3326, %v3387
      %v3412 = vsel %vm3364, %v3329, %v3388
      %v3413 = vsel %vm3365, %v3332, %v3389
      %v3414 = vsel %vm3366, %v3335, %v3390
      %v3415 = vsel %vm3367, %v3338, %v3391
      %v3416 = vsel %vm3368, %v3341, %v3392
      %v3417 = vsel %vm3369, %v3344, %v3393
      %3418 = vst [vmem:[%s206] sm:$0xff] %v3394
      %3419 = vst [vmem:[%s206 + $0x8] sm:$0xff] %v3395
      %3420 = vst [vmem:[%s206 + $0x10] sm:$0xff] %v3396
      %3421 = vst [vmem:[%s206 + $0x18] sm:$0xff] %v3397
      %3422 = vst [vmem:[%s206 + $0x20] sm:$0xff] %v3398
      %3423 = vst [vmem:[%s206 + $0x28] sm:$0xff] %v3399
      %3424 = vst [vmem:[%s206 + $0x30] sm:$0xff] %v3400
      %3425 = vst [vmem:[%s206 + $0x38] sm:$0xff] %v3401
      %3426 = vst [vmem:[%s206 + $0x40] sm:$0xff] %v3402
      %3427 = vst [vmem:[%s206 + $0x48] sm:$0xff] %v3403
      %3428 = vst [vmem:[%s206 + $0x50] sm:$0xff] %v3404
      %3429 = vst [vmem:[%s206 + $0x58] sm:$0xff] %v3405
      %3430 = vst [vmem:[%s206 + $0x60] sm:$0xff] %v3406
      %3431 = vst [vmem:[%s206 + $0x68] sm:$0xff] %v3407
      %3432 = vst [vmem:[%s206 + $0x70] sm:$0xff] %v3408
      %3433 = vst [vmem:[%s206 + $0x78] sm:$0xff] %v3409
      %3434 = vst [vmem:[%s206 + $0x80] sm:$0xff] %v3410
      %3435 = vst [vmem:[%s206 + $0x88] sm:$0xff] %v3411
      %3436 = vst [vmem:[%s206 + $0x90] sm:$0xff] %v3412
      %3437 = vst [vmem:[%s206 + $0x98] sm:$0xff] %v3413
      %3438 = vst [vmem:[%s206 + $0xa0] sm:$0xff] %v3414
      %3439 = vst [vmem:[%s206 + $0xa8] sm:$0xff] %v3415
      %3440 = vst [vmem:[%s206 + $0xb0] sm:$0xff] %v3416
      %3441 = vst [vmem:[%s206 + $0xb8] sm:$0xff] %v3417
      %p3442 = scmp.lt.s32.totalorder %s18, 1
      %s3443 = scalar_select %p3442, %s18, 1
      %p3444 = scmp.lt.s32.totalorder %s19, 0
      %s3445 = scalar_select %p3444, %s19, 0
      %s3446 = smul.addr %s3445, 24
      %s3447 = smul.addr %s3443, 24
      %s3448 = sadd.s32 %s3446, %s3447
      %s3449 = smul.addr %s3448, 8
      %s3450 = scalar_lea.vmem %s3, %s3449
      // Predicated region
      $region33: #{discriminator_r_forward.9} parent=31 // pred_check
        %p3451 = pneg %p116
      $region34: #{discriminator_r_forward.9} parent=31 // pred_check_branch
        %3453 = sbr.rel (%p3451) target = $region36
      $region35: #{discriminator_r_forward.9} parent=31 // pred_region
        _
      $region36: #{discriminator_r_forward.9} parent=31 // pred_fallthru
        _
    $region32: #{discriminator_r_forward.9} parent=5 // pred_fallthru
      _
    %p3454 = scmp.le.s32.totalorder 2, %s9
    // Predicated region
    $region37: #{discriminator_r_forward.9} parent=5 // pred_check
      %p3455 = pneg %p3454
    $region38: #{discriminator_r_forward.9} parent=5 // pred_check_branch
      %3457 = sbr.rel (%p3455) target = $region40
    $region39: #{discriminator_r_forward.9} parent=5 // pred_region
      %s3458 = ssub.s32 %s9, 2
      // Predicated region
      $region41: #{discriminator_r_forward.9} parent=39 // pred_check
        %p3459 = pneg %p122
      $region42: #{discriminator_r_forward.9} parent=39 // pred_check_branch
        %3461 = sbr.rel (%p3459) target = $region44
      $region43: #{discriminator_r_forward.9} parent=39 // pred_region
        %p3462 = scmp.lt.s32.totalorder %s20, 1
        %s3463 = scalar_select %p3462, %s20, 1
        %p3464 = scmp.lt.s32.totalorder %s21, 0
        %s3465 = scalar_select %p3464, %s21, 0
        %s3466 = smul.addr %s3465, 24
        %s3467 = smul.addr %s3463, 24
        %s3468 = sadd.s32 %s3466, %s3467
        %s3469 = smul.addr %s3468, 8
        %s3470 = scalar_lea.vmem %s3, %s3469
      $region44: #{discriminator_r_forward.9} parent=39 // pred_fallthru
        _
    $region40: #{discriminator_r_forward.9} parent=5 // pred_fallthru
      _
  $region6: #{discriminator_r_forward.9} parent=0 // loop_footer
    %s13 = sadd.s32 1, %s9
  $region7: #{discriminator_r_forward.9} parent=0 // loop_footer_branch
    %8 = sbr.rel target = $region3
  $region8: #{discriminator_r_forward.9} parent=0 // loop_exit
    _

// kernel: discriminator_r_forward.12
$region0: #{discriminator_r_forward.12}
  #allocation0 [shape = 'u32[]', space=smem, size = 0x4, offset = 0x4, fixed_abs, tag = 'smem constant byte address 0x4 - core index']
  #allocation1 [shape = 'u32[72,128]{1,0:T(1,128)}', space=vmem, size = 0x9000, scoped, tag = 'internal scratch']
  #allocation2 [shape = 'f32[192,768]{1,0:T(8,128)}', space=vmem, size = 0x90000, scoped, tag = 'scratch operand']
  %s0 = inlined_call_operand.vmem [shape: f32[2,1,26,9,128], index: 0, kind: input, shape index: {}]
  %s1 = inlined_call_operand.vmem [shape: f32[768,128], index: 1, kind: input, shape index: {}]
  %s2 = inlined_call_operand.vmem [shape: f32[1,128], index: 2, kind: input, shape index: {}]
  %s3 = inlined_call_operand.vmem [shape: f32[2,1,24,8,128], index: 3, kind: output, shape index: {}]
  %s4 = sld [smem:[#allocation0]]
  $region45: #{discriminator_r_forward.12} parent=0
    _
  %s6 = ssub.s32 1, %s4
  %s7 = scalar_select 0, %s6, %s4
  loop: start=0, step=1, limit=4
  $region2: #{discriminator_r_forward.12} parent=0 // loop_pre_header
    _
  $region3: #{discriminator_r_forward.12} parent=0 // loop_header
    %s9 = sphi 0, %s13
    %p10 = scmp.ge.s32.totalorder %s9, 4
    %s16 = sphi 0, %s28
    %s17 = sphi 0, %s24
    %s18 = sphi 0, %s16
    %s19 = sphi 0, %s17
    %s20 = sphi 0, %s18
    %s21 = sphi 0, %s19
    %s33 = sphi 0, %s35
    %s36 = sphi 0, %s33
    %s37 = sphi 0, %s36
    %s53 = sphi 0, %s37
    %s57 = sphi 0, %s57
    %s59 = sphi 0, %s57
    %s60 = sphi 0, %s59
    %s74 = sphi 0, %s60
    %s78 = sphi 0, %s78
    %s80 = sphi 0, %s78
    %s81 = sphi 0, %s80
    %s95 = sphi 0, %s81
    %s103 = sphi 0, %s105
    %s106 = sphi 0, %s103
    %s107 = sphi 0, %s106
    %s123 = sphi 0, %s107
  $region4: #{discriminator_r_forward.12} parent=0 // loop_header_branch
    %12 = sbr.rel (%p10) target = $region8
  $region5: #{discriminator_r_forward.12} parent=0 // loop_body
    %s14 = ssub.s32 %s9, 1
    %s15 = ssub.s32 %s9, 2
    %s22 = sadd.s32 1, %s17
    %p23 = scmp.ge.s32.totalorder %s22, 1
    %s24 = scalar_select %p23, 0, %s22
    %s25 = sadd.s32 1, %s16
    %s26 = scalar_select %p23, %s25, %s16
    %p27 = scmp.ge.s32.totalorder %s26, 2
    %s28 = scalar_select %p27, 0, %s26
    %s29 = ssub.s32 %s16, %s28
    %s30 = ssub.s32 %s17, %s24
    %s31 = sor.u32 %s29, %s30
    %p32 = scmp.eq.s32.totalorder %s31, 0
    %s34 = sadd.s32 %s33, 1
    %s35 = scalar_select %p32, %s33, %s34
    %p38 = pneg %p32
    %p39 = scmp.eq.s32.totalorder %s9, 1
    %p40 = por %p38, %p39
    %p41 = scmp.ne.s32.totalorder %s33, %s36
    %p42 = scmp.eq.s32.totalorder %s9, 0
    %p43 = por %p41, %p42
    %p44 = scmp.ne.s32.totalorder %s33, %s36
    %p45 = scmp.eq.s32.totalorder %s14, 1
    %p46 = por %p44, %p45
    %p47 = scmp.ne.s32.totalorder %s36, %s37
    %p48 = scmp.eq.s32.totalorder %s14, 0
    %p49 = por %p47, %p48
    %p50 = scmp.ne.s32.totalorder %s36, %s37
    %p51 = scmp.eq.s32.totalorder %s15, 1
    %p52 = por %p50, %p51
    %p54 = scmp.ne.s32.totalorder %s37, %s53
    %p55 = scmp.eq.s32.totalorder %s15, 0
    %p56 = por %p54, %p55
    %s58 = sadd.s32 %s57, 1
    %p61 = scmp.eq.s32.totalorder %s9, 1
    %p62 = scmp.ne.s32.totalorder %s57, %s59
    %p63 = scmp.eq.s32.totalorder %s9, 0
    %p64 = por %p62, %p63
    %p65 = scmp.ne.s32.totalorder %s57, %s59
    %p66 = scmp.eq.s32.totalorder %s14, 1
    %p67 = por %p65, %p66
    %p68 = scmp.ne.s32.totalorder %s59, %s60
    %p69 = scmp.eq.s32.totalorder %s14, 0
    %p70 = por %p68, %p69
    %p71 = scmp.ne.s32.totalorder %s59, %s60
    %p72 = scmp.eq.s32.totalorder %s15, 1
    %p73 = por %p71, %p72
    %p75 = scmp.ne.s32.totalorder %s60, %s74
    %p76 = scmp.eq.s32.totalorder %s15, 0
    %p77 = por %p75, %p76
    %s79 = sadd.s32 %s78, 1
    %p82 = scmp.eq.s32.totalorder %s9, 1
    %p83 = scmp.ne.s32.totalorder %s78, %s80
    %p84 = scmp.eq.s32.totalorder %s9, 0
    %p85 = por %p83, %p84
    %p86 = scmp.ne.s32.totalorder %s78, %s80
    %p87 = scmp.eq.s32.totalorder %s14, 1
    %p88 = por %p86, %p87
    %p89 = scmp.ne.s32.totalorder %s80, %s81
    %p90 = scmp.eq.s32.totalorder %s14, 0
    %p91 = por %p89, %p90
    %p92 = scmp.ne.s32.totalorder %s80, %s81
    %p93 = scmp.eq.s32.totalorder %s15, 1
    %p94 = por %p92, %p93
    %p96 = scmp.ne.s32.totalorder %s81, %s95
    %p97 = scmp.eq.s32.totalorder %s15, 0
    %p98 = por %p96, %p97
    %s99 = ssub.s32 %s16, %s28
    %s100 = ssub.s32 %s17, %s24
    %s101 = sor.u32 %s99, %s100
    %p102 = scmp.eq.s32.totalorder %s101, 0
    %s104 = sadd.s32 %s103, 1
    %s105 = scalar_select %p102, %s103, %s104
    %p108 = pneg %p102
    %p109 = scmp.eq.s32.totalorder %s9, 1
    %p110 = por %p108, %p109
    %p111 = scmp.ne.s32.totalorder %s103, %s106
    %p112 = scmp.eq.s32.totalorder %s9, 0
    %p113 = por %p111, %p112
    %p114 = scmp.ne.s32.totalorder %s103, %s106
    %p115 = scmp.eq.s32.totalorder %s14, 1
    %p116 = por %p114, %p115
    %p117 = scmp.ne.s32.totalorder %s106, %s107
    %p118 = scmp.eq.s32.totalorder %s14, 0
    %p119 = por %p117, %p118
    %p120 = scmp.ne.s32.totalorder %s106, %s107
    %p121 = scmp.eq.s32.totalorder %s15, 1
    %p122 = por %p120, %p121
    %p124 = scmp.ne.s32.totalorder %s107, %s123
    %p125 = scmp.eq.s32.totalorder %s15, 0
    %p126 = por %p124, %p125
    %p127 = scmp.le.s32.totalorder 1, %s9
    %p128 = scmp.lt.s32.totalorder %s9, 3
    %p129 = pnand %p127, %p128
    %p130 = pneg %p129
    // Predicated region
    $region9: #{discriminator_r_forward.12} parent=5 // pred_check
      _
    $region10: #{discriminator_r_forward.12} parent=5 // pred_check_branch
      %132 = sbr.rel (%p129) target = $region12
    $region11: #{discriminator_r_forward.12} parent=5 // pred_region
      %s133 = ssub.s32 %s9, 1
      // Predicated region
      $region13: #{discriminator_r_forward.12} parent=11 // pred_check
        %p134 = pneg %p70
      $region14: #{discriminator_r_forward.12} parent=11 // pred_check_branch
        %136 = sbr.rel (%p134) target = $region16
      $region15: #{discriminator_r_forward.12} parent=11 // pred_region
        _
      $region16: #{discriminator_r_forward.12} parent=11 // pred_fallthru
        _
      // Predicated region
      $region17: #{discriminator_r_forward.12} parent=11 // pred_check
        %p137 = pneg %p91
      $region18: #{discriminator_r_forward.12} parent=11 // pred_check_branch
        %139 = sbr.rel (%p137) target = $region20
      $region19: #{discriminator_r_forward.12} parent=11 // pred_region
        _
      $region20: #{discriminator_r_forward.12} parent=11 // pred_fallthru
        _
    $region12: #{discriminator_r_forward.12} parent=5 // pred_fallthru
      _
    %p140 = scmp.lt.s32.totalorder %s9, 2
    // Predicated region
    $region21: #{discriminator_r_forward.12} parent=5 // pred_check
      %p141 = pneg %p140
    $region22: #{discriminator_r_forward.12} parent=5 // pred_check_branch
      %143 = sbr.rel (%p141) target = $region24
    $region23: #{discriminator_r_forward.12} parent=5 // pred_region
      // Predicated region
      $region25: #{discriminator_r_forward.12} parent=23 // pred_check
        %p144 = pneg %p43
      $region26: #{discriminator_r_forward.12} parent=23 // pred_check_branch
        %146 = sbr.rel (%p144) target = $region28
      $region27: #{discriminator_r_forward.12} parent=23 // pred_region
        %p147 = scmp.lt.s32.totalorder %s16, 1
        %s148 = scalar_select %p147, %s16, 1
        %p149 = scmp.lt.s32.totalorder %s17, 0
        %s150 = scalar_select %p149, %s17, 0
        %s151 = smul.addr %s150, 52
        %s152 = smul.addr %s148, 52
        %s153 = sadd.s32 %s151, %s152
        %s154 = smul.addr %s153, 8
        %s155 = scalar_lea.vmem %s0, %s154
      $region28: #{discriminator_r_forward.12} parent=23 // pred_fallthru
        _
    $region24: #{discriminator_r_forward.12} parent=5 // pred_fallthru
      _
    %p156 = scmp.le.s32.totalorder 1, %s9
    %p157 = scmp.lt.s32.totalorder %s9, 3
    %p158 = pnand %p156, %p157
    %p159 = pneg %p158
    // Predicated region
    $region29: #{discriminator_r_forward.12} parent=5 // pred_check
      _
    $region30: #{discriminator_r_forward.12} parent=5 // pred_check_branch
      %161 = sbr.rel (%p158) target = $region32
    $region31: #{discriminator_r_forward.12} parent=5 // pred_region
      %s162 = ssub.s32 %s9, 1
      %p163 = scmp.lt.s32.totalorder %s18, 1
      %s164 = scalar_select %p163, %s18, 1
      %p165 = scmp.lt.s32.totalorder %s19, 0
      %s166 = scalar_select %p165, %s19, 0
      %s167 = smul.addr %s166, 52
      %s168 = smul.addr %s164, 52
      %s169 = sadd.s32 %s167, %s168
      %s170 = smul.addr %s169, 8
      %s171 = scalar_lea.vmem %s0, %s170
      %p172 = pneg %p49
      %p173 = pneg %p46
      %p174 = pneg %p70
      %p175 = pneg %p67
      %p176 = pneg %p91
      %p177 = pneg %p88
      %p178 = pneg %p119
      %p179 = pneg %p116
      %p180 = scmp.lt.s32.totalorder %s18, 1
      %s181 = scalar_select %p180, %s18, 1
      %p182 = scmp.lt.s32.totalorder %s19, 0
      %s183 = scalar_select %p182, %s19, 0
      %s184 = smul.addr %s183, 24
      %s185 = smul.addr %s181, 24
      %s186 = sadd.s32 %s184, %s185
      %s187 = smul.addr %s186, 8
      %s188 = scalar_lea.vmem %s3, %s187
      %p189 = scmp.lt.s32.totalorder %s18, 1
      %s190 = scalar_select %p189, %s18, 1
      %p191 = scmp.lt.s32.totalorder %s19, 0
      %s192 = scalar_select %p191, %s19, 0
      %s193 = smul.addr %s192, 52
      %s194 = smul.addr %s190, 52
      %s195 = sadd.s32 %s193, %s194
      %s196 = smul.addr %s195, 8
      %s197 = scalar_lea.vmem %s0, %s196
      %p198 = scmp.lt.s32.totalorder %s18, 1
      %s199 = scalar_select %p198, %s18, 1
      %p200 = scmp.lt.s32.totalorder %s19, 0
      %s201 = scalar_select %p200, %s19, 0
      %s202 = smul.addr %s201, 24
      %s203 = smul.addr %s199, 24
      %s204 = sadd.s32 %s202, %s203
      %s205 = smul.addr %s204, 8
      %s206 = scalar_lea.vmem %s3, %s205
      %v207 = vld [vmem:[%s197] sm:$0xff]
      %v208 = vld [vmem:[%s197 + $0x10] sm:$0xff]
      %v209 = vld [vmem:[%s197 + $0x20] sm:$0xff]
      %v210 = vld [vmem:[%s197 + $0x30] sm:$0xff]
      %v211 = vld [vmem:[%s197 + $0x40] sm:$0xff]
      %v212 = vld [vmem:[%s197 + $0x50] sm:$0xff]
      %v213 = vld [vmem:[%s197 + $0x60] sm:$0xff]
      %v214 = vld [vmem:[%s197 + $0x70] sm:$0xff]
      %v215 = vld [vmem:[%s197 + $0x80] sm:$0xff]
      %v216 = vld [vmem:[%s197 + $0x90] sm:$0xff]
      %v217 = vld [vmem:[%s197 + $0xa0] sm:$0xff]
      %v218 = vld [vmem:[%s197 + $0xb0] sm:$0xff]
      %v219 = vld [vmem:[%s197 + $0xc0] sm:$0xff]
      %v220 = vld [vmem:[%s197 + $0xd0] sm:$0xff]
      %v221 = vld [vmem:[%s197 + $0xe0] sm:$0xff]
      %v222 = vld [vmem:[%s197 + $0xf0] sm:$0xff]
      %v223 = vld [vmem:[%s197 + $0x100] sm:$0xff]
      %v224 = vld [vmem:[%s197 + $0x110] sm:$0xff]
      %v225 = vld [vmem:[%s197 + $0x120] sm:$0xff]
      %v226 = vld [vmem:[%s197 + $0x130] sm:$0xff]
      %v227 = vld [vmem:[%s197 + $0x140] sm:$0xff]
      %v228 = vld [vmem:[%s197 + $0x150] sm:$0xff]
      %v229 = vld [vmem:[%s197 + $0x160] sm:$0xff]
      %v230 = vld [vmem:[%s197 + $0x170] sm:$0xff]
      %231 = vst [vmem:[#allocation2] sm:$0xff] %v207
      %232 = vst [vmem:[#allocation2 + $0x30] sm:$0xff] %v208
      %233 = vst [vmem:[#allocation2 + $0x60] sm:$0xff] %v209
      %234 = vst [vmem:[#allocation2 + $0x90] sm:$0xff] %v210
      %235 = vst [vmem:[#allocation2 + $0xc0] sm:$0xff] %v211
      %236 = vst [vmem:[#allocation2 + $0xf0] sm:$0xff] %v212
      %237 = vst [vmem:[#allocation2 + $0x120] sm:$0xff] %v213
      %238 = vst [vmem:[#allocation2 + $0x150] sm:$0xff] %v214
      %239 = vst [vmem:[#allocation2 + $0x180] sm:$0xff] %v215
      %240 = vst [vmem:[#allocation2 + $0x1b0] sm:$0xff] %v216
      %241 = vst [vmem:[#allocation2 + $0x1e0] sm:$0xff] %v217
      %242 = vst [vmem:[#allocation2 + $0x210] sm:$0xff] %v218
      %243 = vst [vmem:[#allocation2 + $0x240] sm:$0xff] %v219
      %244 = vst [vmem:[#allocation2 + $0x270] sm:$0xff] %v220
      %245 = vst [vmem:[#allocation2 + $0x2a0] sm:$0xff] %v221
      %246 = vst [vmem:[#allocation2 + $0x2d0] sm:$0xff] %v222
      %247 = vst [vmem:[#allocation2 + $0x300] sm:$0xff] %v223
      %248 = vst [vmem:[#allocation2 + $0x330] sm:$0xff] %v224
      %249 = vst [vmem:[#allocation2 + $0x360] sm:$0xff] %v225
      %250 = vst [vmem:[#allocation2 + $0x390] sm:$0xff] %v226
      %251 = vst [vmem:[#allocation2 + $0x3c0] sm:$0xff] %v227
      %252 = vst [vmem:[#allocation2 + $0x3f0] sm:$0xff] %v228
      %253 = vst [vmem:[#allocation2 + $0x420] sm:$0xff] %v229
      %254 = vst [vmem:[#allocation2 + $0x450] sm:$0xff] %v230
      %v255 = vld [vmem:[%s197 + $0x1] sm:$0xff]
      %v256 = vld [vmem:[%s197 + $0x11] sm:$0xff]
      %v257 = vld [vmem:[%s197 + $0x21] sm:$0xff]
      %v258 = vld [vmem:[%s197 + $0x31] sm:$0xff]
      %v259 = vld [vmem:[%s197 + $0x41] sm:$0xff]
      %v260 = vld [vmem:[%s197 + $0x51] sm:$0xff]
      %v261 = vld [vmem:[%s197 + $0x61] sm:$0xff]
      %v262 = vld [vmem:[%s197 + $0x71] sm:$0xff]
      %v263 = vld [vmem:[%s197 + $0x81] sm:$0xff]
      %v264 = vld [vmem:[%s197 + $0x91] sm:$0xff]
      %v265 = vld [vmem:[%s197 + $0xa1] sm:$0xff]
      %v266 = vld [vmem:[%s197 + $0xb1] sm:$0xff]
      %v267 = vld [vmem:[%s197 + $0xc1] sm:$0xff]
      %v268 = vld [vmem:[%s197 + $0xd1] sm:$0xff]
      %v269 = vld [vmem:[%s197 + $0xe1] sm:$0xff]
      %v270 = vld [vmem:[%s197 + $0xf1] sm:$0xff]
      %v271 = vld [vmem:[%s197 + $0x101] sm:$0xff]
      %v272 = vld [vmem:[%s197 + $0x111] sm:$0xff]
      %v273 = vld [vmem:[%s197 + $0x121] sm:$0xff]
      %v274 = vld [vmem:[%s197 + $0x131] sm:$0xff]
      %v275 = vld [vmem:[%s197 + $0x141] sm:$0xff]
      %v276 = vld [vmem:[%s197 + $0x151] sm:$0xff]
      %v277 = vld [vmem:[%s197 + $0x161] sm:$0xff]
      %v278 = vld [vmem:[%s197 + $0x171] sm:$0xff]
      %279 = vst [vmem:[#allocation2 + $0x8] sm:$0xff] %v255
      %280 = vst [vmem:[#allocation2 + $0x38] sm:$0xff] %v256
      %281 = vst [vmem:[#allocation2 + $0x68] sm:$0xff] %v257
      %282 = vst [vmem:[#allocation2 + $0x98] sm:$0xff] %v258
      %283 = vst [vmem:[#allocation2 + $0xc8] sm:$0xff] %v259
      %284 = vst [vmem:[#allocation2 + $0xf8] sm:$0xff] %v260
      %285 = vst [vmem:[#allocation2 + $0x128] sm:$0xff] %v261
      %286 = vst [vmem:[#allocation2 + $0x158] sm:$0xff] %v262
      %287 = vst [vmem:[#allocation2 + $0x188] sm:$0xff] %v263
      %288 = vst [vmem:[#allocation2 + $0x1b8] sm:$0xff] %v264
      %289 = vst [vmem:[#allocation2 + $0x1e8] sm:$0xff] %v265
      %290 = vst [vmem:[#allocation2 + $0x218] sm:$0xff] %v266
      %291 = vst [vmem:[#allocation2 + $0x248] sm:$0xff] %v267
      %292 = vst [vmem:[#allocation2 + $0x278] sm:$0xff] %v268
      %293 = vst [vmem:[#allocation2 + $0x2a8] sm:$0xff] %v269
      %294 = vst [vmem:[#allocation2 + $0x2d8] sm:$0xff] %v270
      %295 = vst [vmem:[#allocation2 + $0x308] sm:$0xff] %v271
      %296 = vst [vmem:[#allocation2 + $0x338] sm:$0xff] %v272
      %297 = vst [vmem:[#allocation2 + $0x368] sm:$0xff] %v273
      %298 = vst [vmem:[#allocation2 + $0x398] sm:$0xff] %v274
      %299 = vst [vmem:[#allocation2 + $0x3c8] sm:$0xff] %v275
      %300 = vst [vmem:[#allocation2 + $0x3f8] sm:$0xff] %v276
      %301 = vst [vmem:[#allocation2 + $0x428] sm:$0xff] %v277
      %302 = vst [vmem:[#allocation2 + $0x458] sm:$0xff] %v278
      %s303 = scalar_lea.vmem %s197, 16
      %v304 = vld [vmem:[%s303] sm:$0xff]
      %v305 = vld [vmem:[%s303 + $0x10] sm:$0xff]
      %v306 = vld [vmem:[%s303 + $0x20] sm:$0xff]
      %v307 = vld [vmem:[%s303 + $0x30] sm:$0xff]
      %v308 = vld [vmem:[%s303 + $0x40] sm:$0xff]
      %v309 = vld [vmem:[%s303 + $0x50] sm:$0xff]
      %v310 = vld [vmem:[%s303 + $0x60] sm:$0xff]
      %v311 = vld [vmem:[%s303 + $0x70] sm:$0xff]
      %v312 = vld [vmem:[%s303 + $0x80] sm:$0xff]
      %v313 = vld [vmem:[%s303 + $0x90] sm:$0xff]
      %v314 = vld [vmem:[%s303 + $0xa0] sm:$0xff]
      %v315 = vld [vmem:[%s303 + $0xb0] sm:$0xff]
      %v316 = vld [vmem:[%s303 + $0xc0] sm:$0xff]
      %v317 = vld [vmem:[%s303 + $0xd0] sm:$0xff]
      %v318 = vld [vmem:[%s303 + $0xe0] sm:$0xff]
      %v319 = vld [vmem:[%s303 + $0xf0] sm:$0xff]
      %v320 = vld [vmem:[%s303 + $0x100] sm:$0xff]
      %v321 = vld [vmem:[%s303 + $0x110] sm:$0xff]
      %v322 = vld [vmem:[%s303 + $0x120] sm:$0xff]
      %v323 = vld [vmem:[%s303 + $0x130] sm:$0xff]
      %v324 = vld [vmem:[%s303 + $0x140] sm:$0xff]
      %v325 = vld [vmem:[%s303 + $0x150] sm:$0xff]
      %v326 = vld [vmem:[%s303 + $0x160] sm:$0xff]
      %v327 = vld [vmem:[%s303 + $0x170] sm:$0xff]
      %328 = vst [vmem:[#allocation2 + $0x10] sm:$0xff] %v304
      %329 = vst [vmem:[#allocation2 + $0x40] sm:$0xff] %v305
      %330 = vst [vmem:[#allocation2 + $0x70] sm:$0xff] %v306
      %331 = vst [vmem:[#allocation2 + $0xa0] sm:$0xff] %v307
      %332 = vst [vmem:[#allocation2 + $0xd0] sm:$0xff] %v308
      %333 = vst [vmem:[#allocation2 + $0x100] sm:$0xff] %v309
      %334 = vst [vmem:[#allocation2 + $0x130] sm:$0xff] %v310
      %335 = vst [vmem:[#allocation2 + $0x160] sm:$0xff] %v311
      %336 = vst [vmem:[#allocation2 + $0x190] sm:$0xff] %v312
      %337 = vst [vmem:[#allocation2 + $0x1c0] sm:$0xff] %v313
      %338 = vst [vmem:[#allocation2 + $0x1f0] sm:$0xff] %v314
      %339 = vst [vmem:[#allocation2 + $0x220] sm:$0xff] %v315
      %340 = vst [vmem:[#allocation2 + $0x250] sm:$0xff] %v316
      %341 = vst [vmem:[#allocation2 + $0x280] sm:$0xff] %v317
      %342 = vst [vmem:[#allocation2 + $0x2b0] sm:$0xff] %v318
      %343 = vst [vmem:[#allocation2 + $0x2e0] sm:$0xff] %v319
      %344 = vst [vmem:[#allocation2 + $0x310] sm:$0xff] %v320
      %345 = vst [vmem:[#allocation2 + $0x340] sm:$0xff] %v321
      %346 = vst [vmem:[#allocation2 + $0x370] sm:$0xff] %v322
      %347 = vst [vmem:[#allocation2 + $0x3a0] sm:$0xff] %v323
      %348 = vst [vmem:[#allocation2 + $0x3d0] sm:$0xff] %v324
      %349 = vst [vmem:[#allocation2 + $0x400] sm:$0xff] %v325
      %350 = vst [vmem:[#allocation2 + $0x430] sm:$0xff] %v326
      %351 = vst [vmem:[#allocation2 + $0x460] sm:$0xff] %v327
      %v352 = vld [vmem:[%s303 + $0x1] sm:$0xff]
      %v353 = vld [vmem:[%s303 + $0x11] sm:$0xff]
      %v354 = vld [vmem:[%s303 + $0x21] sm:$0xff]
      %v355 = vld [vmem:[%s303 + $0x31] sm:$0xff]
      %v356 = vld [vmem:[%s303 + $0x41] sm:$0xff]
      %v357 = vld [vmem:[%s303 + $0x51] sm:$0xff]
      %v358 = vld [vmem:[%s303 + $0x61] sm:$0xff]
      %v359 = vld [vmem:[%s303 + $0x71] sm:$0xff]
      %v360 = vld [vmem:[%s303 + $0x81] sm:$0xff]
      %v361 = vld [vmem:[%s303 + $0x91] sm:$0xff]
      %v362 = vld [vmem:[%s303 + $0xa1] sm:$0xff]
      %v363 = vld [vmem:[%s303 + $0xb1] sm:$0xff]
      %v364 = vld [vmem:[%s303 + $0xc1] sm:$0xff]
      %v365 = vld [vmem:[%s303 + $0xd1] sm:$0xff]
      %v366 = vld [vmem:[%s303 + $0xe1] sm:$0xff]
      %v367 = vld [vmem:[%s303 + $0xf1] sm:$0xff]
      %v368 = vld [vmem:[%s303 + $0x101] sm:$0xff]
      %v369 = vld [vmem:[%s303 + $0x111] sm:$0xff]
      %v370 = vld [vmem:[%s303 + $0x121] sm:$0xff]
      %v371 = vld [vmem:[%s303 + $0x131] sm:$0xff]
      %v372 = vld [vmem:[%s303 + $0x141] sm:$0xff]
      %v373 = vld [vmem:[%s303 + $0x151] sm:$0xff]
      %v374 = vld [vmem:[%s303 + $0x161] sm:$0xff]
      %v375 = vld [vmem:[%s303 + $0x171] sm:$0xff]
      %376 = vst [vmem:[#allocation2 + $0x18] sm:$0xff] %v352
      %377 = vst [vmem:[#allocation2 + $0x48] sm:$0xff] %v353
      %378 = vst [vmem:[#allocation2 + $0x78] sm:$0xff] %v354
      %379 = vst [vmem:[#allocation2 + $0xa8] sm:$0xff] %v355
      %380 = vst [vmem:[#allocation2 + $0xd8] sm:$0xff] %v356
      %381 = vst [vmem:[#allocation2 + $0x108] sm:$0xff] %v357
      %382 = vst [vmem:[#allocation2 + $0x138] sm:$0xff] %v358
      %383 = vst [vmem:[#allocation2 + $0x168] sm:$0xff] %v359
      %384 = vst [vmem:[#allocation2 + $0x198] sm:$0xff] %v360
      %385 = vst [vmem:[#allocation2 + $0x1c8] sm:$0xff] %v361
      %386 = vst [vmem:[#allocation2 + $0x1f8] sm:$0xff] %v362
      %387 = vst [vmem:[#allocation2 + $0x228] sm:$0xff] %v363
      %388 = vst [vmem:[#allocation2 + $0x258] sm:$0xff] %v364
      %389 = vst [vmem:[#allocation2 + $0x288] sm:$0xff] %v365
      %390 = vst [vmem:[#allocation2 + $0x2b8] sm:$0xff] %v366
      %391 = vst [vmem:[#allocation2 + $0x2e8] sm:$0xff] %v367
      %392 = vst [vmem:[#allocation2 + $0x318] sm:$0xff] %v368
      %393 = vst [vmem:[#allocation2 + $0x348] sm:$0xff] %v369
      %394 = vst [vmem:[#allocation2 + $0x378] sm:$0xff] %v370
      %395 = vst [vmem:[#allocation2 + $0x3a8] sm:$0xff] %v371
      %396 = vst [vmem:[#allocation2 + $0x3d8] sm:$0xff] %v372
      %397 = vst [vmem:[#allocation2 + $0x408] sm:$0xff] %v373
      %398 = vst [vmem:[#allocation2 + $0x438] sm:$0xff] %v374
      %399 = vst [vmem:[#allocation2 + $0x468] sm:$0xff] %v375
      %s400 = scalar_lea.vmem %s197, 32
      %v401 = vld [vmem:[%s400] sm:$0xff]
      %v402 = vld [vmem:[%s400 + $0x10] sm:$0xff]
      %v403 = vld [vmem:[%s400 + $0x20] sm:$0xff]
      %v404 = vld [vmem:[%s400 + $0x30] sm:$0xff]
      %v405 = vld [vmem:[%s400 + $0x40] sm:$0xff]
      %v406 = vld [vmem:[%s400 + $0x50] sm:$0xff]
      %v407 = vld [vmem:[%s400 + $0x60] sm:$0xff]
      %v408 = vld [vmem:[%s400 + $0x70] sm:$0xff]
      %v409 = vld [vmem:[%s400 + $0x80] sm:$0xff]
      %v410 = vld [vmem:[%s400 + $0x90] sm:$0xff]
      %v411 = vld [vmem:[%s400 + $0xa0] sm:$0xff]
      %v412 = vld [vmem:[%s400 + $0xb0] sm:$0xff]
      %v413 = vld [vmem:[%s400 + $0xc0] sm:$0xff]
      %v414 = vld [vmem:[%s400 + $0xd0] sm:$0xff]
      %v415 = vld [vmem:[%s400 + $0xe0] sm:$0xff]
      %v416 = vld [vmem:[%s400 + $0xf0] sm:$0xff]
      %v417 = vld [vmem:[%s400 + $0x100] sm:$0xff]
      %v418 = vld [vmem:[%s400 + $0x110] sm:$0xff]
      %v419 = vld [vmem:[%s400 + $0x120] sm:$0xff]
      %v420 = vld [vmem:[%s400 + $0x130] sm:$0xff]
      %v421 = vld [vmem:[%s400 + $0x140] sm:$0xff]
      %v422 = vld [vmem:[%s400 + $0x150] sm:$0xff]
      %v423 = vld [vmem:[%s400 + $0x160] sm:$0xff]
      %v424 = vld [vmem:[%s400 + $0x170] sm:$0xff]
      %425 = vst [vmem:[#allocation2 + $0x20] sm:$0xff] %v401
      %426 = vst [vmem:[#allocation2 + $0x50] sm:$0xff] %v402
      %427 = vst [vmem:[#allocation2 + $0x80] sm:$0xff] %v403
      %428 = vst [vmem:[#allocation2 + $0xb0] sm:$0xff] %v404
      %429 = vst [vmem:[#allocation2 + $0xe0] sm:$0xff] %v405
      %430 = vst [vmem:[#allocation2 + $0x110] sm:$0xff] %v406
      %431 = vst [vmem:[#allocation2 + $0x140] sm:$0xff] %v407
      %432 = vst [vmem:[#allocation2 + $0x170] sm:$0xff] %v408
      %433 = vst [vmem:[#allocation2 + $0x1a0] sm:$0xff] %v409
      %434 = vst [vmem:[#allocation2 + $0x1d0] sm:$0xff] %v410
      %435 = vst [vmem:[#allocation2 + $0x200] sm:$0xff] %v411
      %436 = vst [vmem:[#allocation2 + $0x230] sm:$0xff] %v412
      %437 = vst [vmem:[#allocation2 + $0x260] sm:$0xff] %v413
      %438 = vst [vmem:[#allocation2 + $0x290] sm:$0xff] %v414
      %439 = vst [vmem:[#allocation2 + $0x2c0] sm:$0xff] %v415
      %440 = vst [vmem:[#allocation2 + $0x2f0] sm:$0xff] %v416
      %441 = vst [vmem:[#allocation2 + $0x320] sm:$0xff] %v417
      %442 = vst [vmem:[#allocation2 + $0x350] sm:$0xff] %v418
      %443 = vst [vmem:[#allocation2 + $0x380] sm:$0xff] %v419
      %444 = vst [vmem:[#allocation2 + $0x3b0] sm:$0xff] %v420
      %445 = vst [vmem:[#allocation2 + $0x3e0] sm:$0xff] %v421
      %446 = vst [vmem:[#allocation2 + $0x410] sm:$0xff] %v422
      %447 = vst [vmem:[#allocation2 + $0x440] sm:$0xff] %v423
      %448 = vst [vmem:[#allocation2 + $0x470] sm:$0xff] %v424
      %v449 = vld [vmem:[%s400 + $0x1] sm:$0xff]
      %v450 = vld [vmem:[%s400 + $0x11] sm:$0xff]
      %v451 = vld [vmem:[%s400 + $0x21] sm:$0xff]
      %v452 = vld [vmem:[%s400 + $0x31] sm:$0xff]
      %v453 = vld [vmem:[%s400 + $0x41] sm:$0xff]
      %v454 = vld [vmem:[%s400 + $0x51] sm:$0xff]
      %v455 = vld [vmem:[%s400 + $0x61] sm:$0xff]
      %v456 = vld [vmem:[%s400 + $0x71] sm:$0xff]
      %v457 = vld [vmem:[%s400 + $0x81] sm:$0xff]
      %v458 = vld [vmem:[%s400 + $0x91] sm:$0xff]
      %v459 = vld [vmem:[%s400 + $0xa1] sm:$0xff]
      %v460 = vld [vmem:[%s400 + $0xb1] sm:$0xff]
      %v461 = vld [vmem:[%s400 + $0xc1] sm:$0xff]
      %v462 = vld [vmem:[%s400 + $0xd1] sm:$0xff]
      %v463 = vld [vmem:[%s400 + $0xe1] sm:$0xff]
      %v464 = vld [vmem:[%s400 + $0xf1] sm:$0xff]
      %v465 = vld [vmem:[%s400 + $0x101] sm:$0xff]
      %v466 = vld [vmem:[%s400 + $0x111] sm:$0xff]
      %v467 = vld [vmem:[%s400 + $0x121] sm:$0xff]
      %v468 = vld [vmem:[%s400 + $0x131] sm:$0xff]
      %v469 = vld [vmem:[%s400 + $0x141] sm:$0xff]
      %v470 = vld [vmem:[%s400 + $0x151] sm:$0xff]
      %v471 = vld [vmem:[%s400 + $0x161] sm:$0xff]
      %v472 = vld [vmem:[%s400 + $0x171] sm:$0xff]
      %473 = vst [vmem:[#allocation2 + $0x28] sm:$0xff] %v449
      %474 = vst [vmem:[#allocation2 + $0x58] sm:$0xff] %v450
      %475 = vst [vmem:[#allocation2 + $0x88] sm:$0xff] %v451
      %476 = vst [vmem:[#allocation2 + $0xb8] sm:$0xff] %v452
      %477 = vst [vmem:[#allocation2 + $0xe8] sm:$0xff] %v453
      %478 = vst [vmem:[#allocation2 + $0x118] sm:$0xff] %v454
      %479 = vst [vmem:[#allocation2 + $0x148] sm:$0xff] %v455
      %480 = vst [vmem:[#allocation2 + $0x178] sm:$0xff] %v456
      %481 = vst [vmem:[#allocation2 + $0x1a8] sm:$0xff] %v457
      %482 = vst [vmem:[#allocation2 + $0x1d8] sm:$0xff] %v458
      %483 = vst [vmem:[#allocation2 + $0x208] sm:$0xff] %v459
      %484 = vst [vmem:[#allocation2 + $0x238] sm:$0xff] %v460
      %485 = vst [vmem:[#allocation2 + $0x268] sm:$0xff] %v461
      %486 = vst [vmem:[#allocation2 + $0x298] sm:$0xff] %v462
      %487 = vst [vmem:[#allocation2 + $0x2c8] sm:$0xff] %v463
      %488 = vst [vmem:[#allocation2 + $0x2f8] sm:$0xff] %v464
      %489 = vst [vmem:[#allocation2 + $0x328] sm:$0xff] %v465
      %490 = vst [vmem:[#allocation2 + $0x358] sm:$0xff] %v466
      %491 = vst [vmem:[#allocation2 + $0x388] sm:$0xff] %v467
      %492 = vst [vmem:[#allocation2 + $0x3b8] sm:$0xff] %v468
      %493 = vst [vmem:[#allocation2 + $0x3e8] sm:$0xff] %v469
      %494 = vst [vmem:[#allocation2 + $0x418] sm:$0xff] %v470
      %495 = vst [vmem:[#allocation2 + $0x448] sm:$0xff] %v471
      %496 = vst [vmem:[#allocation2 + $0x478] sm:$0xff] %v472
      %v497 = vld [vmem:[#allocation2] sm:$0xff]
      %v498 = vld [vmem:[#allocation2 + $0x8] sm:$0xff]
      %v499 = vld [vmem:[#allocation2 + $0x10] sm:$0xff]
      %v500 = vld [vmem:[#allocation2 + $0x18] sm:$0xff]
      %v501 = vld [vmem:[#allocation2 + $0x20] sm:$0xff]
      %v502 = vld [vmem:[#allocation2 + $0x28] sm:$0xff]
      %v503 = vld [vmem:[#allocation2 + $0x30] sm:$0xff]
      %v504 = vld [vmem:[#allocation2 + $0x38] sm:$0xff]
      %v505 = vld [vmem:[#allocation2 + $0x40] sm:$0xff]
      %v506 = vld [vmem:[#allocation2 + $0x48] sm:$0xff]
      %v507 = vld [vmem:[#allocation2 + $0x50] sm:$0xff]
      %v508 = vld [vmem:[#allocation2 + $0x58] sm:$0xff]
      %v509 = vld [vmem:[#allocation2 + $0x60] sm:$0xff]
      %v510 = vld [vmem:[#allocation2 + $0x68] sm:$0xff]
      %v511 = vld [vmem:[#allocation2 + $0x70] sm:$0xff]
      %v512 = vld [vmem:[#allocation2 + $0x78] sm:$0xff]
      %v513 = vld [vmem:[#allocation2 + $0x80] sm:$0xff]
      %v514 = vld [vmem:[#allocation2 + $0x88] sm:$0xff]
      %v515 = vld [vmem:[#allocation2 + $0x90] sm:$0xff]
      %v516 = vld [vmem:[#allocation2 + $0x98] sm:$0xff]
      %v517 = vld [vmem:[#allocation2 + $0xa0] sm:$0xff]
      %v518 = vld [vmem:[#allocation2 + $0xa8] sm:$0xff]
      %v519 = vld [vmem:[#allocation2 + $0xb0] sm:$0xff]
      %v520 = vld [vmem:[#allocation2 + $0xb8] sm:$0xff]
      %v521 = vld [vmem:[#allocation2 + $0xc0] sm:$0xff]
      %v522 = vld [vmem:[#allocation2 + $0xc8] sm:$0xff]
      %v523 = vld [vmem:[#allocation2 + $0xd0] sm:$0xff]
      %v524 = vld [vmem:[#allocation2 + $0xd8] sm:$0xff]
      %v525 = vld [vmem:[#allocation2 + $0xe0] sm:$0xff]
      %v526 = vld [vmem:[#allocation2 + $0xe8] sm:$0xff]
      %v527 = vld [vmem:[#allocation2 + $0xf0] sm:$0xff]
      %v528 = vld [vmem:[#allocation2 + $0xf8] sm:$0xff]
      %v529 = vld [vmem:[#allocation2 + $0x100] sm:$0xff]
      %v530 = vld [vmem:[#allocation2 + $0x108] sm:$0xff]
      %v531 = vld [vmem:[#allocation2 + $0x110] sm:$0xff]
      %v532 = vld [vmem:[#allocation2 + $0x118] sm:$0xff]
      %v533 = vld [vmem:[#allocation2 + $0x120] sm:$0xff]
      %v534 = vld [vmem:[#allocation2 + $0x128] sm:$0xff]
      %v535 = vld [vmem:[#allocation2 + $0x130] sm:$0xff]
      %v536 = vld [vmem:[#allocation2 + $0x138] sm:$0xff]
      %v537 = vld [vmem:[#allocation2 + $0x140] sm:$0xff]
      %v538 = vld [vmem:[#allocation2 + $0x148] sm:$0xff]
      %v539 = vld [vmem:[#allocation2 + $0x150] sm:$0xff]
      %v540 = vld [vmem:[#allocation2 + $0x158] sm:$0xff]
      %v541 = vld [vmem:[#allocation2 + $0x160] sm:$0xff]
      %v542 = vld [vmem:[#allocation2 + $0x168] sm:$0xff]
      %v543 = vld [vmem:[#allocation2 + $0x170] sm:$0xff]
      %v544 = vld [vmem:[#allocation2 + $0x178] sm:$0xff]
      %v545 = vld [vmem:[#allocation2 + $0x180] sm:$0xff]
      %v546 = vld [vmem:[#allocation2 + $0x188] sm:$0xff]
      %v547 = vld [vmem:[#allocation2 + $0x190] sm:$0xff]
      %v548 = vld [vmem:[#allocation2 + $0x198] sm:$0xff]
      %v549 = vld [vmem:[#allocation2 + $0x1a0] sm:$0xff]
      %v550 = vld [vmem:[#allocation2 + $0x1a8] sm:$0xff]
      %v551 = vld [vmem:[#allocation2 + $0x1b0] sm:$0xff]
      %v552 = vld [vmem:[#allocation2 + $0x1b8] sm:$0xff]
      %v553 = vld [vmem:[#allocation2 + $0x1c0] sm:$0xff]
      %v554 = vld [vmem:[#allocation2 + $0x1c8] sm:$0xff]
      %v555 = vld [vmem:[#allocation2 + $0x1d0] sm:$0xff]
      %v556 = vld [vmem:[#allocation2 + $0x1d8] sm:$0xff]
      %v557 = vld [vmem:[#allocation2 + $0x1e0] sm:$0xff]
      %v558 = vld [vmem:[#allocation2 + $0x1e8] sm:$0xff]
      %v559 = vld [vmem:[#allocation2 + $0x1f0] sm:$0xff]
      %v560 = vld [vmem:[#allocation2 + $0x1f8] sm:$0xff]
      %v561 = vld [vmem:[#allocation2 + $0x200] sm:$0xff]
      %v562 = vld [vmem:[#allocation2 + $0x208] sm:$0xff]
      %v563 = vld [vmem:[#allocation2 + $0x210] sm:$0xff]
      %v564 = vld [vmem:[#allocation2 + $0x218] sm:$0xff]
      %v565 = vld [vmem:[#allocation2 + $0x220] sm:$0xff]
      %v566 = vld [vmem:[#allocation2 + $0x228] sm:$0xff]
      %v567 = vld [vmem:[#allocation2 + $0x230] sm:$0xff]
      %v568 = vld [vmem:[#allocation2 + $0x238] sm:$0xff]
      %v569 = vld [vmem:[#allocation2 + $0x240] sm:$0xff]
      %v570 = vld [vmem:[#allocation2 + $0x248] sm:$0xff]
      %v571 = vld [vmem:[#allocation2 + $0x250] sm:$0xff]
      %v572 = vld [vmem:[#allocation2 + $0x258] sm:$0xff]
      %v573 = vld [vmem:[#allocation2 + $0x260] sm:$0xff]
      %v574 = vld [vmem:[#allocation2 + $0x268] sm:$0xff]
      %v575 = vld [vmem:[#allocation2 + $0x270] sm:$0xff]
      %v576 = vld [vmem:[#allocation2 + $0x278] sm:$0xff]
      %v577 = vld [vmem:[#allocation2 + $0x280] sm:$0xff]
      %v578 = vld [vmem:[#allocation2 + $0x288] sm:$0xff]
      %v579 = vld [vmem:[#allocation2 + $0x290] sm:$0xff]
      %v580 = vld [vmem:[#allocation2 + $0x298] sm:$0xff]
      %v581 = vld [vmem:[#allocation2 + $0x2a0] sm:$0xff]
      %v582 = vld [vmem:[#allocation2 + $0x2a8] sm:$0xff]
      %v583 = vld [vmem:[#allocation2 + $0x2b0] sm:$0xff]
      %v584 = vld [vmem:[#allocation2 + $0x2b8] sm:$0xff]
      %v585 = vld [vmem:[#allocation2 + $0x2c0] sm:$0xff]
      %v586 = vld [vmem:[#allocation2 + $0x2c8] sm:$0xff]
      %v587 = vld [vmem:[#allocation2 + $0x2d0] sm:$0xff]
      %v588 = vld [vmem:[#allocation2 + $0x2d8] sm:$0xff]
      %v589 = vld [vmem:[#allocation2 + $0x2e0] sm:$0xff]
      %v590 = vld [vmem:[#allocation2 + $0x2e8] sm:$0xff]
      %v591 = vld [vmem:[#allocation2 + $0x2f0] sm:$0xff]
      %v592 = vld [vmem:[#allocation2 + $0x2f8] sm:$0xff]
      %v593 = vld [vmem:[#allocation2 + $0x300] sm:$0xff]
      %v594 = vld [vmem:[#allocation2 + $0x308] sm:$0xff]
      %v595 = vld [vmem:[#allocation2 + $0x310] sm:$0xff]
      %v596 = vld [vmem:[#allocation2 + $0x318] sm:$0xff]
      %v597 = vld [vmem:[#allocation2 + $0x320] sm:$0xff]
      %v598 = vld [vmem:[#allocation2 + $0x328] sm:$0xff]
      %v599 = vld [vmem:[#allocation2 + $0x330] sm:$0xff]
      %v600 = vld [vmem:[#allocation2 + $0x338] sm:$0xff]
      %v601 = vld [vmem:[#allocation2 + $0x340] sm:$0xff]
      %v602 = vld [vmem:[#allocation2 + $0x348] sm:$0xff]
      %v603 = vld [vmem:[#allocation2 + $0x350] sm:$0xff]
      %v604 = vld [vmem:[#allocation2 + $0x358] sm:$0xff]
      %v605 = vld [vmem:[#allocation2 + $0x360] sm:$0xff]
      %v606 = vld [vmem:[#allocation2 + $0x368] sm:$0xff]
      %v607 = vld [vmem:[#allocation2 + $0x370] sm:$0xff]
      %v608 = vld [vmem:[#allocation2 + $0x378] sm:$0xff]
      %v609 = vld [vmem:[#allocation2 + $0x380] sm:$0xff]
      %v610 = vld [vmem:[#allocation2 + $0x388] sm:$0xff]
      %v611 = vld [vmem:[#allocation2 + $0x390] sm:$0xff]
      %v612 = vld [vmem:[#allocation2 + $0x398] sm:$0xff]
      %v613 = vld [vmem:[#allocation2 + $0x3a0] sm:$0xff]
      %v614 = vld [vmem:[#allocation2 + $0x3a8] sm:$0xff]
      %v615 = vld [vmem:[#allocation2 + $0x3b0] sm:$0xff]
      %v616 = vld [vmem:[#allocation2 + $0x3b8] sm:$0xff]
      %v617 = vld [vmem:[#allocation2 + $0x3c0] sm:$0xff]
      %v618 = vld [vmem:[#allocation2 + $0x3c8] sm:$0xff]
      %v619 = vld [vmem:[#allocation2 + $0x3d0] sm:$0xff]
      %v620 = vld [vmem:[#allocation2 + $0x3d8] sm:$0xff]
      %v621 = vld [vmem:[#allocation2 + $0x3e0] sm:$0xff]
      %v622 = vld [vmem:[#allocation2 + $0x3e8] sm:$0xff]
      %v623 = vld [vmem:[#allocation2 + $0x3f0] sm:$0xff]
      %v624 = vld [vmem:[#allocation2 + $0x3f8] sm:$0xff]
      %v625 = vld [vmem:[#allocation2 + $0x400] sm:$0xff]
      %v626 = vld [vmem:[#allocation2 + $0x408] sm:$0xff]
      %v627 = vld [vmem:[#allocation2 + $0x410] sm:$0xff]
      %v628 = vld [vmem:[#allocation2 + $0x418] sm:$0xff]
      %v629 = vld [vmem:[#allocation2 + $0x420] sm:$0xff]
      %v630 = vld [vmem:[#allocation2 + $0x428] sm:$0xff]
      %v631 = vld [vmem:[#allocation2 + $0x430] sm:$0xff]
      %v632 = vld [vmem:[#allocation2 + $0x438] sm:$0xff]
      %v633 = vld [vmem:[#allocation2 + $0x440] sm:$0xff]
      %v634 = vld [vmem:[#allocation2 + $0x448] sm:$0xff]
      %v635 = vld [vmem:[#allocation2 + $0x450] sm:$0xff]
      %v636 = vld [vmem:[#allocation2 + $0x458] sm:$0xff]
      %v637 = vld [vmem:[#allocation2 + $0x460] sm:$0xff]
      %v638 = vld [vmem:[#allocation2 + $0x468] sm:$0xff]
      %v639 = vld [vmem:[#allocation2 + $0x470] sm:$0xff]
      %v640 = vld [vmem:[#allocation2 + $0x478] sm:$0xff]
      %v641 = vld [vmem:[%s1] sm:$0xff]
      %v642 = vld [vmem:[%s1 + $0x8] sm:$0xff]
      %v643 = vld [vmem:[%s1 + $0x10] sm:$0xff]
      %v644 = vld [vmem:[%s1 + $0x18] sm:$0xff]
      %v645 = vld [vmem:[%s1 + $0x20] sm:$0xff]
      %v646 = vld [vmem:[%s1 + $0x28] sm:$0xff]
      %v647 = vld [vmem:[%s1 + $0x30] sm:$0xff]
      %v648 = vld [vmem:[%s1 + $0x38] sm:$0xff]
      %v649 = vld [vmem:[%s1 + $0x40] sm:$0xff]
      %v650 = vld [vmem:[%s1 + $0x48] sm:$0xff]
      %v651 = vld [vmem:[%s1 + $0x50] sm:$0xff]
      %v652 = vld [vmem:[%s1 + $0x58] sm:$0xff]
      %v653 = vld [vmem:[%s1 + $0x60] sm:$0xff]
      %v654 = vld [vmem:[%s1 + $0x68] sm:$0xff]
      %v655 = vld [vmem:[%s1 + $0x70] sm:$0xff]
      %v656 = vld [vmem:[%s1 + $0x78] sm:$0xff]
      %v657 = vld [vmem:[%s1 + $0x80] sm:$0xff]
      %v658 = vld [vmem:[%s1 + $0x88] sm:$0xff]
      %v659 = vld [vmem:[%s1 + $0x90] sm:$0xff]
      %v660 = vld [vmem:[%s1 + $0x98] sm:$0xff]
      %v661 = vld [vmem:[%s1 + $0xa0] sm:$0xff]
      %v662 = vld [vmem:[%s1 + $0xa8] sm:$0xff]
      %v663 = vld [vmem:[%s1 + $0xb0] sm:$0xff]
      %v664 = vld [vmem:[%s1 + $0xb8] sm:$0xff]
      %v665 = vld [vmem:[%s1 + $0xc0] sm:$0xff]
      %v666 = vld [vmem:[%s1 + $0xc8] sm:$0xff]
      %v667 = vld [vmem:[%s1 + $0xd0] sm:$0xff]
      %v668 = vld [vmem:[%s1 + $0xd8] sm:$0xff]
      %v669 = vld [vmem:[%s1 + $0xe0] sm:$0xff]
      %v670 = vld [vmem:[%s1 + $0xe8] sm:$0xff]
      %v671 = vld [vmem:[%s1 + $0xf0] sm:$0xff]
      %v672 = vld [vmem:[%s1 + $0xf8] sm:$0xff]
      %v673 = vld [vmem:[%s1 + $0x100] sm:$0xff]
      %v674 = vld [vmem:[%s1 + $0x108] sm:$0xff]
      %v675 = vld [vmem:[%s1 + $0x110] sm:$0xff]
      %v676 = vld [vmem:[%s1 + $0x118] sm:$0xff]
      %v677 = vld [vmem:[%s1 + $0x120] sm:$0xff]
      %v678 = vld [vmem:[%s1 + $0x128] sm:$0xff]
      %v679 = vld [vmem:[%s1 + $0x130] sm:$0xff]
      %v680 = vld [vmem:[%s1 + $0x138] sm:$0xff]
      %v681 = vld [vmem:[%s1 + $0x140] sm:$0xff]
      %v682 = vld [vmem:[%s1 + $0x148] sm:$0xff]
      %v683 = vld [vmem:[%s1 + $0x150] sm:$0xff]
      %v684 = vld [vmem:[%s1 + $0x158] sm:$0xff]
      %v685 = vld [vmem:[%s1 + $0x160] sm:$0xff]
      %v686 = vld [vmem:[%s1 + $0x168] sm:$0xff]
      %v687 = vld [vmem:[%s1 + $0x170] sm:$0xff]
      %v688 = vld [vmem:[%s1 + $0x178] sm:$0xff]
      %v689 = vld [vmem:[%s1 + $0x180] sm:$0xff]
      %v690 = vld [vmem:[%s1 + $0x188] sm:$0xff]
      %v691 = vld [vmem:[%s1 + $0x190] sm:$0xff]
      %v692 = vld [vmem:[%s1 + $0x198] sm:$0xff]
      %v693 = vld [vmem:[%s1 + $0x1a0] sm:$0xff]
      %v694 = vld [vmem:[%s1 + $0x1a8] sm:$0xff]
      %v695 = vld [vmem:[%s1 + $0x1b0] sm:$0xff]
      %v696 = vld [vmem:[%s1 + $0x1b8] sm:$0xff]
      %v697 = vld [vmem:[%s1 + $0x1c0] sm:$0xff]
      %v698 = vld [vmem:[%s1 + $0x1c8] sm:$0xff]
      %v699 = vld [vmem:[%s1 + $0x1d0] sm:$0xff]
      %v700 = vld [vmem:[%s1 + $0x1d8] sm:$0xff]
      %v701 = vld [vmem:[%s1 + $0x1e0] sm:$0xff]
      %v702 = vld [vmem:[%s1 + $0x1e8] sm:$0xff]
      %v703 = vld [vmem:[%s1 + $0x1f0] sm:$0xff]
      %v704 = vld [vmem:[%s1 + $0x1f8] sm:$0xff]
      %v705 = vld [vmem:[%s1 + $0x200] sm:$0xff]
      %v706 = vld [vmem:[%s1 + $0x208] sm:$0xff]
      %v707 = vld [vmem:[%s1 + $0x210] sm:$0xff]
      %v708 = vld [vmem:[%s1 + $0x218] sm:$0xff]
      %v709 = vld [vmem:[%s1 + $0x220] sm:$0xff]
      %v710 = vld [vmem:[%s1 + $0x228] sm:$0xff]
      %v711 = vld [vmem:[%s1 + $0x230] sm:$0xff]
      %v712 = vld [vmem:[%s1 + $0x238] sm:$0xff]
      %v713 = vld [vmem:[%s1 + $0x240] sm:$0xff]
      %v714 = vld [vmem:[%s1 + $0x248] sm:$0xff]
      %v715 = vld [vmem:[%s1 + $0x250] sm:$0xff]
      %v716 = vld [vmem:[%s1 + $0x258] sm:$0xff]
      %v717 = vld [vmem:[%s1 + $0x260] sm:$0xff]
      %v718 = vld [vmem:[%s1 + $0x268] sm:$0xff]
      %v719 = vld [vmem:[%s1 + $0x270] sm:$0xff]
      %v720 = vld [vmem:[%s1 + $0x278] sm:$0xff]
      %v721 = vld [vmem:[%s1 + $0x280] sm:$0xff]
      %v722 = vld [vmem:[%s1 + $0x288] sm:$0xff]
      %v723 = vld [vmem:[%s1 + $0x290] sm:$0xff]
      %v724 = vld [vmem:[%s1 + $0x298] sm:$0xff]
      %v725 = vld [vmem:[%s1 + $0x2a0] sm:$0xff]
      %v726 = vld [vmem:[%s1 + $0x2a8] sm:$0xff]
      %v727 = vld [vmem:[%s1 + $0x2b0] sm:$0xff]
      %v728 = vld [vmem:[%s1 + $0x2b8] sm:$0xff]
      %v729 = vld [vmem:[%s1 + $0x2c0] sm:$0xff]
      %v730 = vld [vmem:[%s1 + $0x2c8] sm:$0xff]
      %v731 = vld [vmem:[%s1 + $0x2d0] sm:$0xff]
      %v732 = vld [vmem:[%s1 + $0x2d8] sm:$0xff]
      %v733 = vld [vmem:[%s1 + $0x2e0] sm:$0xff]
      %v734 = vld [vmem:[%s1 + $0x2e8] sm:$0xff]
      %v735 = vld [vmem:[%s1 + $0x2f0] sm:$0xff]
      %v736 = vld [vmem:[%s1 + $0x2f8] sm:$0xff]
      %v737 = vld [vmem:[%s2] sm:$0x1]
      %v739 = vperm.slane %v737, 0
      %741 = vmatpush.msra.mxu0 %v656
      %742 = vmatpush.msra.mxu0 %v655
      %743 = vmatpush.msra.mxu0 %v654
      %744 = vmatpush.msra.mxu0 %v653
      %745 = vmatpush.msra.mxu0 %v652
      %746 = vmatpush.msra.mxu0 %v651
      %747 = vmatpush.msra.mxu0 %v650
      %748 = vmatpush.msra.mxu0 %v649
      %749 = vmatpush.msra.mxu0 %v648
      %750 = vmatpush.msra.mxu0 %v647
      %751 = vmatpush.msra.mxu0 %v646
      %752 = vmatpush.msra.mxu0 %v645
      %753 = vmatpush.msra.mxu0 %v644
      %754 = vmatpush.msra.mxu0 %v643
      %755 = vmatpush.msra.mxu0 %v642
      %756 = vmatpush.msra.mxu0 %v641
      %757 = vmatmul.f32.gmra.mxu0 %v497
      %v758 = vpop.f32.mrf.mxu0
      %v759 = vadd.f32 %v739, %v758
      %760 = vmatmul.f32.gmra.mxu0 %v503
      %v761 = vpop.f32.mrf.mxu0
      %v762 = vadd.f32 %v739, %v761
      %763 = vmatmul.f32.gmra.mxu0 %v509
      %v764 = vpop.f32.mrf.mxu0
      %v765 = vadd.f32 %v739, %v764
      %766 = vmatmul.f32.gmra.mxu0 %v515
      %v767 = vpop.f32.mrf.mxu0
      %v768 = vadd.f32 %v739, %v767
      %769 = vmatmul.f32.gmra.mxu0 %v521
      %v770 = vpop.f32.mrf.mxu0
      %v771 = vadd.f32 %v739, %v770
      %772 = vmatmul.f32.gmra.mxu0 %v527
      %v773 = vpop.f32.mrf.mxu0
      %v774 = vadd.f32 %v739, %v773
      %775 = vmatmul.f32.gmra.mxu0 %v533
      %v776 = vpop.f32.mrf.mxu0
      %v777 = vadd.f32 %v739, %v776
      %778 = vmatmul.f32.gmra.mxu0 %v539
      %v779 = vpop.f32.mrf.mxu0
      %v780 = vadd.f32 %v739, %v779
      %781 = vmatmul.f32.gmra.mxu0 %v545
      %v782 = vpop.f32.mrf.mxu0
      %v783 = vadd.f32 %v739, %v782
      %784 = vmatmul.f32.gmra.mxu0 %v551
      %v785 = vpop.f32.mrf.mxu0
      %v786 = vadd.f32 %v739, %v785
      %787 = vmatmul.f32.gmra.mxu0 %v557
      %v788 = vpop.f32.mrf.mxu0
      %v789 = vadd.f32 %v739, %v788
      %790 = vmatmul.f32.gmra.mxu0 %v563
      %v791 = vpop.f32.mrf.mxu0
      %v792 = vadd.f32 %v739, %v791
      %793 = vmatmul.f32.gmra.mxu0 %v569
      %v794 = vpop.f32.mrf.mxu0
      %v795 = vadd.f32 %v739, %v794
      %796 = vmatmul.f32.gmra.mxu0 %v575
      %v797 = vpop.f32.mrf.mxu0
      %v798 = vadd.f32 %v739, %v797
      %799 = vmatmul.f32.gmra.mxu0 %v581
      %v800 = vpop.f32.mrf.mxu0
      %v801 = vadd.f32 %v739, %v800
      %802 = vmatmul.f32.gmra.mxu0 %v587
      %v803 = vpop.f32.mrf.mxu0
      %v804 = vadd.f32 %v739, %v803
      %805 = vmatmul.f32.gmra.mxu0 %v593
      %v806 = vpop.f32.mrf.mxu0
      %v807 = vadd.f32 %v739, %v806
      %808 = vmatmul.f32.gmra.mxu0 %v599
      %v809 = vpop.f32.mrf.mxu0
      %v810 = vadd.f32 %v739, %v809
      %811 = vmatmul.f32.gmra.mxu0 %v605
      %v812 = vpop.f32.mrf.mxu0
      %v813 = vadd.f32 %v739, %v812
      %814 = vmatmul.f32.gmra.mxu0 %v611
      %v815 = vpop.f32.mrf.mxu0
      %v816 = vadd.f32 %v739, %v815
      %817 = vmatmul.f32.gmra.mxu0 %v617
      %v818 = vpop.f32.mrf.mxu0
      %v819 = vadd.f32 %v739, %v818
      %820 = vmatmul.f32.gmra.mxu0 %v623
      %v821 = vpop.f32.mrf.mxu0
      %v822 = vadd.f32 %v739, %v821
      %823 = vmatmul.f32.gmra.mxu0 %v629
      %v824 = vpop.f32.mrf.mxu0
      %v825 = vadd.f32 %v739, %v824
      %826 = vmatmul.f32.gmra.mxu0 %v635
      %v827 = vpop.f32.mrf.mxu0
      %v828 = vadd.f32 %v739, %v827
      %829 = vdwg.mxu0
      %830 = vmatpush.msra.mxu0 %v672
      %831 = vmatpush.msra.mxu0 %v671
      %832 = vmatpush.msra.mxu0 %v670
      %833 = vmatpush.msra.mxu0 %v669
      %834 = vmatpush.msra.mxu0 %v668
      %835 = vmatpush.msra.mxu0 %v667
      %836 = vmatpush.msra.mxu0 %v666
      %837 = vmatpush.msra.mxu0 %v665
      %838 = vmatpush.msra.mxu0 %v664
      %839 = vmatpush.msra.mxu0 %v663
      %840 = vmatpush.msra.mxu0 %v662
      %841 = vmatpush.msra.mxu0 %v661
      %842 = vmatpush.msra.mxu0 %v660
      %843 = vmatpush.msra.mxu0 %v659
      %844 = vmatpush.msra.mxu0 %v658
      %845 = vmatpush.msra.mxu0 %v657
      %846 = vmatmul.f32.gmra.mxu0 %v498
      %v847 = vpop.f32.mrf.mxu0
      %v848 = vadd.f32 %v759, %v847
      %849 = vmatmul.f32.gmra.mxu0 %v504
      %v850 = vpop.f32.mrf.mxu0
      %v851 = vadd.f32 %v762, %v850
      %852 = vmatmul.f32.gmra.mxu0 %v510
      %v853 = vpop.f32.mrf.mxu0
      %v854 = vadd.f32 %v765, %v853
      %855 = vmatmul.f32.gmra.mxu0 %v516
      %v856 = vpop.f32.mrf.mxu0
      %v857 = vadd.f32 %v768, %v856
      %858 = vmatmul.f32.gmra.mxu0 %v522
      %v859 = vpop.f32.mrf.mxu0
      %v860 = vadd.f32 %v771, %v859
      %861 = vmatmul.f32.gmra.mxu0 %v528
      %v862 = vpop.f32.mrf.mxu0
      %v863 = vadd.f32 %v774, %v862
      %864 = vmatmul.f32.gmra.mxu0 %v534
      %v865 = vpop.f32.mrf.mxu0
      %v866 = vadd.f32 %v777, %v865
      %867 = vmatmul.f32.gmra.mxu0 %v540
      %v868 = vpop.f32.mrf.mxu0
      %v869 = vadd.f32 %v780, %v868
      %870 = vmatmul.f32.gmra.mxu0 %v546
      %v871 = vpop.f32.mrf.mxu0
      %v872 = vadd.f32 %v783, %v871
      %873 = vmatmul.f32.gmra.mxu0 %v552
      %v874 = vpop.f32.mrf.mxu0
      %v875 = vadd.f32 %v786, %v874
      %876 = vmatmul.f32.gmra.mxu0 %v558
      %v877 = vpop.f32.mrf.mxu0
      %v878 = vadd.f32 %v789, %v877
      %879 = vmatmul.f32.gmra.mxu0 %v564
      %v880 = vpop.f32.mrf.mxu0
      %v881 = vadd.f32 %v792, %v880
      %882 = vmatmul.f32.gmra.mxu0 %v570
      %v883 = vpop.f32.mrf.mxu0
      %v884 = vadd.f32 %v795, %v883
      %885 = vmatmul.f32.gmra.mxu0 %v576
      %v886 = vpop.f32.mrf.mxu0
      %v887 = vadd.f32 %v798, %v886
      %888 = vmatmul.f32.gmra.mxu0 %v582
      %v889 = vpop.f32.mrf.mxu0
      %v890 = vadd.f32 %v801, %v889
      %891 = vmatmul.f32.gmra.mxu0 %v588
      %v892 = vpop.f32.mrf.mxu0
      %v893 = vadd.f32 %v804, %v892
      %894 = vmatmul.f32.gmra.mxu0 %v594
      %v895 = vpop.f32.mrf.mxu0
      %v896 = vadd.f32 %v807, %v895
      %897 = vmatmul.f32.gmra.mxu0 %v600
      %v898 = vpop.f32.mrf.mxu0
      %v899 = vadd.f32 %v810, %v898
      %900 = vmatmul.f32.gmra.mxu0 %v606
      %v901 = vpop.f32.mrf.mxu0
      %v902 = vadd.f32 %v813, %v901
      %903 = vmatmul.f32.gmra.mxu0 %v612
      %v904 = vpop.f32.mrf.mxu0
      %v905 = vadd.f32 %v816, %v904
      %906 = vmatmul.f32.gmra.mxu0 %v618
      %v907 = vpop.f32.mrf.mxu0
      %v908 = vadd.f32 %v819, %v907
      %909 = vmatmul.f32.gmra.mxu0 %v624
      %v910 = vpop.f32.mrf.mxu0
      %v911 = vadd.f32 %v822, %v910
      %912 = vmatmul.f32.gmra.mxu0 %v630
      %v913 = vpop.f32.mrf.mxu0
      %v914 = vadd.f32 %v825, %v913
      %915 = vmatmul.f32.gmra.mxu0 %v636
      %v916 = vpop.f32.mrf.mxu0
      %v917 = vadd.f32 %v828, %v916
      %918 = vdwg.mxu0
      %919 = vmatpush.msra.mxu0 %v688
      %920 = vmatpush.msra.mxu0 %v687
      %921 = vmatpush.msra.mxu0 %v686
      %922 = vmatpush.msra.mxu0 %v685
      %923 = vmatpush.msra.mxu0 %v684
      %924 = vmatpush.msra.mxu0 %v683
      %925 = vmatpush.msra.mxu0 %v682
      %926 = vmatpush.msra.mxu0 %v681
      %927 = vmatpush.msra.mxu0 %v680
      %928 = vmatpush.msra.mxu0 %v679
      %929 = vmatpush.msra.mxu0 %v678
      %930 = vmatpush.msra.mxu0 %v677
      %931 = vmatpush.msra.mxu0 %v676
      %932 = vmatpush.msra.mxu0 %v675
      %933 = vmatpush.msra.mxu0 %v674
      %934 = vmatpush.msra.mxu0 %v673
      %935 = vmatmul.f32.gmra.mxu0 %v499
      %v936 = vpop.f32.mrf.mxu0
      %v937 = vadd.f32 %v848, %v936
      %938 = vmatmul.f32.gmra.mxu0 %v505
      %v939 = vpop.f32.mrf.mxu0
      %v940 = vadd.f32 %v851, %v939
      %941 = vmatmul.f32.gmra.mxu0 %v511
      %v942 = vpop.f32.mrf.mxu0
      %v943 = vadd.f32 %v854, %v942
      %944 = vmatmul.f32.gmra.mxu0 %v517
      %v945 = vpop.f32.mrf.mxu0
      %v946 = vadd.f32 %v857, %v945
      %947 = vmatmul.f32.gmra.mxu0 %v523
      %v948 = vpop.f32.mrf.mxu0
      %v949 = vadd.f32 %v860, %v948
      %950 = vmatmul.f32.gmra.mxu0 %v529
      %v951 = vpop.f32.mrf.mxu0
      %v952 = vadd.f32 %v863, %v951
      %953 = vmatmul.f32.gmra.mxu0 %v535
      %v954 = vpop.f32.mrf.mxu0
      %v955 = vadd.f32 %v866, %v954
      %956 = vmatmul.f32.gmra.mxu0 %v541
      %v957 = vpop.f32.mrf.mxu0
      %v958 = vadd.f32 %v869, %v957
      %959 = vmatmul.f32.gmra.mxu0 %v547
      %v960 = vpop.f32.mrf.mxu0
      %v961 = vadd.f32 %v872, %v960
      %962 = vmatmul.f32.gmra.mxu0 %v553
      %v963 = vpop.f32.mrf.mxu0
      %v964 = vadd.f32 %v875, %v963
      %965 = vmatmul.f32.gmra.mxu0 %v559
      %v966 = vpop.f32.mrf.mxu0
      %v967 = vadd.f32 %v878, %v966
      %968 = vmatmul.f32.gmra.mxu0 %v565
      %v969 = vpop.f32.mrf.mxu0
      %v970 = vadd.f32 %v881, %v969
      %971 = vmatmul.f32.gmra.mxu0 %v571
      %v972 = vpop.f32.mrf.mxu0
      %v973 = vadd.f32 %v884, %v972
      %974 = vmatmul.f32.gmra.mxu0 %v577
      %v975 = vpop.f32.mrf.mxu0
      %v976 = vadd.f32 %v887, %v975
      %977 = vmatmul.f32.gmra.mxu0 %v583
      %v978 = vpop.f32.mrf.mxu0
      %v979 = vadd.f32 %v890, %v978
      %980 = vmatmul.f32.gmra.mxu0 %v589
      %v981 = vpop.f32.mrf.mxu0
      %v982 = vadd.f32 %v893, %v981
      %983 = vmatmul.f32.gmra.mxu0 %v595
      %v984 = vpop.f32.mrf.mxu0
      %v985 = vadd.f32 %v896, %v984
      %986 = vmatmul.f32.gmra.mxu0 %v601
      %v987 = vpop.f32.mrf.mxu0
      %v988 = vadd.f32 %v899, %v987
      %989 = vmatmul.f32.gmra.mxu0 %v607
      %v990 = vpop.f32.mrf.mxu0
      %v991 = vadd.f32 %v902, %v990
      %992 = vmatmul.f32.gmra.mxu0 %v613
      %v993 = vpop.f32.mrf.mxu0
      %v994 = vadd.f32 %v905, %v993
      %995 = vmatmul.f32.gmra.mxu0 %v619
      %v996 = vpop.f32.mrf.mxu0
      %v997 = vadd.f32 %v908, %v996
      %998 = vmatmul.f32.gmra.mxu0 %v625
      %v999 = vpop.f32.mrf.mxu0
      %v1000 = vadd.f32 %v911, %v999
      %1001 = vmatmul.f32.gmra.mxu0 %v631
      %v1002 = vpop.f32.mrf.mxu0
      %v1003 = vadd.f32 %v914, %v1002
      %1004 = vmatmul.f32.gmra.mxu0 %v637
      %v1005 = vpop.f32.mrf.mxu0
      %v1006 = vadd.f32 %v917, %v1005
      %1007 = vdwg.mxu0
      %1008 = vmatpush.msra.mxu0 %v704
      %1009 = vmatpush.msra.mxu0 %v703
      %1010 = vmatpush.msra.mxu0 %v702
      %1011 = vmatpush.msra.mxu0 %v701
      %1012 = vmatpush.msra.mxu0 %v700
      %1013 = vmatpush.msra.mxu0 %v699
      %1014 = vmatpush.msra.mxu0 %v698
      %1015 = vmatpush.msra.mxu0 %v697
      %1016 = vmatpush.msra.mxu0 %v696
      %1017 = vmatpush.msra.mxu0 %v695
      %1018 = vmatpush.msra.mxu0 %v694
      %1019 = vmatpush.msra.mxu0 %v693
      %1020 = vmatpush.msra.mxu0 %v692
      %1021 = vmatpush.msra.mxu0 %v691
      %1022 = vmatpush.msra.mxu0 %v690
      %1023 = vmatpush.msra.mxu0 %v689
      %1024 = vmatmul.f32.gmra.mxu0 %v500
      %v1025 = vpop.f32.mrf.mxu0
      %v1026 = vadd.f32 %v937, %v1025
      %1027 = vmatmul.f32.gmra.mxu0 %v506
      %v1028 = vpop.f32.mrf.mxu0
      %v1029 = vadd.f32 %v940, %v1028
      %1030 = vmatmul.f32.gmra.mxu0 %v512
      %v1031 = vpop.f32.mrf.mxu0
      %v1032 = vadd.f32 %v943, %v1031
      %1033 = vmatmul.f32.gmra.mxu0 %v518
      %v1034 = vpop.f32.mrf.mxu0
      %v1035 = vadd.f32 %v946, %v1034
      %1036 = vmatmul.f32.gmra.mxu0 %v524
      %v1037 = vpop.f32.mrf.mxu0
      %v1038 = vadd.f32 %v949, %v1037
      %1039 = vmatmul.f32.gmra.mxu0 %v530
      %v1040 = vpop.f32.mrf.mxu0
      %v1041 = vadd.f32 %v952, %v1040
      %1042 = vmatmul.f32.gmra.mxu0 %v536
      %v1043 = vpop.f32.mrf.mxu0
      %v1044 = vadd.f32 %v955, %v1043
      %1045 = vmatmul.f32.gmra.mxu0 %v542
      %v1046 = vpop.f32.mrf.mxu0
      %v1047 = vadd.f32 %v958, %v1046
      %1048 = vmatmul.f32.gmra.mxu0 %v548
      %v1049 = vpop.f32.mrf.mxu0
      %v1050 = vadd.f32 %v961, %v1049
      %1051 = vmatmul.f32.gmra.mxu0 %v554
      %v1052 = vpop.f32.mrf.mxu0
      %v1053 = vadd.f32 %v964, %v1052
      %1054 = vmatmul.f32.gmra.mxu0 %v560
      %v1055 = vpop.f32.mrf.mxu0
      %v1056 = vadd.f32 %v967, %v1055
      %1057 = vmatmul.f32.gmra.mxu0 %v566
      %v1058 = vpop.f32.mrf.mxu0
      %v1059 = vadd.f32 %v970, %v1058
      %1060 = vmatmul.f32.gmra.mxu0 %v572
      %v1061 = vpop.f32.mrf.mxu0
      %v1062 = vadd.f32 %v973, %v1061
      %1063 = vmatmul.f32.gmra.mxu0 %v578
      %v1064 = vpop.f32.mrf.mxu0
      %v1065 = vadd.f32 %v976, %v1064
      %1066 = vmatmul.f32.gmra.mxu0 %v584
      %v1067 = vpop.f32.mrf.mxu0
      %v1068 = vadd.f32 %v979, %v1067
      %1069 = vmatmul.f32.gmra.mxu0 %v590
      %v1070 = vpop.f32.mrf.mxu0
      %v1071 = vadd.f32 %v982, %v1070
      %1072 = vmatmul.f32.gmra.mxu0 %v596
      %v1073 = vpop.f32.mrf.mxu0
      %v1074 = vadd.f32 %v985, %v1073
      %1075 = vmatmul.f32.gmra.mxu0 %v602
      %v1076 = vpop.f32.mrf.mxu0
      %v1077 = vadd.f32 %v988, %v1076
      %1078 = vmatmul.f32.gmra.mxu0 %v608
      %v1079 = vpop.f32.mrf.mxu0
      %v1080 = vadd.f32 %v991, %v1079
      %1081 = vmatmul.f32.gmra.mxu0 %v614
      %v1082 = vpop.f32.mrf.mxu0
      %v1083 = vadd.f32 %v994, %v1082
      %1084 = vmatmul.f32.gmra.mxu0 %v620
      %v1085 = vpop.f32.mrf.mxu0
      %v1086 = vadd.f32 %v997, %v1085
      %1087 = vmatmul.f32.gmra.mxu0 %v626
      %v1088 = vpop.f32.mrf.mxu0
      %v1089 = vadd.f32 %v1000, %v1088
      %1090 = vmatmul.f32.gmra.mxu0 %v632
      %v1091 = vpop.f32.mrf.mxu0
      %v1092 = vadd.f32 %v1003, %v1091
      %1093 = vmatmul.f32.gmra.mxu0 %v638
      %v1094 = vpop.f32.mrf.mxu0
      %v1095 = vadd.f32 %v1006, %v1094
      %1096 = vdwg.mxu0
      %1097 = vmatpush.msra.mxu0 %v720
      %1098 = vmatpush.msra.mxu0 %v719
      %1099 = vmatpush.msra.mxu0 %v718
      %1100 = vmatpush.msra.mxu0 %v717
      %1101 = vmatpush.msra.mxu0 %v716
      %1102 = vmatpush.msra.mxu0 %v715
      %1103 = vmatpush.msra.mxu0 %v714
      %1104 = vmatpush.msra.mxu0 %v713
      %1105 = vmatpush.msra.mxu0 %v712
      %1106 = vmatpush.msra.mxu0 %v711
      %1107 = vmatpush.msra.mxu0 %v710
      %1108 = vmatpush.msra.mxu0 %v709
      %1109 = vmatpush.msra.mxu0 %v708
      %1110 = vmatpush.msra.mxu0 %v707
      %1111 = vmatpush.msra.mxu0 %v706
      %1112 = vmatpush.msra.mxu0 %v705
      %1113 = vmatmul.f32.gmra.mxu0 %v501
      %v1114 = vpop.f32.mrf.mxu0
      %v1115 = vadd.f32 %v1026, %v1114
      %1116 = vmatmul.f32.gmra.mxu0 %v507
      %v1117 = vpop.f32.mrf.mxu0
      %v1118 = vadd.f32 %v1029, %v1117
      %1119 = vmatmul.f32.gmra.mxu0 %v513
      %v1120 = vpop.f32.mrf.mxu0
      %v1121 = vadd.f32 %v1032, %v1120
      %1122 = vmatmul.f32.gmra.mxu0 %v519
      %v1123 = vpop.f32.mrf.mxu0
      %v1124 = vadd.f32 %v1035, %v1123
      %1125 = vmatmul.f32.gmra.mxu0 %v525
      %v1126 = vpop.f32.mrf.mxu0
      %v1127 = vadd.f32 %v1038, %v1126
      %1128 = vmatmul.f32.gmra.mxu0 %v531
      %v1129 = vpop.f32.mrf.mxu0
      %v1130 = vadd.f32 %v1041, %v1129
      %1131 = vmatmul.f32.gmra.mxu0 %v537
      %v1132 = vpop.f32.mrf.mxu0
      %v1133 = vadd.f32 %v1044, %v1132
      %1134 = vmatmul.f32.gmra.mxu0 %v543
      %v1135 = vpop.f32.mrf.mxu0
      %v1136 = vadd.f32 %v1047, %v1135
      %1137 = vmatmul.f32.gmra.mxu0 %v549
      %v1138 = vpop.f32.mrf.mxu0
      %v1139 = vadd.f32 %v1050, %v1138
      %1140 = vmatmul.f32.gmra.mxu0 %v555
      %v1141 = vpop.f32.mrf.mxu0
      %v1142 = vadd.f32 %v1053, %v1141
      %1143 = vmatmul.f32.gmra.mxu0 %v561
      %v1144 = vpop.f32.mrf.mxu0
      %v1145 = vadd.f32 %v1056, %v1144
      %1146 = vmatmul.f32.gmra.mxu0 %v567
      %v1147 = vpop.f32.mrf.mxu0
      %v1148 = vadd.f32 %v1059, %v1147
      %1149 = vmatmul.f32.gmra.mxu0 %v573
      %v1150 = vpop.f32.mrf.mxu0
      %v1151 = vadd.f32 %v1062, %v1150
      %1152 = vmatmul.f32.gmra.mxu0 %v579
      %v1153 = vpop.f32.mrf.mxu0
      %v1154 = vadd.f32 %v1065, %v1153
      %1155 = vmatmul.f32.gmra.mxu0 %v585
      %v1156 = vpop.f32.mrf.mxu0
      %v1157 = vadd.f32 %v1068, %v1156
      %1158 = vmatmul.f32.gmra.mxu0 %v591
      %v1159 = vpop.f32.mrf.mxu0
      %v1160 = vadd.f32 %v1071, %v1159
      %1161 = vmatmul.f32.gmra.mxu0 %v597
      %v1162 = vpop.f32.mrf.mxu0
      %v1163 = vadd.f32 %v1074, %v1162
      %1164 = vmatmul.f32.gmra.mxu0 %v603
      %v1165 = vpop.f32.mrf.mxu0
      %v1166 = vadd.f32 %v1077, %v1165
      %1167 = vmatmul.f32.gmra.mxu0 %v609
      %v1168 = vpop.f32.mrf.mxu0
      %v1169 = vadd.f32 %v1080, %v1168
      %1170 = vmatmul.f32.gmra.mxu0 %v615
      %v1171 = vpop.f32.mrf.mxu0
      %v1172 = vadd.f32 %v1083, %v1171
      %1173 = vmatmul.f32.gmra.mxu0 %v621
      %v1174 = vpop.f32.mrf.mxu0
      %v1175 = vadd.f32 %v1086, %v1174
      %1176 = vmatmul.f32.gmra.mxu0 %v627
      %v1177 = vpop.f32.mrf.mxu0
      %v1178 = vadd.f32 %v1089, %v1177
      %1179 = vmatmul.f32.gmra.mxu0 %v633
      %v1180 = vpop.f32.mrf.mxu0
      %v1181 = vadd.f32 %v1092, %v1180
      %1182 = vmatmul.f32.gmra.mxu0 %v639
      %v1183 = vpop.f32.mrf.mxu0
      %v1184 = vadd.f32 %v1095, %v1183
      %1185 = vdwg.mxu0
      %1186 = vmatpush.msra.mxu0 %v736
      %1187 = vmatpush.msra.mxu0 %v735
      %1188 = vmatpush.msra.mxu0 %v734
      %1189 = vmatpush.msra.mxu0 %v733
      %1190 = vmatpush.msra.mxu0 %v732
      %1191 = vmatpush.msra.mxu0 %v731
      %1192 = vmatpush.msra.mxu0 %v730
      %1193 = vmatpush.msra.mxu0 %v729
      %1194 = vmatpush.msra.mxu0 %v728
      %1195 = vmatpush.msra.mxu0 %v727
      %1196 = vmatpush.msra.mxu0 %v726
      %1197 = vmatpush.msra.mxu0 %v725
      %1198 = vmatpush.msra.mxu0 %v724
      %1199 = vmatpush.msra.mxu0 %v723
      %1200 = vmatpush.msra.mxu0 %v722
      %1201 = vmatpush.msra.mxu0 %v721
      %1202 = vmatmul.f32.gmra.mxu0 %v502
      %v1203 = vpop.f32.mrf.mxu0
      %v1204 = vadd.f32 %v1115, %v1203
      %1205 = vmatmul.f32.gmra.mxu0 %v508
      %v1206 = vpop.f32.mrf.mxu0
      %v1207 = vadd.f32 %v1118, %v1206
      %1208 = vmatmul.f32.gmra.mxu0 %v514
      %v1209 = vpop.f32.mrf.mxu0
      %v1210 = vadd.f32 %v1121, %v1209
      %1211 = vmatmul.f32.gmra.mxu0 %v520
      %v1212 = vpop.f32.mrf.mxu0
      %v1213 = vadd.f32 %v1124, %v1212
      %1214 = vmatmul.f32.gmra.mxu0 %v526
      %v1215 = vpop.f32.mrf.mxu0
      %v1216 = vadd.f32 %v1127, %v1215
      %1217 = vmatmul.f32.gmra.mxu0 %v532
      %v1218 = vpop.f32.mrf.mxu0
      %v1219 = vadd.f32 %v1130, %v1218
      %1220 = vmatmul.f32.gmra.mxu0 %v538
      %v1221 = vpop.f32.mrf.mxu0
      %v1222 = vadd.f32 %v1133, %v1221
      %1223 = vmatmul.f32.gmra.mxu0 %v544
      %v1224 = vpop.f32.mrf.mxu0
      %v1225 = vadd.f32 %v1136, %v1224
      %1226 = vmatmul.f32.gmra.mxu0 %v550
      %v1227 = vpop.f32.mrf.mxu0
      %v1228 = vadd.f32 %v1139, %v1227
      %1229 = vmatmul.f32.gmra.mxu0 %v556
      %v1230 = vpop.f32.mrf.mxu0
      %v1231 = vadd.f32 %v1142, %v1230
      %1232 = vmatmul.f32.gmra.mxu0 %v562
      %v1233 = vpop.f32.mrf.mxu0
      %v1234 = vadd.f32 %v1145, %v1233
      %1235 = vmatmul.f32.gmra.mxu0 %v568
      %v1236 = vpop.f32.mrf.mxu0
      %v1237 = vadd.f32 %v1148, %v1236
      %1238 = vmatmul.f32.gmra.mxu0 %v574
      %v1239 = vpop.f32.mrf.mxu0
      %v1240 = vadd.f32 %v1151, %v1239
      %1241 = vmatmul.f32.gmra.mxu0 %v580
      %v1242 = vpop.f32.mrf.mxu0
      %v1243 = vadd.f32 %v1154, %v1242
      %1244 = vmatmul.f32.gmra.mxu0 %v586
      %v1245 = vpop.f32.mrf.mxu0
      %v1246 = vadd.f32 %v1157, %v1245
      %1247 = vmatmul.f32.gmra.mxu0 %v592
      %v1248 = vpop.f32.mrf.mxu0
      %v1249 = vadd.f32 %v1160, %v1248
      %1250 = vmatmul.f32.gmra.mxu0 %v598
      %v1251 = vpop.f32.mrf.mxu0
      %v1252 = vadd.f32 %v1163, %v1251
      %1253 = vmatmul.f32.gmra.mxu0 %v604
      %v1254 = vpop.f32.mrf.mxu0
      %v1255 = vadd.f32 %v1166, %v1254
      %1256 = vmatmul.f32.gmra.mxu0 %v610
      %v1257 = vpop.f32.mrf.mxu0
      %v1258 = vadd.f32 %v1169, %v1257
      %1259 = vmatmul.f32.gmra.mxu0 %v616
      %v1260 = vpop.f32.mrf.mxu0
      %v1261 = vadd.f32 %v1172, %v1260
      %1262 = vmatmul.f32.gmra.mxu0 %v622
      %v1263 = vpop.f32.mrf.mxu0
      %v1264 = vadd.f32 %v1175, %v1263
      %1265 = vmatmul.f32.gmra.mxu0 %v628
      %v1266 = vpop.f32.mrf.mxu0
      %v1267 = vadd.f32 %v1178, %v1266
      %1268 = vmatmul.f32.gmra.mxu0 %v634
      %v1269 = vpop.f32.mrf.mxu0
      %v1270 = vadd.f32 %v1181, %v1269
      %1271 = vmatmul.f32.gmra.mxu0 %v640
      %v1272 = vpop.f32.mrf.mxu0
      %v1273 = vadd.f32 %v1184, %v1272
      %1274 = vdwg.mxu0
      %vm1275 = vcmp.gt.f32.partialorder %v1204, 0.0
      %vm1276 = vcmp.gt.f32.partialorder %v1207, 0.0
      %vm1277 = vcmp.gt.f32.partialorder %v1210, 0.0
      %vm1278 = vcmp.gt.f32.partialorder %v1213, 0.0
      %vm1279 = vcmp.gt.f32.partialorder %v1216, 0.0
      %vm1280 = vcmp.gt.f32.partialorder %v1219, 0.0
      %vm1281 = vcmp.gt.f32.partialorder %v1222, 0.0
      %vm1282 = vcmp.gt.f32.partialorder %v1225, 0.0
      %vm1283 = vcmp.gt.f32.partialorder %v1228, 0.0
      %vm1284 = vcmp.gt.f32.partialorder %v1231, 0.0
      %vm1285 = vcmp.gt.f32.partialorder %v1234, 0.0
      %vm1286 = vcmp.gt.f32.partialorder %v1237, 0.0
      %vm1287 = vcmp.gt.f32.partialorder %v1240, 0.0
      %vm1288 = vcmp.gt.f32.partialorder %v1243, 0.0
      %vm1289 = vcmp.gt.f32.partialorder %v1246, 0.0
      %vm1290 = vcmp.gt.f32.partialorder %v1249, 0.0
      %vm1291 = vcmp.gt.f32.partialorder %v1252, 0.0
      %vm1292 = vcmp.gt.f32.partialorder %v1255, 0.0
      %vm1293 = vcmp.gt.f32.partialorder %v1258, 0.0
      %vm1294 = vcmp.gt.f32.partialorder %v1261, 0.0
      %vm1295 = vcmp.gt.f32.partialorder %v1264, 0.0
      %vm1296 = vcmp.gt.f32.partialorder %v1267, 0.0
      %vm1297 = vcmp.gt.f32.partialorder %v1270, 0.0
      %vm1298 = vcmp.gt.f32.partialorder %v1273, 0.0
      %v1299 = vmul.f32 %v1204, 0.1
      %v1300 = vmul.f32 %v1207, 0.1
      %v1301 = vmul.f32 %v1210, 0.1
      %v1302 = vmul.f32 %v1213, 0.1
      %v1303 = vmul.f32 %v1216, 0.1
      %v1304 = vmul.f32 %v1219, 0.1
      %v1305 = vmul.f32 %v1222, 0.1
      %v1306 = vmul.f32 %v1225, 0.1
      %v1307 = vmul.f32 %v1228, 0.1
      %v1308 = vmul.f32 %v1231, 0.1
      %v1309 = vmul.f32 %v1234, 0.1
      %v1310 = vmul.f32 %v1237, 0.1
      %v1311 = vmul.f32 %v1240, 0.1
      %v1312 = vmul.f32 %v1243, 0.1
      %v1313 = vmul.f32 %v1246, 0.1
      %v1314 = vmul.f32 %v1249, 0.1
      %v1315 = vmul.f32 %v1252, 0.1
      %v1316 = vmul.f32 %v1255, 0.1
      %v1317 = vmul.f32 %v1258, 0.1
      %v1318 = vmul.f32 %v1261, 0.1
      %v1319 = vmul.f32 %v1264, 0.1
      %v1320 = vmul.f32 %v1267, 0.1
      %v1321 = vmul.f32 %v1270, 0.1
      %v1322 = vmul.f32 %v1273, 0.1
      %v1323 = vsel %vm1275, %v1204, %v1299
      %v1324 = vsel %vm1276, %v1207, %v1300
      %v1325 = vsel %vm1277, %v1210, %v1301
      %v1326 = vsel %vm1278, %v1213, %v1302
      %v1327 = vsel %vm1279, %v1216, %v1303
      %v1328 = vsel %vm1280, %v1219, %v1304
      %v1329 = vsel %vm1281, %v1222, %v1305
      %v1330 = vsel %vm1282, %v1225, %v1306
      %v1331 = vsel %vm1283, %v1228, %v1307
      %v1332 = vsel %vm1284, %v1231, %v1308
      %v1333 = vsel %vm1285, %v1234, %v1309
      %v1334 = vsel %vm1286, %v1237, %v1310
      %v1335 = vsel %vm1287, %v1240, %v1311
      %v1336 = vsel %vm1288, %v1243, %v1312
      %v1337 = vsel %vm1289, %v1246, %v1313
      %v1338 = vsel %vm1290, %v1249, %v1314
      %v1339 = vsel %vm1291, %v1252, %v1315
      %v1340 = vsel %vm1292, %v1255, %v1316
      %v1341 = vsel %vm1293, %v1258, %v1317
      %v1342 = vsel %vm1294, %v1261, %v1318
      %v1343 = vsel %vm1295, %v1264, %v1319
      %v1344 = vsel %vm1296, %v1267, %v1320
      %v1345 = vsel %vm1297, %v1270, %v1321
      %v1346 = vsel %vm1298, %v1273, %v1322
      %1347 = vst [vmem:[%s206] sm:$0xff] %v1323
      %1348 = vst [vmem:[%s206 + $0x8] sm:$0xff] %v1324
      %1349 = vst [vmem:[%s206 + $0x10] sm:$0xff] %v1325
      %1350 = vst [vmem:[%s206 + $0x18] sm:$0xff] %v1326
      %1351 = vst [vmem:[%s206 + $0x20] sm:$0xff] %v1327
      %1352 = vst [vmem:[%s206 + $0x28] sm:$0xff] %v1328
      %1353 = vst [vmem:[%s206 + $0x30] sm:$0xff] %v1329
      %1354 = vst [vmem:[%s206 + $0x38] sm:$0xff] %v1330
      %1355 = vst [vmem:[%s206 + $0x40] sm:$0xff] %v1331
      %1356 = vst [vmem:[%s206 + $0x48] sm:$0xff] %v1332
      %1357 = vst [vmem:[%s206 + $0x50] sm:$0xff] %v1333
      %1358 = vst [vmem:[%s206 + $0x58] sm:$0xff] %v1334
      %1359 = vst [vmem:[%s206 + $0x60] sm:$0xff] %v1335
      %1360 = vst [vmem:[%s206 + $0x68] sm:$0xff] %v1336
      %1361 = vst [vmem:[%s206 + $0x70] sm:$0xff] %v1337
      %1362 = vst [vmem:[%s206 + $0x78] sm:$0xff] %v1338
      %1363 = vst [vmem:[%s206 + $0x80] sm:$0xff] %v1339
      %1364 = vst [vmem:[%s206 + $0x88] sm:$0xff] %v1340
      %1365 = vst [vmem:[%s206 + $0x90] sm:$0xff] %v1341
      %1366 = vst [vmem:[%s206 + $0x98] sm:$0xff] %v1342
      %1367 = vst [vmem:[%s206 + $0xa0] sm:$0xff] %v1343
      %1368 = vst [vmem:[%s206 + $0xa8] sm:$0xff] %v1344
      %1369 = vst [vmem:[%s206 + $0xb0] sm:$0xff] %v1345
      %1370 = vst [vmem:[%s206 + $0xb8] sm:$0xff] %v1346
      %p1371 = scmp.lt.s32.totalorder %s18, 1
      %s1372 = scalar_select %p1371, %s18, 1
      %p1373 = scmp.lt.s32.totalorder %s19, 0
      %s1374 = scalar_select %p1373, %s19, 0
      %s1375 = smul.addr %s1374, 24
      %s1376 = smul.addr %s1372, 24
      %s1377 = sadd.s32 %s1375, %s1376
      %s1378 = smul.addr %s1377, 8
      %s1379 = scalar_lea.vmem %s3, %s1378
      // Predicated region
      $region33: #{discriminator_r_forward.12} parent=31 // pred_check
        %p1380 = pneg %p116
      $region34: #{discriminator_r_forward.12} parent=31 // pred_check_branch
        %1382 = sbr.rel (%p1380) target = $region36
      $region35: #{discriminator_r_forward.12} parent=31 // pred_region
        _
      $region36: #{discriminator_r_forward.12} parent=31 // pred_fallthru
        _
    $region32: #{discriminator_r_forward.12} parent=5 // pred_fallthru
      _
    %p1383 = scmp.le.s32.totalorder 2, %s9
    // Predicated region
    $region37: #{discriminator_r_forward.12} parent=5 // pred_check
      %p1384 = pneg %p1383
    $region38: #{discriminator_r_forward.12} parent=5 // pred_check_branch
      %1386 = sbr.rel (%p1384) target = $region40
    $region39: #{discriminator_r_forward.12} parent=5 // pred_region
      %s1387 = ssub.s32 %s9, 2
      // Predicated region
      $region41: #{discriminator_r_forward.12} parent=39 // pred_check
        %p1388 = pneg %p122
      $region42: #{discriminator_r_forward.12} parent=39 // pred_check_branch
        %1390 = sbr.rel (%p1388) target = $region44
      $region43: #{discriminator_r_forward.12} parent=39 // pred_region
        %p1391 = scmp.lt.s32.totalorder %s20, 1
        %s1392 = scalar_select %p1391, %s20, 1
        %p1393 = scmp.lt.s32.totalorder %s21, 0
        %s1394 = scalar_select %p1393, %s21, 0
        %s1395 = smul.addr %s1394, 24
        %s1396 = smul.addr %s1392, 24
        %s1397 = sadd.s32 %s1395, %s1396
        %s1398 = smul.addr %s1397, 8
        %s1399 = scalar_lea.vmem %s3, %s1398
      $region44: #{discriminator_r_forward.12} parent=39 // pred_fallthru
        _
    $region40: #{discriminator_r_forward.12} parent=5 // pred_fallthru
      _
  $region6: #{discriminator_r_forward.12} parent=0 // loop_footer
    %s13 = sadd.s32 1, %s9
  $region7: #{discriminator_r_forward.12} parent=0 // loop_footer_branch
    %8 = sbr.rel target = $region3
  $region8: #{discriminator_r_forward.12} parent=0 // loop_exit
    _

// kernel: discriminator_r_forward.13
$region0: #{discriminator_r_forward.13}
  #allocation0 [shape = 'u32[]', space=smem, size = 0x4, offset = 0x4, fixed_abs, tag = 'smem constant byte address 0x4 - core index']
  #allocation1 [shape = 'u32[72,128]{1,0:T(1,128)}', space=vmem, size = 0x9000, scoped, tag = 'internal scratch']
  #allocation2 [shape = 'f32[192,768]{1,0:T(8,128)}', space=vmem, size = 0x90000, scoped, tag = 'scratch operand']
  %s0 = inlined_call_operand.vmem [shape: f32[2,1,26,9,128], index: 0, kind: input, shape index: {}]
  %s1 = inlined_call_operand.vmem [shape: f32[768,4], index: 1, kind: input, shape index: {}]
  %s2 = inlined_call_operand.vmem [shape: f32[1,4], index: 2, kind: input, shape index: {}]
  %s3 = inlined_call_operand.vmem [shape: f32[2,1,24,8,4], index: 3, kind: output, shape index: {}]
  %s4 = sld [smem:[#allocation0]]
  $region45: #{discriminator_r_forward.13} parent=0
    _
  %s6 = ssub.s32 1, %s4
  %s7 = scalar_select 0, %s6, %s4
  loop: start=0, step=1, limit=4
  $region2: #{discriminator_r_forward.13} parent=0 // loop_pre_header
    _
  $region3: #{discriminator_r_forward.13} parent=0 // loop_header
    %s9 = sphi 0, %s13
    %p10 = scmp.ge.s32.totalorder %s9, 4
    %s16 = sphi 0, %s28
    %s17 = sphi 0, %s24
    %s18 = sphi 0, %s16
    %s19 = sphi 0, %s17
    %s20 = sphi 0, %s18
    %s21 = sphi 0, %s19
    %s33 = sphi 0, %s35
    %s36 = sphi 0, %s33
    %s37 = sphi 0, %s36
    %s53 = sphi 0, %s37
    %s57 = sphi 0, %s57
    %s59 = sphi 0, %s57
    %s60 = sphi 0, %s59
    %s74 = sphi 0, %s60
    %s78 = sphi 0, %s78
    %s80 = sphi 0, %s78
    %s81 = sphi 0, %s80
    %s95 = sphi 0, %s81
    %s103 = sphi 0, %s105
    %s106 = sphi 0, %s103
    %s107 = sphi 0, %s106
    %s123 = sphi 0, %s107
  $region4: #{discriminator_r_forward.13} parent=0 // loop_header_branch
    %12 = sbr.rel (%p10) target = $region8
  $region5: #{discriminator_r_forward.13} parent=0 // loop_body
    %s14 = ssub.s32 %s9, 1
    %s15 = ssub.s32 %s9, 2
    %s22 = sadd.s32 1, %s17
    %p23 = scmp.ge.s32.totalorder %s22, 1
    %s24 = scalar_select %p23, 0, %s22
    %s25 = sadd.s32 1, %s16
    %s26 = scalar_select %p23, %s25, %s16
    %p27 = scmp.ge.s32.totalorder %s26, 2
    %s28 = scalar_select %p27, 0, %s26
    %s29 = ssub.s32 %s16, %s28
    %s30 = ssub.s32 %s17, %s24
    %s31 = sor.u32 %s29, %s30
    %p32 = scmp.eq.s32.totalorder %s31, 0
    %s34 = sadd.s32 %s33, 1
    %s35 = scalar_select %p32, %s33, %s34
    %p38 = pneg %p32
    %p39 = scmp.eq.s32.totalorder %s9, 1
    %p40 = por %p38, %p39
    %p41 = scmp.ne.s32.totalorder %s33, %s36
    %p42 = scmp.eq.s32.totalorder %s9, 0
    %p43 = por %p41, %p42
    %p44 = scmp.ne.s32.totalorder %s33, %s36
    %p45 = scmp.eq.s32.totalorder %s14, 1
    %p46 = por %p44, %p45
    %p47 = scmp.ne.s32.totalorder %s36, %s37
    %p48 = scmp.eq.s32.totalorder %s14, 0
    %p49 = por %p47, %p48
    %p50 = scmp.ne.s32.totalorder %s36, %s37
    %p51 = scmp.eq.s32.totalorder %s15, 1
    %p52 = por %p50, %p51
    %p54 = scmp.ne.s32.totalorder %s37, %s53
    %p55 = scmp.eq.s32.totalorder %s15, 0
    %p56 = por %p54, %p55
    %s58 = sadd.s32 %s57, 1
    %p61 = scmp.eq.s32.totalorder %s9, 1
    %p62 = scmp.ne.s32.totalorder %s57, %s59
    %p63 = scmp.eq.s32.totalorder %s9, 0
    %p64 = por %p62, %p63
    %p65 = scmp.ne.s32.totalorder %s57, %s59
    %p66 = scmp.eq.s32.totalorder %s14, 1
    %p67 = por %p65, %p66
    %p68 = scmp.ne.s32.totalorder %s59, %s60
    %p69 = scmp.eq.s32.totalorder %s14, 0
    %p70 = por %p68, %p69
    %p71 = scmp.ne.s32.totalorder %s59, %s60
    %p72 = scmp.eq.s32.totalorder %s15, 1
    %p73 = por %p71, %p72
    %p75 = scmp.ne.s32.totalorder %s60, %s74
    %p76 = scmp.eq.s32.totalorder %s15, 0
    %p77 = por %p75, %p76
    %s79 = sadd.s32 %s78, 1
    %p82 = scmp.eq.s32.totalorder %s9, 1
    %p83 = scmp.ne.s32.totalorder %s78, %s80
    %p84 = scmp.eq.s32.totalorder %s9, 0
    %p85 = por %p83, %p84
    %p86 = scmp.ne.s32.totalorder %s78, %s80
    %p87 = scmp.eq.s32.totalorder %s14, 1
    %p88 = por %p86, %p87
    %p89 = scmp.ne.s32.totalorder %s80, %s81
    %p90 = scmp.eq.s32.totalorder %s14, 0
    %p91 = por %p89, %p90
    %p92 = scmp.ne.s32.totalorder %s80, %s81
    %p93 = scmp.eq.s32.totalorder %s15, 1
    %p94 = por %p92, %p93
    %p96 = scmp.ne.s32.totalorder %s81, %s95
    %p97 = scmp.eq.s32.totalorder %s15, 0
    %p98 = por %p96, %p97
    %s99 = ssub.s32 %s16, %s28
    %s100 = ssub.s32 %s17, %s24
    %s101 = sor.u32 %s99, %s100
    %p102 = scmp.eq.s32.totalorder %s101, 0
    %s104 = sadd.s32 %s103, 1
    %s105 = scalar_select %p102, %s103, %s104
    %p108 = pneg %p102
    %p109 = scmp.eq.s32.totalorder %s9, 1
    %p110 = por %p108, %p109
    %p111 = scmp.ne.s32.totalorder %s103, %s106
    %p112 = scmp.eq.s32.totalorder %s9, 0
    %p113 = por %p111, %p112
    %p114 = scmp.ne.s32.totalorder %s103, %s106
    %p115 = scmp.eq.s32.totalorder %s14, 1
    %p116 = por %p114, %p115
    %p117 = scmp.ne.s32.totalorder %s106, %s107
    %p118 = scmp.eq.s32.totalorder %s14, 0
    %p119 = por %p117, %p118
    %p120 = scmp.ne.s32.totalorder %s106, %s107
    %p121 = scmp.eq.s32.totalorder %s15, 1
    %p122 = por %p120, %p121
    %p124 = scmp.ne.s32.totalorder %s107, %s123
    %p125 = scmp.eq.s32.totalorder %s15, 0
    %p126 = por %p124, %p125
    %p127 = scmp.le.s32.totalorder 1, %s9
    %p128 = scmp.lt.s32.totalorder %s9, 3
    %p129 = pnand %p127, %p128
    %p130 = pneg %p129
    // Predicated region
    $region9: #{discriminator_r_forward.13} parent=5 // pred_check
      _
    $region10: #{discriminator_r_forward.13} parent=5 // pred_check_branch
      %132 = sbr.rel (%p129) target = $region12
    $region11: #{discriminator_r_forward.13} parent=5 // pred_region
      %s133 = ssub.s32 %s9, 1
      // Predicated region
      $region13: #{discriminator_r_forward.13} parent=11 // pred_check
        %p134 = pneg %p70
      $region14: #{discriminator_r_forward.13} parent=11 // pred_check_branch
        %136 = sbr.rel (%p134) target = $region16
      $region15: #{discriminator_r_forward.13} parent=11 // pred_region
        _
      $region16: #{discriminator_r_forward.13} parent=11 // pred_fallthru
        _
      // Predicated region
      $region17: #{discriminator_r_forward.13} parent=11 // pred_check
        %p137 = pneg %p91
      $region18: #{discriminator_r_forward.13} parent=11 // pred_check_branch
        %139 = sbr.rel (%p137) target = $region20
      $region19: #{discriminator_r_forward.13} parent=11 // pred_region
        _
      $region20: #{discriminator_r_forward.13} parent=11 // pred_fallthru
        _
    $region12: #{discriminator_r_forward.13} parent=5 // pred_fallthru
      _
    %p140 = scmp.lt.s32.totalorder %s9, 2
    // Predicated region
    $region21: #{discriminator_r_forward.13} parent=5 // pred_check
      %p141 = pneg %p140
    $region22: #{discriminator_r_forward.13} parent=5 // pred_check_branch
      %143 = sbr.rel (%p141) target = $region24
    $region23: #{discriminator_r_forward.13} parent=5 // pred_region
      // Predicated region
      $region25: #{discriminator_r_forward.13} parent=23 // pred_check
        %p144 = pneg %p43
      $region26: #{discriminator_r_forward.13} parent=23 // pred_check_branch
        %146 = sbr.rel (%p144) target = $region28
      $region27: #{discriminator_r_forward.13} parent=23 // pred_region
        %p147 = scmp.lt.s32.totalorder %s16, 1
        %s148 = scalar_select %p147, %s16, 1
        %p149 = scmp.lt.s32.totalorder %s17, 0
        %s150 = scalar_select %p149, %s17, 0
        %s151 = smul.addr %s150, 52
        %s152 = smul.addr %s148, 52
        %s153 = sadd.s32 %s151, %s152
        %s154 = smul.addr %s153, 8
        %s155 = scalar_lea.vmem %s0, %s154
      $region28: #{discriminator_r_forward.13} parent=23 // pred_fallthru
        _
    $region24: #{discriminator_r_forward.13} parent=5 // pred_fallthru
      _
    %p156 = scmp.le.s32.totalorder 1, %s9
    %p157 = scmp.lt.s32.totalorder %s9, 3
    %p158 = pnand %p156, %p157
    %p159 = pneg %p158
    // Predicated region
    $region29: #{discriminator_r_forward.13} parent=5 // pred_check
      _
    $region30: #{discriminator_r_forward.13} parent=5 // pred_check_branch
      %161 = sbr.rel (%p158) target = $region32
    $region31: #{discriminator_r_forward.13} parent=5 // pred_region
      %s162 = ssub.s32 %s9, 1
      %p163 = scmp.lt.s32.totalorder %s18, 1
      %s164 = scalar_select %p163, %s18, 1
      %p165 = scmp.lt.s32.totalorder %s19, 0
      %s166 = scalar_select %p165, %s19, 0
      %s167 = smul.addr %s166, 52
      %s168 = smul.addr %s164, 52
      %s169 = sadd.s32 %s167, %s168
      %s170 = smul.addr %s169, 8
      %s171 = scalar_lea.vmem %s0, %s170
      %p172 = pneg %p49
      %p173 = pneg %p46
      %p174 = pneg %p70
      %p175 = pneg %p67
      %p176 = pneg %p91
      %p177 = pneg %p88
      %p178 = pneg %p119
      %p179 = pneg %p116
      %p180 = scmp.lt.s32.totalorder %s18, 1
      %s181 = scalar_select %p180, %s18, 1
      %p182 = scmp.lt.s32.totalorder %s19, 0
      %s183 = scalar_select %p182, %s19, 0
      %s184 = smul.addr %s183, 24
      %s185 = smul.addr %s181, 24
      %s186 = sadd.s32 %s184, %s185
      %s187 = smul.addr %s186, 8
      %s188 = scalar_lea.vmem %s3, %s187
      %p189 = scmp.lt.s32.totalorder %s18, 1
      %s190 = scalar_select %p189, %s18, 1
      %p191 = scmp.lt.s32.totalorder %s19, 0
      %s192 = scalar_select %p191, %s19, 0
      %s193 = smul.addr %s192, 52
      %s194 = smul.addr %s190, 52
      %s195 = sadd.s32 %s193, %s194
      %s196 = smul.addr %s195, 8
      %s197 = scalar_lea.vmem %s0, %s196
      %p198 = scmp.lt.s32.totalorder %s18, 1
      %s199 = scalar_select %p198, %s18, 1
      %p200 = scmp.lt.s32.totalorder %s19, 0
      %s201 = scalar_select %p200, %s19, 0
      %s202 = smul.addr %s201, 24
      %s203 = smul.addr %s199, 24
      %s204 = sadd.s32 %s202, %s203
      %s205 = smul.addr %s204, 8
      %s206 = scalar_lea.vmem %s3, %s205
      %v207 = vld [vmem:[%s197] sm:$0xff]
      %v208 = vld [vmem:[%s197 + $0x10] sm:$0xff]
      %v209 = vld [vmem:[%s197 + $0x20] sm:$0xff]
      %v210 = vld [vmem:[%s197 + $0x30] sm:$0xff]
      %v211 = vld [vmem:[%s197 + $0x40] sm:$0xff]
      %v212 = vld [vmem:[%s197 + $0x50] sm:$0xff]
      %v213 = vld [vmem:[%s197 + $0x60] sm:$0xff]
      %v214 = vld [vmem:[%s197 + $0x70] sm:$0xff]
      %v215 = vld [vmem:[%s197 + $0x80] sm:$0xff]
      %v216 = vld [vmem:[%s197 + $0x90] sm:$0xff]
      %v217 = vld [vmem:[%s197 + $0xa0] sm:$0xff]
      %v218 = vld [vmem:[%s197 + $0xb0] sm:$0xff]
      %v219 = vld [vmem:[%s197 + $0xc0] sm:$0xff]
      %v220 = vld [vmem:[%s197 + $0xd0] sm:$0xff]
      %v221 = vld [vmem:[%s197 + $0xe0] sm:$0xff]
      %v222 = vld [vmem:[%s197 + $0xf0] sm:$0xff]
      %v223 = vld [vmem:[%s197 + $0x100] sm:$0xff]
      %v224 = vld [vmem:[%s197 + $0x110] sm:$0xff]
      %v225 = vld [vmem:[%s197 + $0x120] sm:$0xff]
      %v226 = vld [vmem:[%s197 + $0x130] sm:$0xff]
      %v227 = vld [vmem:[%s197 + $0x140] sm:$0xff]
      %v228 = vld [vmem:[%s197 + $0x150] sm:$0xff]
      %v229 = vld [vmem:[%s197 + $0x160] sm:$0xff]
      %v230 = vld [vmem:[%s197 + $0x170] sm:$0xff]
      %231 = vst [vmem:[#allocation2] sm:$0xff] %v207
      %232 = vst [vmem:[#allocation2 + $0x30] sm:$0xff] %v208
      %233 = vst [vmem:[#allocation2 + $0x60] sm:$0xff] %v209
      %234 = vst [vmem:[#allocation2 + $0x90] sm:$0xff] %v210
      %235 = vst [vmem:[#allocation2 + $0xc0] sm:$0xff] %v211
      %236 = vst [vmem:[#allocation2 + $0xf0] sm:$0xff] %v212
      %237 = vst [vmem:[#allocation2 + $0x120] sm:$0xff] %v213
      %238 = vst [vmem:[#allocation2 + $0x150] sm:$0xff] %v214
      %239 = vst [vmem:[#allocation2 + $0x180] sm:$0xff] %v215
      %240 = vst [vmem:[#allocation2 + $0x1b0] sm:$0xff] %v216
      %241 = vst [vmem:[#allocation2 + $0x1e0] sm:$0xff] %v217
      %242 = vst [vmem:[#allocation2 + $0x210] sm:$0xff] %v218
      %243 = vst [vmem:[#allocation2 + $0x240] sm:$0xff] %v219
      %244 = vst [vmem:[#allocation2 + $0x270] sm:$0xff] %v220
      %245 = vst [vmem:[#allocation2 + $0x2a0] sm:$0xff] %v221
      %246 = vst [vmem:[#allocation2 + $0x2d0] sm:$0xff] %v222
      %247 = vst [vmem:[#allocation2 + $0x300] sm:$0xff] %v223
      %248 = vst [vmem:[#allocation2 + $0x330] sm:$0xff] %v224
      %249 = vst [vmem:[#allocation2 + $0x360] sm:$0xff] %v225
      %250 = vst [vmem:[#allocation2 + $0x390] sm:$0xff] %v226
      %251 = vst [vmem:[#allocation2 + $0x3c0] sm:$0xff] %v227
      %252 = vst [vmem:[#allocation2 + $0x3f0] sm:$0xff] %v228
      %253 = vst [vmem:[#allocation2 + $0x420] sm:$0xff] %v229
      %254 = vst [vmem:[#allocation2 + $0x450] sm:$0xff] %v230
      %v255 = vld [vmem:[%s197 + $0x1] sm:$0xff]
      %v256 = vld [vmem:[%s197 + $0x11] sm:$0xff]
      %v257 = vld [vmem:[%s197 + $0x21] sm:$0xff]
      %v258 = vld [vmem:[%s197 + $0x31] sm:$0xff]
      %v259 = vld [vmem:[%s197 + $0x41] sm:$0xff]
      %v260 = vld [vmem:[%s197 + $0x51] sm:$0xff]
      %v261 = vld [vmem:[%s197 + $0x61] sm:$0xff]
      %v262 = vld [vmem:[%s197 + $0x71] sm:$0xff]
      %v263 = vld [vmem:[%s197 + $0x81] sm:$0xff]
      %v264 = vld [vmem:[%s197 + $0x91] sm:$0xff]
      %v265 = vld [vmem:[%s197 + $0xa1] sm:$0xff]
      %v266 = vld [vmem:[%s197 + $0xb1] sm:$0xff]
      %v267 = vld [vmem:[%s197 + $0xc1] sm:$0xff]
      %v268 = vld [vmem:[%s197 + $0xd1] sm:$0xff]
      %v269 = vld [vmem:[%s197 + $0xe1] sm:$0xff]
      %v270 = vld [vmem:[%s197 + $0xf1] sm:$0xff]
      %v271 = vld [vmem:[%s197 + $0x101] sm:$0xff]
      %v272 = vld [vmem:[%s197 + $0x111] sm:$0xff]
      %v273 = vld [vmem:[%s197 + $0x121] sm:$0xff]
      %v274 = vld [vmem:[%s197 + $0x131] sm:$0xff]
      %v275 = vld [vmem:[%s197 + $0x141] sm:$0xff]
      %v276 = vld [vmem:[%s197 + $0x151] sm:$0xff]
      %v277 = vld [vmem:[%s197 + $0x161] sm:$0xff]
      %v278 = vld [vmem:[%s197 + $0x171] sm:$0xff]
      %279 = vst [vmem:[#allocation2 + $0x8] sm:$0xff] %v255
      %280 = vst [vmem:[#allocation2 + $0x38] sm:$0xff] %v256
      %281 = vst [vmem:[#allocation2 + $0x68] sm:$0xff] %v257
      %282 = vst [vmem:[#allocation2 + $0x98] sm:$0xff] %v258
      %283 = vst [vmem:[#allocation2 + $0xc8] sm:$0xff] %v259
      %284 = vst [vmem:[#allocation2 + $0xf8] sm:$0xff] %v260
      %285 = vst [vmem:[#allocation2 + $0x128] sm:$0xff] %v261
      %286 = vst [vmem:[#allocation2 + $0x158] sm:$0xff] %v262
      %287 = vst [vmem:[#allocation2 + $0x188] sm:$0xff] %v263
      %288 = vst [vmem:[#allocation2 + $0x1b8] sm:$0xff] %v264
      %289 = vst [vmem:[#allocation2 + $0x1e8] sm:$0xff] %v265
      %290 = vst [vmem:[#allocation2 + $0x218] sm:$0xff] %v266
      %291 = vst [vmem:[#allocation2 + $0x248] sm:$0xff] %v267
      %292 = vst [vmem:[#allocation2 + $0x278] sm:$0xff] %v268
      %293 = vst [vmem:[#allocation2 + $0x2a8] sm:$0xff] %v269
      %294 = vst [vmem:[#allocation2 + $0x2d8] sm:$0xff] %v270
      %295 = vst [vmem:[#allocation2 + $0x308] sm:$0xff] %v271
      %296 = vst [vmem:[#allocation2 + $0x338] sm:$0xff] %v272
      %297 = vst [vmem:[#allocation2 + $0x368] sm:$0xff] %v273
      %298 = vst [vmem:[#allocation2 + $0x398] sm:$0xff] %v274
      %299 = vst [vmem:[#allocation2 + $0x3c8] sm:$0xff] %v275
      %300 = vst [vmem:[#allocation2 + $0x3f8] sm:$0xff] %v276
      %301 = vst [vmem:[#allocation2 + $0x428] sm:$0xff] %v277
      %302 = vst [vmem:[#allocation2 + $0x458] sm:$0xff] %v278
      %s303 = scalar_lea.vmem %s197, 16
      %v304 = vld [vmem:[%s303] sm:$0xff]
      %v305 = vld [vmem:[%s303 + $0x10] sm:$0xff]
      %v306 = vld [vmem:[%s303 + $0x20] sm:$0xff]
      %v307 = vld [vmem:[%s303 + $0x30] sm:$0xff]
      %v308 = vld [vmem:[%s303 + $0x40] sm:$0xff]
      %v309 = vld [vmem:[%s303 + $0x50] sm:$0xff]
      %v310 = vld [vmem:[%s303 + $0x60] sm:$0xff]
      %v311 = vld [vmem:[%s303 + $0x70] sm:$0xff]
      %v312 = vld [vmem:[%s303 + $0x80] sm:$0xff]
      %v313 = vld [vmem:[%s303 + $0x90] sm:$0xff]
      %v314 = vld [vmem:[%s303 + $0xa0] sm:$0xff]
      %v315 = vld [vmem:[%s303 + $0xb0] sm:$0xff]
      %v316 = vld [vmem:[%s303 + $0xc0] sm:$0xff]
      %v317 = vld [vmem:[%s303 + $0xd0] sm:$0xff]
      %v318 = vld [vmem:[%s303 + $0xe0] sm:$0xff]
      %v319 = vld [vmem:[%s303 + $0xf0] sm:$0xff]
      %v320 = vld [vmem:[%s303 + $0x100] sm:$0xff]
      %v321 = vld [vmem:[%s303 + $0x110] sm:$0xff]
      %v322 = vld [vmem:[%s303 + $0x120] sm:$0xff]
      %v323 = vld [vmem:[%s303 + $0x130] sm:$0xff]
      %v324 = vld [vmem:[%s303 + $0x140] sm:$0xff]
      %v325 = vld [vmem:[%s303 + $0x150] sm:$0xff]
      %v326 = vld [vmem:[%s303 + $0x160] sm:$0xff]
      %v327 = vld [vmem:[%s303 + $0x170] sm:$0xff]
      %328 = vst [vmem:[#allocation2 + $0x10] sm:$0xff] %v304
      %329 = vst [vmem:[#allocation2 + $0x40] sm:$0xff] %v305
      %330 = vst [vmem:[#allocation2 + $0x70] sm:$0xff] %v306
      %331 = vst [vmem:[#allocation2 + $0xa0] sm:$0xff] %v307
      %332 = vst [vmem:[#allocation2 + $0xd0] sm:$0xff] %v308
      %333 = vst [vmem:[#allocation2 + $0x100] sm:$0xff] %v309
      %334 = vst [vmem:[#allocation2 + $0x130] sm:$0xff] %v310
      %335 = vst [vmem:[#allocation2 + $0x160] sm:$0xff] %v311
      %336 = vst [vmem:[#allocation2 + $0x190] sm:$0xff] %v312
      %337 = vst [vmem:[#allocation2 + $0x1c0] sm:$0xff] %v313
      %338 = vst [vmem:[#allocation2 + $0x1f0] sm:$0xff] %v314
      %339 = vst [vmem:[#allocation2 + $0x220] sm:$0xff] %v315
      %340 = vst [vmem:[#allocation2 + $0x250] sm:$0xff] %v316
      %341 = vst [vmem:[#allocation2 + $0x280] sm:$0xff] %v317
      %342 = vst [vmem:[#allocation2 + $0x2b0] sm:$0xff] %v318
      %343 = vst [vmem:[#allocation2 + $0x2e0] sm:$0xff] %v319
      %344 = vst [vmem:[#allocation2 + $0x310] sm:$0xff] %v320
      %345 = vst [vmem:[#allocation2 + $0x340] sm:$0xff] %v321
      %346 = vst [vmem:[#allocation2 + $0x370] sm:$0xff] %v322
      %347 = vst [vmem:[#allocation2 + $0x3a0] sm:$0xff] %v323
      %348 = vst [vmem:[#allocation2 + $0x3d0] sm:$0xff] %v324
      %349 = vst [vmem:[#allocation2 + $0x400] sm:$0xff] %v325
      %350 = vst [vmem:[#allocation2 + $0x430] sm:$0xff] %v326
      %351 = vst [vmem:[#allocation2 + $0x460] sm:$0xff] %v327
      %v352 = vld [vmem:[%s303 + $0x1] sm:$0xff]
      %v353 = vld [vmem:[%s303 + $0x11] sm:$0xff]
      %v354 = vld [vmem:[%s303 + $0x21] sm:$0xff]
      %v355 = vld [vmem:[%s303 + $0x31] sm:$0xff]
      %v356 = vld [vmem:[%s303 + $0x41] sm:$0xff]
      %v357 = vld [vmem:[%s303 + $0x51] sm:$0xff]
      %v358 = vld [vmem:[%s303 + $0x61] sm:$0xff]
      %v359 = vld [vmem:[%s303 + $0x71] sm:$0xff]
      %v360 = vld [vmem:[%s303 + $0x81] sm:$0xff]
      %v361 = vld [vmem:[%s303 + $0x91] sm:$0xff]
      %v362 = vld [vmem:[%s303 + $0xa1] sm:$0xff]
      %v363 = vld [vmem:[%s303 + $0xb1] sm:$0xff]
      %v364 = vld [vmem:[%s303 + $0xc1] sm:$0xff]
      %v365 = vld [vmem:[%s303 + $0xd1] sm:$0xff]
      %v366 = vld [vmem:[%s303 + $0xe1] sm:$0xff]
      %v367 = vld [vmem:[%s303 + $0xf1] sm:$0xff]
      %v368 = vld [vmem:[%s303 + $0x101] sm:$0xff]
      %v369 = vld [vmem:[%s303 + $0x111] sm:$0xff]
      %v370 = vld [vmem:[%s303 + $0x121] sm:$0xff]
      %v371 = vld [vmem:[%s303 + $0x131] sm:$0xff]
      %v372 = vld [vmem:[%s303 + $0x141] sm:$0xff]
      %v373 = vld [vmem:[%s303 + $0x151] sm:$0xff]
      %v374 = vld [vmem:[%s303 + $0x161] sm:$0xff]
      %v375 = vld [vmem:[%s303 + $0x171] sm:$0xff]
      %376 = vst [vmem:[#allocation2 + $0x18] sm:$0xff] %v352
      %377 = vst [vmem:[#allocation2 + $0x48] sm:$0xff] %v353
      %378 = vst [vmem:[#allocation2 + $0x78] sm:$0xff] %v354
      %379 = vst [vmem:[#allocation2 + $0xa8] sm:$0xff] %v355
      %380 = vst [vmem:[#allocation2 + $0xd8] sm:$0xff] %v356
      %381 = vst [vmem:[#allocation2 + $0x108] sm:$0xff] %v357
      %382 = vst [vmem:[#allocation2 + $0x138] sm:$0xff] %v358
      %383 = vst [vmem:[#allocation2 + $0x168] sm:$0xff] %v359
      %384 = vst [vmem:[#allocation2 + $0x198] sm:$0xff] %v360
      %385 = vst [vmem:[#allocation2 + $0x1c8] sm:$0xff] %v361
      %386 = vst [vmem:[#allocation2 + $0x1f8] sm:$0xff] %v362
      %387 = vst [vmem:[#allocation2 + $0x228] sm:$0xff] %v363
      %388 = vst [vmem:[#allocation2 + $0x258] sm:$0xff] %v364
      %389 = vst [vmem:[#allocation2 + $0x288] sm:$0xff] %v365
      %390 = vst [vmem:[#allocation2 + $0x2b8] sm:$0xff] %v366
      %391 = vst [vmem:[#allocation2 + $0x2e8] sm:$0xff] %v367
      %392 = vst [vmem:[#allocation2 + $0x318] sm:$0xff] %v368
      %393 = vst [vmem:[#allocation2 + $0x348] sm:$0xff] %v369
      %394 = vst [vmem:[#allocation2 + $0x378] sm:$0xff] %v370
      %395 = vst [vmem:[#allocation2 + $0x3a8] sm:$0xff] %v371
      %396 = vst [vmem:[#allocation2 + $0x3d8] sm:$0xff] %v372
      %397 = vst [vmem:[#allocation2 + $0x408] sm:$0xff] %v373
      %398 = vst [vmem:[#allocation2 + $0x438] sm:$0xff] %v374
      %399 = vst [vmem:[#allocation2 + $0x468] sm:$0xff] %v375
      %s400 = scalar_lea.vmem %s197, 32
      %v401 = vld [vmem:[%s400] sm:$0xff]
      %v402 = vld [vmem:[%s400 + $0x10] sm:$0xff]
      %v403 = vld [vmem:[%s400 + $0x20] sm:$0xff]
      %v404 = vld [vmem:[%s400 + $0x30] sm:$0xff]
      %v405 = vld [vmem:[%s400 + $0x40] sm:$0xff]
      %v406 = vld [vmem:[%s400 + $0x50] sm:$0xff]
      %v407 = vld [vmem:[%s400 + $0x60] sm:$0xff]
      %v408 = vld [vmem:[%s400 + $0x70] sm:$0xff]
      %v409 = vld [vmem:[%s400 + $0x80] sm:$0xff]
      %v410 = vld [vmem:[%s400 + $0x90] sm:$0xff]
      %v411 = vld [vmem:[%s400 + $0xa0] sm:$0xff]
      %v412 = vld [vmem:[%s400 + $0xb0] sm:$0xff]
      %v413 = vld [vmem:[%s400 + $0xc0] sm:$0xff]
      %v414 = vld [vmem:[%s400 + $0xd0] sm:$0xff]
      %v415 = vld [vmem:[%s400 + $0xe0] sm:$0xff]
      %v416 = vld [vmem:[%s400 + $0xf0] sm:$0xff]
      %v417 = vld [vmem:[%s400 + $0x100] sm:$0xff]
      %v418 = vld [vmem:[%s400 + $0x110] sm:$0xff]
      %v419 = vld [vmem:[%s400 + $0x120] sm:$0xff]
      %v420 = vld [vmem:[%s400 + $0x130] sm:$0xff]
      %v421 = vld [vmem:[%s400 + $0x140] sm:$0xff]
      %v422 = vld [vmem:[%s400 + $0x150] sm:$0xff]
      %v423 = vld [vmem:[%s400 + $0x160] sm:$0xff]
      %v424 = vld [vmem:[%s400 + $0x170] sm:$0xff]
      %425 = vst [vmem:[#allocation2 + $0x20] sm:$0xff] %v401
      %426 = vst [vmem:[#allocation2 + $0x50] sm:$0xff] %v402
      %427 = vst [vmem:[#allocation2 + $0x80] sm:$0xff] %v403
      %428 = vst [vmem:[#allocation2 + $0xb0] sm:$0xff] %v404
      %429 = vst [vmem:[#allocation2 + $0xe0] sm:$0xff] %v405
      %430 = vst [vmem:[#allocation2 + $0x110] sm:$0xff] %v406
      %431 = vst [vmem:[#allocation2 + $0x140] sm:$0xff] %v407
      %432 = vst [vmem:[#allocation2 + $0x170] sm:$0xff] %v408
      %433 = vst [vmem:[#allocation2 + $0x1a0] sm:$0xff] %v409
      %434 = vst [vmem:[#allocation2 + $0x1d0] sm:$0xff] %v410
      %435 = vst [vmem:[#allocation2 + $0x200] sm:$0xff] %v411
      %436 = vst [vmem:[#allocation2 + $0x230] sm:$0xff] %v412
      %437 = vst [vmem:[#allocation2 + $0x260] sm:$0xff] %v413
      %438 = vst [vmem:[#allocation2 + $0x290] sm:$0xff] %v414
      %439 = vst [vmem:[#allocation2 + $0x2c0] sm:$0xff] %v415
      %440 = vst [vmem:[#allocation2 + $0x2f0] sm:$0xff] %v416
      %441 = vst [vmem:[#allocation2 + $0x320] sm:$0xff] %v417
      %442 = vst [vmem:[#allocation2 + $0x350] sm:$0xff] %v418
      %443 = vst [vmem:[#allocation2 + $0x380] sm:$0xff] %v419
      %444 = vst [vmem:[#allocation2 + $0x3b0] sm:$0xff] %v420
      %445 = vst [vmem:[#allocation2 + $0x3e0] sm:$0xff] %v421
      %446 = vst [vmem:[#allocation2 + $0x410] sm:$0xff] %v422
      %447 = vst [vmem:[#allocation2 + $0x440] sm:$0xff] %v423
      %448 = vst [vmem:[#allocation2 + $0x470] sm:$0xff] %v424
      %v449 = vld [vmem:[%s400 + $0x1] sm:$0xff]
      %v450 = vld [vmem:[%s400 + $0x11] sm:$0xff]
      %v451 = vld [vmem:[%s400 + $0x21] sm:$0xff]
      %v452 = vld [vmem:[%s400 + $0x31] sm:$0xff]
      %v453 = vld [vmem:[%s400 + $0x41] sm:$0xff]
      %v454 = vld [vmem:[%s400 + $0x51] sm:$0xff]
      %v455 = vld [vmem:[%s400 + $0x61] sm:$0xff]
      %v456 = vld [vmem:[%s400 + $0x71] sm:$0xff]
      %v457 = vld [vmem:[%s400 + $0x81] sm:$0xff]
      %v458 = vld [vmem:[%s400 + $0x91] sm:$0xff]
      %v459 = vld [vmem:[%s400 + $0xa1] sm:$0xff]
      %v460 = vld [vmem:[%s400 + $0xb1] sm:$0xff]
      %v461 = vld [vmem:[%s400 + $0xc1] sm:$0xff]
      %v462 = vld [vmem:[%s400 + $0xd1] sm:$0xff]
      %v463 = vld [vmem:[%s400 + $0xe1] sm:$0xff]
      %v464 = vld [vmem:[%s400 + $0xf1] sm:$0xff]
      %v465 = vld [vmem:[%s400 + $0x101] sm:$0xff]
      %v466 = vld [vmem:[%s400 + $0x111] sm:$0xff]
      %v467 = vld [vmem:[%s400 + $0x121] sm:$0xff]
      %v468 = vld [vmem:[%s400 + $0x131] sm:$0xff]
      %v469 = vld [vmem:[%s400 + $0x141] sm:$0xff]
      %v470 = vld [vmem:[%s400 + $0x151] sm:$0xff]
      %v471 = vld [vmem:[%s400 + $0x161] sm:$0xff]
      %v472 = vld [vmem:[%s400 + $0x171] sm:$0xff]
      %473 = vst [vmem:[#allocation2 + $0x28] sm:$0xff] %v449
      %474 = vst [vmem:[#allocation2 + $0x58] sm:$0xff] %v450
      %475 = vst [vmem:[#allocation2 + $0x88] sm:$0xff] %v451
      %476 = vst [vmem:[#allocation2 + $0xb8] sm:$0xff] %v452
      %477 = vst [vmem:[#allocation2 + $0xe8] sm:$0xff] %v453
      %478 = vst [vmem:[#allocation2 + $0x118] sm:$0xff] %v454
      %479 = vst [vmem:[#allocation2 + $0x148] sm:$0xff] %v455
      %480 = vst [vmem:[#allocation2 + $0x178] sm:$0xff] %v456
      %481 = vst [vmem:[#allocation2 + $0x1a8] sm:$0xff] %v457
      %482 = vst [vmem:[#allocation2 + $0x1d8] sm:$0xff] %v458
      %483 = vst [vmem:[#allocation2 + $0x208] sm:$0xff] %v459
      %484 = vst [vmem:[#allocation2 + $0x238] sm:$0xff] %v460
      %485 = vst [vmem:[#allocation2 + $0x268] sm:$0xff] %v461
      %486 = vst [vmem:[#allocation2 + $0x298] sm:$0xff] %v462
      %487 = vst [vmem:[#allocation2 + $0x2c8] sm:$0xff] %v463
      %488 = vst [vmem:[#allocation2 + $0x2f8] sm:$0xff] %v464
      %489 = vst [vmem:[#allocation2 + $0x328] sm:$0xff] %v465
      %490 = vst [vmem:[#allocation2 + $0x358] sm:$0xff] %v466
      %491 = vst [vmem:[#allocation2 + $0x388] sm:$0xff] %v467
      %492 = vst [vmem:[#allocation2 + $0x3b8] sm:$0xff] %v468
      %493 = vst [vmem:[#allocation2 + $0x3e8] sm:$0xff] %v469
      %494 = vst [vmem:[#allocation2 + $0x418] sm:$0xff] %v470
      %495 = vst [vmem:[#allocation2 + $0x448] sm:$0xff] %v471
      %496 = vst [vmem:[#allocation2 + $0x478] sm:$0xff] %v472
      %v497 = vld [vmem:[#allocation2] sm:$0xff]
      %v498 = vld [vmem:[#allocation2 + $0x8] sm:$0xff]
      %v499 = vld [vmem:[#allocation2 + $0x10] sm:$0xff]
      %v500 = vld [vmem:[#allocation2 + $0x18] sm:$0xff]
      %v501 = vld [vmem:[#allocation2 + $0x20] sm:$0xff]
      %v502 = vld [vmem:[#allocation2 + $0x28] sm:$0xff]
      %v503 = vld [vmem:[#allocation2 + $0x30] sm:$0xff]
      %v504 = vld [vmem:[#allocation2 + $0x38] sm:$0xff]
      %v505 = vld [vmem:[#allocation2 + $0x40] sm:$0xff]
      %v506 = vld [vmem:[#allocation2 + $0x48] sm:$0xff]
      %v507 = vld [vmem:[#allocation2 + $0x50] sm:$0xff]
      %v508 = vld [vmem:[#allocation2 + $0x58] sm:$0xff]
      %v509 = vld [vmem:[#allocation2 + $0x60] sm:$0xff]
      %v510 = vld [vmem:[#allocation2 + $0x68] sm:$0xff]
      %v511 = vld [vmem:[#allocation2 + $0x70] sm:$0xff]
      %v512 = vld [vmem:[#allocation2 + $0x78] sm:$0xff]
      %v513 = vld [vmem:[#allocation2 + $0x80] sm:$0xff]
      %v514 = vld [vmem:[#allocation2 + $0x88] sm:$0xff]
      %v515 = vld [vmem:[#allocation2 + $0x90] sm:$0xff]
      %v516 = vld [vmem:[#allocation2 + $0x98] sm:$0xff]
      %v517 = vld [vmem:[#allocation2 + $0xa0] sm:$0xff]
      %v518 = vld [vmem:[#allocation2 + $0xa8] sm:$0xff]
      %v519 = vld [vmem:[#allocation2 + $0xb0] sm:$0xff]
      %v520 = vld [vmem:[#allocation2 + $0xb8] sm:$0xff]
      %v521 = vld [vmem:[#allocation2 + $0xc0] sm:$0xff]
      %v522 = vld [vmem:[#allocation2 + $0xc8] sm:$0xff]
      %v523 = vld [vmem:[#allocation2 + $0xd0] sm:$0xff]
      %v524 = vld [vmem:[#allocation2 + $0xd8] sm:$0xff]
      %v525 = vld [vmem:[#allocation2 + $0xe0] sm:$0xff]
      %v526 = vld [vmem:[#allocation2 + $0xe8] sm:$0xff]
      %v527 = vld [vmem:[#allocation2 + $0xf0] sm:$0xff]
      %v528 = vld [vmem:[#allocation2 + $0xf8] sm:$0xff]
      %v529 = vld [vmem:[#allocation2 + $0x100] sm:$0xff]
      %v530 = vld [vmem:[#allocation2 + $0x108] sm:$0xff]
      %v531 = vld [vmem:[#allocation2 + $0x110] sm:$0xff]
      %v532 = vld [vmem:[#allocation2 + $0x118] sm:$0xff]
      %v533 = vld [vmem:[#allocation2 + $0x120] sm:$0xff]
      %v534 = vld [vmem:[#allocation2 + $0x128] sm:$0xff]
      %v535 = vld [vmem:[#allocation2 + $0x130] sm:$0xff]
      %v536 = vld [vmem:[#allocation2 + $0x138] sm:$0xff]
      %v537 = vld [vmem:[#allocation2 + $0x140] sm:$0xff]
      %v538 = vld [vmem:[#allocation2 + $0x148] sm:$0xff]
      %v539 = vld [vmem:[#allocation2 + $0x150] sm:$0xff]
      %v540 = vld [vmem:[#allocation2 + $0x158] sm:$0xff]
      %v541 = vld [vmem:[#allocation2 + $0x160] sm:$0xff]
      %v542 = vld [vmem:[#allocation2 + $0x168] sm:$0xff]
      %v543 = vld [vmem:[#allocation2 + $0x170] sm:$0xff]
      %v544 = vld [vmem:[#allocation2 + $0x178] sm:$0xff]
      %v545 = vld [vmem:[#allocation2 + $0x180] sm:$0xff]
      %v546 = vld [vmem:[#allocation2 + $0x188] sm:$0xff]
      %v547 = vld [vmem:[#allocation2 + $0x190] sm:$0xff]
      %v548 = vld [vmem:[#allocation2 + $0x198] sm:$0xff]
      %v549 = vld [vmem:[#allocation2 + $0x1a0] sm:$0xff]
      %v550 = vld [vmem:[#allocation2 + $0x1a8] sm:$0xff]
      %v551 = vld [vmem:[#allocation2 + $0x1b0] sm:$0xff]
      %v552 = vld [vmem:[#allocation2 + $0x1b8] sm:$0xff]
      %v553 = vld [vmem:[#allocation2 + $0x1c0] sm:$0xff]
      %v554 = vld [vmem:[#allocation2 + $0x1c8] sm:$0xff]
      %v555 = vld [vmem:[#allocation2 + $0x1d0] sm:$0xff]
      %v556 = vld [vmem:[#allocation2 + $0x1d8] sm:$0xff]
      %v557 = vld [vmem:[#allocation2 + $0x1e0] sm:$0xff]
      %v558 = vld [vmem:[#allocation2 + $0x1e8] sm:$0xff]
      %v559 = vld [vmem:[#allocation2 + $0x1f0] sm:$0xff]
      %v560 = vld [vmem:[#allocation2 + $0x1f8] sm:$0xff]
      %v561 = vld [vmem:[#allocation2 + $0x200] sm:$0xff]
      %v562 = vld [vmem:[#allocation2 + $0x208] sm:$0xff]
      %v563 = vld [vmem:[#allocation2 + $0x210] sm:$0xff]
      %v564 = vld [vmem:[#allocation2 + $0x218] sm:$0xff]
      %v565 = vld [vmem:[#allocation2 + $0x220] sm:$0xff]
      %v566 = vld [vmem:[#allocation2 + $0x228] sm:$0xff]
      %v567 = vld [vmem:[#allocation2 + $0x230] sm:$0xff]
      %v568 = vld [vmem:[#allocation2 + $0x238] sm:$0xff]
      %v569 = vld [vmem:[#allocation2 + $0x240] sm:$0xff]
      %v570 = vld [vmem:[#allocation2 + $0x248] sm:$0xff]
      %v571 = vld [vmem:[#allocation2 + $0x250] sm:$0xff]
      %v572 = vld [vmem:[#allocation2 + $0x258] sm:$0xff]
      %v573 = vld [vmem:[#allocation2 + $0x260] sm:$0xff]
      %v574 = vld [vmem:[#allocation2 + $0x268] sm:$0xff]
      %v575 = vld [vmem:[#allocation2 + $0x270] sm:$0xff]
      %v576 = vld [vmem:[#allocation2 + $0x278] sm:$0xff]
      %v577 = vld [vmem:[#allocation2 + $0x280] sm:$0xff]
      %v578 = vld [vmem:[#allocation2 + $0x288] sm:$0xff]
      %v579 = vld [vmem:[#allocation2 + $0x290] sm:$0xff]
      %v580 = vld [vmem:[#allocation2 + $0x298] sm:$0xff]
      %v581 = vld [vmem:[#allocation2 + $0x2a0] sm:$0xff]
      %v582 = vld [vmem:[#allocation2 + $0x2a8] sm:$0xff]
      %v583 = vld [vmem:[#allocation2 + $0x2b0] sm:$0xff]
      %v584 = vld [vmem:[#allocation2 + $0x2b8] sm:$0xff]
      %v585 = vld [vmem:[#allocation2 + $0x2c0] sm:$0xff]
      %v586 = vld [vmem:[#allocation2 + $0x2c8] sm:$0xff]
      %v587 = vld [vmem:[#allocation2 + $0x2d0] sm:$0xff]
      %v588 = vld [vmem:[#allocation2 + $0x2d8] sm:$0xff]
      %v589 = vld [vmem:[#allocation2 + $0x2e0] sm:$0xff]
      %v590 = vld [vmem:[#allocation2 + $0x2e8] sm:$0xff]
      %v591 = vld [vmem:[#allocation2 + $0x2f0] sm:$0xff]
      %v592 = vld [vmem:[#allocation2 + $0x2f8] sm:$0xff]
      %v593 = vld [vmem:[#allocation2 + $0x300] sm:$0xff]
      %v594 = vld [vmem:[#allocation2 + $0x308] sm:$0xff]
      %v595 = vld [vmem:[#allocation2 + $0x310] sm:$0xff]
      %v596 = vld [vmem:[#allocation2 + $0x318] sm:$0xff]
      %v597 = vld [vmem:[#allocation2 + $0x320] sm:$0xff]
      %v598 = vld [vmem:[#allocation2 + $0x328] sm:$0xff]
      %v599 = vld [vmem:[#allocation2 + $0x330] sm:$0xff]
      %v600 = vld [vmem:[#allocation2 + $0x338] sm:$0xff]
      %v601 = vld [vmem:[#allocation2 + $0x340] sm:$0xff]
      %v602 = vld [vmem:[#allocation2 + $0x348] sm:$0xff]
      %v603 = vld [vmem:[#allocation2 + $0x350] sm:$0xff]
      %v604 = vld [vmem:[#allocation2 + $0x358] sm:$0xff]
      %v605 = vld [vmem:[#allocation2 + $0x360] sm:$0xff]
      %v606 = vld [vmem:[#allocation2 + $0x368] sm:$0xff]
      %v607 = vld [vmem:[#allocation2 + $0x370] sm:$0xff]
      %v608 = vld [vmem:[#allocation2 + $0x378] sm:$0xff]
      %v609 = vld [vmem:[#allocation2 + $0x380] sm:$0xff]
      %v610 = vld [vmem:[#allocation2 + $0x388] sm:$0xff]
      %v611 = vld [vmem:[#allocation2 + $0x390] sm:$0xff]
      %v612 = vld [vmem:[#allocation2 + $0x398] sm:$0xff]
      %v613 = vld [vmem:[#allocation2 + $0x3a0] sm:$0xff]
      %v614 = vld [vmem:[#allocation2 + $0x3a8] sm:$0xff]
      %v615 = vld [vmem:[#allocation2 + $0x3b0] sm:$0xff]
      %v616 = vld [vmem:[#allocation2 + $0x3b8] sm:$0xff]
      %v617 = vld [vmem:[#allocation2 + $0x3c0] sm:$0xff]
      %v618 = vld [vmem:[#allocation2 + $0x3c8] sm:$0xff]
      %v619 = vld [vmem:[#allocation2 + $0x3d0] sm:$0xff]
      %v620 = vld [vmem:[#allocation2 + $0x3d8] sm:$0xff]
      %v621 = vld [vmem:[#allocation2 + $0x3e0] sm:$0xff]
      %v622 = vld [vmem:[#allocation2 + $0x3e8] sm:$0xff]
      %v623 = vld [vmem:[#allocation2 + $0x3f0] sm:$0xff]
      %v624 = vld [vmem:[#allocation2 + $0x3f8] sm:$0xff]
      %v625 = vld [vmem:[#allocation2 + $0x400] sm:$0xff]
      %v626 = vld [vmem:[#allocation2 + $0x408] sm:$0xff]
      %v627 = vld [vmem:[#allocation2 + $0x410] sm:$0xff]
      %v628 = vld [vmem:[#allocation2 + $0x418] sm:$0xff]
      %v629 = vld [vmem:[#allocation2 + $0x420] sm:$0xff]
      %v630 = vld [vmem:[#allocation2 + $0x428] sm:$0xff]
      %v631 = vld [vmem:[#allocation2 + $0x430] sm:$0xff]
      %v632 = vld [vmem:[#allocation2 + $0x438] sm:$0xff]
      %v633 = vld [vmem:[#allocation2 + $0x440] sm:$0xff]
      %v634 = vld [vmem:[#allocation2 + $0x448] sm:$0xff]
      %v635 = vld [vmem:[#allocation2 + $0x450] sm:$0xff]
      %v636 = vld [vmem:[#allocation2 + $0x458] sm:$0xff]
      %v637 = vld [vmem:[#allocation2 + $0x460] sm:$0xff]
      %v638 = vld [vmem:[#allocation2 + $0x468] sm:$0xff]
      %v639 = vld [vmem:[#allocation2 + $0x470] sm:$0xff]
      %v640 = vld [vmem:[#allocation2 + $0x478] sm:$0xff]
      %v641 = vld [vmem:[%s1] sm:$0xff]
      %v642 = vld [vmem:[%s1 + $0x8] sm:$0xff]
      %v643 = vld [vmem:[%s1 + $0x10] sm:$0xff]
      %v644 = vld [vmem:[%s1 + $0x18] sm:$0xff]
      %v645 = vld [vmem:[%s1 + $0x20] sm:$0xff]
      %v646 = vld [vmem:[%s1 + $0x28] sm:$0xff]
      %v647 = vld [vmem:[%s1 + $0x30] sm:$0xff]
      %v648 = vld [vmem:[%s1 + $0x38] sm:$0xff]
      %v649 = vld [vmem:[%s1 + $0x40] sm:$0xff]
      %v650 = vld [vmem:[%s1 + $0x48] sm:$0xff]
      %v651 = vld [vmem:[%s1 + $0x50] sm:$0xff]
      %v652 = vld [vmem:[%s1 + $0x58] sm:$0xff]
      %v653 = vld [vmem:[%s1 + $0x60] sm:$0xff]
      %v654 = vld [vmem:[%s1 + $0x68] sm:$0xff]
      %v655 = vld [vmem:[%s1 + $0x70] sm:$0xff]
      %v656 = vld [vmem:[%s1 + $0x78] sm:$0xff]
      %v657 = vld [vmem:[%s1 + $0x80] sm:$0xff]
      %v658 = vld [vmem:[%s1 + $0x88] sm:$0xff]
      %v659 = vld [vmem:[%s1 + $0x90] sm:$0xff]
      %v660 = vld [vmem:[%s1 + $0x98] sm:$0xff]
      %v661 = vld [vmem:[%s1 + $0xa0] sm:$0xff]
      %v662 = vld [vmem:[%s1 + $0xa8] sm:$0xff]
      %v663 = vld [vmem:[%s1 + $0xb0] sm:$0xff]
      %v664 = vld [vmem:[%s1 + $0xb8] sm:$0xff]
      %v665 = vld [vmem:[%s1 + $0xc0] sm:$0xff]
      %v666 = vld [vmem:[%s1 + $0xc8] sm:$0xff]
      %v667 = vld [vmem:[%s1 + $0xd0] sm:$0xff]
      %v668 = vld [vmem:[%s1 + $0xd8] sm:$0xff]
      %v669 = vld [vmem:[%s1 + $0xe0] sm:$0xff]
      %v670 = vld [vmem:[%s1 + $0xe8] sm:$0xff]
      %v671 = vld [vmem:[%s1 + $0xf0] sm:$0xff]
      %v672 = vld [vmem:[%s1 + $0xf8] sm:$0xff]
      %v673 = vld [vmem:[%s1 + $0x100] sm:$0xff]
      %v674 = vld [vmem:[%s1 + $0x108] sm:$0xff]
      %v675 = vld [vmem:[%s1 + $0x110] sm:$0xff]
      %v676 = vld [vmem:[%s1 + $0x118] sm:$0xff]
      %v677 = vld [vmem:[%s1 + $0x120] sm:$0xff]
      %v678 = vld [vmem:[%s1 + $0x128] sm:$0xff]
      %v679 = vld [vmem:[%s1 + $0x130] sm:$0xff]
      %v680 = vld [vmem:[%s1 + $0x138] sm:$0xff]
      %v681 = vld [vmem:[%s1 + $0x140] sm:$0xff]
      %v682 = vld [vmem:[%s1 + $0x148] sm:$0xff]
      %v683 = vld [vmem:[%s1 + $0x150] sm:$0xff]
      %v684 = vld [vmem:[%s1 + $0x158] sm:$0xff]
      %v685 = vld [vmem:[%s1 + $0x160] sm:$0xff]
      %v686 = vld [vmem:[%s1 + $0x168] sm:$0xff]
      %v687 = vld [vmem:[%s1 + $0x170] sm:$0xff]
      %v688 = vld [vmem:[%s1 + $0x178] sm:$0xff]
      %v689 = vld [vmem:[%s1 + $0x180] sm:$0xff]
      %v690 = vld [vmem:[%s1 + $0x188] sm:$0xff]
      %v691 = vld [vmem:[%s1 + $0x190] sm:$0xff]
      %v692 = vld [vmem:[%s1 + $0x198] sm:$0xff]
      %v693 = vld [vmem:[%s1 + $0x1a0] sm:$0xff]
      %v694 = vld [vmem:[%s1 + $0x1a8] sm:$0xff]
      %v695 = vld [vmem:[%s1 + $0x1b0] sm:$0xff]
      %v696 = vld [vmem:[%s1 + $0x1b8] sm:$0xff]
      %v697 = vld [vmem:[%s1 + $0x1c0] sm:$0xff]
      %v698 = vld [vmem:[%s1 + $0x1c8] sm:$0xff]
      %v699 = vld [vmem:[%s1 + $0x1d0] sm:$0xff]
      %v700 = vld [vmem:[%s1 + $0x1d8] sm:$0xff]
      %v701 = vld [vmem:[%s1 + $0x1e0] sm:$0xff]
      %v702 = vld [vmem:[%s1 + $0x1e8] sm:$0xff]
      %v703 = vld [vmem:[%s1 + $0x1f0] sm:$0xff]
      %v704 = vld [vmem:[%s1 + $0x1f8] sm:$0xff]
      %v705 = vld [vmem:[%s1 + $0x200] sm:$0xff]
      %v706 = vld [vmem:[%s1 + $0x208] sm:$0xff]
      %v707 = vld [vmem:[%s1 + $0x210] sm:$0xff]
      %v708 = vld [vmem:[%s1 + $0x218] sm:$0xff]
      %v709 = vld [vmem:[%s1 + $0x220] sm:$0xff]
      %v710 = vld [vmem:[%s1 + $0x228] sm:$0xff]
      %v711 = vld [vmem:[%s1 + $0x230] sm:$0xff]
      %v712 = vld [vmem:[%s1 + $0x238] sm:$0xff]
      %v713 = vld [vmem:[%s1 + $0x240] sm:$0xff]
      %v714 = vld [vmem:[%s1 + $0x248] sm:$0xff]
      %v715 = vld [vmem:[%s1 + $0x250] sm:$0xff]
      %v716 = vld [vmem:[%s1 + $0x258] sm:$0xff]
      %v717 = vld [vmem:[%s1 + $0x260] sm:$0xff]
      %v718 = vld [vmem:[%s1 + $0x268] sm:$0xff]
      %v719 = vld [vmem:[%s1 + $0x270] sm:$0xff]
      %v720 = vld [vmem:[%s1 + $0x278] sm:$0xff]
      %v721 = vld [vmem:[%s1 + $0x280] sm:$0xff]
      %v722 = vld [vmem:[%s1 + $0x288] sm:$0xff]
      %v723 = vld [vmem:[%s1 + $0x290] sm:$0xff]
      %v724 = vld [vmem:[%s1 + $0x298] sm:$0xff]
      %v725 = vld [vmem:[%s1 + $0x2a0] sm:$0xff]
      %v726 = vld [vmem:[%s1 + $0x2a8] sm:$0xff]
      %v727 = vld [vmem:[%s1 + $0x2b0] sm:$0xff]
      %v728 = vld [vmem:[%s1 + $0x2b8] sm:$0xff]
      %v729 = vld [vmem:[%s1 + $0x2c0] sm:$0xff]
      %v730 = vld [vmem:[%s1 + $0x2c8] sm:$0xff]
      %v731 = vld [vmem:[%s1 + $0x2d0] sm:$0xff]
      %v732 = vld [vmem:[%s1 + $0x2d8] sm:$0xff]
      %v733 = vld [vmem:[%s1 + $0x2e0] sm:$0xff]
      %v734 = vld [vmem:[%s1 + $0x2e8] sm:$0xff]
      %v735 = vld [vmem:[%s1 + $0x2f0] sm:$0xff]
      %v736 = vld [vmem:[%s1 + $0x2f8] sm:$0xff]
      %v737 = vld [vmem:[%s2] sm:$0x1]
      %v739 = vperm.slane %v737, 0
      %741 = vmatpush.msra.mxu0 %v656
      %742 = vmatpush.msra.mxu0 %v655
      %743 = vmatpush.msra.mxu0 %v654
      %744 = vmatpush.msra.mxu0 %v653
      %745 = vmatpush.msra.mxu0 %v652
      %746 = vmatpush.msra.mxu0 %v651
      %747 = vmatpush.msra.mxu0 %v650
      %748 = vmatpush.msra.mxu0 %v649
      %749 = vmatpush.msra.mxu0 %v648
      %750 = vmatpush.msra.mxu0 %v647
      %751 = vmatpush.msra.mxu0 %v646
      %752 = vmatpush.msra.mxu0 %v645
      %753 = vmatpush.msra.mxu0 %v644
      %754 = vmatpush.msra.mxu0 %v643
      %755 = vmatpush.msra.mxu0 %v642
      %756 = vmatpush.msra.mxu0 %v641
      %757 = vmatmul.f32.gmra.mxu0 %v497
      %v758 = vpop.f32.mrf.mxu0
      %v759 = vadd.f32 %v739, %v758
      %760 = vmatmul.f32.gmra.mxu0 %v503
      %v761 = vpop.f32.mrf.mxu0
      %v762 = vadd.f32 %v739, %v761
      %763 = vmatmul.f32.gmra.mxu0 %v509
      %v764 = vpop.f32.mrf.mxu0
      %v765 = vadd.f32 %v739, %v764
      %766 = vmatmul.f32.gmra.mxu0 %v515
      %v767 = vpop.f32.mrf.mxu0
      %v768 = vadd.f32 %v739, %v767
      %769 = vmatmul.f32.gmra.mxu0 %v521
      %v770 = vpop.f32.mrf.mxu0
      %v771 = vadd.f32 %v739, %v770
      %772 = vmatmul.f32.gmra.mxu0 %v527
      %v773 = vpop.f32.mrf.mxu0
      %v774 = vadd.f32 %v739, %v773
      %775 = vmatmul.f32.gmra.mxu0 %v533
      %v776 = vpop.f32.mrf.mxu0
      %v777 = vadd.f32 %v739, %v776
      %778 = vmatmul.f32.gmra.mxu0 %v539
      %v779 = vpop.f32.mrf.mxu0
      %v780 = vadd.f32 %v739, %v779
      %781 = vmatmul.f32.gmra.mxu0 %v545
      %v782 = vpop.f32.mrf.mxu0
      %v783 = vadd.f32 %v739, %v782
      %784 = vmatmul.f32.gmra.mxu0 %v551
      %v785 = vpop.f32.mrf.mxu0
      %v786 = vadd.f32 %v739, %v785
      %787 = vmatmul.f32.gmra.mxu0 %v557
      %v788 = vpop.f32.mrf.mxu0
      %v789 = vadd.f32 %v739, %v788
      %790 = vmatmul.f32.gmra.mxu0 %v563
      %v791 = vpop.f32.mrf.mxu0
      %v792 = vadd.f32 %v739, %v791
      %793 = vmatmul.f32.gmra.mxu0 %v569
      %v794 = vpop.f32.mrf.mxu0
      %v795 = vadd.f32 %v739, %v794
      %796 = vmatmul.f32.gmra.mxu0 %v575
      %v797 = vpop.f32.mrf.mxu0
      %v798 = vadd.f32 %v739, %v797
      %799 = vmatmul.f32.gmra.mxu0 %v581
      %v800 = vpop.f32.mrf.mxu0
      %v801 = vadd.f32 %v739, %v800
      %802 = vmatmul.f32.gmra.mxu0 %v587
      %v803 = vpop.f32.mrf.mxu0
      %v804 = vadd.f32 %v739, %v803
      %805 = vmatmul.f32.gmra.mxu0 %v593
      %v806 = vpop.f32.mrf.mxu0
      %v807 = vadd.f32 %v739, %v806
      %808 = vmatmul.f32.gmra.mxu0 %v599
      %v809 = vpop.f32.mrf.mxu0
      %v810 = vadd.f32 %v739, %v809
      %811 = vmatmul.f32.gmra.mxu0 %v605
      %v812 = vpop.f32.mrf.mxu0
      %v813 = vadd.f32 %v739, %v812
      %814 = vmatmul.f32.gmra.mxu0 %v611
      %v815 = vpop.f32.mrf.mxu0
      %v816 = vadd.f32 %v739, %v815
      %817 = vmatmul.f32.gmra.mxu0 %v617
      %v818 = vpop.f32.mrf.mxu0
      %v819 = vadd.f32 %v739, %v818
      %820 = vmatmul.f32.gmra.mxu0 %v623
      %v821 = vpop.f32.mrf.mxu0
      %v822 = vadd.f32 %v739, %v821
      %823 = vmatmul.f32.gmra.mxu0 %v629
      %v824 = vpop.f32.mrf.mxu0
      %v825 = vadd.f32 %v739, %v824
      %826 = vmatmul.f32.gmra.mxu0 %v635
      %v827 = vpop.f32.mrf.mxu0
      %v828 = vadd.f32 %v739, %v827
      %829 = vdwg.mxu0
      %830 = vmatpush.msra.mxu0 %v672
      %831 = vmatpush.msra.mxu0 %v671
      %832 = vmatpush.msra.mxu0 %v670
      %833 = vmatpush.msra.mxu0 %v669
      %834 = vmatpush.msra.mxu0 %v668
      %835 = vmatpush.msra.mxu0 %v667
      %836 = vmatpush.msra.mxu0 %v666
      %837 = vmatpush.msra.mxu0 %v665
      %838 = vmatpush.msra.mxu0 %v664
      %839 = vmatpush.msra.mxu0 %v663
      %840 = vmatpush.msra.mxu0 %v662
      %841 = vmatpush.msra.mxu0 %v661
      %842 = vmatpush.msra.mxu0 %v660
      %843 = vmatpush.msra.mxu0 %v659
      %844 = vmatpush.msra.mxu0 %v658
      %845 = vmatpush.msra.mxu0 %v657
      %846 = vmatmul.f32.gmra.mxu0 %v498
      %v847 = vpop.f32.mrf.mxu0
      %v848 = vadd.f32 %v759, %v847
      %849 = vmatmul.f32.gmra.mxu0 %v504
      %v850 = vpop.f32.mrf.mxu0
      %v851 = vadd.f32 %v762, %v850
      %852 = vmatmul.f32.gmra.mxu0 %v510
      %v853 = vpop.f32.mrf.mxu0
      %v854 = vadd.f32 %v765, %v853
      %855 = vmatmul.f32.gmra.mxu0 %v516
      %v856 = vpop.f32.mrf.mxu0
      %v857 = vadd.f32 %v768, %v856
      %858 = vmatmul.f32.gmra.mxu0 %v522
      %v859 = vpop.f32.mrf.mxu0
      %v860 = vadd.f32 %v771, %v859
      %861 = vmatmul.f32.gmra.mxu0 %v528
      %v862 = vpop.f32.mrf.mxu0
      %v863 = vadd.f32 %v774, %v862
      %864 = vmatmul.f32.gmra.mxu0 %v534
      %v865 = vpop.f32.mrf.mxu0
      %v866 = vadd.f32 %v777, %v865
      %867 = vmatmul.f32.gmra.mxu0 %v540
      %v868 = vpop.f32.mrf.mxu0
      %v869 = vadd.f32 %v780, %v868
      %870 = vmatmul.f32.gmra.mxu0 %v546
      %v871 = vpop.f32.mrf.mxu0
      %v872 = vadd.f32 %v783, %v871
      %873 = vmatmul.f32.gmra.mxu0 %v552
      %v874 = vpop.f32.mrf.mxu0
      %v875 = vadd.f32 %v786, %v874
      %876 = vmatmul.f32.gmra.mxu0 %v558
      %v877 = vpop.f32.mrf.mxu0
      %v878 = vadd.f32 %v789, %v877
      %879 = vmatmul.f32.gmra.mxu0 %v564
      %v880 = vpop.f32.mrf.mxu0
      %v881 = vadd.f32 %v792, %v880
      %882 = vmatmul.f32.gmra.mxu0 %v570
      %v883 = vpop.f32.mrf.mxu0
      %v884 = vadd.f32 %v795, %v883
      %885 = vmatmul.f32.gmra.mxu0 %v576
      %v886 = vpop.f32.mrf.mxu0
      %v887 = vadd.f32 %v798, %v886
      %888 = vmatmul.f32.gmra.mxu0 %v582
      %v889 = vpop.f32.mrf.mxu0
      %v890 = vadd.f32 %v801, %v889
      %891 = vmatmul.f32.gmra.mxu0 %v588
      %v892 = vpop.f32.mrf.mxu0
      %v893 = vadd.f32 %v804, %v892
      %894 = vmatmul.f32.gmra.mxu0 %v594
      %v895 = vpop.f32.mrf.mxu0
      %v896 = vadd.f32 %v807, %v895
      %897 = vmatmul.f32.gmra.mxu0 %v600
      %v898 = vpop.f32.mrf.mxu0
      %v899 = vadd.f32 %v810, %v898
      %900 = vmatmul.f32.gmra.mxu0 %v606
      %v901 = vpop.f32.mrf.mxu0
      %v902 = vadd.f32 %v813, %v901
      %903 = vmatmul.f32.gmra.mxu0 %v612
      %v904 = vpop.f32.mrf.mxu0
      %v905 = vadd.f32 %v816, %v904
      %906 = vmatmul.f32.gmra.mxu0 %v618
      %v907 = vpop.f32.mrf.mxu0
      %v908 = vadd.f32 %v819, %v907
      %909 = vmatmul.f32.gmra.mxu0 %v624
      %v910 = vpop.f32.mrf.mxu0
      %v911 = vadd.f32 %v822, %v910
      %912 = vmatmul.f32.gmra.mxu0 %v630
      %v913 = vpop.f32.mrf.mxu0
      %v914 = vadd.f32 %v825, %v913
      %915 = vmatmul.f32.gmra.mxu0 %v636
      %v916 = vpop.f32.mrf.mxu0
      %v917 = vadd.f32 %v828, %v916
      %918 = vdwg.mxu0
      %919 = vmatpush.msra.mxu0 %v688
      %920 = vmatpush.msra.mxu0 %v687
      %921 = vmatpush.msra.mxu0 %v686
      %922 = vmatpush.msra.mxu0 %v685
      %923 = vmatpush.msra.mxu0 %v684
      %924 = vmatpush.msra.mxu0 %v683
      %925 = vmatpush.msra.mxu0 %v682
      %926 = vmatpush.msra.mxu0 %v681
      %927 = vmatpush.msra.mxu0 %v680
      %928 = vmatpush.msra.mxu0 %v679
      %929 = vmatpush.msra.mxu0 %v678
      %930 = vmatpush.msra.mxu0 %v677
      %931 = vmatpush.msra.mxu0 %v676
      %932 = vmatpush.msra.mxu0 %v675
      %933 = vmatpush.msra.mxu0 %v674
      %934 = vmatpush.msra.mxu0 %v673
      %935 = vmatmul.f32.gmra.mxu0 %v499
      %v936 = vpop.f32.mrf.mxu0
      %v937 = vadd.f32 %v848, %v936
      %938 = vmatmul.f32.gmra.mxu0 %v505
      %v939 = vpop.f32.mrf.mxu0
      %v940 = vadd.f32 %v851, %v939
      %941 = vmatmul.f32.gmra.mxu0 %v511
      %v942 = vpop.f32.mrf.mxu0
      %v943 = vadd.f32 %v854, %v942
      %944 = vmatmul.f32.gmra.mxu0 %v517
      %v945 = vpop.f32.mrf.mxu0
      %v946 = vadd.f32 %v857, %v945
      %947 = vmatmul.f32.gmra.mxu0 %v523
      %v948 = vpop.f32.mrf.mxu0
      %v949 = vadd.f32 %v860, %v948
      %950 = vmatmul.f32.gmra.mxu0 %v529
      %v951 = vpop.f32.mrf.mxu0
      %v952 = vadd.f32 %v863, %v951
      %953 = vmatmul.f32.gmra.mxu0 %v535
      %v954 = vpop.f32.mrf.mxu0
      %v955 = vadd.f32 %v866, %v954
      %956 = vmatmul.f32.gmra.mxu0 %v541
      %v957 = vpop.f32.mrf.mxu0
      %v958 = vadd.f32 %v869, %v957
      %959 = vmatmul.f32.gmra.mxu0 %v547
      %v960 = vpop.f32.mrf.mxu0
      %v961 = vadd.f32 %v872, %v960
      %962 = vmatmul.f32.gmra.mxu0 %v553
      %v963 = vpop.f32.mrf.mxu0
      %v964 = vadd.f32 %v875, %v963
      %965 = vmatmul.f32.gmra.mxu0 %v559
      %v966 = vpop.f32.mrf.mxu0
      %v967 = vadd.f32 %v878, %v966
      %968 = vmatmul.f32.gmra.mxu0 %v565
      %v969 = vpop.f32.mrf.mxu0
      %v970 = vadd.f32 %v881, %v969
      %971 = vmatmul.f32.gmra.mxu0 %v571
      %v972 = vpop.f32.mrf.mxu0
      %v973 = vadd.f32 %v884, %v972
      %974 = vmatmul.f32.gmra.mxu0 %v577
      %v975 = vpop.f32.mrf.mxu0
      %v976 = vadd.f32 %v887, %v975
      %977 = vmatmul.f32.gmra.mxu0 %v583
      %v978 = vpop.f32.mrf.mxu0
      %v979 = vadd.f32 %v890, %v978
      %980 = vmatmul.f32.gmra.mxu0 %v589
      %v981 = vpop.f32.mrf.mxu0
      %v982 = vadd.f32 %v893, %v981
      %983 = vmatmul.f32.gmra.mxu0 %v595
      %v984 = vpop.f32.mrf.mxu0
      %v985 = vadd.f32 %v896, %v984
      %986 = vmatmul.f32.gmra.mxu0 %v601
      %v987 = vpop.f32.mrf.mxu0
      %v988 = vadd.f32 %v899, %v987
      %989 = vmatmul.f32.gmra.mxu0 %v607
      %v990 = vpop.f32.mrf.mxu0
      %v991 = vadd.f32 %v902, %v990
      %992 = vmatmul.f32.gmra.mxu0 %v613
      %v993 = vpop.f32.mrf.mxu0
      %v994 = vadd.f32 %v905, %v993
      %995 = vmatmul.f32.gmra.mxu0 %v619
      %v996 = vpop.f32.mrf.mxu0
      %v997 = vadd.f32 %v908, %v996
      %998 = vmatmul.f32.gmra.mxu0 %v625
      %v999 = vpop.f32.mrf.mxu0
      %v1000 = vadd.f32 %v911, %v999
      %1001 = vmatmul.f32.gmra.mxu0 %v631
      %v1002 = vpop.f32.mrf.mxu0
      %v1003 = vadd.f32 %v914, %v1002
      %1004 = vmatmul.f32.gmra.mxu0 %v637
      %v1005 = vpop.f32.mrf.mxu0
      %v1006 = vadd.f32 %v917, %v1005
      %1007 = vdwg.mxu0
      %1008 = vmatpush.msra.mxu0 %v704
      %1009 = vmatpush.msra.mxu0 %v703
      %1010 = vmatpush.msra.mxu0 %v702
      %1011 = vmatpush.msra.mxu0 %v701
      %1012 = vmatpush.msra.mxu0 %v700
      %1013 = vmatpush.msra.mxu0 %v699
      %1014 = vmatpush.msra.mxu0 %v698
      %1015 = vmatpush.msra.mxu0 %v697
      %1016 = vmatpush.msra.mxu0 %v696
      %1017 = vmatpush.msra.mxu0 %v695
      %1018 = vmatpush.msra.mxu0 %v694
      %1019 = vmatpush.msra.mxu0 %v693
      %1020 = vmatpush.msra.mxu0 %v692
      %1021 = vmatpush.msra.mxu0 %v691
      %1022 = vmatpush.msra.mxu0 %v690
      %1023 = vmatpush.msra.mxu0 %v689
      %1024 = vmatmul.f32.gmra.mxu0 %v500
      %v1025 = vpop.f32.mrf.mxu0
      %v1026 = vadd.f32 %v937, %v1025
      %1027 = vmatmul.f32.gmra.mxu0 %v506
      %v1028 = vpop.f32.mrf.mxu0
      %v1029 = vadd.f32 %v940, %v1028
      %1030 = vmatmul.f32.gmra.mxu0 %v512
      %v1031 = vpop.f32.mrf.mxu0
      %v1032 = vadd.f32 %v943, %v1031
      %1033 = vmatmul.f32.gmra.mxu0 %v518
      %v1034 = vpop.f32.mrf.mxu0
      %v1035 = vadd.f32 %v946, %v1034
      %1036 = vmatmul.f32.gmra.mxu0 %v524
      %v1037 = vpop.f32.mrf.mxu0
      %v1038 = vadd.f32 %v949, %v1037
      %1039 = vmatmul.f32.gmra.mxu0 %v530
      %v1040 = vpop.f32.mrf.mxu0
      %v1041 = vadd.f32 %v952, %v1040
      %1042 = vmatmul.f32.gmra.mxu0 %v536
      %v1043 = vpop.f32.mrf.mxu0
      %v1044 = vadd.f32 %v955, %v1043
      %1045 = vmatmul.f32.gmra.mxu0 %v542
      %v1046 = vpop.f32.mrf.mxu0
      %v1047 = vadd.f32 %v958, %v1046
      %1048 = vmatmul.f32.gmra.mxu0 %v548
      %v1049 = vpop.f32.mrf.mxu0
      %v1050 = vadd.f32 %v961, %v1049
      %1051 = vmatmul.f32.gmra.mxu0 %v554
      %v1052 = vpop.f32.mrf.mxu0
      %v1053 = vadd.f32 %v964, %v1052
      %1054 = vmatmul.f32.gmra.mxu0 %v560
      %v1055 = vpop.f32.mrf.mxu0
      %v1056 = vadd.f32 %v967, %v1055
      %1057 = vmatmul.f32.gmra.mxu0 %v566
      %v1058 = vpop.f32.mrf.mxu0
      %v1059 = vadd.f32 %v970, %v1058
      %1060 = vmatmul.f32.gmra.mxu0 %v572
      %v1061 = vpop.f32.mrf.mxu0
      %v1062 = vadd.f32 %v973, %v1061
      %1063 = vmatmul.f32.gmra.mxu0 %v578
      %v1064 = vpop.f32.mrf.mxu0
      %v1065 = vadd.f32 %v976, %v1064
      %1066 = vmatmul.f32.gmra.mxu0 %v584
      %v1067 = vpop.f32.mrf.mxu0
      %v1068 = vadd.f32 %v979, %v1067
      %1069 = vmatmul.f32.gmra.mxu0 %v590
      %v1070 = vpop.f32.mrf.mxu0
      %v1071 = vadd.f32 %v982, %v1070
      %1072 = vmatmul.f32.gmra.mxu0 %v596
      %v1073 = vpop.f32.mrf.mxu0
      %v1074 = vadd.f32 %v985, %v1073
      %1075 = vmatmul.f32.gmra.mxu0 %v602
      %v1076 = vpop.f32.mrf.mxu0
      %v1077 = vadd.f32 %v988, %v1076
      %1078 = vmatmul.f32.gmra.mxu0 %v608
      %v1079 = vpop.f32.mrf.mxu0
      %v1080 = vadd.f32 %v991, %v1079
      %1081 = vmatmul.f32.gmra.mxu0 %v614
      %v1082 = vpop.f32.mrf.mxu0
      %v1083 = vadd.f32 %v994, %v1082
      %1084 = vmatmul.f32.gmra.mxu0 %v620
      %v1085 = vpop.f32.mrf.mxu0
      %v1086 = vadd.f32 %v997, %v1085
      %1087 = vmatmul.f32.gmra.mxu0 %v626
      %v1088 = vpop.f32.mrf.mxu0
      %v1089 = vadd.f32 %v1000, %v1088
      %1090 = vmatmul.f32.gmra.mxu0 %v632
      %v1091 = vpop.f32.mrf.mxu0
      %v1092 = vadd.f32 %v1003, %v1091
      %1093 = vmatmul.f32.gmra.mxu0 %v638
      %v1094 = vpop.f32.mrf.mxu0
      %v1095 = vadd.f32 %v1006, %v1094
      %1096 = vdwg.mxu0
      %1097 = vmatpush.msra.mxu0 %v720
      %1098 = vmatpush.msra.mxu0 %v719
      %1099 = vmatpush.msra.mxu0 %v718
      %1100 = vmatpush.msra.mxu0 %v717
      %1101 = vmatpush.msra.mxu0 %v716
      %1102 = vmatpush.msra.mxu0 %v715
      %1103 = vmatpush.msra.mxu0 %v714
      %1104 = vmatpush.msra.mxu0 %v713
      %1105 = vmatpush.msra.mxu0 %v712
      %1106 = vmatpush.msra.mxu0 %v711
      %1107 = vmatpush.msra.mxu0 %v710
      %1108 = vmatpush.msra.mxu0 %v709
      %1109 = vmatpush.msra.mxu0 %v708
      %1110 = vmatpush.msra.mxu0 %v707
      %1111 = vmatpush.msra.mxu0 %v706
      %1112 = vmatpush.msra.mxu0 %v705
      %1113 = vmatmul.f32.gmra.mxu0 %v501
      %v1114 = vpop.f32.mrf.mxu0
      %v1115 = vadd.f32 %v1026, %v1114
      %1116 = vmatmul.f32.gmra.mxu0 %v507
      %v1117 = vpop.f32.mrf.mxu0
      %v1118 = vadd.f32 %v1029, %v1117
      %1119 = vmatmul.f32.gmra.mxu0 %v513
      %v1120 = vpop.f32.mrf.mxu0
      %v1121 = vadd.f32 %v1032, %v1120
      %1122 = vmatmul.f32.gmra.mxu0 %v519
      %v1123 = vpop.f32.mrf.mxu0
      %v1124 = vadd.f32 %v1035, %v1123
      %1125 = vmatmul.f32.gmra.mxu0 %v525
      %v1126 = vpop.f32.mrf.mxu0
      %v1127 = vadd.f32 %v1038, %v1126
      %1128 = vmatmul.f32.gmra.mxu0 %v531
      %v1129 = vpop.f32.mrf.mxu0
      %v1130 = vadd.f32 %v1041, %v1129
      %1131 = vmatmul.f32.gmra.mxu0 %v537
      %v1132 = vpop.f32.mrf.mxu0
      %v1133 = vadd.f32 %v1044, %v1132
      %1134 = vmatmul.f32.gmra.mxu0 %v543
      %v1135 = vpop.f32.mrf.mxu0
      %v1136 = vadd.f32 %v1047, %v1135
      %1137 = vmatmul.f32.gmra.mxu0 %v549
      %v1138 = vpop.f32.mrf.mxu0
      %v1139 = vadd.f32 %v1050, %v1138
      %1140 = vmatmul.f32.gmra.mxu0 %v555
      %v1141 = vpop.f32.mrf.mxu0
      %v1142 = vadd.f32 %v1053, %v1141
      %1143 = vmatmul.f32.gmra.mxu0 %v561
      %v1144 = vpop.f32.mrf.mxu0
      %v1145 = vadd.f32 %v1056, %v1144
      %1146 = vmatmul.f32.gmra.mxu0 %v567
      %v1147 = vpop.f32.mrf.mxu0
      %v1148 = vadd.f32 %v1059, %v1147
      %1149 = vmatmul.f32.gmra.mxu0 %v573
      %v1150 = vpop.f32.mrf.mxu0
      %v1151 = vadd.f32 %v1062, %v1150
      %1152 = vmatmul.f32.gmra.mxu0 %v579
      %v1153 = vpop.f32.mrf.mxu0
      %v1154 = vadd.f32 %v1065, %v1153
      %1155 = vmatmul.f32.gmra.mxu0 %v585
      %v1156 = vpop.f32.mrf.mxu0
      %v1157 = vadd.f32 %v1068, %v1156
      %1158 = vmatmul.f32.gmra.mxu0 %v591
      %v1159 = vpop.f32.mrf.mxu0
      %v1160 = vadd.f32 %v1071, %v1159
      %1161 = vmatmul.f32.gmra.mxu0 %v597
      %v1162 = vpop.f32.mrf.mxu0
      %v1163 = vadd.f32 %v1074, %v1162
      %1164 = vmatmul.f32.gmra.mxu0 %v603
      %v1165 = vpop.f32.mrf.mxu0
      %v1166 = vadd.f32 %v1077, %v1165
      %1167 = vmatmul.f32.gmra.mxu0 %v609
      %v1168 = vpop.f32.mrf.mxu0
      %v1169 = vadd.f32 %v1080, %v1168
      %1170 = vmatmul.f32.gmra.mxu0 %v615
      %v1171 = vpop.f32.mrf.mxu0
      %v1172 = vadd.f32 %v1083, %v1171
      %1173 = vmatmul.f32.gmra.mxu0 %v621
      %v1174 = vpop.f32.mrf.mxu0
      %v1175 = vadd.f32 %v1086, %v1174
      %1176 = vmatmul.f32.gmra.mxu0 %v627
      %v1177 = vpop.f32.mrf.mxu0
      %v1178 = vadd.f32 %v1089, %v1177
      %1179 = vmatmul.f32.gmra.mxu0 %v633
      %v1180 = vpop.f32.mrf.mxu0
      %v1181 = vadd.f32 %v1092, %v1180
      %1182 = vmatmul.f32.gmra.mxu0 %v639
      %v1183 = vpop.f32.mrf.mxu0
      %v1184 = vadd.f32 %v1095, %v1183
      %1185 = vdwg.mxu0
      %1186 = vmatpush.msra.mxu0 %v736
      %1187 = vmatpush.msra.mxu0 %v735
      %1188 = vmatpush.msra.mxu0 %v734
      %1189 = vmatpush.msra.mxu0 %v733
      %1190 = vmatpush.msra.mxu0 %v732
      %1191 = vmatpush.msra.mxu0 %v731
      %1192 = vmatpush.msra.mxu0 %v730
      %1193 = vmatpush.msra.mxu0 %v729
      %1194 = vmatpush.msra.mxu0 %v728
      %1195 = vmatpush.msra.mxu0 %v727
      %1196 = vmatpush.msra.mxu0 %v726
      %1197 = vmatpush.msra.mxu0 %v725
      %1198 = vmatpush.msra.mxu0 %v724
      %1199 = vmatpush.msra.mxu0 %v723
      %1200 = vmatpush.msra.mxu0 %v722
      %1201 = vmatpush.msra.mxu0 %v721
      %1202 = vmatmul.f32.gmra.mxu0 %v502
      %v1203 = vpop.f32.mrf.mxu0
      %v1204 = vadd.f32 %v1115, %v1203
      %1205 = vmatmul.f32.gmra.mxu0 %v508
      %v1206 = vpop.f32.mrf.mxu0
      %v1207 = vadd.f32 %v1118, %v1206
      %1208 = vmatmul.f32.gmra.mxu0 %v514
      %v1209 = vpop.f32.mrf.mxu0
      %v1210 = vadd.f32 %v1121, %v1209
      %1211 = vmatmul.f32.gmra.mxu0 %v520
      %v1212 = vpop.f32.mrf.mxu0
      %v1213 = vadd.f32 %v1124, %v1212
      %1214 = vmatmul.f32.gmra.mxu0 %v526
      %v1215 = vpop.f32.mrf.mxu0
      %v1216 = vadd.f32 %v1127, %v1215
      %1217 = vmatmul.f32.gmra.mxu0 %v532
      %v1218 = vpop.f32.mrf.mxu0
      %v1219 = vadd.f32 %v1130, %v1218
      %1220 = vmatmul.f32.gmra.mxu0 %v538
      %v1221 = vpop.f32.mrf.mxu0
      %v1222 = vadd.f32 %v1133, %v1221
      %1223 = vmatmul.f32.gmra.mxu0 %v544
      %v1224 = vpop.f32.mrf.mxu0
      %v1225 = vadd.f32 %v1136, %v1224
      %1226 = vmatmul.f32.gmra.mxu0 %v550
      %v1227 = vpop.f32.mrf.mxu0
      %v1228 = vadd.f32 %v1139, %v1227
      %1229 = vmatmul.f32.gmra.mxu0 %v556
      %v1230 = vpop.f32.mrf.mxu0
      %v1231 = vadd.f32 %v1142, %v1230
      %1232 = vmatmul.f32.gmra.mxu0 %v562
      %v1233 = vpop.f32.mrf.mxu0
      %v1234 = vadd.f32 %v1145, %v1233
      %1235 = vmatmul.f32.gmra.mxu0 %v568
      %v1236 = vpop.f32.mrf.mxu0
      %v1237 = vadd.f32 %v1148, %v1236
      %1238 = vmatmul.f32.gmra.mxu0 %v574
      %v1239 = vpop.f32.mrf.mxu0
      %v1240 = vadd.f32 %v1151, %v1239
      %1241 = vmatmul.f32.gmra.mxu0 %v580
      %v1242 = vpop.f32.mrf.mxu0
      %v1243 = vadd.f32 %v1154, %v1242
      %1244 = vmatmul.f32.gmra.mxu0 %v586
      %v1245 = vpop.f32.mrf.mxu0
      %v1246 = vadd.f32 %v1157, %v1245
      %1247 = vmatmul.f32.gmra.mxu0 %v592
      %v1248 = vpop.f32.mrf.mxu0
      %v1249 = vadd.f32 %v1160, %v1248
      %1250 = vmatmul.f32.gmra.mxu0 %v598
      %v1251 = vpop.f32.mrf.mxu0
      %v1252 = vadd.f32 %v1163, %v1251
      %1253 = vmatmul.f32.gmra.mxu0 %v604
      %v1254 = vpop.f32.mrf.mxu0
      %v1255 = vadd.f32 %v1166, %v1254
      %1256 = vmatmul.f32.gmra.mxu0 %v610
      %v1257 = vpop.f32.mrf.mxu0
      %v1258 = vadd.f32 %v1169, %v1257
      %1259 = vmatmul.f32.gmra.mxu0 %v616
      %v1260 = vpop.f32.mrf.mxu0
      %v1261 = vadd.f32 %v1172, %v1260
      %1262 = vmatmul.f32.gmra.mxu0 %v622
      %v1263 = vpop.f32.mrf.mxu0
      %v1264 = vadd.f32 %v1175, %v1263
      %1265 = vmatmul.f32.gmra.mxu0 %v628
      %v1266 = vpop.f32.mrf.mxu0
      %v1267 = vadd.f32 %v1178, %v1266
      %1268 = vmatmul.f32.gmra.mxu0 %v634
      %v1269 = vpop.f32.mrf.mxu0
      %v1270 = vadd.f32 %v1181, %v1269
      %1271 = vmatmul.f32.gmra.mxu0 %v640
      %v1272 = vpop.f32.mrf.mxu0
      %v1273 = vadd.f32 %v1184, %v1272
      %1274 = vdwg.mxu0
      %vm1275 = vcmask 31744
      %1276 = vst.msk [vmem:[%s206] sm:$0xff] %vm1275, %v1204
      %1277 = vst.msk [vmem:[%s206 + $0x8] sm:$0xff] %vm1275, %v1207
      %1278 = vst.msk [vmem:[%s206 + $0x10] sm:$0xff] %vm1275, %v1210
      %1279 = vst.msk [vmem:[%s206 + $0x18] sm:$0xff] %vm1275, %v1213
      %1280 = vst.msk [vmem:[%s206 + $0x20] sm:$0xff] %vm1275, %v1216
      %1281 = vst.msk [vmem:[%s206 + $0x28] sm:$0xff] %vm1275, %v1219
      %1282 = vst.msk [vmem:[%s206 + $0x30] sm:$0xff] %vm1275, %v1222
      %1283 = vst.msk [vmem:[%s206 + $0x38] sm:$0xff] %vm1275, %v1225
      %1284 = vst.msk [vmem:[%s206 + $0x40] sm:$0xff] %vm1275, %v1228
      %1285 = vst.msk [vmem:[%s206 + $0x48] sm:$0xff] %vm1275, %v1231
      %1286 = vst.msk [vmem:[%s206 + $0x50] sm:$0xff] %vm1275, %v1234
      %1287 = vst.msk [vmem:[%s206 + $0x58] sm:$0xff] %vm1275, %v1237
      %1288 = vst.msk [vmem:[%s206 + $0x60] sm:$0xff] %vm1275, %v1240
      %1289 = vst.msk [vmem:[%s206 + $0x68] sm:$0xff] %vm1275, %v1243
      %1290 = vst.msk [vmem:[%s206 + $0x70] sm:$0xff] %vm1275, %v1246
      %1291 = vst.msk [vmem:[%s206 + $0x78] sm:$0xff] %vm1275, %v1249
      %1292 = vst.msk [vmem:[%s206 + $0x80] sm:$0xff] %vm1275, %v1252
      %1293 = vst.msk [vmem:[%s206 + $0x88] sm:$0xff] %vm1275, %v1255
      %1294 = vst.msk [vmem:[%s206 + $0x90] sm:$0xff] %vm1275, %v1258
      %1295 = vst.msk [vmem:[%s206 + $0x98] sm:$0xff] %vm1275, %v1261
      %1296 = vst.msk [vmem:[%s206 + $0xa0] sm:$0xff] %vm1275, %v1264
      %1297 = vst.msk [vmem:[%s206 + $0xa8] sm:$0xff] %vm1275, %v1267
      %1298 = vst.msk [vmem:[%s206 + $0xb0] sm:$0xff] %vm1275, %v1270
      %1299 = vst.msk [vmem:[%s206 + $0xb8] sm:$0xff] %vm1275, %v1273
      %p1300 = scmp.lt.s32.totalorder %s18, 1
      %s1301 = scalar_select %p1300, %s18, 1
      %p1302 = scmp.lt.s32.totalorder %s19, 0
      %s1303 = scalar_select %p1302, %s19, 0
      %s1304 = smul.addr %s1303, 24
      %s1305 = smul.addr %s1301, 24
      %s1306 = sadd.s32 %s1304, %s1305
      %s1307 = smul.addr %s1306, 8
      %s1308 = scalar_lea.vmem %s3, %s1307
      // Predicated region
      $region33: #{discriminator_r_forward.13} parent=31 // pred_check
        %p1309 = pneg %p116
      $region34: #{discriminator_r_forward.13} parent=31 // pred_check_branch
        %1311 = sbr.rel (%p1309) target = $region36
      $region35: #{discriminator_r_forward.13} parent=31 // pred_region
        _
      $region36: #{discriminator_r_forward.13} parent=31 // pred_fallthru
        _
    $region32: #{discriminator_r_forward.13} parent=5 // pred_fallthru
      _
    %p1312 = scmp.le.s32.totalorder 2, %s9
    // Predicated region
    $region37: #{discriminator_r_forward.13} parent=5 // pred_check
      %p1313 = pneg %p1312
    $region38: #{discriminator_r_forward.13} parent=5 // pred_check_branch
      %1315 = sbr.rel (%p1313) target = $region40
    $region39: #{discriminator_r_forward.13} parent=5 // pred_region
      %s1316 = ssub.s32 %s9, 2
      // Predicated region
      $region41: #{discriminator_r_forward.13} parent=39 // pred_check
        %p1317 = pneg %p122
      $region42: #{discriminator_r_forward.13} parent=39 // pred_check_branch
        %1319 = sbr.rel (%p1317) target = $region44
      $region43: #{discriminator_r_forward.13} parent=39 // pred_region
        %p1320 = scmp.lt.s32.totalorder %s20, 1
        %s1321 = scalar_select %p1320, %s20, 1
        %p1322 = scmp.lt.s32.totalorder %s21, 0
        %s1323 = scalar_select %p1322, %s21, 0
        %s1324 = smul.addr %s1323, 24
        %s1325 = smul.addr %s1321, 24
        %s1326 = sadd.s32 %s1324, %s1325
        %s1327 = smul.addr %s1326, 8
        %s1328 = scalar_lea.vmem %s3, %s1327
      $region44: #{discriminator_r_forward.13} parent=39 // pred_fallthru
        _
    $region40: #{discriminator_r_forward.13} parent=5 // pred_fallthru
      _
  $region6: #{discriminator_r_forward.13} parent=0 // loop_footer
    %s13 = sadd.s32 1, %s9
  $region7: #{discriminator_r_forward.13} parent=0 // loop_footer_branch
    %8 = sbr.rel target = $region3
  $region8: #{discriminator_r_forward.13} parent=0 // loop_exit
    _

</llo_original>
